<compile_context>
chip_gen: v7x
topology: tpu7x:2x2x1
jax: 0.10.0
libtpu: 0.0.40
codegen_flags: <defaults>
</compile_context>

<pallas_src>
import functools

import jax
import jax.numpy as jnp
from jax import lax
from jax.experimental import pallas as pl
from jax.experimental.pallas import tpu as pltpu


# ----------------------------------------------------------------------------
# LSTM cell pieces (f32 gate math).
# ----------------------------------------------------------------------------
def _sigmoid(x):
    return 1.0 / (1.0 + jnp.exp(-x))


def _lstm_cell(gates, c_prev, H):
    """gates [Bx, 4H] f32 in PyTorch (i, f, g, o) order; c_prev [Bx, H] f32."""
    i = _sigmoid(gates[:, 0:H])
    f = _sigmoid(gates[:, H:2 * H])
    g = jnp.tanh(gates[:, 2 * H:3 * H])
    o = _sigmoid(gates[:, 3 * H:4 * H])
    c = f * c_prev + i * g
    h = o * jnp.tanh(c)
    return h, c


def _encode(x, w_refs, T, Bx, H, L):
    """Run an L-layer bidirectional LSTM over x [T*Bx, D_in] (time-major rows).

    w_refs: 3 refs per layer: wih [D_in, 8H] bf16, whh [2H, 8H] bf16 block-diag,
    b [1, 8H] f32.  Returns the PyTorch-equivalent
    h_n.transpose(0,1).reshape(Bx, -1): [Bx, 2*L*H] f32.
    """
    H2, H4, H8 = 2 * H, 4 * H, 8 * H
    finals = []
    for l in range(L):
        wih = w_refs[3 * l][...]                        # [D_in, 8H] bf16
        whh = w_refs[3 * l + 1][...]                    # [2H, 8H]   bf16
        b = w_refs[3 * l + 2][...]                      # [1, 8H]    f32

        # Input projection for ALL timesteps and BOTH directions: one matmul.
        gx = jnp.dot(x, wih, preferred_element_type=jnp.float32) + b  # [T*Bx,8H]

        h = jnp.zeros((Bx, H2), jnp.float32)            # [h_fwd | h_bwd]
        c_f = jnp.zeros((Bx, H), jnp.float32)
        c_b = jnp.zeros((Bx, H), jnp.float32)
        hs_f = [None] * T
        hs_b = [None] * T
        for t in range(T):                              # short, statically unrolled
            gh = jnp.dot(h.astype(jnp.bfloat16), whh,
                         preferred_element_type=jnp.float32)          # [Bx, 8H]
            tb = T - 1 - t
            g_f = gx[t * Bx:(t + 1) * Bx, 0:H4] + gh[:, 0:H4]
            g_b = gx[tb * Bx:(tb + 1) * Bx, H4:H8] + gh[:, H4:H8]
            h_f, c_f = _lstm_cell(g_f, c_f, H)
            h_b, c_b = _lstm_cell(g_b, c_b, H)
            h = jnp.concatenate([h_f, h_b], axis=-1)
            hs_f[t] = h_f                               # fwd hidden at time t
            hs_b[tb] = h_b                              # bwd hidden at time tb
        finals.append(h)                                # [h_fwd(T-1) | h_bwd(0)]
        if l < L - 1:
            # Next-layer input sequence [T*Bx, 2H] (stays in VMEM/registers).
            x = jnp.concatenate(
                [jnp.concatenate([hs_f[t], hs_b[t]], axis=-1) for t in range(T)],
                axis=0).astype(jnp.bfloat16)

    return jnp.concatenate(finals, axis=-1)             # [Bx, 2*L*H]


# ----------------------------------------------------------------------------
# Single fused kernel: both encoders + cosine scores + margin ranking loss.
# ----------------------------------------------------------------------------
def _fused_forward_kernel(*refs, T, B, H, L, margin):
    """Ref layout:
      inputs : xt [T*B, D] bf16, xpn [T*2B, D] bf16,
               3*L tweet-encoder weight refs, 3*L group-encoder weight refs
      outputs: pos [B,1], neg [B,1], loss [1,1],
               tweet_h [B,2LH], pos_h [B,2LH], neg_h [B,2LH]   (all f32)
    """
    n_w = 3 * L
    xt_ref = refs[0]
    xpn_ref = refs[1]
    tw = refs[2:2 + n_w]
    gw = refs[2 + n_w:2 + 2 * n_w]
    pos_ref, neg_ref, loss_ref, th_ref, ph_ref, nh_ref = refs[2 + 2 * n_w:]

    th = _encode(xt_ref[...], tw, T, B, H, L)           # [B,  2LH] f32
    pnh = _encode(xpn_ref[...], gw, T, 2 * B, H, L)     # [2B, 2LH] f32
    ph = pnh[0:B]
    nh = pnh[B:2 * B]

    # CosineSimilarity(dim=1, eps=1e-8); F.dropout(training=False) == identity.
    eps2 = 1e-8 * 1e-8
    tt = jnp.maximum(jnp.sum(th * th, axis=1, keepdims=True), eps2)
    pp = jnp.maximum(jnp.sum(ph * ph, axis=1, keepdims=True), eps2)
    nn_ = jnp.maximum(jnp.sum(nh * nh, axis=1, keepdims=True), eps2)
    inv_t = lax.rsqrt(tt)                               # EUP, ~free slot
    pos = jnp.sum(th * ph, axis=1, keepdims=True) * inv_t * lax.rsqrt(pp)
    neg = jnp.sum(th * nh, axis=1, keepdims=True) * inv_t * lax.rsqrt(nn_)

    # MarginRankingLoss(margin), y = 1: mean(max(0, margin - (pos - neg)))
    hinge = jnp.maximum(margin - (pos - neg), 0.0)      # [B, 1]
    loss = jnp.sum(hinge, axis=0, keepdims=True) * (1.0 / B)

    pos_ref[...] = pos
    neg_ref[...] = neg
    loss_ref[...] = loss
    th_ref[...] = th
    ph_ref[...] = ph
    nh_ref[...] = nh


# ----------------------------------------------------------------------------
# Full forward pass (similarity == 'cos', eval mode). ONE pallas_call total.
# ----------------------------------------------------------------------------
def bilstm_model_forward(tweet_ids, pos_ids, neg_ids, emb,
                         tweet_params, group_params, *, margin):
    B, T = tweet_ids.shape
    D = emb.shape[1]
    L = len(tweet_params)
    H = tweet_params[0][1].shape[0] // 2
    F2 = 2 * L * H

    # TODO(synk): embedding gather stays in XLA (jnp.take); data-dependent
    # row gather has no clean/portable Mosaic lowering at these shapes.
    def embed_flat(ids):
        e = jnp.take(emb, ids, axis=0)                  # [Bx, T, D], row 0 = pad
        # time-major rows (row t*Bx + b) so the kernel only handles 2-D tiles
        return jnp.transpose(e, (1, 0, 2)).reshape(-1, D).astype(jnp.bfloat16)

    xt = embed_flat(tweet_ids)                          # [T*B,  D]
    pn_ids = jnp.concatenate([pos_ids, neg_ids], axis=0)
    xpn = embed_flat(pn_ids)                            # [T*2B, D]

    flat_tw = [w for trip in tweet_params for w in trip]
    flat_gw = [w for trip in group_params for w in trip]

    kernel = functools.partial(_fused_forward_kernel,
                               T=T, B=B, H=H, L=L, margin=margin)
    pos_s, neg_s, loss, th, ph, nh = pl.pallas_call(
        kernel,
        out_shape=(
            jax.ShapeDtypeStruct((B, 1), jnp.float32),
            jax.ShapeDtypeStruct((B, 1), jnp.float32),
            jax.ShapeDtypeStruct((1, 1), jnp.float32),
            jax.ShapeDtypeStruct((B, F2), jnp.float32),
            jax.ShapeDtypeStruct((B, F2), jnp.float32),
            jax.ShapeDtypeStruct((B, F2), jnp.float32),
        ),
        compiler_params=pltpu.CompilerParams(vmem_limit_bytes=64 << 20),
    )(xt, xpn, *flat_tw, *flat_gw)
    return pos_s[:, 0], neg_s[:, 0], loss[0, 0], th, ph, nh


# ----------------------------------------------------------------------------
# Deterministic parameter construction (mirrors nn.LSTM shapes, then fuses
# both directions into the kernel's combined layout).
# ----------------------------------------------------------------------------
def init_lstm_params(key, num_layers, input_dim, hidden):
    params = []
    H = hidden
    scale = 1.0 / jnp.sqrt(jnp.float32(H))
    for layer in range(num_layers):
        d_in = input_dim if layer == 0 else 2 * H
        dirs = []
        for _direction in range(2):
            key, k1, k2, k3, k4 = jax.random.split(key, 5)
            w_ih = jax.random.uniform(k1, (4 * H, d_in), jnp.float32, -scale, scale)
            w_hh = jax.random.uniform(k2, (4 * H, H), jnp.float32, -scale, scale)
            b_ih = jax.random.uniform(k3, (4 * H,), jnp.float32, -scale, scale)
            b_hh = jax.random.uniform(k4, (4 * H,), jnp.float32, -scale, scale)
            dirs.append((w_ih, w_hh, b_ih, b_hh))
        (wih_f, whh_f, bih_f, bhh_f), (wih_b, whh_b, bih_b, bhh_b) = dirs
        # Fused layouts used by the kernel (bf16 matmul operands, f32 bias).
        wih = jnp.concatenate([wih_f.T, wih_b.T], axis=1).astype(jnp.bfloat16)
        zero = jnp.zeros((H, 4 * H), jnp.float32)
        whh = jnp.concatenate(
            [jnp.concatenate([whh_f.T, zero], axis=1),
             jnp.concatenate([zero, whh_b.T], axis=1)], axis=0).astype(jnp.bfloat16)
        b = jnp.concatenate([bih_f + bhh_f, bih_b + bhh_b]).reshape(1, 8 * H)
        params.append((wih, whh, b))
    return params, key


if __name__ == "__main__":
    # Module hyper-parameters (kwargs of BilstmModel).
    B, T = 2, 8                 # batch, sequence length
    VOCAB_SIZE = 50
    WORD_DIM = 32
    HIDDEN_SIZE = 32
    NUM_LAYERS = 2
    LOSS_MARGIN = 1.0           # kwargs['loss_margin']; similarity == 'cos'

    key = jax.random.PRNGKey(0)

    # Embedding table (padding_idx=0 -> zero row).
    key, k_emb = jax.random.split(key)
    emb = 0.1 * jax.random.normal(k_emb, (VOCAB_SIZE, WORD_DIM), jnp.float32)
    emb = emb.at[0].set(0.0)

    tweet_params, key = init_lstm_params(key, NUM_LAYERS, WORD_DIM, HIDDEN_SIZE)
    group_params, key = init_lstm_params(key, NUM_LAYERS, WORD_DIM, HIDDEN_SIZE)

    key, k1, k2, k3 = jax.random.split(key, 4)
    tweet_ids = jax.random.randint(k1, (B, T), 0, VOCAB_SIZE, jnp.int32)
    pos_ids = jax.random.randint(k2, (B, T), 0, VOCAB_SIZE, jnp.int32)
    neg_ids = jax.random.randint(k3, (B, T), 0, VOCAB_SIZE, jnp.int32)

    fwd = jax.jit(functools.partial(bilstm_model_forward, margin=LOSS_MARGIN))
    pos_score, neg_score, loss, tweet_h, pos_h, neg_h = fwd(
        tweet_ids, pos_ids, neg_ids, emb, tweet_params, group_params)

    jax.block_until_ready((pos_score, neg_score, loss, tweet_h, pos_h, neg_h))
    assert pos_score.shape == (B,) and neg_score.shape == (B,)
    assert tweet_h.shape == (B, 2 * NUM_LAYERS * HIDDEN_SIZE)
    assert pos_h.shape == (B, 2 * NUM_LAYERS * HIDDEN_SIZE)
    assert neg_h.shape == (B, 2 * NUM_LAYERS * HIDDEN_SIZE)
    assert bool(jnp.isfinite(loss))
    assert bool(jnp.all(jnp.abs(pos_score) <= 1.0 + 1e-4))
    assert bool(jnp.all(jnp.abs(neg_score) <= 1.0 + 1e-4))
    print("KERNEL_OK")
</pallas_src>

<mosaic_0001>
module attributes {stable_mosaic.version = 11 : i64} {
  func.func @_fused_forward_kernel(%arg0: memref<16x32xbf16, #tpu.memory_space<vmem>>, %arg1: memref<32x32xbf16, #tpu.memory_space<vmem>>, %arg2: memref<32x256xbf16, #tpu.memory_space<vmem>>, %arg3: memref<64x256xbf16, #tpu.memory_space<vmem>>, %arg4: memref<1x256xf32, #tpu.memory_space<vmem>>, %arg5: memref<64x256xbf16, #tpu.memory_space<vmem>>, %arg6: memref<64x256xbf16, #tpu.memory_space<vmem>>, %arg7: memref<1x256xf32, #tpu.memory_space<vmem>>, %arg8: memref<32x256xbf16, #tpu.memory_space<vmem>>, %arg9: memref<64x256xbf16, #tpu.memory_space<vmem>>, %arg10: memref<1x256xf32, #tpu.memory_space<vmem>>, %arg11: memref<64x256xbf16, #tpu.memory_space<vmem>>, %arg12: memref<64x256xbf16, #tpu.memory_space<vmem>>, %arg13: memref<1x256xf32, #tpu.memory_space<vmem>>, %arg14: memref<2x1xf32, #tpu.memory_space<vmem>>, %arg15: memref<2x1xf32, #tpu.memory_space<vmem>>, %arg16: memref<1x1xf32, #tpu.memory_space<vmem>>, %arg17: memref<2x128xf32, #tpu.memory_space<vmem>>, %arg18: memref<2x128xf32, #tpu.memory_space<vmem>>, %arg19: memref<2x128xf32, #tpu.memory_space<vmem>>) attributes {dimension_semantics = [], scalar_prefetch = 0 : i64, scratch_operands = 0 : i64, tpu.core_type = #tpu.core_type<tc>} {
    %c0 = arith.constant 0 : index
    %c0_0 = arith.constant 0 : index
    %0 = vector.load %arg0[%c0, %c0_0] : memref<16x32xbf16, #tpu.memory_space<vmem>>, vector<16x32xbf16>
    %c0_1 = arith.constant 0 : index
    %c0_2 = arith.constant 0 : index
    %1 = vector.load %arg2[%c0_1, %c0_2] : memref<32x256xbf16, #tpu.memory_space<vmem>>, vector<32x256xbf16>
    %c0_3 = arith.constant 0 : index
    %c0_4 = arith.constant 0 : index
    %2 = vector.load %arg3[%c0_3, %c0_4] : memref<64x256xbf16, #tpu.memory_space<vmem>>, vector<64x256xbf16>
    %c0_5 = arith.constant 0 : index
    %c0_6 = arith.constant 0 : index
    %3 = vector.load %arg4[%c0_5, %c0_6] : memref<1x256xf32, #tpu.memory_space<vmem>>, vector<1x256xf32>
    %cst = arith.constant dense<0.000000e+00> : vector<16x256xf32>
    %4 = tpu.matmul %0, %1, %cst {dimension_numbers = #tpu.dot_dimension_numbers<[1], [0], [0], [1], [0, 0, 1, 1], [], []>} : vector<16x32xbf16>, vector<32x256xbf16>, vector<16x256xf32> -> vector<16x256xf32>
    %5 = vector.broadcast %3 : vector<1x256xf32> to vector<16x256xf32>
    %6 = arith.addf %4, %5 : vector<16x256xf32>
    %cst_7 = arith.constant 0.000000e+00 : f32
    %7 = vector.broadcast %cst_7 : f32 to vector<2x64xf32>
    %cst_8 = arith.constant 0.000000e+00 : f32
    %8 = vector.broadcast %cst_8 : f32 to vector<2x32xf32>
    %cst_9 = arith.constant 0.000000e+00 : f32
    %9 = vector.broadcast %cst_9 : f32 to vector<2x32xf32>
    %10 = arith.truncf %7 : vector<2x64xf32> to vector<2x64xbf16>
    %cst_10 = arith.constant dense<0.000000e+00> : vector<2x256xf32>
    %11 = tpu.matmul %10, %2, %cst_10 {dimension_numbers = #tpu.dot_dimension_numbers<[1], [0], [0], [1], [0, 0, 1, 1], [], []>} : vector<2x64xbf16>, vector<64x256xbf16>, vector<2x256xf32> -> vector<2x256xf32>
    %12 = vector.extract_strided_slice %6 {offsets = [0, 0], sizes = [2, 128], strides = [1, 1]} : vector<16x256xf32> to vector<2x128xf32>
    %13 = vector.extract_strided_slice %11 {offsets = [0, 0], sizes = [2, 128], strides = [1, 1]} : vector<2x256xf32> to vector<2x128xf32>
    %14 = arith.addf %12, %13 : vector<2x128xf32>
    %15 = vector.extract_strided_slice %6 {offsets = [14, 128], sizes = [2, 128], strides = [1, 1]} : vector<16x256xf32> to vector<2x128xf32>
    %16 = vector.extract_strided_slice %11 {offsets = [0, 128], sizes = [2, 128], strides = [1, 1]} : vector<2x256xf32> to vector<2x128xf32>
    %17 = arith.addf %15, %16 : vector<2x128xf32>
    %18 = vector.extract_strided_slice %14 {offsets = [0, 0], sizes = [2, 32], strides = [1, 1]} : vector<2x128xf32> to vector<2x32xf32>
    %cst_11 = arith.constant 0.000000e+00 : f32
    %19 = vector.broadcast %cst_11 : f32 to vector<2x32xf32>
    %20 = arith.subf %19, %18 : vector<2x32xf32>
    %21 = math.exp %20 : vector<2x32xf32>
    %cst_12 = arith.constant 1.000000e+00 : f32
    %22 = vector.broadcast %cst_12 : f32 to vector<2x32xf32>
    %23 = arith.addf %22, %21 : vector<2x32xf32>
    %cst_13 = arith.constant 1.000000e+00 : f32
    %24 = vector.broadcast %cst_13 : f32 to vector<2x32xf32>
    %25 = arith.divf %24, %23 : vector<2x32xf32>
    %26 = vector.extract_strided_slice %14 {offsets = [0, 32], sizes = [2, 32], strides = [1, 1]} : vector<2x128xf32> to vector<2x32xf32>
    %cst_14 = arith.constant 0.000000e+00 : f32
    %27 = vector.broadcast %cst_14 : f32 to vector<2x32xf32>
    %28 = arith.subf %27, %26 : vector<2x32xf32>
    %29 = math.exp %28 : vector<2x32xf32>
    %cst_15 = arith.constant 1.000000e+00 : f32
    %30 = vector.broadcast %cst_15 : f32 to vector<2x32xf32>
    %31 = arith.addf %30, %29 : vector<2x32xf32>
    %cst_16 = arith.constant 1.000000e+00 : f32
    %32 = vector.broadcast %cst_16 : f32 to vector<2x32xf32>
    %33 = arith.divf %32, %31 : vector<2x32xf32>
    %34 = vector.extract_strided_slice %14 {offsets = [0, 64], sizes = [2, 32], strides = [1, 1]} : vector<2x128xf32> to vector<2x32xf32>
    %35 = math.tanh %34 : vector<2x32xf32>
    %36 = vector.extract_strided_slice %14 {offsets = [0, 96], sizes = [2, 32], strides = [1, 1]} : vector<2x128xf32> to vector<2x32xf32>
    %cst_17 = arith.constant 0.000000e+00 : f32
    %37 = vector.broadcast %cst_17 : f32 to vector<2x32xf32>
    %38 = arith.subf %37, %36 : vector<2x32xf32>
    %39 = math.exp %38 : vector<2x32xf32>
    %cst_18 = arith.constant 1.000000e+00 : f32
    %40 = vector.broadcast %cst_18 : f32 to vector<2x32xf32>
    %41 = arith.addf %40, %39 : vector<2x32xf32>
    %cst_19 = arith.constant 1.000000e+00 : f32
    %42 = vector.broadcast %cst_19 : f32 to vector<2x32xf32>
    %43 = arith.divf %42, %41 : vector<2x32xf32>
    %44 = arith.mulf %33, %8 : vector<2x32xf32>
    %45 = arith.mulf %25, %35 : vector<2x32xf32>
    %46 = arith.addf %44, %45 : vector<2x32xf32>
    %47 = math.tanh %46 : vector<2x32xf32>
    %48 = arith.mulf %43, %47 : vector<2x32xf32>
    %49 = vector.extract_strided_slice %17 {offsets = [0, 0], sizes = [2, 32], strides = [1, 1]} : vector<2x128xf32> to vector<2x32xf32>
    %cst_20 = arith.constant 0.000000e+00 : f32
    %50 = vector.broadcast %cst_20 : f32 to vector<2x32xf32>
    %51 = arith.subf %50, %49 : vector<2x32xf32>
    %52 = math.exp %51 : vector<2x32xf32>
    %cst_21 = arith.constant 1.000000e+00 : f32
    %53 = vector.broadcast %cst_21 : f32 to vector<2x32xf32>
    %54 = arith.addf %53, %52 : vector<2x32xf32>
    %cst_22 = arith.constant 1.000000e+00 : f32
    %55 = vector.broadcast %cst_22 : f32 to vector<2x32xf32>
    %56 = arith.divf %55, %54 : vector<2x32xf32>
    %57 = vector.extract_strided_slice %17 {offsets = [0, 32], sizes = [2, 32], strides = [1, 1]} : vector<2x128xf32> to vector<2x32xf32>
    %cst_23 = arith.constant 0.000000e+00 : f32
    %58 = vector.broadcast %cst_23 : f32 to vector<2x32xf32>
    %59 = arith.subf %58, %57 : vector<2x32xf32>
    %60 = math.exp %59 : vector<2x32xf32>
    %cst_24 = arith.constant 1.000000e+00 : f32
    %61 = vector.broadcast %cst_24 : f32 to vector<2x32xf32>
    %62 = arith.addf %61, %60 : vector<2x32xf32>
    %cst_25 = arith.constant 1.000000e+00 : f32
    %63 = vector.broadcast %cst_25 : f32 to vector<2x32xf32>
    %64 = arith.divf %63, %62 : vector<2x32xf32>
    %65 = vector.extract_strided_slice %17 {offsets = [0, 64], sizes = [2, 32], strides = [1, 1]} : vector<2x128xf32> to vector<2x32xf32>
    %66 = math.tanh %65 : vector<2x32xf32>
    %67 = vector.extract_strided_slice %17 {offsets = [0, 96], sizes = [2, 32], strides = [1, 1]} : vector<2x128xf32> to vector<2x32xf32>
    %cst_26 = arith.constant 0.000000e+00 : f32
    %68 = vector.broadcast %cst_26 : f32 to vector<2x32xf32>
    %69 = arith.subf %68, %67 : vector<2x32xf32>
    %70 = math.exp %69 : vector<2x32xf32>
    %cst_27 = arith.constant 1.000000e+00 : f32
    %71 = vector.broadcast %cst_27 : f32 to vector<2x32xf32>
    %72 = arith.addf %71, %70 : vector<2x32xf32>
    %cst_28 = arith.constant 1.000000e+00 : f32
    %73 = vector.broadcast %cst_28 : f32 to vector<2x32xf32>
    %74 = arith.divf %73, %72 : vector<2x32xf32>
    %75 = arith.mulf %64, %9 : vector<2x32xf32>
    %76 = arith.mulf %56, %66 : vector<2x32xf32>
    %77 = arith.addf %75, %76 : vector<2x32xf32>
    %78 = math.tanh %77 : vector<2x32xf32>
    %79 = arith.mulf %74, %78 : vector<2x32xf32>
    %80 = tpu.concatenate %48, %79 in 1 : vector<2x32xf32>, vector<2x32xf32> -> vector<2x64xf32>
    %81 = arith.truncf %80 : vector<2x64xf32> to vector<2x64xbf16>
    %cst_29 = arith.constant dense<0.000000e+00> : vector<2x256xf32>
    %82 = tpu.matmul %81, %2, %cst_29 {dimension_numbers = #tpu.dot_dimension_numbers<[1], [0], [0], [1], [0, 0, 1, 1], [], []>} : vector<2x64xbf16>, vector<64x256xbf16>, vector<2x256xf32> -> vector<2x256xf32>
    %83 = vector.extract_strided_slice %6 {offsets = [2, 0], sizes = [2, 128], strides = [1, 1]} : vector<16x256xf32> to vector<2x128xf32>
    %84 = vector.extract_strided_slice %82 {offsets = [0, 0], sizes = [2, 128], strides = [1, 1]} : vector<2x256xf32> to vector<2x128xf32>
    %85 = arith.addf %83, %84 : vector<2x128xf32>
    %86 = vector.extract_strided_slice %6 {offsets = [12, 128], sizes = [2, 128], strides = [1, 1]} : vector<16x256xf32> to vector<2x128xf32>
    %87 = vector.extract_strided_slice %82 {offsets = [0, 128], sizes = [2, 128], strides = [1, 1]} : vector<2x256xf32> to vector<2x128xf32>
    %88 = arith.addf %86, %87 : vector<2x128xf32>
    %89 = vector.extract_strided_slice %85 {offsets = [0, 0], sizes = [2, 32], strides = [1, 1]} : vector<2x128xf32> to vector<2x32xf32>
    %cst_30 = arith.constant 0.000000e+00 : f32
    %90 = vector.broadcast %cst_30 : f32 to vector<2x32xf32>
    %91 = arith.subf %90, %89 : vector<2x32xf32>
    %92 = math.exp %91 : vector<2x32xf32>
    %cst_31 = arith.constant 1.000000e+00 : f32
    %93 = vector.broadcast %cst_31 : f32 to vector<2x32xf32>
    %94 = arith.addf %93, %92 : vector<2x32xf32>
    %cst_32 = arith.constant 1.000000e+00 : f32
    %95 = vector.broadcast %cst_32 : f32 to vector<2x32xf32>
    %96 = arith.divf %95, %94 : vector<2x32xf32>
    %97 = vector.extract_strided_slice %85 {offsets = [0, 32], sizes = [2, 32], strides = [1, 1]} : vector<2x128xf32> to vector<2x32xf32>
    %cst_33 = arith.constant 0.000000e+00 : f32
    %98 = vector.broadcast %cst_33 : f32 to vector<2x32xf32>
    %99 = arith.subf %98, %97 : vector<2x32xf32>
    %100 = math.exp %99 : vector<2x32xf32>
    %cst_34 = arith.constant 1.000000e+00 : f32
    %101 = vector.broadcast %cst_34 : f32 to vector<2x32xf32>
    %102 = arith.addf %101, %100 : vector<2x32xf32>
    %cst_35 = arith.constant 1.000000e+00 : f32
    %103 = vector.broadcast %cst_35 : f32 to vector<2x32xf32>
    %104 = arith.divf %103, %102 : vector<2x32xf32>
    %105 = vector.extract_strided_slice %85 {offsets = [0, 64], sizes = [2, 32], strides = [1, 1]} : vector<2x128xf32> to vector<2x32xf32>
    %106 = math.tanh %105 : vector<2x32xf32>
    %107 = vector.extract_strided_slice %85 {offsets = [0, 96], sizes = [2, 32], strides = [1, 1]} : vector<2x128xf32> to vector<2x32xf32>
    %cst_36 = arith.constant 0.000000e+00 : f32
    %108 = vector.broadcast %cst_36 : f32 to vector<2x32xf32>
    %109 = arith.subf %108, %107 : vector<2x32xf32>
    %110 = math.exp %109 : vector<2x32xf32>
    %cst_37 = arith.constant 1.000000e+00 : f32
    %111 = vector.broadcast %cst_37 : f32 to vector<2x32xf32>
    %112 = arith.addf %111, %110 : vector<2x32xf32>
    %cst_38 = arith.constant 1.000000e+00 : f32
    %113 = vector.broadcast %cst_38 : f32 to vector<2x32xf32>
    %114 = arith.divf %113, %112 : vector<2x32xf32>
    %115 = arith.mulf %104, %46 : vector<2x32xf32>
    %116 = arith.mulf %96, %106 : vector<2x32xf32>
    %117 = arith.addf %115, %116 : vector<2x32xf32>
    %118 = math.tanh %117 : vector<2x32xf32>
    %119 = arith.mulf %114, %118 : vector<2x32xf32>
    %120 = vector.extract_strided_slice %88 {offsets = [0, 0], sizes = [2, 32], strides = [1, 1]} : vector<2x128xf32> to vector<2x32xf32>
    %cst_39 = arith.constant 0.000000e+00 : f32
    %121 = vector.broadcast %cst_39 : f32 to vector<2x32xf32>
    %122 = arith.subf %121, %120 : vector<2x32xf32>
    %123 = math.exp %122 : vector<2x32xf32>
    %cst_40 = arith.constant 1.000000e+00 : f32
    %124 = vector.broadcast %cst_40 : f32 to vector<2x32xf32>
    %125 = arith.addf %124, %123 : vector<2x32xf32>
    %cst_41 = arith.constant 1.000000e+00 : f32
    %126 = vector.broadcast %cst_41 : f32 to vector<2x32xf32>
    %127 = arith.divf %126, %125 : vector<2x32xf32>
    %128 = vector.extract_strided_slice %88 {offsets = [0, 32], sizes = [2, 32], strides = [1, 1]} : vector<2x128xf32> to vector<2x32xf32>
    %cst_42 = arith.constant 0.000000e+00 : f32
    %129 = vector.broadcast %cst_42 : f32 to vector<2x32xf32>
    %130 = arith.subf %129, %128 : vector<2x32xf32>
    %131 = math.exp %130 : vector<2x32xf32>
    %cst_43 = arith.constant 1.000000e+00 : f32
    %132 = vector.broadcast %cst_43 : f32 to vector<2x32xf32>
    %133 = arith.addf %132, %131 : vector<2x32xf32>
    %cst_44 = arith.constant 1.000000e+00 : f32
    %134 = vector.broadcast %cst_44 : f32 to vector<2x32xf32>
    %135 = arith.divf %134, %133 : vector<2x32xf32>
    %136 = vector.extract_strided_slice %88 {offsets = [0, 64], sizes = [2, 32], strides = [1, 1]} : vector<2x128xf32> to vector<2x32xf32>
    %137 = math.tanh %136 : vector<2x32xf32>
    %138 = vector.extract_strided_slice %88 {offsets = [0, 96], sizes = [2, 32], strides = [1, 1]} : vector<2x128xf32> to vector<2x32xf32>
    %cst_45 = arith.constant 0.000000e+00 : f32
    %139 = vector.broadcast %cst_45 : f32 to vector<2x32xf32>
    %140 = arith.subf %139, %138 : vector<2x32xf32>
    %141 = math.exp %140 : vector<2x32xf32>
    %cst_46 = arith.constant 1.000000e+00 : f32
    %142 = vector.broadcast %cst_46 : f32 to vector<2x32xf32>
    %143 = arith.addf %142, %141 : vector<2x32xf32>
    %cst_47 = arith.constant 1.000000e+00 : f32
    %144 = vector.broadcast %cst_47 : f32 to vector<2x32xf32>
    %145 = arith.divf %144, %143 : vector<2x32xf32>
    %146 = arith.mulf %135, %77 : vector<2x32xf32>
    %147 = arith.mulf %127, %137 : vector<2x32xf32>
    %148 = arith.addf %146, %147 : vector<2x32xf32>
    %149 = math.tanh %148 : vector<2x32xf32>
    %150 = arith.mulf %145, %149 : vector<2x32xf32>
    %151 = tpu.concatenate %119, %150 in 1 : vector<2x32xf32>, vector<2x32xf32> -> vector<2x64xf32>
    %152 = arith.truncf %151 : vector<2x64xf32> to vector<2x64xbf16>
    %cst_48 = arith.constant dense<0.000000e+00> : vector<2x256xf32>
    %153 = tpu.matmul %152, %2, %cst_48 {dimension_numbers = #tpu.dot_dimension_numbers<[1], [0], [0], [1], [0, 0, 1, 1], [], []>} : vector<2x64xbf16>, vector<64x256xbf16>, vector<2x256xf32> -> vector<2x256xf32>
    %154 = vector.extract_strided_slice %6 {offsets = [4, 0], sizes = [2, 128], strides = [1, 1]} : vector<16x256xf32> to vector<2x128xf32>
    %155 = vector.extract_strided_slice %153 {offsets = [0, 0], sizes = [2, 128], strides = [1, 1]} : vector<2x256xf32> to vector<2x128xf32>
    %156 = arith.addf %154, %155 : vector<2x128xf32>
    %157 = vector.extract_strided_slice %6 {offsets = [10, 128], sizes = [2, 128], strides = [1, 1]} : vector<16x256xf32> to vector<2x128xf32>
    %158 = vector.extract_strided_slice %153 {offsets = [0, 128], sizes = [2, 128], strides = [1, 1]} : vector<2x256xf32> to vector<2x128xf32>
    %159 = arith.addf %157, %158 : vector<2x128xf32>
    %160 = vector.extract_strided_slice %156 {offsets = [0, 0], sizes = [2, 32], strides = [1, 1]} : vector<2x128xf32> to vector<2x32xf32>
    %cst_49 = arith.constant 0.000000e+00 : f32
    %161 = vector.broadcast %cst_49 : f32 to vector<2x32xf32>
    %162 = arith.subf %161, %160 : vector<2x32xf32>
    %163 = math.exp %162 : vector<2x32xf32>
    %cst_50 = arith.constant 1.000000e+00 : f32
    %164 = vector.broadcast %cst_50 : f32 to vector<2x32xf32>
    %165 = arith.addf %164, %163 : vector<2x32xf32>
    %cst_51 = arith.constant 1.000000e+00 : f32
    %166 = vector.broadcast %cst_51 : f32 to vector<2x32xf32>
    %167 = arith.divf %166, %165 : vector<2x32xf32>
    %168 = vector.extract_strided_slice %156 {offsets = [0, 32], sizes = [2, 32], strides = [1, 1]} : vector<2x128xf32> to vector<2x32xf32>
    %cst_52 = arith.constant 0.000000e+00 : f32
    %169 = vector.broadcast %cst_52 : f32 to vector<2x32xf32>
    %170 = arith.subf %169, %168 : vector<2x32xf32>
    %171 = math.exp %170 : vector<2x32xf32>
    %cst_53 = arith.constant 1.000000e+00 : f32
    %172 = vector.broadcast %cst_53 : f32 to vector<2x32xf32>
    %173 = arith.addf %172, %171 : vector<2x32xf32>
    %cst_54 = arith.constant 1.000000e+00 : f32
    %174 = vector.broadcast %cst_54 : f32 to vector<2x32xf32>
    %175 = arith.divf %174, %173 : vector<2x32xf32>
    %176 = vector.extract_strided_slice %156 {offsets = [0, 64], sizes = [2, 32], strides = [1, 1]} : vector<2x128xf32> to vector<2x32xf32>
    %177 = math.tanh %176 : vector<2x32xf32>
    %178 = vector.extract_strided_slice %156 {offsets = [0, 96], sizes = [2, 32], strides = [1, 1]} : vector<2x128xf32> to vector<2x32xf32>
    %cst_55 = arith.constant 0.000000e+00 : f32
    %179 = vector.broadcast %cst_55 : f32 to vector<2x32xf32>
    %180 = arith.subf %179, %178 : vector<2x32xf32>
    %181 = math.exp %180 : vector<2x32xf32>
    %cst_56 = arith.constant 1.000000e+00 : f32
    %182 = vector.broadcast %cst_56 : f32 to vector<2x32xf32>
    %183 = arith.addf %182, %181 : vector<2x32xf32>
    %cst_57 = arith.constant 1.000000e+00 : f32
    %184 = vector.broadcast %cst_57 : f32 to vector<2x32xf32>
    %185 = arith.divf %184, %183 : vector<2x32xf32>
    %186 = arith.mulf %175, %117 : vector<2x32xf32>
    %187 = arith.mulf %167, %177 : vector<2x32xf32>
    %188 = arith.addf %186, %187 : vector<2x32xf32>
    %189 = math.tanh %188 : vector<2x32xf32>
    %190 = arith.mulf %185, %189 : vector<2x32xf32>
    %191 = vector.extract_strided_slice %159 {offsets = [0, 0], sizes = [2, 32], strides = [1, 1]} : vector<2x128xf32> to vector<2x32xf32>
    %cst_58 = arith.constant 0.000000e+00 : f32
    %192 = vector.broadcast %cst_58 : f32 to vector<2x32xf32>
    %193 = arith.subf %192, %191 : vector<2x32xf32>
    %194 = math.exp %193 : vector<2x32xf32>
    %cst_59 = arith.constant 1.000000e+00 : f32
    %195 = vector.broadcast %cst_59 : f32 to vector<2x32xf32>
    %196 = arith.addf %195, %194 : vector<2x32xf32>
    %cst_60 = arith.constant 1.000000e+00 : f32
    %197 = vector.broadcast %cst_60 : f32 to vector<2x32xf32>
    %198 = arith.divf %197, %196 : vector<2x32xf32>
    %199 = vector.extract_strided_slice %159 {offsets = [0, 32], sizes = [2, 32], strides = [1, 1]} : vector<2x128xf32> to vector<2x32xf32>
    %cst_61 = arith.constant 0.000000e+00 : f32
    %200 = vector.broadcast %cst_61 : f32 to vector<2x32xf32>
    %201 = arith.subf %200, %199 : vector<2x32xf32>
    %202 = math.exp %201 : vector<2x32xf32>
    %cst_62 = arith.constant 1.000000e+00 : f32
    %203 = vector.broadcast %cst_62 : f32 to vector<2x32xf32>
    %204 = arith.addf %203, %202 : vector<2x32xf32>
    %cst_63 = arith.constant 1.000000e+00 : f32
    %205 = vector.broadcast %cst_63 : f32 to vector<2x32xf32>
    %206 = arith.divf %205, %204 : vector<2x32xf32>
    %207 = vector.extract_strided_slice %159 {offsets = [0, 64], sizes = [2, 32], strides = [1, 1]} : vector<2x128xf32> to vector<2x32xf32>
    %208 = math.tanh %207 : vector<2x32xf32>
    %209 = vector.extract_strided_slice %159 {offsets = [0, 96], sizes = [2, 32], strides = [1, 1]} : vector<2x128xf32> to vector<2x32xf32>
    %cst_64 = arith.constant 0.000000e+00 : f32
    %210 = vector.broadcast %cst_64 : f32 to vector<2x32xf32>
    %211 = arith.subf %210, %209 : vector<2x32xf32>
    %212 = math.exp %211 : vector<2x32xf32>
    %cst_65 = arith.constant 1.000000e+00 : f32
    %213 = vector.broadcast %cst_65 : f32 to vector<2x32xf32>
    %214 = arith.addf %213, %212 : vector<2x32xf32>
    %cst_66 = arith.constant 1.000000e+00 : f32
    %215 = vector.broadcast %cst_66 : f32 to vector<2x32xf32>
    %216 = arith.divf %215, %214 : vector<2x32xf32>
    %217 = arith.mulf %206, %148 : vector<2x32xf32>
    %218 = arith.mulf %198, %208 : vector<2x32xf32>
    %219 = arith.addf %217, %218 : vector<2x32xf32>
    %220 = math.tanh %219 : vector<2x32xf32>
    %221 = arith.mulf %216, %220 : vector<2x32xf32>
    %222 = tpu.concatenate %190, %221 in 1 : vector<2x32xf32>, vector<2x32xf32> -> vector<2x64xf32>
    %223 = arith.truncf %222 : vector<2x64xf32> to vector<2x64xbf16>
    %cst_67 = arith.constant dense<0.000000e+00> : vector<2x256xf32>
    %224 = tpu.matmul %223, %2, %cst_67 {dimension_numbers = #tpu.dot_dimension_numbers<[1], [0], [0], [1], [0, 0, 1, 1], [], []>} : vector<2x64xbf16>, vector<64x256xbf16>, vector<2x256xf32> -> vector<2x256xf32>
    %225 = vector.extract_strided_slice %6 {offsets = [6, 0], sizes = [2, 128], strides = [1, 1]} : vector<16x256xf32> to vector<2x128xf32>
    %226 = vector.extract_strided_slice %224 {offsets = [0, 0], sizes = [2, 128], strides = [1, 1]} : vector<2x256xf32> to vector<2x128xf32>
    %227 = arith.addf %225, %226 : vector<2x128xf32>
    %228 = vector.extract_strided_slice %6 {offsets = [8, 128], sizes = [2, 128], strides = [1, 1]} : vector<16x256xf32> to vector<2x128xf32>
    %229 = vector.extract_strided_slice %224 {offsets = [0, 128], sizes = [2, 128], strides = [1, 1]} : vector<2x256xf32> to vector<2x128xf32>
    %230 = arith.addf %228, %229 : vector<2x128xf32>
    %231 = vector.extract_strided_slice %227 {offsets = [0, 0], sizes = [2, 32], strides = [1, 1]} : vector<2x128xf32> to vector<2x32xf32>
    %cst_68 = arith.constant 0.000000e+00 : f32
    %232 = vector.broadcast %cst_68 : f32 to vector<2x32xf32>
    %233 = arith.subf %232, %231 : vector<2x32xf32>
    %234 = math.exp %233 : vector<2x32xf32>
    %cst_69 = arith.constant 1.000000e+00 : f32
    %235 = vector.broadcast %cst_69 : f32 to vector<2x32xf32>
    %236 = arith.addf %235, %234 : vector<2x32xf32>
    %cst_70 = arith.constant 1.000000e+00 : f32
    %237 = vector.broadcast %cst_70 : f32 to vector<2x32xf32>
    %238 = arith.divf %237, %236 : vector<2x32xf32>
    %239 = vector.extract_strided_slice %227 {offsets = [0, 32], sizes = [2, 32], strides = [1, 1]} : vector<2x128xf32> to vector<2x32xf32>
    %cst_71 = arith.constant 0.000000e+00 : f32
    %240 = vector.broadcast %cst_71 : f32 to vector<2x32xf32>
    %241 = arith.subf %240, %239 : vector<2x32xf32>
    %242 = math.exp %241 : vector<2x32xf32>
    %cst_72 = arith.constant 1.000000e+00 : f32
    %243 = vector.broadcast %cst_72 : f32 to vector<2x32xf32>
    %244 = arith.addf %243, %242 : vector<2x32xf32>
    %cst_73 = arith.constant 1.000000e+00 : f32
    %245 = vector.broadcast %cst_73 : f32 to vector<2x32xf32>
    %246 = arith.divf %245, %244 : vector<2x32xf32>
    %247 = vector.extract_strided_slice %227 {offsets = [0, 64], sizes = [2, 32], strides = [1, 1]} : vector<2x128xf32> to vector<2x32xf32>
    %248 = math.tanh %247 : vector<2x32xf32>
    %249 = vector.extract_strided_slice %227 {offsets = [0, 96], sizes = [2, 32], strides = [1, 1]} : vector<2x128xf32> to vector<2x32xf32>
    %cst_74 = arith.constant 0.000000e+00 : f32
    %250 = vector.broadcast %cst_74 : f32 to vector<2x32xf32>
    %251 = arith.subf %250, %249 : vector<2x32xf32>
    %252 = math.exp %251 : vector<2x32xf32>
    %cst_75 = arith.constant 1.000000e+00 : f32
    %253 = vector.broadcast %cst_75 : f32 to vector<2x32xf32>
    %254 = arith.addf %253, %252 : vector<2x32xf32>
    %cst_76 = arith.constant 1.000000e+00 : f32
    %255 = vector.broadcast %cst_76 : f32 to vector<2x32xf32>
    %256 = arith.divf %255, %254 : vector<2x32xf32>
    %257 = arith.mulf %246, %188 : vector<2x32xf32>
    %258 = arith.mulf %238, %248 : vector<2x32xf32>
    %259 = arith.addf %257, %258 : vector<2x32xf32>
    %260 = math.tanh %259 : vector<2x32xf32>
    %261 = arith.mulf %256, %260 : vector<2x32xf32>
    %262 = vector.extract_strided_slice %230 {offsets = [0, 0], sizes = [2, 32], strides = [1, 1]} : vector<2x128xf32> to vector<2x32xf32>
    %cst_77 = arith.constant 0.000000e+00 : f32
    %263 = vector.broadcast %cst_77 : f32 to vector<2x32xf32>
    %264 = arith.subf %263, %262 : vector<2x32xf32>
    %265 = math.exp %264 : vector<2x32xf32>
    %cst_78 = arith.constant 1.000000e+00 : f32
    %266 = vector.broadcast %cst_78 : f32 to vector<2x32xf32>
    %267 = arith.addf %266, %265 : vector<2x32xf32>
    %cst_79 = arith.constant 1.000000e+00 : f32
    %268 = vector.broadcast %cst_79 : f32 to vector<2x32xf32>
    %269 = arith.divf %268, %267 : vector<2x32xf32>
    %270 = vector.extract_strided_slice %230 {offsets = [0, 32], sizes = [2, 32], strides = [1, 1]} : vector<2x128xf32> to vector<2x32xf32>
    %cst_80 = arith.constant 0.000000e+00 : f32
    %271 = vector.broadcast %cst_80 : f32 to vector<2x32xf32>
    %272 = arith.subf %271, %270 : vector<2x32xf32>
    %273 = math.exp %272 : vector<2x32xf32>
    %cst_81 = arith.constant 1.000000e+00 : f32
    %274 = vector.broadcast %cst_81 : f32 to vector<2x32xf32>
    %275 = arith.addf %274, %273 : vector<2x32xf32>
    %cst_82 = arith.constant 1.000000e+00 : f32
    %276 = vector.broadcast %cst_82 : f32 to vector<2x32xf32>
    %277 = arith.divf %276, %275 : vector<2x32xf32>
    %278 = vector.extract_strided_slice %230 {offsets = [0, 64], sizes = [2, 32], strides = [1, 1]} : vector<2x128xf32> to vector<2x32xf32>
    %279 = math.tanh %278 : vector<2x32xf32>
    %280 = vector.extract_strided_slice %230 {offsets = [0, 96], sizes = [2, 32], strides = [1, 1]} : vector<2x128xf32> to vector<2x32xf32>
    %cst_83 = arith.constant 0.000000e+00 : f32
    %281 = vector.broadcast %cst_83 : f32 to vector<2x32xf32>
    %282 = arith.subf %281, %280 : vector<2x32xf32>
    %283 = math.exp %282 : vector<2x32xf32>
    %cst_84 = arith.constant 1.000000e+00 : f32
    %284 = vector.broadcast %cst_84 : f32 to vector<2x32xf32>
    %285 = arith.addf %284, %283 : vector<2x32xf32>
    %cst_85 = arith.constant 1.000000e+00 : f32
    %286 = vector.broadcast %cst_85 : f32 to vector<2x32xf32>
    %287 = arith.divf %286, %285 : vector<2x32xf32>
    %288 = arith.mulf %277, %219 : vector<2x32xf32>
    %289 = arith.mulf %269, %279 : vector<2x32xf32>
    %290 = arith.addf %288, %289 : vector<2x32xf32>
    %291 = math.tanh %290 : vector<2x32xf32>
    %292 = arith.mulf %287, %291 : vector<2x32xf32>
    %293 = tpu.concatenate %261, %292 in 1 : vector<2x32xf32>, vector<2x32xf32> -> vector<2x64xf32>
    %294 = arith.truncf %293 : vector<2x64xf32> to vector<2x64xbf16>
    %cst_86 = arith.constant dense<0.000000e+00> : vector<2x256xf32>
    %295 = tpu.matmul %294, %2, %cst_86 {dimension_numbers = #tpu.dot_dimension_numbers<[1], [0], [0], [1], [0, 0, 1, 1], [], []>} : vector<2x64xbf16>, vector<64x256xbf16>, vector<2x256xf32> -> vector<2x256xf32>
    %296 = vector.extract_strided_slice %6 {offsets = [8, 0], sizes = [2, 128], strides = [1, 1]} : vector<16x256xf32> to vector<2x128xf32>
    %297 = vector.extract_strided_slice %295 {offsets = [0, 0], sizes = [2, 128], strides = [1, 1]} : vector<2x256xf32> to vector<2x128xf32>
    %298 = arith.addf %296, %297 : vector<2x128xf32>
    %299 = vector.extract_strided_slice %6 {offsets = [6, 128], sizes = [2, 128], strides = [1, 1]} : vector<16x256xf32> to vector<2x128xf32>
    %300 = vector.extract_strided_slice %295 {offsets = [0, 128], sizes = [2, 128], strides = [1, 1]} : vector<2x256xf32> to vector<2x128xf32>
    %301 = arith.addf %299, %300 : vector<2x128xf32>
    %302 = vector.extract_strided_slice %298 {offsets = [0, 0], sizes = [2, 32], strides = [1, 1]} : vector<2x128xf32> to vector<2x32xf32>
    %cst_87 = arith.constant 0.000000e+00 : f32
    %303 = vector.broadcast %cst_87 : f32 to vector<2x32xf32>
    %304 = arith.subf %303, %302 : vector<2x32xf32>
    %305 = math.exp %304 : vector<2x32xf32>
    %cst_88 = arith.constant 1.000000e+00 : f32
    %306 = vector.broadcast %cst_88 : f32 to vector<2x32xf32>
    %307 = arith.addf %306, %305 : vector<2x32xf32>
    %cst_89 = arith.constant 1.000000e+00 : f32
    %308 = vector.broadcast %cst_89 : f32 to vector<2x32xf32>
    %309 = arith.divf %308, %307 : vector<2x32xf32>
    %310 = vector.extract_strided_slice %298 {offsets = [0, 32], sizes = [2, 32], strides = [1, 1]} : vector<2x128xf32> to vector<2x32xf32>
    %cst_90 = arith.constant 0.000000e+00 : f32
    %311 = vector.broadcast %cst_90 : f32 to vector<2x32xf32>
    %312 = arith.subf %311, %310 : vector<2x32xf32>
    %313 = math.exp %312 : vector<2x32xf32>
    %cst_91 = arith.constant 1.000000e+00 : f32
    %314 = vector.broadcast %cst_91 : f32 to vector<2x32xf32>
    %315 = arith.addf %314, %313 : vector<2x32xf32>
    %cst_92 = arith.constant 1.000000e+00 : f32
    %316 = vector.broadcast %cst_92 : f32 to vector<2x32xf32>
    %317 = arith.divf %316, %315 : vector<2x32xf32>
    %318 = vector.extract_strided_slice %298 {offsets = [0, 64], sizes = [2, 32], strides = [1, 1]} : vector<2x128xf32> to vector<2x32xf32>
    %319 = math.tanh %318 : vector<2x32xf32>
    %320 = vector.extract_strided_slice %298 {offsets = [0, 96], sizes = [2, 32], strides = [1, 1]} : vector<2x128xf32> to vector<2x32xf32>
    %cst_93 = arith.constant 0.000000e+00 : f32
    %321 = vector.broadcast %cst_93 : f32 to vector<2x32xf32>
    %322 = arith.subf %321, %320 : vector<2x32xf32>
    %323 = math.exp %322 : vector<2x32xf32>
    %cst_94 = arith.constant 1.000000e+00 : f32
    %324 = vector.broadcast %cst_94 : f32 to vector<2x32xf32>
    %325 = arith.addf %324, %323 : vector<2x32xf32>
    %cst_95 = arith.constant 1.000000e+00 : f32
    %326 = vector.broadcast %cst_95 : f32 to vector<2x32xf32>
    %327 = arith.divf %326, %325 : vector<2x32xf32>
    %328 = arith.mulf %317, %259 : vector<2x32xf32>
    %329 = arith.mulf %309, %319 : vector<2x32xf32>
    %330 = arith.addf %328, %329 : vector<2x32xf32>
    %331 = math.tanh %330 : vector<2x32xf32>
    %332 = arith.mulf %327, %331 : vector<2x32xf32>
    %333 = vector.extract_strided_slice %301 {offsets = [0, 0], sizes = [2, 32], strides = [1, 1]} : vector<2x128xf32> to vector<2x32xf32>
    %cst_96 = arith.constant 0.000000e+00 : f32
    %334 = vector.broadcast %cst_96 : f32 to vector<2x32xf32>
    %335 = arith.subf %334, %333 : vector<2x32xf32>
    %336 = math.exp %335 : vector<2x32xf32>
    %cst_97 = arith.constant 1.000000e+00 : f32
    %337 = vector.broadcast %cst_97 : f32 to vector<2x32xf32>
    %338 = arith.addf %337, %336 : vector<2x32xf32>
    %cst_98 = arith.constant 1.000000e+00 : f32
    %339 = vector.broadcast %cst_98 : f32 to vector<2x32xf32>
    %340 = arith.divf %339, %338 : vector<2x32xf32>
    %341 = vector.extract_strided_slice %301 {offsets = [0, 32], sizes = [2, 32], strides = [1, 1]} : vector<2x128xf32> to vector<2x32xf32>
    %cst_99 = arith.constant 0.000000e+00 : f32
    %342 = vector.broadcast %cst_99 : f32 to vector<2x32xf32>
    %343 = arith.subf %342, %341 : vector<2x32xf32>
    %344 = math.exp %343 : vector<2x32xf32>
    %cst_100 = arith.constant 1.000000e+00 : f32
    %345 = vector.broadcast %cst_100 : f32 to vector<2x32xf32>
    %346 = arith.addf %345, %344 : vector<2x32xf32>
    %cst_101 = arith.constant 1.000000e+00 : f32
    %347 = vector.broadcast %cst_101 : f32 to vector<2x32xf32>
    %348 = arith.divf %347, %346 : vector<2x32xf32>
    %349 = vector.extract_strided_slice %301 {offsets = [0, 64], sizes = [2, 32], strides = [1, 1]} : vector<2x128xf32> to vector<2x32xf32>
    %350 = math.tanh %349 : vector<2x32xf32>
    %351 = vector.extract_strided_slice %301 {offsets = [0, 96], sizes = [2, 32], strides = [1, 1]} : vector<2x128xf32> to vector<2x32xf32>
    %cst_102 = arith.constant 0.000000e+00 : f32
    %352 = vector.broadcast %cst_102 : f32 to vector<2x32xf32>
    %353 = arith.subf %352, %351 : vector<2x32xf32>
    %354 = math.exp %353 : vector<2x32xf32>
    %cst_103 = arith.constant 1.000000e+00 : f32
    %355 = vector.broadcast %cst_103 : f32 to vector<2x32xf32>
    %356 = arith.addf %355, %354 : vector<2x32xf32>
    %cst_104 = arith.constant 1.000000e+00 : f32
    %357 = vector.broadcast %cst_104 : f32 to vector<2x32xf32>
    %358 = arith.divf %357, %356 : vector<2x32xf32>
    %359 = arith.mulf %348, %290 : vector<2x32xf32>
    %360 = arith.mulf %340, %350 : vector<2x32xf32>
    %361 = arith.addf %359, %360 : vector<2x32xf32>
    %362 = math.tanh %361 : vector<2x32xf32>
    %363 = arith.mulf %358, %362 : vector<2x32xf32>
    %364 = tpu.concatenate %332, %363 in 1 : vector<2x32xf32>, vector<2x32xf32> -> vector<2x64xf32>
    %365 = arith.truncf %364 : vector<2x64xf32> to vector<2x64xbf16>
    %cst_105 = arith.constant dense<0.000000e+00> : vector<2x256xf32>
    %366 = tpu.matmul %365, %2, %cst_105 {dimension_numbers = #tpu.dot_dimension_numbers<[1], [0], [0], [1], [0, 0, 1, 1], [], []>} : vector<2x64xbf16>, vector<64x256xbf16>, vector<2x256xf32> -> vector<2x256xf32>
    %367 = vector.extract_strided_slice %6 {offsets = [10, 0], sizes = [2, 128], strides = [1, 1]} : vector<16x256xf32> to vector<2x128xf32>
    %368 = vector.extract_strided_slice %366 {offsets = [0, 0], sizes = [2, 128], strides = [1, 1]} : vector<2x256xf32> to vector<2x128xf32>
    %369 = arith.addf %367, %368 : vector<2x128xf32>
    %370 = vector.extract_strided_slice %6 {offsets = [4, 128], sizes = [2, 128], strides = [1, 1]} : vector<16x256xf32> to vector<2x128xf32>
    %371 = vector.extract_strided_slice %366 {offsets = [0, 128], sizes = [2, 128], strides = [1, 1]} : vector<2x256xf32> to vector<2x128xf32>
    %372 = arith.addf %370, %371 : vector<2x128xf32>
    %373 = vector.extract_strided_slice %369 {offsets = [0, 0], sizes = [2, 32], strides = [1, 1]} : vector<2x128xf32> to vector<2x32xf32>
    %cst_106 = arith.constant 0.000000e+00 : f32
    %374 = vector.broadcast %cst_106 : f32 to vector<2x32xf32>
    %375 = arith.subf %374, %373 : vector<2x32xf32>
    %376 = math.exp %375 : vector<2x32xf32>
    %cst_107 = arith.constant 1.000000e+00 : f32
    %377 = vector.broadcast %cst_107 : f32 to vector<2x32xf32>
    %378 = arith.addf %377, %376 : vector<2x32xf32>
    %cst_108 = arith.constant 1.000000e+00 : f32
    %379 = vector.broadcast %cst_108 : f32 to vector<2x32xf32>
    %380 = arith.divf %379, %378 : vector<2x32xf32>
    %381 = vector.extract_strided_slice %369 {offsets = [0, 32], sizes = [2, 32], strides = [1, 1]} : vector<2x128xf32> to vector<2x32xf32>
    %cst_109 = arith.constant 0.000000e+00 : f32
    %382 = vector.broadcast %cst_109 : f32 to vector<2x32xf32>
    %383 = arith.subf %382, %381 : vector<2x32xf32>
    %384 = math.exp %383 : vector<2x32xf32>
    %cst_110 = arith.constant 1.000000e+00 : f32
    %385 = vector.broadcast %cst_110 : f32 to vector<2x32xf32>
    %386 = arith.addf %385, %384 : vector<2x32xf32>
    %cst_111 = arith.constant 1.000000e+00 : f32
    %387 = vector.broadcast %cst_111 : f32 to vector<2x32xf32>
    %388 = arith.divf %387, %386 : vector<2x32xf32>
    %389 = vector.extract_strided_slice %369 {offsets = [0, 64], sizes = [2, 32], strides = [1, 1]} : vector<2x128xf32> to vector<2x32xf32>
    %390 = math.tanh %389 : vector<2x32xf32>
    %391 = vector.extract_strided_slice %369 {offsets = [0, 96], sizes = [2, 32], strides = [1, 1]} : vector<2x128xf32> to vector<2x32xf32>
    %cst_112 = arith.constant 0.000000e+00 : f32
    %392 = vector.broadcast %cst_112 : f32 to vector<2x32xf32>
    %393 = arith.subf %392, %391 : vector<2x32xf32>
    %394 = math.exp %393 : vector<2x32xf32>
    %cst_113 = arith.constant 1.000000e+00 : f32
    %395 = vector.broadcast %cst_113 : f32 to vector<2x32xf32>
    %396 = arith.addf %395, %394 : vector<2x32xf32>
    %cst_114 = arith.constant 1.000000e+00 : f32
    %397 = vector.broadcast %cst_114 : f32 to vector<2x32xf32>
    %398 = arith.divf %397, %396 : vector<2x32xf32>
    %399 = arith.mulf %388, %330 : vector<2x32xf32>
    %400 = arith.mulf %380, %390 : vector<2x32xf32>
    %401 = arith.addf %399, %400 : vector<2x32xf32>
    %402 = math.tanh %401 : vector<2x32xf32>
    %403 = arith.mulf %398, %402 : vector<2x32xf32>
    %404 = vector.extract_strided_slice %372 {offsets = [0, 0], sizes = [2, 32], strides = [1, 1]} : vector<2x128xf32> to vector<2x32xf32>
    %cst_115 = arith.constant 0.000000e+00 : f32
    %405 = vector.broadcast %cst_115 : f32 to vector<2x32xf32>
    %406 = arith.subf %405, %404 : vector<2x32xf32>
    %407 = math.exp %406 : vector<2x32xf32>
    %cst_116 = arith.constant 1.000000e+00 : f32
    %408 = vector.broadcast %cst_116 : f32 to vector<2x32xf32>
    %409 = arith.addf %408, %407 : vector<2x32xf32>
    %cst_117 = arith.constant 1.000000e+00 : f32
    %410 = vector.broadcast %cst_117 : f32 to vector<2x32xf32>
    %411 = arith.divf %410, %409 : vector<2x32xf32>
    %412 = vector.extract_strided_slice %372 {offsets = [0, 32], sizes = [2, 32], strides = [1, 1]} : vector<2x128xf32> to vector<2x32xf32>
    %cst_118 = arith.constant 0.000000e+00 : f32
    %413 = vector.broadcast %cst_118 : f32 to vector<2x32xf32>
    %414 = arith.subf %413, %412 : vector<2x32xf32>
    %415 = math.exp %414 : vector<2x32xf32>
    %cst_119 = arith.constant 1.000000e+00 : f32
    %416 = vector.broadcast %cst_119 : f32 to vector<2x32xf32>
    %417 = arith.addf %416, %415 : vector<2x32xf32>
    %cst_120 = arith.constant 1.000000e+00 : f32
    %418 = vector.broadcast %cst_120 : f32 to vector<2x32xf32>
    %419 = arith.divf %418, %417 : vector<2x32xf32>
    %420 = vector.extract_strided_slice %372 {offsets = [0, 64], sizes = [2, 32], strides = [1, 1]} : vector<2x128xf32> to vector<2x32xf32>
    %421 = math.tanh %420 : vector<2x32xf32>
    %422 = vector.extract_strided_slice %372 {offsets = [0, 96], sizes = [2, 32], strides = [1, 1]} : vector<2x128xf32> to vector<2x32xf32>
    %cst_121 = arith.constant 0.000000e+00 : f32
    %423 = vector.broadcast %cst_121 : f32 to vector<2x32xf32>
    %424 = arith.subf %423, %422 : vector<2x32xf32>
    %425 = math.exp %424 : vector<2x32xf32>
    %cst_122 = arith.constant 1.000000e+00 : f32
    %426 = vector.broadcast %cst_122 : f32 to vector<2x32xf32>
    %427 = arith.addf %426, %425 : vector<2x32xf32>
    %cst_123 = arith.constant 1.000000e+00 : f32
    %428 = vector.broadcast %cst_123 : f32 to vector<2x32xf32>
    %429 = arith.divf %428, %427 : vector<2x32xf32>
    %430 = arith.mulf %419, %361 : vector<2x32xf32>
    %431 = arith.mulf %411, %421 : vector<2x32xf32>
    %432 = arith.addf %430, %431 : vector<2x32xf32>
    %433 = math.tanh %432 : vector<2x32xf32>
    %434 = arith.mulf %429, %433 : vector<2x32xf32>
    %435 = tpu.concatenate %403, %434 in 1 : vector<2x32xf32>, vector<2x32xf32> -> vector<2x64xf32>
    %436 = arith.truncf %435 : vector<2x64xf32> to vector<2x64xbf16>
    %cst_124 = arith.constant dense<0.000000e+00> : vector<2x256xf32>
    %437 = tpu.matmul %436, %2, %cst_124 {dimension_numbers = #tpu.dot_dimension_numbers<[1], [0], [0], [1], [0, 0, 1, 1], [], []>} : vector<2x64xbf16>, vector<64x256xbf16>, vector<2x256xf32> -> vector<2x256xf32>
    %438 = vector.extract_strided_slice %6 {offsets = [12, 0], sizes = [2, 128], strides = [1, 1]} : vector<16x256xf32> to vector<2x128xf32>
    %439 = vector.extract_strided_slice %437 {offsets = [0, 0], sizes = [2, 128], strides = [1, 1]} : vector<2x256xf32> to vector<2x128xf32>
    %440 = arith.addf %438, %439 : vector<2x128xf32>
    %441 = vector.extract_strided_slice %6 {offsets = [2, 128], sizes = [2, 128], strides = [1, 1]} : vector<16x256xf32> to vector<2x128xf32>
    %442 = vector.extract_strided_slice %437 {offsets = [0, 128], sizes = [2, 128], strides = [1, 1]} : vector<2x256xf32> to vector<2x128xf32>
    %443 = arith.addf %441, %442 : vector<2x128xf32>
    %444 = vector.extract_strided_slice %440 {offsets = [0, 0], sizes = [2, 32], strides = [1, 1]} : vector<2x128xf32> to vector<2x32xf32>
    %cst_125 = arith.constant 0.000000e+00 : f32
    %445 = vector.broadcast %cst_125 : f32 to vector<2x32xf32>
    %446 = arith.subf %445, %444 : vector<2x32xf32>
    %447 = math.exp %446 : vector<2x32xf32>
    %cst_126 = arith.constant 1.000000e+00 : f32
    %448 = vector.broadcast %cst_126 : f32 to vector<2x32xf32>
    %449 = arith.addf %448, %447 : vector<2x32xf32>
    %cst_127 = arith.constant 1.000000e+00 : f32
    %450 = vector.broadcast %cst_127 : f32 to vector<2x32xf32>
    %451 = arith.divf %450, %449 : vector<2x32xf32>
    %452 = vector.extract_strided_slice %440 {offsets = [0, 32], sizes = [2, 32], strides = [1, 1]} : vector<2x128xf32> to vector<2x32xf32>
    %cst_128 = arith.constant 0.000000e+00 : f32
    %453 = vector.broadcast %cst_128 : f32 to vector<2x32xf32>
    %454 = arith.subf %453, %452 : vector<2x32xf32>
    %455 = math.exp %454 : vector<2x32xf32>
    %cst_129 = arith.constant 1.000000e+00 : f32
    %456 = vector.broadcast %cst_129 : f32 to vector<2x32xf32>
    %457 = arith.addf %456, %455 : vector<2x32xf32>
    %cst_130 = arith.constant 1.000000e+00 : f32
    %458 = vector.broadcast %cst_130 : f32 to vector<2x32xf32>
    %459 = arith.divf %458, %457 : vector<2x32xf32>
    %460 = vector.extract_strided_slice %440 {offsets = [0, 64], sizes = [2, 32], strides = [1, 1]} : vector<2x128xf32> to vector<2x32xf32>
    %461 = math.tanh %460 : vector<2x32xf32>
    %462 = vector.extract_strided_slice %440 {offsets = [0, 96], sizes = [2, 32], strides = [1, 1]} : vector<2x128xf32> to vector<2x32xf32>
    %cst_131 = arith.constant 0.000000e+00 : f32
    %463 = vector.broadcast %cst_131 : f32 to vector<2x32xf32>
    %464 = arith.subf %463, %462 : vector<2x32xf32>
    %465 = math.exp %464 : vector<2x32xf32>
    %cst_132 = arith.constant 1.000000e+00 : f32
    %466 = vector.broadcast %cst_132 : f32 to vector<2x32xf32>
    %467 = arith.addf %466, %465 : vector<2x32xf32>
    %cst_133 = arith.constant 1.000000e+00 : f32
    %468 = vector.broadcast %cst_133 : f32 to vector<2x32xf32>
    %469 = arith.divf %468, %467 : vector<2x32xf32>
    %470 = arith.mulf %459, %401 : vector<2x32xf32>
    %471 = arith.mulf %451, %461 : vector<2x32xf32>
    %472 = arith.addf %470, %471 : vector<2x32xf32>
    %473 = math.tanh %472 : vector<2x32xf32>
    %474 = arith.mulf %469, %473 : vector<2x32xf32>
    %475 = vector.extract_strided_slice %443 {offsets = [0, 0], sizes = [2, 32], strides = [1, 1]} : vector<2x128xf32> to vector<2x32xf32>
    %cst_134 = arith.constant 0.000000e+00 : f32
    %476 = vector.broadcast %cst_134 : f32 to vector<2x32xf32>
    %477 = arith.subf %476, %475 : vector<2x32xf32>
    %478 = math.exp %477 : vector<2x32xf32>
    %cst_135 = arith.constant 1.000000e+00 : f32
    %479 = vector.broadcast %cst_135 : f32 to vector<2x32xf32>
    %480 = arith.addf %479, %478 : vector<2x32xf32>
    %cst_136 = arith.constant 1.000000e+00 : f32
    %481 = vector.broadcast %cst_136 : f32 to vector<2x32xf32>
    %482 = arith.divf %481, %480 : vector<2x32xf32>
    %483 = vector.extract_strided_slice %443 {offsets = [0, 32], sizes = [2, 32], strides = [1, 1]} : vector<2x128xf32> to vector<2x32xf32>
    %cst_137 = arith.constant 0.000000e+00 : f32
    %484 = vector.broadcast %cst_137 : f32 to vector<2x32xf32>
    %485 = arith.subf %484, %483 : vector<2x32xf32>
    %486 = math.exp %485 : vector<2x32xf32>
    %cst_138 = arith.constant 1.000000e+00 : f32
    %487 = vector.broadcast %cst_138 : f32 to vector<2x32xf32>
    %488 = arith.addf %487, %486 : vector<2x32xf32>
    %cst_139 = arith.constant 1.000000e+00 : f32
    %489 = vector.broadcast %cst_139 : f32 to vector<2x32xf32>
    %490 = arith.divf %489, %488 : vector<2x32xf32>
    %491 = vector.extract_strided_slice %443 {offsets = [0, 64], sizes = [2, 32], strides = [1, 1]} : vector<2x128xf32> to vector<2x32xf32>
    %492 = math.tanh %491 : vector<2x32xf32>
    %493 = vector.extract_strided_slice %443 {offsets = [0, 96], sizes = [2, 32], strides = [1, 1]} : vector<2x128xf32> to vector<2x32xf32>
    %cst_140 = arith.constant 0.000000e+00 : f32
    %494 = vector.broadcast %cst_140 : f32 to vector<2x32xf32>
    %495 = arith.subf %494, %493 : vector<2x32xf32>
    %496 = math.exp %495 : vector<2x32xf32>
    %cst_141 = arith.constant 1.000000e+00 : f32
    %497 = vector.broadcast %cst_141 : f32 to vector<2x32xf32>
    %498 = arith.addf %497, %496 : vector<2x32xf32>
    %cst_142 = arith.constant 1.000000e+00 : f32
    %499 = vector.broadcast %cst_142 : f32 to vector<2x32xf32>
    %500 = arith.divf %499, %498 : vector<2x32xf32>
    %501 = arith.mulf %490, %432 : vector<2x32xf32>
    %502 = arith.mulf %482, %492 : vector<2x32xf32>
    %503 = arith.addf %501, %502 : vector<2x32xf32>
    %504 = math.tanh %503 : vector<2x32xf32>
    %505 = arith.mulf %500, %504 : vector<2x32xf32>
    %506 = tpu.concatenate %474, %505 in 1 : vector<2x32xf32>, vector<2x32xf32> -> vector<2x64xf32>
    %507 = arith.truncf %506 : vector<2x64xf32> to vector<2x64xbf16>
    %cst_143 = arith.constant dense<0.000000e+00> : vector<2x256xf32>
    %508 = tpu.matmul %507, %2, %cst_143 {dimension_numbers = #tpu.dot_dimension_numbers<[1], [0], [0], [1], [0, 0, 1, 1], [], []>} : vector<2x64xbf16>, vector<64x256xbf16>, vector<2x256xf32> -> vector<2x256xf32>
    %509 = vector.extract_strided_slice %6 {offsets = [14, 0], sizes = [2, 128], strides = [1, 1]} : vector<16x256xf32> to vector<2x128xf32>
    %510 = vector.extract_strided_slice %508 {offsets = [0, 0], sizes = [2, 128], strides = [1, 1]} : vector<2x256xf32> to vector<2x128xf32>
    %511 = arith.addf %509, %510 : vector<2x128xf32>
    %512 = vector.extract_strided_slice %6 {offsets = [0, 128], sizes = [2, 128], strides = [1, 1]} : vector<16x256xf32> to vector<2x128xf32>
    %513 = vector.extract_strided_slice %508 {offsets = [0, 128], sizes = [2, 128], strides = [1, 1]} : vector<2x256xf32> to vector<2x128xf32>
    %514 = arith.addf %512, %513 : vector<2x128xf32>
    %515 = vector.extract_strided_slice %511 {offsets = [0, 0], sizes = [2, 32], strides = [1, 1]} : vector<2x128xf32> to vector<2x32xf32>
    %cst_144 = arith.constant 0.000000e+00 : f32
    %516 = vector.broadcast %cst_144 : f32 to vector<2x32xf32>
    %517 = arith.subf %516, %515 : vector<2x32xf32>
    %518 = math.exp %517 : vector<2x32xf32>
    %cst_145 = arith.constant 1.000000e+00 : f32
    %519 = vector.broadcast %cst_145 : f32 to vector<2x32xf32>
    %520 = arith.addf %519, %518 : vector<2x32xf32>
    %cst_146 = arith.constant 1.000000e+00 : f32
    %521 = vector.broadcast %cst_146 : f32 to vector<2x32xf32>
    %522 = arith.divf %521, %520 : vector<2x32xf32>
    %523 = vector.extract_strided_slice %511 {offsets = [0, 32], sizes = [2, 32], strides = [1, 1]} : vector<2x128xf32> to vector<2x32xf32>
    %cst_147 = arith.constant 0.000000e+00 : f32
    %524 = vector.broadcast %cst_147 : f32 to vector<2x32xf32>
    %525 = arith.subf %524, %523 : vector<2x32xf32>
    %526 = math.exp %525 : vector<2x32xf32>
    %cst_148 = arith.constant 1.000000e+00 : f32
    %527 = vector.broadcast %cst_148 : f32 to vector<2x32xf32>
    %528 = arith.addf %527, %526 : vector<2x32xf32>
    %cst_149 = arith.constant 1.000000e+00 : f32
    %529 = vector.broadcast %cst_149 : f32 to vector<2x32xf32>
    %530 = arith.divf %529, %528 : vector<2x32xf32>
    %531 = vector.extract_strided_slice %511 {offsets = [0, 64], sizes = [2, 32], strides = [1, 1]} : vector<2x128xf32> to vector<2x32xf32>
    %532 = math.tanh %531 : vector<2x32xf32>
    %533 = vector.extract_strided_slice %511 {offsets = [0, 96], sizes = [2, 32], strides = [1, 1]} : vector<2x128xf32> to vector<2x32xf32>
    %cst_150 = arith.constant 0.000000e+00 : f32
    %534 = vector.broadcast %cst_150 : f32 to vector<2x32xf32>
    %535 = arith.subf %534, %533 : vector<2x32xf32>
    %536 = math.exp %535 : vector<2x32xf32>
    %cst_151 = arith.constant 1.000000e+00 : f32
    %537 = vector.broadcast %cst_151 : f32 to vector<2x32xf32>
    %538 = arith.addf %537, %536 : vector<2x32xf32>
    %cst_152 = arith.constant 1.000000e+00 : f32
    %539 = vector.broadcast %cst_152 : f32 to vector<2x32xf32>
    %540 = arith.divf %539, %538 : vector<2x32xf32>
    %541 = arith.mulf %530, %472 : vector<2x32xf32>
    %542 = arith.mulf %522, %532 : vector<2x32xf32>
    %543 = arith.addf %541, %542 : vector<2x32xf32>
    %544 = math.tanh %543 : vector<2x32xf32>
    %545 = arith.mulf %540, %544 : vector<2x32xf32>
    %546 = vector.extract_strided_slice %514 {offsets = [0, 0], sizes = [2, 32], strides = [1, 1]} : vector<2x128xf32> to vector<2x32xf32>
    %cst_153 = arith.constant 0.000000e+00 : f32
    %547 = vector.broadcast %cst_153 : f32 to vector<2x32xf32>
    %548 = arith.subf %547, %546 : vector<2x32xf32>
    %549 = math.exp %548 : vector<2x32xf32>
    %cst_154 = arith.constant 1.000000e+00 : f32
    %550 = vector.broadcast %cst_154 : f32 to vector<2x32xf32>
    %551 = arith.addf %550, %549 : vector<2x32xf32>
    %cst_155 = arith.constant 1.000000e+00 : f32
    %552 = vector.broadcast %cst_155 : f32 to vector<2x32xf32>
    %553 = arith.divf %552, %551 : vector<2x32xf32>
    %554 = vector.extract_strided_slice %514 {offsets = [0, 32], sizes = [2, 32], strides = [1, 1]} : vector<2x128xf32> to vector<2x32xf32>
    %cst_156 = arith.constant 0.000000e+00 : f32
    %555 = vector.broadcast %cst_156 : f32 to vector<2x32xf32>
    %556 = arith.subf %555, %554 : vector<2x32xf32>
    %557 = math.exp %556 : vector<2x32xf32>
    %cst_157 = arith.constant 1.000000e+00 : f32
    %558 = vector.broadcast %cst_157 : f32 to vector<2x32xf32>
    %559 = arith.addf %558, %557 : vector<2x32xf32>
    %cst_158 = arith.constant 1.000000e+00 : f32
    %560 = vector.broadcast %cst_158 : f32 to vector<2x32xf32>
    %561 = arith.divf %560, %559 : vector<2x32xf32>
    %562 = vector.extract_strided_slice %514 {offsets = [0, 64], sizes = [2, 32], strides = [1, 1]} : vector<2x128xf32> to vector<2x32xf32>
    %563 = math.tanh %562 : vector<2x32xf32>
    %564 = vector.extract_strided_slice %514 {offsets = [0, 96], sizes = [2, 32], strides = [1, 1]} : vector<2x128xf32> to vector<2x32xf32>
    %cst_159 = arith.constant 0.000000e+00 : f32
    %565 = vector.broadcast %cst_159 : f32 to vector<2x32xf32>
    %566 = arith.subf %565, %564 : vector<2x32xf32>
    %567 = math.exp %566 : vector<2x32xf32>
    %cst_160 = arith.constant 1.000000e+00 : f32
    %568 = vector.broadcast %cst_160 : f32 to vector<2x32xf32>
    %569 = arith.addf %568, %567 : vector<2x32xf32>
    %cst_161 = arith.constant 1.000000e+00 : f32
    %570 = vector.broadcast %cst_161 : f32 to vector<2x32xf32>
    %571 = arith.divf %570, %569 : vector<2x32xf32>
    %572 = arith.mulf %561, %503 : vector<2x32xf32>
    %573 = arith.mulf %553, %563 : vector<2x32xf32>
    %574 = arith.addf %572, %573 : vector<2x32xf32>
    %575 = math.tanh %574 : vector<2x32xf32>
    %576 = arith.mulf %571, %575 : vector<2x32xf32>
    %577 = tpu.concatenate %545, %576 in 1 : vector<2x32xf32>, vector<2x32xf32> -> vector<2x64xf32>
    %578 = tpu.concatenate %48, %576 in 1 : vector<2x32xf32>, vector<2x32xf32> -> vector<2x64xf32>
    %579 = tpu.concatenate %119, %505 in 1 : vector<2x32xf32>, vector<2x32xf32> -> vector<2x64xf32>
    %580 = tpu.concatenate %190, %434 in 1 : vector<2x32xf32>, vector<2x32xf32> -> vector<2x64xf32>
    %581 = tpu.concatenate %261, %363 in 1 : vector<2x32xf32>, vector<2x32xf32> -> vector<2x64xf32>
    %582 = tpu.concatenate %332, %292 in 1 : vector<2x32xf32>, vector<2x32xf32> -> vector<2x64xf32>
    %583 = tpu.concatenate %403, %221 in 1 : vector<2x32xf32>, vector<2x32xf32> -> vector<2x64xf32>
    %584 = tpu.concatenate %474, %150 in 1 : vector<2x32xf32>, vector<2x32xf32> -> vector<2x64xf32>
    %585 = tpu.concatenate %545, %79 in 1 : vector<2x32xf32>, vector<2x32xf32> -> vector<2x64xf32>
    %586 = tpu.concatenate %578, %579, %580, %581, %582, %583, %584, %585 in 0 : vector<2x64xf32>, vector<2x64xf32>, vector<2x64xf32>, vector<2x64xf32>, vector<2x64xf32>, vector<2x64xf32>, vector<2x64xf32>, vector<2x64xf32> -> vector<16x64xf32>
    %587 = arith.truncf %586 : vector<16x64xf32> to vector<16x64xbf16>
    %c0_162 = arith.constant 0 : index
    %c0_163 = arith.constant 0 : index
    %588 = vector.load %arg5[%c0_162, %c0_163] : memref<64x256xbf16, #tpu.memory_space<vmem>>, vector<64x256xbf16>
    %c0_164 = arith.constant 0 : index
    %c0_165 = arith.constant 0 : index
    %589 = vector.load %arg6[%c0_164, %c0_165] : memref<64x256xbf16, #tpu.memory_space<vmem>>, vector<64x256xbf16>
    %c0_166 = arith.constant 0 : index
    %c0_167 = arith.constant 0 : index
    %590 = vector.load %arg7[%c0_166, %c0_167] : memref<1x256xf32, #tpu.memory_space<vmem>>, vector<1x256xf32>
    %cst_168 = arith.constant dense<0.000000e+00> : vector<16x256xf32>
    %591 = tpu.matmul %587, %588, %cst_168 {dimension_numbers = #tpu.dot_dimension_numbers<[1], [0], [0], [1], [0, 0, 1, 1], [], []>} : vector<16x64xbf16>, vector<64x256xbf16>, vector<16x256xf32> -> vector<16x256xf32>
    %592 = vector.broadcast %590 : vector<1x256xf32> to vector<16x256xf32>
    %593 = arith.addf %591, %592 : vector<16x256xf32>
    %cst_169 = arith.constant 0.000000e+00 : f32
    %594 = vector.broadcast %cst_169 : f32 to vector<2x64xf32>
    %cst_170 = arith.constant 0.000000e+00 : f32
    %595 = vector.broadcast %cst_170 : f32 to vector<2x32xf32>
    %cst_171 = arith.constant 0.000000e+00 : f32
    %596 = vector.broadcast %cst_171 : f32 to vector<2x32xf32>
    %597 = arith.truncf %594 : vector<2x64xf32> to vector<2x64xbf16>
    %cst_172 = arith.constant dense<0.000000e+00> : vector<2x256xf32>
    %598 = tpu.matmul %597, %589, %cst_172 {dimension_numbers = #tpu.dot_dimension_numbers<[1], [0], [0], [1], [0, 0, 1, 1], [], []>} : vector<2x64xbf16>, vector<64x256xbf16>, vector<2x256xf32> -> vector<2x256xf32>
    %599 = vector.extract_strided_slice %593 {offsets = [0, 0], sizes = [2, 128], strides = [1, 1]} : vector<16x256xf32> to vector<2x128xf32>
    %600 = vector.extract_strided_slice %598 {offsets = [0, 0], sizes = [2, 128], strides = [1, 1]} : vector<2x256xf32> to vector<2x128xf32>
    %601 = arith.addf %599, %600 : vector<2x128xf32>
    %602 = vector.extract_strided_slice %593 {offsets = [14, 128], sizes = [2, 128], strides = [1, 1]} : vector<16x256xf32> to vector<2x128xf32>
    %603 = vector.extract_strided_slice %598 {offsets = [0, 128], sizes = [2, 128], strides = [1, 1]} : vector<2x256xf32> to vector<2x128xf32>
    %604 = arith.addf %602, %603 : vector<2x128xf32>
    %605 = vector.extract_strided_slice %601 {offsets = [0, 0], sizes = [2, 32], strides = [1, 1]} : vector<2x128xf32> to vector<2x32xf32>
    %cst_173 = arith.constant 0.000000e+00 : f32
    %606 = vector.broadcast %cst_173 : f32 to vector<2x32xf32>
    %607 = arith.subf %606, %605 : vector<2x32xf32>
    %608 = math.exp %607 : vector<2x32xf32>
    %cst_174 = arith.constant 1.000000e+00 : f32
    %609 = vector.broadcast %cst_174 : f32 to vector<2x32xf32>
    %610 = arith.addf %609, %608 : vector<2x32xf32>
    %cst_175 = arith.constant 1.000000e+00 : f32
    %611 = vector.broadcast %cst_175 : f32 to vector<2x32xf32>
    %612 = arith.divf %611, %610 : vector<2x32xf32>
    %613 = vector.extract_strided_slice %601 {offsets = [0, 32], sizes = [2, 32], strides = [1, 1]} : vector<2x128xf32> to vector<2x32xf32>
    %cst_176 = arith.constant 0.000000e+00 : f32
    %614 = vector.broadcast %cst_176 : f32 to vector<2x32xf32>
    %615 = arith.subf %614, %613 : vector<2x32xf32>
    %616 = math.exp %615 : vector<2x32xf32>
    %cst_177 = arith.constant 1.000000e+00 : f32
    %617 = vector.broadcast %cst_177 : f32 to vector<2x32xf32>
    %618 = arith.addf %617, %616 : vector<2x32xf32>
    %cst_178 = arith.constant 1.000000e+00 : f32
    %619 = vector.broadcast %cst_178 : f32 to vector<2x32xf32>
    %620 = arith.divf %619, %618 : vector<2x32xf32>
    %621 = vector.extract_strided_slice %601 {offsets = [0, 64], sizes = [2, 32], strides = [1, 1]} : vector<2x128xf32> to vector<2x32xf32>
    %622 = math.tanh %621 : vector<2x32xf32>
    %623 = vector.extract_strided_slice %601 {offsets = [0, 96], sizes = [2, 32], strides = [1, 1]} : vector<2x128xf32> to vector<2x32xf32>
    %cst_179 = arith.constant 0.000000e+00 : f32
    %624 = vector.broadcast %cst_179 : f32 to vector<2x32xf32>
    %625 = arith.subf %624, %623 : vector<2x32xf32>
    %626 = math.exp %625 : vector<2x32xf32>
    %cst_180 = arith.constant 1.000000e+00 : f32
    %627 = vector.broadcast %cst_180 : f32 to vector<2x32xf32>
    %628 = arith.addf %627, %626 : vector<2x32xf32>
    %cst_181 = arith.constant 1.000000e+00 : f32
    %629 = vector.broadcast %cst_181 : f32 to vector<2x32xf32>
    %630 = arith.divf %629, %628 : vector<2x32xf32>
    %631 = arith.mulf %620, %595 : vector<2x32xf32>
    %632 = arith.mulf %612, %622 : vector<2x32xf32>
    %633 = arith.addf %631, %632 : vector<2x32xf32>
    %634 = math.tanh %633 : vector<2x32xf32>
    %635 = arith.mulf %630, %634 : vector<2x32xf32>
    %636 = vector.extract_strided_slice %604 {offsets = [0, 0], sizes = [2, 32], strides = [1, 1]} : vector<2x128xf32> to vector<2x32xf32>
    %cst_182 = arith.constant 0.000000e+00 : f32
    %637 = vector.broadcast %cst_182 : f32 to vector<2x32xf32>
    %638 = arith.subf %637, %636 : vector<2x32xf32>
    %639 = math.exp %638 : vector<2x32xf32>
    %cst_183 = arith.constant 1.000000e+00 : f32
    %640 = vector.broadcast %cst_183 : f32 to vector<2x32xf32>
    %641 = arith.addf %640, %639 : vector<2x32xf32>
    %cst_184 = arith.constant 1.000000e+00 : f32
    %642 = vector.broadcast %cst_184 : f32 to vector<2x32xf32>
    %643 = arith.divf %642, %641 : vector<2x32xf32>
    %644 = vector.extract_strided_slice %604 {offsets = [0, 32], sizes = [2, 32], strides = [1, 1]} : vector<2x128xf32> to vector<2x32xf32>
    %cst_185 = arith.constant 0.000000e+00 : f32
    %645 = vector.broadcast %cst_185 : f32 to vector<2x32xf32>
    %646 = arith.subf %645, %644 : vector<2x32xf32>
    %647 = math.exp %646 : vector<2x32xf32>
    %cst_186 = arith.constant 1.000000e+00 : f32
    %648 = vector.broadcast %cst_186 : f32 to vector<2x32xf32>
    %649 = arith.addf %648, %647 : vector<2x32xf32>
    %cst_187 = arith.constant 1.000000e+00 : f32
    %650 = vector.broadcast %cst_187 : f32 to vector<2x32xf32>
    %651 = arith.divf %650, %649 : vector<2x32xf32>
    %652 = vector.extract_strided_slice %604 {offsets = [0, 64], sizes = [2, 32], strides = [1, 1]} : vector<2x128xf32> to vector<2x32xf32>
    %653 = math.tanh %652 : vector<2x32xf32>
    %654 = vector.extract_strided_slice %604 {offsets = [0, 96], sizes = [2, 32], strides = [1, 1]} : vector<2x128xf32> to vector<2x32xf32>
    %cst_188 = arith.constant 0.000000e+00 : f32
    %655 = vector.broadcast %cst_188 : f32 to vector<2x32xf32>
    %656 = arith.subf %655, %654 : vector<2x32xf32>
    %657 = math.exp %656 : vector<2x32xf32>
    %cst_189 = arith.constant 1.000000e+00 : f32
    %658 = vector.broadcast %cst_189 : f32 to vector<2x32xf32>
    %659 = arith.addf %658, %657 : vector<2x32xf32>
    %cst_190 = arith.constant 1.000000e+00 : f32
    %660 = vector.broadcast %cst_190 : f32 to vector<2x32xf32>
    %661 = arith.divf %660, %659 : vector<2x32xf32>
    %662 = arith.mulf %651, %596 : vector<2x32xf32>
    %663 = arith.mulf %643, %653 : vector<2x32xf32>
    %664 = arith.addf %662, %663 : vector<2x32xf32>
    %665 = math.tanh %664 : vector<2x32xf32>
    %666 = arith.mulf %661, %665 : vector<2x32xf32>
    %667 = tpu.concatenate %635, %666 in 1 : vector<2x32xf32>, vector<2x32xf32> -> vector<2x64xf32>
    %668 = arith.truncf %667 : vector<2x64xf32> to vector<2x64xbf16>
    %cst_191 = arith.constant dense<0.000000e+00> : vector<2x256xf32>
    %669 = tpu.matmul %668, %589, %cst_191 {dimension_numbers = #tpu.dot_dimension_numbers<[1], [0], [0], [1], [0, 0, 1, 1], [], []>} : vector<2x64xbf16>, vector<64x256xbf16>, vector<2x256xf32> -> vector<2x256xf32>
    %670 = vector.extract_strided_slice %593 {offsets = [2, 0], sizes = [2, 128], strides = [1, 1]} : vector<16x256xf32> to vector<2x128xf32>
    %671 = vector.extract_strided_slice %669 {offsets = [0, 0], sizes = [2, 128], strides = [1, 1]} : vector<2x256xf32> to vector<2x128xf32>
    %672 = arith.addf %670, %671 : vector<2x128xf32>
    %673 = vector.extract_strided_slice %593 {offsets = [12, 128], sizes = [2, 128], strides = [1, 1]} : vector<16x256xf32> to vector<2x128xf32>
    %674 = vector.extract_strided_slice %669 {offsets = [0, 128], sizes = [2, 128], strides = [1, 1]} : vector<2x256xf32> to vector<2x128xf32>
    %675 = arith.addf %673, %674 : vector<2x128xf32>
    %676 = vector.extract_strided_slice %672 {offsets = [0, 0], sizes = [2, 32], strides = [1, 1]} : vector<2x128xf32> to vector<2x32xf32>
    %cst_192 = arith.constant 0.000000e+00 : f32
    %677 = vector.broadcast %cst_192 : f32 to vector<2x32xf32>
    %678 = arith.subf %677, %676 : vector<2x32xf32>
    %679 = math.exp %678 : vector<2x32xf32>
    %cst_193 = arith.constant 1.000000e+00 : f32
    %680 = vector.broadcast %cst_193 : f32 to vector<2x32xf32>
    %681 = arith.addf %680, %679 : vector<2x32xf32>
    %cst_194 = arith.constant 1.000000e+00 : f32
    %682 = vector.broadcast %cst_194 : f32 to vector<2x32xf32>
    %683 = arith.divf %682, %681 : vector<2x32xf32>
    %684 = vector.extract_strided_slice %672 {offsets = [0, 32], sizes = [2, 32], strides = [1, 1]} : vector<2x128xf32> to vector<2x32xf32>
    %cst_195 = arith.constant 0.000000e+00 : f32
    %685 = vector.broadcast %cst_195 : f32 to vector<2x32xf32>
    %686 = arith.subf %685, %684 : vector<2x32xf32>
    %687 = math.exp %686 : vector<2x32xf32>
    %cst_196 = arith.constant 1.000000e+00 : f32
    %688 = vector.broadcast %cst_196 : f32 to vector<2x32xf32>
    %689 = arith.addf %688, %687 : vector<2x32xf32>
    %cst_197 = arith.constant 1.000000e+00 : f32
    %690 = vector.broadcast %cst_197 : f32 to vector<2x32xf32>
    %691 = arith.divf %690, %689 : vector<2x32xf32>
    %692 = vector.extract_strided_slice %672 {offsets = [0, 64], sizes = [2, 32], strides = [1, 1]} : vector<2x128xf32> to vector<2x32xf32>
    %693 = math.tanh %692 : vector<2x32xf32>
    %694 = vector.extract_strided_slice %672 {offsets = [0, 96], sizes = [2, 32], strides = [1, 1]} : vector<2x128xf32> to vector<2x32xf32>
    %cst_198 = arith.constant 0.000000e+00 : f32
    %695 = vector.broadcast %cst_198 : f32 to vector<2x32xf32>
    %696 = arith.subf %695, %694 : vector<2x32xf32>
    %697 = math.exp %696 : vector<2x32xf32>
    %cst_199 = arith.constant 1.000000e+00 : f32
    %698 = vector.broadcast %cst_199 : f32 to vector<2x32xf32>
    %699 = arith.addf %698, %697 : vector<2x32xf32>
    %cst_200 = arith.constant 1.000000e+00 : f32
    %700 = vector.broadcast %cst_200 : f32 to vector<2x32xf32>
    %701 = arith.divf %700, %699 : vector<2x32xf32>
    %702 = arith.mulf %691, %633 : vector<2x32xf32>
    %703 = arith.mulf %683, %693 : vector<2x32xf32>
    %704 = arith.addf %702, %703 : vector<2x32xf32>
    %705 = math.tanh %704 : vector<2x32xf32>
    %706 = arith.mulf %701, %705 : vector<2x32xf32>
    %707 = vector.extract_strided_slice %675 {offsets = [0, 0], sizes = [2, 32], strides = [1, 1]} : vector<2x128xf32> to vector<2x32xf32>
    %cst_201 = arith.constant 0.000000e+00 : f32
    %708 = vector.broadcast %cst_201 : f32 to vector<2x32xf32>
    %709 = arith.subf %708, %707 : vector<2x32xf32>
    %710 = math.exp %709 : vector<2x32xf32>
    %cst_202 = arith.constant 1.000000e+00 : f32
    %711 = vector.broadcast %cst_202 : f32 to vector<2x32xf32>
    %712 = arith.addf %711, %710 : vector<2x32xf32>
    %cst_203 = arith.constant 1.000000e+00 : f32
    %713 = vector.broadcast %cst_203 : f32 to vector<2x32xf32>
    %714 = arith.divf %713, %712 : vector<2x32xf32>
    %715 = vector.extract_strided_slice %675 {offsets = [0, 32], sizes = [2, 32], strides = [1, 1]} : vector<2x128xf32> to vector<2x32xf32>
    %cst_204 = arith.constant 0.000000e+00 : f32
    %716 = vector.broadcast %cst_204 : f32 to vector<2x32xf32>
    %717 = arith.subf %716, %715 : vector<2x32xf32>
    %718 = math.exp %717 : vector<2x32xf32>
    %cst_205 = arith.constant 1.000000e+00 : f32
    %719 = vector.broadcast %cst_205 : f32 to vector<2x32xf32>
    %720 = arith.addf %719, %718 : vector<2x32xf32>
    %cst_206 = arith.constant 1.000000e+00 : f32
    %721 = vector.broadcast %cst_206 : f32 to vector<2x32xf32>
    %722 = arith.divf %721, %720 : vector<2x32xf32>
    %723 = vector.extract_strided_slice %675 {offsets = [0, 64], sizes = [2, 32], strides = [1, 1]} : vector<2x128xf32> to vector<2x32xf32>
    %724 = math.tanh %723 : vector<2x32xf32>
    %725 = vector.extract_strided_slice %675 {offsets = [0, 96], sizes = [2, 32], strides = [1, 1]} : vector<2x128xf32> to vector<2x32xf32>
    %cst_207 = arith.constant 0.000000e+00 : f32
    %726 = vector.broadcast %cst_207 : f32 to vector<2x32xf32>
    %727 = arith.subf %726, %725 : vector<2x32xf32>
    %728 = math.exp %727 : vector<2x32xf32>
    %cst_208 = arith.constant 1.000000e+00 : f32
    %729 = vector.broadcast %cst_208 : f32 to vector<2x32xf32>
    %730 = arith.addf %729, %728 : vector<2x32xf32>
    %cst_209 = arith.constant 1.000000e+00 : f32
    %731 = vector.broadcast %cst_209 : f32 to vector<2x32xf32>
    %732 = arith.divf %731, %730 : vector<2x32xf32>
    %733 = arith.mulf %722, %664 : vector<2x32xf32>
    %734 = arith.mulf %714, %724 : vector<2x32xf32>
    %735 = arith.addf %733, %734 : vector<2x32xf32>
    %736 = math.tanh %735 : vector<2x32xf32>
    %737 = arith.mulf %732, %736 : vector<2x32xf32>
    %738 = tpu.concatenate %706, %737 in 1 : vector<2x32xf32>, vector<2x32xf32> -> vector<2x64xf32>
    %739 = arith.truncf %738 : vector<2x64xf32> to vector<2x64xbf16>
    %cst_210 = arith.constant dense<0.000000e+00> : vector<2x256xf32>
    %740 = tpu.matmul %739, %589, %cst_210 {dimension_numbers = #tpu.dot_dimension_numbers<[1], [0], [0], [1], [0, 0, 1, 1], [], []>} : vector<2x64xbf16>, vector<64x256xbf16>, vector<2x256xf32> -> vector<2x256xf32>
    %741 = vector.extract_strided_slice %593 {offsets = [4, 0], sizes = [2, 128], strides = [1, 1]} : vector<16x256xf32> to vector<2x128xf32>
    %742 = vector.extract_strided_slice %740 {offsets = [0, 0], sizes = [2, 128], strides = [1, 1]} : vector<2x256xf32> to vector<2x128xf32>
    %743 = arith.addf %741, %742 : vector<2x128xf32>
    %744 = vector.extract_strided_slice %593 {offsets = [10, 128], sizes = [2, 128], strides = [1, 1]} : vector<16x256xf32> to vector<2x128xf32>
    %745 = vector.extract_strided_slice %740 {offsets = [0, 128], sizes = [2, 128], strides = [1, 1]} : vector<2x256xf32> to vector<2x128xf32>
    %746 = arith.addf %744, %745 : vector<2x128xf32>
    %747 = vector.extract_strided_slice %743 {offsets = [0, 0], sizes = [2, 32], strides = [1, 1]} : vector<2x128xf32> to vector<2x32xf32>
    %cst_211 = arith.constant 0.000000e+00 : f32
    %748 = vector.broadcast %cst_211 : f32 to vector<2x32xf32>
    %749 = arith.subf %748, %747 : vector<2x32xf32>
    %750 = math.exp %749 : vector<2x32xf32>
    %cst_212 = arith.constant 1.000000e+00 : f32
    %751 = vector.broadcast %cst_212 : f32 to vector<2x32xf32>
    %752 = arith.addf %751, %750 : vector<2x32xf32>
    %cst_213 = arith.constant 1.000000e+00 : f32
    %753 = vector.broadcast %cst_213 : f32 to vector<2x32xf32>
    %754 = arith.divf %753, %752 : vector<2x32xf32>
    %755 = vector.extract_strided_slice %743 {offsets = [0, 32], sizes = [2, 32], strides = [1, 1]} : vector<2x128xf32> to vector<2x32xf32>
    %cst_214 = arith.constant 0.000000e+00 : f32
    %756 = vector.broadcast %cst_214 : f32 to vector<2x32xf32>
    %757 = arith.subf %756, %755 : vector<2x32xf32>
    %758 = math.exp %757 : vector<2x32xf32>
    %cst_215 = arith.constant 1.000000e+00 : f32
    %759 = vector.broadcast %cst_215 : f32 to vector<2x32xf32>
    %760 = arith.addf %759, %758 : vector<2x32xf32>
    %cst_216 = arith.constant 1.000000e+00 : f32
    %761 = vector.broadcast %cst_216 : f32 to vector<2x32xf32>
    %762 = arith.divf %761, %760 : vector<2x32xf32>
    %763 = vector.extract_strided_slice %743 {offsets = [0, 64], sizes = [2, 32], strides = [1, 1]} : vector<2x128xf32> to vector<2x32xf32>
    %764 = math.tanh %763 : vector<2x32xf32>
    %765 = vector.extract_strided_slice %743 {offsets = [0, 96], sizes = [2, 32], strides = [1, 1]} : vector<2x128xf32> to vector<2x32xf32>
    %cst_217 = arith.constant 0.000000e+00 : f32
    %766 = vector.broadcast %cst_217 : f32 to vector<2x32xf32>
    %767 = arith.subf %766, %765 : vector<2x32xf32>
    %768 = math.exp %767 : vector<2x32xf32>
    %cst_218 = arith.constant 1.000000e+00 : f32
    %769 = vector.broadcast %cst_218 : f32 to vector<2x32xf32>
    %770 = arith.addf %769, %768 : vector<2x32xf32>
    %cst_219 = arith.constant 1.000000e+00 : f32
    %771 = vector.broadcast %cst_219 : f32 to vector<2x32xf32>
    %772 = arith.divf %771, %770 : vector<2x32xf32>
    %773 = arith.mulf %762, %704 : vector<2x32xf32>
    %774 = arith.mulf %754, %764 : vector<2x32xf32>
    %775 = arith.addf %773, %774 : vector<2x32xf32>
    %776 = math.tanh %775 : vector<2x32xf32>
    %777 = arith.mulf %772, %776 : vector<2x32xf32>
    %778 = vector.extract_strided_slice %746 {offsets = [0, 0], sizes = [2, 32], strides = [1, 1]} : vector<2x128xf32> to vector<2x32xf32>
    %cst_220 = arith.constant 0.000000e+00 : f32
    %779 = vector.broadcast %cst_220 : f32 to vector<2x32xf32>
    %780 = arith.subf %779, %778 : vector<2x32xf32>
    %781 = math.exp %780 : vector<2x32xf32>
    %cst_221 = arith.constant 1.000000e+00 : f32
    %782 = vector.broadcast %cst_221 : f32 to vector<2x32xf32>
    %783 = arith.addf %782, %781 : vector<2x32xf32>
    %cst_222 = arith.constant 1.000000e+00 : f32
    %784 = vector.broadcast %cst_222 : f32 to vector<2x32xf32>
    %785 = arith.divf %784, %783 : vector<2x32xf32>
    %786 = vector.extract_strided_slice %746 {offsets = [0, 32], sizes = [2, 32], strides = [1, 1]} : vector<2x128xf32> to vector<2x32xf32>
    %cst_223 = arith.constant 0.000000e+00 : f32
    %787 = vector.broadcast %cst_223 : f32 to vector<2x32xf32>
    %788 = arith.subf %787, %786 : vector<2x32xf32>
    %789 = math.exp %788 : vector<2x32xf32>
    %cst_224 = arith.constant 1.000000e+00 : f32
    %790 = vector.broadcast %cst_224 : f32 to vector<2x32xf32>
    %791 = arith.addf %790, %789 : vector<2x32xf32>
    %cst_225 = arith.constant 1.000000e+00 : f32
    %792 = vector.broadcast %cst_225 : f32 to vector<2x32xf32>
    %793 = arith.divf %792, %791 : vector<2x32xf32>
    %794 = vector.extract_strided_slice %746 {offsets = [0, 64], sizes = [2, 32], strides = [1, 1]} : vector<2x128xf32> to vector<2x32xf32>
    %795 = math.tanh %794 : vector<2x32xf32>
    %796 = vector.extract_strided_slice %746 {offsets = [0, 96], sizes = [2, 32], strides = [1, 1]} : vector<2x128xf32> to vector<2x32xf32>
    %cst_226 = arith.constant 0.000000e+00 : f32
    %797 = vector.broadcast %cst_226 : f32 to vector<2x32xf32>
    %798 = arith.subf %797, %796 : vector<2x32xf32>
    %799 = math.exp %798 : vector<2x32xf32>
    %cst_227 = arith.constant 1.000000e+00 : f32
    %800 = vector.broadcast %cst_227 : f32 to vector<2x32xf32>
    %801 = arith.addf %800, %799 : vector<2x32xf32>
    %cst_228 = arith.constant 1.000000e+00 : f32
    %802 = vector.broadcast %cst_228 : f32 to vector<2x32xf32>
    %803 = arith.divf %802, %801 : vector<2x32xf32>
    %804 = arith.mulf %793, %735 : vector<2x32xf32>
    %805 = arith.mulf %785, %795 : vector<2x32xf32>
    %806 = arith.addf %804, %805 : vector<2x32xf32>
    %807 = math.tanh %806 : vector<2x32xf32>
    %808 = arith.mulf %803, %807 : vector<2x32xf32>
    %809 = tpu.concatenate %777, %808 in 1 : vector<2x32xf32>, vector<2x32xf32> -> vector<2x64xf32>
    %810 = arith.truncf %809 : vector<2x64xf32> to vector<2x64xbf16>
    %cst_229 = arith.constant dense<0.000000e+00> : vector<2x256xf32>
    %811 = tpu.matmul %810, %589, %cst_229 {dimension_numbers = #tpu.dot_dimension_numbers<[1], [0], [0], [1], [0, 0, 1, 1], [], []>} : vector<2x64xbf16>, vector<64x256xbf16>, vector<2x256xf32> -> vector<2x256xf32>
    %812 = vector.extract_strided_slice %593 {offsets = [6, 0], sizes = [2, 128], strides = [1, 1]} : vector<16x256xf32> to vector<2x128xf32>
    %813 = vector.extract_strided_slice %811 {offsets = [0, 0], sizes = [2, 128], strides = [1, 1]} : vector<2x256xf32> to vector<2x128xf32>
    %814 = arith.addf %812, %813 : vector<2x128xf32>
    %815 = vector.extract_strided_slice %593 {offsets = [8, 128], sizes = [2, 128], strides = [1, 1]} : vector<16x256xf32> to vector<2x128xf32>
    %816 = vector.extract_strided_slice %811 {offsets = [0, 128], sizes = [2, 128], strides = [1, 1]} : vector<2x256xf32> to vector<2x128xf32>
    %817 = arith.addf %815, %816 : vector<2x128xf32>
    %818 = vector.extract_strided_slice %814 {offsets = [0, 0], sizes = [2, 32], strides = [1, 1]} : vector<2x128xf32> to vector<2x32xf32>
    %cst_230 = arith.constant 0.000000e+00 : f32
    %819 = vector.broadcast %cst_230 : f32 to vector<2x32xf32>
    %820 = arith.subf %819, %818 : vector<2x32xf32>
    %821 = math.exp %820 : vector<2x32xf32>
    %cst_231 = arith.constant 1.000000e+00 : f32
    %822 = vector.broadcast %cst_231 : f32 to vector<2x32xf32>
    %823 = arith.addf %822, %821 : vector<2x32xf32>
    %cst_232 = arith.constant 1.000000e+00 : f32
    %824 = vector.broadcast %cst_232 : f32 to vector<2x32xf32>
    %825 = arith.divf %824, %823 : vector<2x32xf32>
    %826 = vector.extract_strided_slice %814 {offsets = [0, 32], sizes = [2, 32], strides = [1, 1]} : vector<2x128xf32> to vector<2x32xf32>
    %cst_233 = arith.constant 0.000000e+00 : f32
    %827 = vector.broadcast %cst_233 : f32 to vector<2x32xf32>
    %828 = arith.subf %827, %826 : vector<2x32xf32>
    %829 = math.exp %828 : vector<2x32xf32>
    %cst_234 = arith.constant 1.000000e+00 : f32
    %830 = vector.broadcast %cst_234 : f32 to vector<2x32xf32>
    %831 = arith.addf %830, %829 : vector<2x32xf32>
    %cst_235 = arith.constant 1.000000e+00 : f32
    %832 = vector.broadcast %cst_235 : f32 to vector<2x32xf32>
    %833 = arith.divf %832, %831 : vector<2x32xf32>
    %834 = vector.extract_strided_slice %814 {offsets = [0, 64], sizes = [2, 32], strides = [1, 1]} : vector<2x128xf32> to vector<2x32xf32>
    %835 = math.tanh %834 : vector<2x32xf32>
    %836 = vector.extract_strided_slice %814 {offsets = [0, 96], sizes = [2, 32], strides = [1, 1]} : vector<2x128xf32> to vector<2x32xf32>
    %cst_236 = arith.constant 0.000000e+00 : f32
    %837 = vector.broadcast %cst_236 : f32 to vector<2x32xf32>
    %838 = arith.subf %837, %836 : vector<2x32xf32>
    %839 = math.exp %838 : vector<2x32xf32>
    %cst_237 = arith.constant 1.000000e+00 : f32
    %840 = vector.broadcast %cst_237 : f32 to vector<2x32xf32>
    %841 = arith.addf %840, %839 : vector<2x32xf32>
    %cst_238 = arith.constant 1.000000e+00 : f32
    %842 = vector.broadcast %cst_238 : f32 to vector<2x32xf32>
    %843 = arith.divf %842, %841 : vector<2x32xf32>
    %844 = arith.mulf %833, %775 : vector<2x32xf32>
    %845 = arith.mulf %825, %835 : vector<2x32xf32>
    %846 = arith.addf %844, %845 : vector<2x32xf32>
    %847 = math.tanh %846 : vector<2x32xf32>
    %848 = arith.mulf %843, %847 : vector<2x32xf32>
    %849 = vector.extract_strided_slice %817 {offsets = [0, 0], sizes = [2, 32], strides = [1, 1]} : vector<2x128xf32> to vector<2x32xf32>
    %cst_239 = arith.constant 0.000000e+00 : f32
    %850 = vector.broadcast %cst_239 : f32 to vector<2x32xf32>
    %851 = arith.subf %850, %849 : vector<2x32xf32>
    %852 = math.exp %851 : vector<2x32xf32>
    %cst_240 = arith.constant 1.000000e+00 : f32
    %853 = vector.broadcast %cst_240 : f32 to vector<2x32xf32>
    %854 = arith.addf %853, %852 : vector<2x32xf32>
    %cst_241 = arith.constant 1.000000e+00 : f32
    %855 = vector.broadcast %cst_241 : f32 to vector<2x32xf32>
    %856 = arith.divf %855, %854 : vector<2x32xf32>
    %857 = vector.extract_strided_slice %817 {offsets = [0, 32], sizes = [2, 32], strides = [1, 1]} : vector<2x128xf32> to vector<2x32xf32>
    %cst_242 = arith.constant 0.000000e+00 : f32
    %858 = vector.broadcast %cst_242 : f32 to vector<2x32xf32>
    %859 = arith.subf %858, %857 : vector<2x32xf32>
    %860 = math.exp %859 : vector<2x32xf32>
    %cst_243 = arith.constant 1.000000e+00 : f32
    %861 = vector.broadcast %cst_243 : f32 to vector<2x32xf32>
    %862 = arith.addf %861, %860 : vector<2x32xf32>
    %cst_244 = arith.constant 1.000000e+00 : f32
    %863 = vector.broadcast %cst_244 : f32 to vector<2x32xf32>
    %864 = arith.divf %863, %862 : vector<2x32xf32>
    %865 = vector.extract_strided_slice %817 {offsets = [0, 64], sizes = [2, 32], strides = [1, 1]} : vector<2x128xf32> to vector<2x32xf32>
    %866 = math.tanh %865 : vector<2x32xf32>
    %867 = vector.extract_strided_slice %817 {offsets = [0, 96], sizes = [2, 32], strides = [1, 1]} : vector<2x128xf32> to vector<2x32xf32>
    %cst_245 = arith.constant 0.000000e+00 : f32
    %868 = vector.broadcast %cst_245 : f32 to vector<2x32xf32>
    %869 = arith.subf %868, %867 : vector<2x32xf32>
    %870 = math.exp %869 : vector<2x32xf32>
    %cst_246 = arith.constant 1.000000e+00 : f32
    %871 = vector.broadcast %cst_246 : f32 to vector<2x32xf32>
    %872 = arith.addf %871, %870 : vector<2x32xf32>
    %cst_247 = arith.constant 1.000000e+00 : f32
    %873 = vector.broadcast %cst_247 : f32 to vector<2x32xf32>
    %874 = arith.divf %873, %872 : vector<2x32xf32>
    %875 = arith.mulf %864, %806 : vector<2x32xf32>
    %876 = arith.mulf %856, %866 : vector<2x32xf32>
    %877 = arith.addf %875, %876 : vector<2x32xf32>
    %878 = math.tanh %877 : vector<2x32xf32>
    %879 = arith.mulf %874, %878 : vector<2x32xf32>
    %880 = tpu.concatenate %848, %879 in 1 : vector<2x32xf32>, vector<2x32xf32> -> vector<2x64xf32>
    %881 = arith.truncf %880 : vector<2x64xf32> to vector<2x64xbf16>
    %cst_248 = arith.constant dense<0.000000e+00> : vector<2x256xf32>
    %882 = tpu.matmul %881, %589, %cst_248 {dimension_numbers = #tpu.dot_dimension_numbers<[1], [0], [0], [1], [0, 0, 1, 1], [], []>} : vector<2x64xbf16>, vector<64x256xbf16>, vector<2x256xf32> -> vector<2x256xf32>
    %883 = vector.extract_strided_slice %593 {offsets = [8, 0], sizes = [2, 128], strides = [1, 1]} : vector<16x256xf32> to vector<2x128xf32>
    %884 = vector.extract_strided_slice %882 {offsets = [0, 0], sizes = [2, 128], strides = [1, 1]} : vector<2x256xf32> to vector<2x128xf32>
    %885 = arith.addf %883, %884 : vector<2x128xf32>
    %886 = vector.extract_strided_slice %593 {offsets = [6, 128], sizes = [2, 128], strides = [1, 1]} : vector<16x256xf32> to vector<2x128xf32>
    %887 = vector.extract_strided_slice %882 {offsets = [0, 128], sizes = [2, 128], strides = [1, 1]} : vector<2x256xf32> to vector<2x128xf32>
    %888 = arith.addf %886, %887 : vector<2x128xf32>
    %889 = vector.extract_strided_slice %885 {offsets = [0, 0], sizes = [2, 32], strides = [1, 1]} : vector<2x128xf32> to vector<2x32xf32>
    %cst_249 = arith.constant 0.000000e+00 : f32
    %890 = vector.broadcast %cst_249 : f32 to vector<2x32xf32>
    %891 = arith.subf %890, %889 : vector<2x32xf32>
    %892 = math.exp %891 : vector<2x32xf32>
    %cst_250 = arith.constant 1.000000e+00 : f32
    %893 = vector.broadcast %cst_250 : f32 to vector<2x32xf32>
    %894 = arith.addf %893, %892 : vector<2x32xf32>
    %cst_251 = arith.constant 1.000000e+00 : f32
    %895 = vector.broadcast %cst_251 : f32 to vector<2x32xf32>
    %896 = arith.divf %895, %894 : vector<2x32xf32>
    %897 = vector.extract_strided_slice %885 {offsets = [0, 32], sizes = [2, 32], strides = [1, 1]} : vector<2x128xf32> to vector<2x32xf32>
    %cst_252 = arith.constant 0.000000e+00 : f32
    %898 = vector.broadcast %cst_252 : f32 to vector<2x32xf32>
    %899 = arith.subf %898, %897 : vector<2x32xf32>
    %900 = math.exp %899 : vector<2x32xf32>
    %cst_253 = arith.constant 1.000000e+00 : f32
    %901 = vector.broadcast %cst_253 : f32 to vector<2x32xf32>
    %902 = arith.addf %901, %900 : vector<2x32xf32>
    %cst_254 = arith.constant 1.000000e+00 : f32
    %903 = vector.broadcast %cst_254 : f32 to vector<2x32xf32>
    %904 = arith.divf %903, %902 : vector<2x32xf32>
    %905 = vector.extract_strided_slice %885 {offsets = [0, 64], sizes = [2, 32], strides = [1, 1]} : vector<2x128xf32> to vector<2x32xf32>
    %906 = math.tanh %905 : vector<2x32xf32>
    %907 = vector.extract_strided_slice %885 {offsets = [0, 96], sizes = [2, 32], strides = [1, 1]} : vector<2x128xf32> to vector<2x32xf32>
    %cst_255 = arith.constant 0.000000e+00 : f32
    %908 = vector.broadcast %cst_255 : f32 to vector<2x32xf32>
    %909 = arith.subf %908, %907 : vector<2x32xf32>
    %910 = math.exp %909 : vector<2x32xf32>
    %cst_256 = arith.constant 1.000000e+00 : f32
    %911 = vector.broadcast %cst_256 : f32 to vector<2x32xf32>
    %912 = arith.addf %911, %910 : vector<2x32xf32>
    %cst_257 = arith.constant 1.000000e+00 : f32
    %913 = vector.broadcast %cst_257 : f32 to vector<2x32xf32>
    %914 = arith.divf %913, %912 : vector<2x32xf32>
    %915 = arith.mulf %904, %846 : vector<2x32xf32>
    %916 = arith.mulf %896, %906 : vector<2x32xf32>
    %917 = arith.addf %915, %916 : vector<2x32xf32>
    %918 = math.tanh %917 : vector<2x32xf32>
    %919 = arith.mulf %914, %918 : vector<2x32xf32>
    %920 = vector.extract_strided_slice %888 {offsets = [0, 0], sizes = [2, 32], strides = [1, 1]} : vector<2x128xf32> to vector<2x32xf32>
    %cst_258 = arith.constant 0.000000e+00 : f32
    %921 = vector.broadcast %cst_258 : f32 to vector<2x32xf32>
    %922 = arith.subf %921, %920 : vector<2x32xf32>
    %923 = math.exp %922 : vector<2x32xf32>
    %cst_259 = arith.constant 1.000000e+00 : f32
    %924 = vector.broadcast %cst_259 : f32 to vector<2x32xf32>
    %925 = arith.addf %924, %923 : vector<2x32xf32>
    %cst_260 = arith.constant 1.000000e+00 : f32
    %926 = vector.broadcast %cst_260 : f32 to vector<2x32xf32>
    %927 = arith.divf %926, %925 : vector<2x32xf32>
    %928 = vector.extract_strided_slice %888 {offsets = [0, 32], sizes = [2, 32], strides = [1, 1]} : vector<2x128xf32> to vector<2x32xf32>
    %cst_261 = arith.constant 0.000000e+00 : f32
    %929 = vector.broadcast %cst_261 : f32 to vector<2x32xf32>
    %930 = arith.subf %929, %928 : vector<2x32xf32>
    %931 = math.exp %930 : vector<2x32xf32>
    %cst_262 = arith.constant 1.000000e+00 : f32
    %932 = vector.broadcast %cst_262 : f32 to vector<2x32xf32>
    %933 = arith.addf %932, %931 : vector<2x32xf32>
    %cst_263 = arith.constant 1.000000e+00 : f32
    %934 = vector.broadcast %cst_263 : f32 to vector<2x32xf32>
    %935 = arith.divf %934, %933 : vector<2x32xf32>
    %936 = vector.extract_strided_slice %888 {offsets = [0, 64], sizes = [2, 32], strides = [1, 1]} : vector<2x128xf32> to vector<2x32xf32>
    %937 = math.tanh %936 : vector<2x32xf32>
    %938 = vector.extract_strided_slice %888 {offsets = [0, 96], sizes = [2, 32], strides = [1, 1]} : vector<2x128xf32> to vector<2x32xf32>
    %cst_264 = arith.constant 0.000000e+00 : f32
    %939 = vector.broadcast %cst_264 : f32 to vector<2x32xf32>
    %940 = arith.subf %939, %938 : vector<2x32xf32>
    %941 = math.exp %940 : vector<2x32xf32>
    %cst_265 = arith.constant 1.000000e+00 : f32
    %942 = vector.broadcast %cst_265 : f32 to vector<2x32xf32>
    %943 = arith.addf %942, %941 : vector<2x32xf32>
    %cst_266 = arith.constant 1.000000e+00 : f32
    %944 = vector.broadcast %cst_266 : f32 to vector<2x32xf32>
    %945 = arith.divf %944, %943 : vector<2x32xf32>
    %946 = arith.mulf %935, %877 : vector<2x32xf32>
    %947 = arith.mulf %927, %937 : vector<2x32xf32>
    %948 = arith.addf %946, %947 : vector<2x32xf32>
    %949 = math.tanh %948 : vector<2x32xf32>
    %950 = arith.mulf %945, %949 : vector<2x32xf32>
    %951 = tpu.concatenate %919, %950 in 1 : vector<2x32xf32>, vector<2x32xf32> -> vector<2x64xf32>
    %952 = arith.truncf %951 : vector<2x64xf32> to vector<2x64xbf16>
    %cst_267 = arith.constant dense<0.000000e+00> : vector<2x256xf32>
    %953 = tpu.matmul %952, %589, %cst_267 {dimension_numbers = #tpu.dot_dimension_numbers<[1], [0], [0], [1], [0, 0, 1, 1], [], []>} : vector<2x64xbf16>, vector<64x256xbf16>, vector<2x256xf32> -> vector<2x256xf32>
    %954 = vector.extract_strided_slice %593 {offsets = [10, 0], sizes = [2, 128], strides = [1, 1]} : vector<16x256xf32> to vector<2x128xf32>
    %955 = vector.extract_strided_slice %953 {offsets = [0, 0], sizes = [2, 128], strides = [1, 1]} : vector<2x256xf32> to vector<2x128xf32>
    %956 = arith.addf %954, %955 : vector<2x128xf32>
    %957 = vector.extract_strided_slice %593 {offsets = [4, 128], sizes = [2, 128], strides = [1, 1]} : vector<16x256xf32> to vector<2x128xf32>
    %958 = vector.extract_strided_slice %953 {offsets = [0, 128], sizes = [2, 128], strides = [1, 1]} : vector<2x256xf32> to vector<2x128xf32>
    %959 = arith.addf %957, %958 : vector<2x128xf32>
    %960 = vector.extract_strided_slice %956 {offsets = [0, 0], sizes = [2, 32], strides = [1, 1]} : vector<2x128xf32> to vector<2x32xf32>
    %cst_268 = arith.constant 0.000000e+00 : f32
    %961 = vector.broadcast %cst_268 : f32 to vector<2x32xf32>
    %962 = arith.subf %961, %960 : vector<2x32xf32>
    %963 = math.exp %962 : vector<2x32xf32>
    %cst_269 = arith.constant 1.000000e+00 : f32
    %964 = vector.broadcast %cst_269 : f32 to vector<2x32xf32>
    %965 = arith.addf %964, %963 : vector<2x32xf32>
    %cst_270 = arith.constant 1.000000e+00 : f32
    %966 = vector.broadcast %cst_270 : f32 to vector<2x32xf32>
    %967 = arith.divf %966, %965 : vector<2x32xf32>
    %968 = vector.extract_strided_slice %956 {offsets = [0, 32], sizes = [2, 32], strides = [1, 1]} : vector<2x128xf32> to vector<2x32xf32>
    %cst_271 = arith.constant 0.000000e+00 : f32
    %969 = vector.broadcast %cst_271 : f32 to vector<2x32xf32>
    %970 = arith.subf %969, %968 : vector<2x32xf32>
    %971 = math.exp %970 : vector<2x32xf32>
    %cst_272 = arith.constant 1.000000e+00 : f32
    %972 = vector.broadcast %cst_272 : f32 to vector<2x32xf32>
    %973 = arith.addf %972, %971 : vector<2x32xf32>
    %cst_273 = arith.constant 1.000000e+00 : f32
    %974 = vector.broadcast %cst_273 : f32 to vector<2x32xf32>
    %975 = arith.divf %974, %973 : vector<2x32xf32>
    %976 = vector.extract_strided_slice %956 {offsets = [0, 64], sizes = [2, 32], strides = [1, 1]} : vector<2x128xf32> to vector<2x32xf32>
    %977 = math.tanh %976 : vector<2x32xf32>
    %978 = vector.extract_strided_slice %956 {offsets = [0, 96], sizes = [2, 32], strides = [1, 1]} : vector<2x128xf32> to vector<2x32xf32>
    %cst_274 = arith.constant 0.000000e+00 : f32
    %979 = vector.broadcast %cst_274 : f32 to vector<2x32xf32>
    %980 = arith.subf %979, %978 : vector<2x32xf32>
    %981 = math.exp %980 : vector<2x32xf32>
    %cst_275 = arith.constant 1.000000e+00 : f32
    %982 = vector.broadcast %cst_275 : f32 to vector<2x32xf32>
    %983 = arith.addf %982, %981 : vector<2x32xf32>
    %cst_276 = arith.constant 1.000000e+00 : f32
    %984 = vector.broadcast %cst_276 : f32 to vector<2x32xf32>
    %985 = arith.divf %984, %983 : vector<2x32xf32>
    %986 = arith.mulf %975, %917 : vector<2x32xf32>
    %987 = arith.mulf %967, %977 : vector<2x32xf32>
    %988 = arith.addf %986, %987 : vector<2x32xf32>
    %989 = math.tanh %988 : vector<2x32xf32>
    %990 = arith.mulf %985, %989 : vector<2x32xf32>
    %991 = vector.extract_strided_slice %959 {offsets = [0, 0], sizes = [2, 32], strides = [1, 1]} : vector<2x128xf32> to vector<2x32xf32>
    %cst_277 = arith.constant 0.000000e+00 : f32
    %992 = vector.broadcast %cst_277 : f32 to vector<2x32xf32>
    %993 = arith.subf %992, %991 : vector<2x32xf32>
    %994 = math.exp %993 : vector<2x32xf32>
    %cst_278 = arith.constant 1.000000e+00 : f32
    %995 = vector.broadcast %cst_278 : f32 to vector<2x32xf32>
    %996 = arith.addf %995, %994 : vector<2x32xf32>
    %cst_279 = arith.constant 1.000000e+00 : f32
    %997 = vector.broadcast %cst_279 : f32 to vector<2x32xf32>
    %998 = arith.divf %997, %996 : vector<2x32xf32>
    %999 = vector.extract_strided_slice %959 {offsets = [0, 32], sizes = [2, 32], strides = [1, 1]} : vector<2x128xf32> to vector<2x32xf32>
    %cst_280 = arith.constant 0.000000e+00 : f32
    %1000 = vector.broadcast %cst_280 : f32 to vector<2x32xf32>
    %1001 = arith.subf %1000, %999 : vector<2x32xf32>
    %1002 = math.exp %1001 : vector<2x32xf32>
    %cst_281 = arith.constant 1.000000e+00 : f32
    %1003 = vector.broadcast %cst_281 : f32 to vector<2x32xf32>
    %1004 = arith.addf %1003, %1002 : vector<2x32xf32>
    %cst_282 = arith.constant 1.000000e+00 : f32
    %1005 = vector.broadcast %cst_282 : f32 to vector<2x32xf32>
    %1006 = arith.divf %1005, %1004 : vector<2x32xf32>
    %1007 = vector.extract_strided_slice %959 {offsets = [0, 64], sizes = [2, 32], strides = [1, 1]} : vector<2x128xf32> to vector<2x32xf32>
    %1008 = math.tanh %1007 : vector<2x32xf32>
    %1009 = vector.extract_strided_slice %959 {offsets = [0, 96], sizes = [2, 32], strides = [1, 1]} : vector<2x128xf32> to vector<2x32xf32>
    %cst_283 = arith.constant 0.000000e+00 : f32
    %1010 = vector.broadcast %cst_283 : f32 to vector<2x32xf32>
    %1011 = arith.subf %1010, %1009 : vector<2x32xf32>
    %1012 = math.exp %1011 : vector<2x32xf32>
    %cst_284 = arith.constant 1.000000e+00 : f32
    %1013 = vector.broadcast %cst_284 : f32 to vector<2x32xf32>
    %1014 = arith.addf %1013, %1012 : vector<2x32xf32>
    %cst_285 = arith.constant 1.000000e+00 : f32
    %1015 = vector.broadcast %cst_285 : f32 to vector<2x32xf32>
    %1016 = arith.divf %1015, %1014 : vector<2x32xf32>
    %1017 = arith.mulf %1006, %948 : vector<2x32xf32>
    %1018 = arith.mulf %998, %1008 : vector<2x32xf32>
    %1019 = arith.addf %1017, %1018 : vector<2x32xf32>
    %1020 = math.tanh %1019 : vector<2x32xf32>
    %1021 = arith.mulf %1016, %1020 : vector<2x32xf32>
    %1022 = tpu.concatenate %990, %1021 in 1 : vector<2x32xf32>, vector<2x32xf32> -> vector<2x64xf32>
    %1023 = arith.truncf %1022 : vector<2x64xf32> to vector<2x64xbf16>
    %cst_286 = arith.constant dense<0.000000e+00> : vector<2x256xf32>
    %1024 = tpu.matmul %1023, %589, %cst_286 {dimension_numbers = #tpu.dot_dimension_numbers<[1], [0], [0], [1], [0, 0, 1, 1], [], []>} : vector<2x64xbf16>, vector<64x256xbf16>, vector<2x256xf32> -> vector<2x256xf32>
    %1025 = vector.extract_strided_slice %593 {offsets = [12, 0], sizes = [2, 128], strides = [1, 1]} : vector<16x256xf32> to vector<2x128xf32>
    %1026 = vector.extract_strided_slice %1024 {offsets = [0, 0], sizes = [2, 128], strides = [1, 1]} : vector<2x256xf32> to vector<2x128xf32>
    %1027 = arith.addf %1025, %1026 : vector<2x128xf32>
    %1028 = vector.extract_strided_slice %593 {offsets = [2, 128], sizes = [2, 128], strides = [1, 1]} : vector<16x256xf32> to vector<2x128xf32>
    %1029 = vector.extract_strided_slice %1024 {offsets = [0, 128], sizes = [2, 128], strides = [1, 1]} : vector<2x256xf32> to vector<2x128xf32>
    %1030 = arith.addf %1028, %1029 : vector<2x128xf32>
    %1031 = vector.extract_strided_slice %1027 {offsets = [0, 0], sizes = [2, 32], strides = [1, 1]} : vector<2x128xf32> to vector<2x32xf32>
    %cst_287 = arith.constant 0.000000e+00 : f32
    %1032 = vector.broadcast %cst_287 : f32 to vector<2x32xf32>
    %1033 = arith.subf %1032, %1031 : vector<2x32xf32>
    %1034 = math.exp %1033 : vector<2x32xf32>
    %cst_288 = arith.constant 1.000000e+00 : f32
    %1035 = vector.broadcast %cst_288 : f32 to vector<2x32xf32>
    %1036 = arith.addf %1035, %1034 : vector<2x32xf32>
    %cst_289 = arith.constant 1.000000e+00 : f32
    %1037 = vector.broadcast %cst_289 : f32 to vector<2x32xf32>
    %1038 = arith.divf %1037, %1036 : vector<2x32xf32>
    %1039 = vector.extract_strided_slice %1027 {offsets = [0, 32], sizes = [2, 32], strides = [1, 1]} : vector<2x128xf32> to vector<2x32xf32>
    %cst_290 = arith.constant 0.000000e+00 : f32
    %1040 = vector.broadcast %cst_290 : f32 to vector<2x32xf32>
    %1041 = arith.subf %1040, %1039 : vector<2x32xf32>
    %1042 = math.exp %1041 : vector<2x32xf32>
    %cst_291 = arith.constant 1.000000e+00 : f32
    %1043 = vector.broadcast %cst_291 : f32 to vector<2x32xf32>
    %1044 = arith.addf %1043, %1042 : vector<2x32xf32>
    %cst_292 = arith.constant 1.000000e+00 : f32
    %1045 = vector.broadcast %cst_292 : f32 to vector<2x32xf32>
    %1046 = arith.divf %1045, %1044 : vector<2x32xf32>
    %1047 = vector.extract_strided_slice %1027 {offsets = [0, 64], sizes = [2, 32], strides = [1, 1]} : vector<2x128xf32> to vector<2x32xf32>
    %1048 = math.tanh %1047 : vector<2x32xf32>
    %1049 = vector.extract_strided_slice %1027 {offsets = [0, 96], sizes = [2, 32], strides = [1, 1]} : vector<2x128xf32> to vector<2x32xf32>
    %cst_293 = arith.constant 0.000000e+00 : f32
    %1050 = vector.broadcast %cst_293 : f32 to vector<2x32xf32>
    %1051 = arith.subf %1050, %1049 : vector<2x32xf32>
    %1052 = math.exp %1051 : vector<2x32xf32>
    %cst_294 = arith.constant 1.000000e+00 : f32
    %1053 = vector.broadcast %cst_294 : f32 to vector<2x32xf32>
    %1054 = arith.addf %1053, %1052 : vector<2x32xf32>
    %cst_295 = arith.constant 1.000000e+00 : f32
    %1055 = vector.broadcast %cst_295 : f32 to vector<2x32xf32>
    %1056 = arith.divf %1055, %1054 : vector<2x32xf32>
    %1057 = arith.mulf %1046, %988 : vector<2x32xf32>
    %1058 = arith.mulf %1038, %1048 : vector<2x32xf32>
    %1059 = arith.addf %1057, %1058 : vector<2x32xf32>
    %1060 = math.tanh %1059 : vector<2x32xf32>
    %1061 = arith.mulf %1056, %1060 : vector<2x32xf32>
    %1062 = vector.extract_strided_slice %1030 {offsets = [0, 0], sizes = [2, 32], strides = [1, 1]} : vector<2x128xf32> to vector<2x32xf32>
    %cst_296 = arith.constant 0.000000e+00 : f32
    %1063 = vector.broadcast %cst_296 : f32 to vector<2x32xf32>
    %1064 = arith.subf %1063, %1062 : vector<2x32xf32>
    %1065 = math.exp %1064 : vector<2x32xf32>
    %cst_297 = arith.constant 1.000000e+00 : f32
    %1066 = vector.broadcast %cst_297 : f32 to vector<2x32xf32>
    %1067 = arith.addf %1066, %1065 : vector<2x32xf32>
    %cst_298 = arith.constant 1.000000e+00 : f32
    %1068 = vector.broadcast %cst_298 : f32 to vector<2x32xf32>
    %1069 = arith.divf %1068, %1067 : vector<2x32xf32>
    %1070 = vector.extract_strided_slice %1030 {offsets = [0, 32], sizes = [2, 32], strides = [1, 1]} : vector<2x128xf32> to vector<2x32xf32>
    %cst_299 = arith.constant 0.000000e+00 : f32
    %1071 = vector.broadcast %cst_299 : f32 to vector<2x32xf32>
    %1072 = arith.subf %1071, %1070 : vector<2x32xf32>
    %1073 = math.exp %1072 : vector<2x32xf32>
    %cst_300 = arith.constant 1.000000e+00 : f32
    %1074 = vector.broadcast %cst_300 : f32 to vector<2x32xf32>
    %1075 = arith.addf %1074, %1073 : vector<2x32xf32>
    %cst_301 = arith.constant 1.000000e+00 : f32
    %1076 = vector.broadcast %cst_301 : f32 to vector<2x32xf32>
    %1077 = arith.divf %1076, %1075 : vector<2x32xf32>
    %1078 = vector.extract_strided_slice %1030 {offsets = [0, 64], sizes = [2, 32], strides = [1, 1]} : vector<2x128xf32> to vector<2x32xf32>
    %1079 = math.tanh %1078 : vector<2x32xf32>
    %1080 = vector.extract_strided_slice %1030 {offsets = [0, 96], sizes = [2, 32], strides = [1, 1]} : vector<2x128xf32> to vector<2x32xf32>
    %cst_302 = arith.constant 0.000000e+00 : f32
    %1081 = vector.broadcast %cst_302 : f32 to vector<2x32xf32>
    %1082 = arith.subf %1081, %1080 : vector<2x32xf32>
    %1083 = math.exp %1082 : vector<2x32xf32>
    %cst_303 = arith.constant 1.000000e+00 : f32
    %1084 = vector.broadcast %cst_303 : f32 to vector<2x32xf32>
    %1085 = arith.addf %1084, %1083 : vector<2x32xf32>
    %cst_304 = arith.constant 1.000000e+00 : f32
    %1086 = vector.broadcast %cst_304 : f32 to vector<2x32xf32>
    %1087 = arith.divf %1086, %1085 : vector<2x32xf32>
    %1088 = arith.mulf %1077, %1019 : vector<2x32xf32>
    %1089 = arith.mulf %1069, %1079 : vector<2x32xf32>
    %1090 = arith.addf %1088, %1089 : vector<2x32xf32>
    %1091 = math.tanh %1090 : vector<2x32xf32>
    %1092 = arith.mulf %1087, %1091 : vector<2x32xf32>
    %1093 = tpu.concatenate %1061, %1092 in 1 : vector<2x32xf32>, vector<2x32xf32> -> vector<2x64xf32>
    %1094 = arith.truncf %1093 : vector<2x64xf32> to vector<2x64xbf16>
    %cst_305 = arith.constant dense<0.000000e+00> : vector<2x256xf32>
    %1095 = tpu.matmul %1094, %589, %cst_305 {dimension_numbers = #tpu.dot_dimension_numbers<[1], [0], [0], [1], [0, 0, 1, 1], [], []>} : vector<2x64xbf16>, vector<64x256xbf16>, vector<2x256xf32> -> vector<2x256xf32>
    %1096 = vector.extract_strided_slice %593 {offsets = [14, 0], sizes = [2, 128], strides = [1, 1]} : vector<16x256xf32> to vector<2x128xf32>
    %1097 = vector.extract_strided_slice %1095 {offsets = [0, 0], sizes = [2, 128], strides = [1, 1]} : vector<2x256xf32> to vector<2x128xf32>
    %1098 = arith.addf %1096, %1097 : vector<2x128xf32>
    %1099 = vector.extract_strided_slice %593 {offsets = [0, 128], sizes = [2, 128], strides = [1, 1]} : vector<16x256xf32> to vector<2x128xf32>
    %1100 = vector.extract_strided_slice %1095 {offsets = [0, 128], sizes = [2, 128], strides = [1, 1]} : vector<2x256xf32> to vector<2x128xf32>
    %1101 = arith.addf %1099, %1100 : vector<2x128xf32>
    %1102 = vector.extract_strided_slice %1098 {offsets = [0, 0], sizes = [2, 32], strides = [1, 1]} : vector<2x128xf32> to vector<2x32xf32>
    %cst_306 = arith.constant 0.000000e+00 : f32
    %1103 = vector.broadcast %cst_306 : f32 to vector<2x32xf32>
    %1104 = arith.subf %1103, %1102 : vector<2x32xf32>
    %1105 = math.exp %1104 : vector<2x32xf32>
    %cst_307 = arith.constant 1.000000e+00 : f32
    %1106 = vector.broadcast %cst_307 : f32 to vector<2x32xf32>
    %1107 = arith.addf %1106, %1105 : vector<2x32xf32>
    %cst_308 = arith.constant 1.000000e+00 : f32
    %1108 = vector.broadcast %cst_308 : f32 to vector<2x32xf32>
    %1109 = arith.divf %1108, %1107 : vector<2x32xf32>
    %1110 = vector.extract_strided_slice %1098 {offsets = [0, 32], sizes = [2, 32], strides = [1, 1]} : vector<2x128xf32> to vector<2x32xf32>
    %cst_309 = arith.constant 0.000000e+00 : f32
    %1111 = vector.broadcast %cst_309 : f32 to vector<2x32xf32>
    %1112 = arith.subf %1111, %1110 : vector<2x32xf32>
    %1113 = math.exp %1112 : vector<2x32xf32>
    %cst_310 = arith.constant 1.000000e+00 : f32
    %1114 = vector.broadcast %cst_310 : f32 to vector<2x32xf32>
    %1115 = arith.addf %1114, %1113 : vector<2x32xf32>
    %cst_311 = arith.constant 1.000000e+00 : f32
    %1116 = vector.broadcast %cst_311 : f32 to vector<2x32xf32>
    %1117 = arith.divf %1116, %1115 : vector<2x32xf32>
    %1118 = vector.extract_strided_slice %1098 {offsets = [0, 64], sizes = [2, 32], strides = [1, 1]} : vector<2x128xf32> to vector<2x32xf32>
    %1119 = math.tanh %1118 : vector<2x32xf32>
    %1120 = vector.extract_strided_slice %1098 {offsets = [0, 96], sizes = [2, 32], strides = [1, 1]} : vector<2x128xf32> to vector<2x32xf32>
    %cst_312 = arith.constant 0.000000e+00 : f32
    %1121 = vector.broadcast %cst_312 : f32 to vector<2x32xf32>
    %1122 = arith.subf %1121, %1120 : vector<2x32xf32>
    %1123 = math.exp %1122 : vector<2x32xf32>
    %cst_313 = arith.constant 1.000000e+00 : f32
    %1124 = vector.broadcast %cst_313 : f32 to vector<2x32xf32>
    %1125 = arith.addf %1124, %1123 : vector<2x32xf32>
    %cst_314 = arith.constant 1.000000e+00 : f32
    %1126 = vector.broadcast %cst_314 : f32 to vector<2x32xf32>
    %1127 = arith.divf %1126, %1125 : vector<2x32xf32>
    %1128 = arith.mulf %1117, %1059 : vector<2x32xf32>
    %1129 = arith.mulf %1109, %1119 : vector<2x32xf32>
    %1130 = arith.addf %1128, %1129 : vector<2x32xf32>
    %1131 = math.tanh %1130 : vector<2x32xf32>
    %1132 = arith.mulf %1127, %1131 : vector<2x32xf32>
    %1133 = vector.extract_strided_slice %1101 {offsets = [0, 0], sizes = [2, 32], strides = [1, 1]} : vector<2x128xf32> to vector<2x32xf32>
    %cst_315 = arith.constant 0.000000e+00 : f32
    %1134 = vector.broadcast %cst_315 : f32 to vector<2x32xf32>
    %1135 = arith.subf %1134, %1133 : vector<2x32xf32>
    %1136 = math.exp %1135 : vector<2x32xf32>
    %cst_316 = arith.constant 1.000000e+00 : f32
    %1137 = vector.broadcast %cst_316 : f32 to vector<2x32xf32>
    %1138 = arith.addf %1137, %1136 : vector<2x32xf32>
    %cst_317 = arith.constant 1.000000e+00 : f32
    %1139 = vector.broadcast %cst_317 : f32 to vector<2x32xf32>
    %1140 = arith.divf %1139, %1138 : vector<2x32xf32>
    %1141 = vector.extract_strided_slice %1101 {offsets = [0, 32], sizes = [2, 32], strides = [1, 1]} : vector<2x128xf32> to vector<2x32xf32>
    %cst_318 = arith.constant 0.000000e+00 : f32
    %1142 = vector.broadcast %cst_318 : f32 to vector<2x32xf32>
    %1143 = arith.subf %1142, %1141 : vector<2x32xf32>
    %1144 = math.exp %1143 : vector<2x32xf32>
    %cst_319 = arith.constant 1.000000e+00 : f32
    %1145 = vector.broadcast %cst_319 : f32 to vector<2x32xf32>
    %1146 = arith.addf %1145, %1144 : vector<2x32xf32>
    %cst_320 = arith.constant 1.000000e+00 : f32
    %1147 = vector.broadcast %cst_320 : f32 to vector<2x32xf32>
    %1148 = arith.divf %1147, %1146 : vector<2x32xf32>
    %1149 = vector.extract_strided_slice %1101 {offsets = [0, 64], sizes = [2, 32], strides = [1, 1]} : vector<2x128xf32> to vector<2x32xf32>
    %1150 = math.tanh %1149 : vector<2x32xf32>
    %1151 = vector.extract_strided_slice %1101 {offsets = [0, 96], sizes = [2, 32], strides = [1, 1]} : vector<2x128xf32> to vector<2x32xf32>
    %cst_321 = arith.constant 0.000000e+00 : f32
    %1152 = vector.broadcast %cst_321 : f32 to vector<2x32xf32>
    %1153 = arith.subf %1152, %1151 : vector<2x32xf32>
    %1154 = math.exp %1153 : vector<2x32xf32>
    %cst_322 = arith.constant 1.000000e+00 : f32
    %1155 = vector.broadcast %cst_322 : f32 to vector<2x32xf32>
    %1156 = arith.addf %1155, %1154 : vector<2x32xf32>
    %cst_323 = arith.constant 1.000000e+00 : f32
    %1157 = vector.broadcast %cst_323 : f32 to vector<2x32xf32>
    %1158 = arith.divf %1157, %1156 : vector<2x32xf32>
    %1159 = arith.mulf %1148, %1090 : vector<2x32xf32>
    %1160 = arith.mulf %1140, %1150 : vector<2x32xf32>
    %1161 = arith.addf %1159, %1160 : vector<2x32xf32>
    %1162 = math.tanh %1161 : vector<2x32xf32>
    %1163 = arith.mulf %1158, %1162 : vector<2x32xf32>
    %1164 = tpu.concatenate %1132, %1163 in 1 : vector<2x32xf32>, vector<2x32xf32> -> vector<2x64xf32>
    %1165 = tpu.concatenate %577, %1164 in 1 : vector<2x64xf32>, vector<2x64xf32> -> vector<2x128xf32>
    %c0_324 = arith.constant 0 : index
    %c0_325 = arith.constant 0 : index
    %1166 = vector.load %arg1[%c0_324, %c0_325] : memref<32x32xbf16, #tpu.memory_space<vmem>>, vector<32x32xbf16>
    %c0_326 = arith.constant 0 : index
    %c0_327 = arith.constant 0 : index
    %1167 = vector.load %arg8[%c0_326, %c0_327] : memref<32x256xbf16, #tpu.memory_space<vmem>>, vector<32x256xbf16>
    %c0_328 = arith.constant 0 : index
    %c0_329 = arith.constant 0 : index
    %1168 = vector.load %arg9[%c0_328, %c0_329] : memref<64x256xbf16, #tpu.memory_space<vmem>>, vector<64x256xbf16>
    %c0_330 = arith.constant 0 : index
    %c0_331 = arith.constant 0 : index
    %1169 = vector.load %arg10[%c0_330, %c0_331] : memref<1x256xf32, #tpu.memory_space<vmem>>, vector<1x256xf32>
    %cst_332 = arith.constant dense<0.000000e+00> : vector<32x256xf32>
    %1170 = tpu.matmul %1166, %1167, %cst_332 {dimension_numbers = #tpu.dot_dimension_numbers<[1], [0], [0], [1], [0, 0, 1, 1], [], []>} : vector<32x32xbf16>, vector<32x256xbf16>, vector<32x256xf32> -> vector<32x256xf32>
    %1171 = vector.broadcast %1169 : vector<1x256xf32> to vector<32x256xf32>
    %1172 = arith.addf %1170, %1171 : vector<32x256xf32>
    %cst_333 = arith.constant 0.000000e+00 : f32
    %1173 = vector.broadcast %cst_333 : f32 to vector<4x64xf32>
    %cst_334 = arith.constant 0.000000e+00 : f32
    %1174 = vector.broadcast %cst_334 : f32 to vector<4x32xf32>
    %cst_335 = arith.constant 0.000000e+00 : f32
    %1175 = vector.broadcast %cst_335 : f32 to vector<4x32xf32>
    %1176 = arith.truncf %1173 : vector<4x64xf32> to vector<4x64xbf16>
    %cst_336 = arith.constant dense<0.000000e+00> : vector<4x256xf32>
    %1177 = tpu.matmul %1176, %1168, %cst_336 {dimension_numbers = #tpu.dot_dimension_numbers<[1], [0], [0], [1], [0, 0, 1, 1], [], []>} : vector<4x64xbf16>, vector<64x256xbf16>, vector<4x256xf32> -> vector<4x256xf32>
    %1178 = vector.extract_strided_slice %1172 {offsets = [0, 0], sizes = [4, 128], strides = [1, 1]} : vector<32x256xf32> to vector<4x128xf32>
    %1179 = vector.extract_strided_slice %1177 {offsets = [0, 0], sizes = [4, 128], strides = [1, 1]} : vector<4x256xf32> to vector<4x128xf32>
    %1180 = arith.addf %1178, %1179 : vector<4x128xf32>
    %1181 = vector.extract_strided_slice %1172 {offsets = [28, 128], sizes = [4, 128], strides = [1, 1]} : vector<32x256xf32> to vector<4x128xf32>
    %1182 = vector.extract_strided_slice %1177 {offsets = [0, 128], sizes = [4, 128], strides = [1, 1]} : vector<4x256xf32> to vector<4x128xf32>
    %1183 = arith.addf %1181, %1182 : vector<4x128xf32>
    %1184 = vector.extract_strided_slice %1180 {offsets = [0, 0], sizes = [4, 32], strides = [1, 1]} : vector<4x128xf32> to vector<4x32xf32>
    %cst_337 = arith.constant 0.000000e+00 : f32
    %1185 = vector.broadcast %cst_337 : f32 to vector<4x32xf32>
    %1186 = arith.subf %1185, %1184 : vector<4x32xf32>
    %1187 = math.exp %1186 : vector<4x32xf32>
    %cst_338 = arith.constant 1.000000e+00 : f32
    %1188 = vector.broadcast %cst_338 : f32 to vector<4x32xf32>
    %1189 = arith.addf %1188, %1187 : vector<4x32xf32>
    %cst_339 = arith.constant 1.000000e+00 : f32
    %1190 = vector.broadcast %cst_339 : f32 to vector<4x32xf32>
    %1191 = arith.divf %1190, %1189 : vector<4x32xf32>
    %1192 = vector.extract_strided_slice %1180 {offsets = [0, 32], sizes = [4, 32], strides = [1, 1]} : vector<4x128xf32> to vector<4x32xf32>
    %cst_340 = arith.constant 0.000000e+00 : f32
    %1193 = vector.broadcast %cst_340 : f32 to vector<4x32xf32>
    %1194 = arith.subf %1193, %1192 : vector<4x32xf32>
    %1195 = math.exp %1194 : vector<4x32xf32>
    %cst_341 = arith.constant 1.000000e+00 : f32
    %1196 = vector.broadcast %cst_341 : f32 to vector<4x32xf32>
    %1197 = arith.addf %1196, %1195 : vector<4x32xf32>
    %cst_342 = arith.constant 1.000000e+00 : f32
    %1198 = vector.broadcast %cst_342 : f32 to vector<4x32xf32>
    %1199 = arith.divf %1198, %1197 : vector<4x32xf32>
    %1200 = vector.extract_strided_slice %1180 {offsets = [0, 64], sizes = [4, 32], strides = [1, 1]} : vector<4x128xf32> to vector<4x32xf32>
    %1201 = math.tanh %1200 : vector<4x32xf32>
    %1202 = vector.extract_strided_slice %1180 {offsets = [0, 96], sizes = [4, 32], strides = [1, 1]} : vector<4x128xf32> to vector<4x32xf32>
    %cst_343 = arith.constant 0.000000e+00 : f32
    %1203 = vector.broadcast %cst_343 : f32 to vector<4x32xf32>
    %1204 = arith.subf %1203, %1202 : vector<4x32xf32>
    %1205 = math.exp %1204 : vector<4x32xf32>
    %cst_344 = arith.constant 1.000000e+00 : f32
    %1206 = vector.broadcast %cst_344 : f32 to vector<4x32xf32>
    %1207 = arith.addf %1206, %1205 : vector<4x32xf32>
    %cst_345 = arith.constant 1.000000e+00 : f32
    %1208 = vector.broadcast %cst_345 : f32 to vector<4x32xf32>
    %1209 = arith.divf %1208, %1207 : vector<4x32xf32>
    %1210 = arith.mulf %1199, %1174 : vector<4x32xf32>
    %1211 = arith.mulf %1191, %1201 : vector<4x32xf32>
    %1212 = arith.addf %1210, %1211 : vector<4x32xf32>
    %1213 = math.tanh %1212 : vector<4x32xf32>
    %1214 = arith.mulf %1209, %1213 : vector<4x32xf32>
    %1215 = vector.extract_strided_slice %1183 {offsets = [0, 0], sizes = [4, 32], strides = [1, 1]} : vector<4x128xf32> to vector<4x32xf32>
    %cst_346 = arith.constant 0.000000e+00 : f32
    %1216 = vector.broadcast %cst_346 : f32 to vector<4x32xf32>
    %1217 = arith.subf %1216, %1215 : vector<4x32xf32>
    %1218 = math.exp %1217 : vector<4x32xf32>
    %cst_347 = arith.constant 1.000000e+00 : f32
    %1219 = vector.broadcast %cst_347 : f32 to vector<4x32xf32>
    %1220 = arith.addf %1219, %1218 : vector<4x32xf32>
    %cst_348 = arith.constant 1.000000e+00 : f32
    %1221 = vector.broadcast %cst_348 : f32 to vector<4x32xf32>
    %1222 = arith.divf %1221, %1220 : vector<4x32xf32>
    %1223 = vector.extract_strided_slice %1183 {offsets = [0, 32], sizes = [4, 32], strides = [1, 1]} : vector<4x128xf32> to vector<4x32xf32>
    %cst_349 = arith.constant 0.000000e+00 : f32
    %1224 = vector.broadcast %cst_349 : f32 to vector<4x32xf32>
    %1225 = arith.subf %1224, %1223 : vector<4x32xf32>
    %1226 = math.exp %1225 : vector<4x32xf32>
    %cst_350 = arith.constant 1.000000e+00 : f32
    %1227 = vector.broadcast %cst_350 : f32 to vector<4x32xf32>
    %1228 = arith.addf %1227, %1226 : vector<4x32xf32>
    %cst_351 = arith.constant 1.000000e+00 : f32
    %1229 = vector.broadcast %cst_351 : f32 to vector<4x32xf32>
    %1230 = arith.divf %1229, %1228 : vector<4x32xf32>
    %1231 = vector.extract_strided_slice %1183 {offsets = [0, 64], sizes = [4, 32], strides = [1, 1]} : vector<4x128xf32> to vector<4x32xf32>
    %1232 = math.tanh %1231 : vector<4x32xf32>
    %1233 = vector.extract_strided_slice %1183 {offsets = [0, 96], sizes = [4, 32], strides = [1, 1]} : vector<4x128xf32> to vector<4x32xf32>
    %cst_352 = arith.constant 0.000000e+00 : f32
    %1234 = vector.broadcast %cst_352 : f32 to vector<4x32xf32>
    %1235 = arith.subf %1234, %1233 : vector<4x32xf32>
    %1236 = math.exp %1235 : vector<4x32xf32>
    %cst_353 = arith.constant 1.000000e+00 : f32
    %1237 = vector.broadcast %cst_353 : f32 to vector<4x32xf32>
    %1238 = arith.addf %1237, %1236 : vector<4x32xf32>
    %cst_354 = arith.constant 1.000000e+00 : f32
    %1239 = vector.broadcast %cst_354 : f32 to vector<4x32xf32>
    %1240 = arith.divf %1239, %1238 : vector<4x32xf32>
    %1241 = arith.mulf %1230, %1175 : vector<4x32xf32>
    %1242 = arith.mulf %1222, %1232 : vector<4x32xf32>
    %1243 = arith.addf %1241, %1242 : vector<4x32xf32>
    %1244 = math.tanh %1243 : vector<4x32xf32>
    %1245 = arith.mulf %1240, %1244 : vector<4x32xf32>
    %1246 = tpu.concatenate %1214, %1245 in 1 : vector<4x32xf32>, vector<4x32xf32> -> vector<4x64xf32>
    %1247 = arith.truncf %1246 : vector<4x64xf32> to vector<4x64xbf16>
    %cst_355 = arith.constant dense<0.000000e+00> : vector<4x256xf32>
    %1248 = tpu.matmul %1247, %1168, %cst_355 {dimension_numbers = #tpu.dot_dimension_numbers<[1], [0], [0], [1], [0, 0, 1, 1], [], []>} : vector<4x64xbf16>, vector<64x256xbf16>, vector<4x256xf32> -> vector<4x256xf32>
    %1249 = vector.extract_strided_slice %1172 {offsets = [4, 0], sizes = [4, 128], strides = [1, 1]} : vector<32x256xf32> to vector<4x128xf32>
    %1250 = vector.extract_strided_slice %1248 {offsets = [0, 0], sizes = [4, 128], strides = [1, 1]} : vector<4x256xf32> to vector<4x128xf32>
    %1251 = arith.addf %1249, %1250 : vector<4x128xf32>
    %1252 = vector.extract_strided_slice %1172 {offsets = [24, 128], sizes = [4, 128], strides = [1, 1]} : vector<32x256xf32> to vector<4x128xf32>
    %1253 = vector.extract_strided_slice %1248 {offsets = [0, 128], sizes = [4, 128], strides = [1, 1]} : vector<4x256xf32> to vector<4x128xf32>
    %1254 = arith.addf %1252, %1253 : vector<4x128xf32>
    %1255 = vector.extract_strided_slice %1251 {offsets = [0, 0], sizes = [4, 32], strides = [1, 1]} : vector<4x128xf32> to vector<4x32xf32>
    %cst_356 = arith.constant 0.000000e+00 : f32
    %1256 = vector.broadcast %cst_356 : f32 to vector<4x32xf32>
    %1257 = arith.subf %1256, %1255 : vector<4x32xf32>
    %1258 = math.exp %1257 : vector<4x32xf32>
    %cst_357 = arith.constant 1.000000e+00 : f32
    %1259 = vector.broadcast %cst_357 : f32 to vector<4x32xf32>
    %1260 = arith.addf %1259, %1258 : vector<4x32xf32>
    %cst_358 = arith.constant 1.000000e+00 : f32
    %1261 = vector.broadcast %cst_358 : f32 to vector<4x32xf32>
    %1262 = arith.divf %1261, %1260 : vector<4x32xf32>
    %1263 = vector.extract_strided_slice %1251 {offsets = [0, 32], sizes = [4, 32], strides = [1, 1]} : vector<4x128xf32> to vector<4x32xf32>
    %cst_359 = arith.constant 0.000000e+00 : f32
    %1264 = vector.broadcast %cst_359 : f32 to vector<4x32xf32>
    %1265 = arith.subf %1264, %1263 : vector<4x32xf32>
    %1266 = math.exp %1265 : vector<4x32xf32>
    %cst_360 = arith.constant 1.000000e+00 : f32
    %1267 = vector.broadcast %cst_360 : f32 to vector<4x32xf32>
    %1268 = arith.addf %1267, %1266 : vector<4x32xf32>
    %cst_361 = arith.constant 1.000000e+00 : f32
    %1269 = vector.broadcast %cst_361 : f32 to vector<4x32xf32>
    %1270 = arith.divf %1269, %1268 : vector<4x32xf32>
    %1271 = vector.extract_strided_slice %1251 {offsets = [0, 64], sizes = [4, 32], strides = [1, 1]} : vector<4x128xf32> to vector<4x32xf32>
    %1272 = math.tanh %1271 : vector<4x32xf32>
    %1273 = vector.extract_strided_slice %1251 {offsets = [0, 96], sizes = [4, 32], strides = [1, 1]} : vector<4x128xf32> to vector<4x32xf32>
    %cst_362 = arith.constant 0.000000e+00 : f32
    %1274 = vector.broadcast %cst_362 : f32 to vector<4x32xf32>
    %1275 = arith.subf %1274, %1273 : vector<4x32xf32>
    %1276 = math.exp %1275 : vector<4x32xf32>
    %cst_363 = arith.constant 1.000000e+00 : f32
    %1277 = vector.broadcast %cst_363 : f32 to vector<4x32xf32>
    %1278 = arith.addf %1277, %1276 : vector<4x32xf32>
    %cst_364 = arith.constant 1.000000e+00 : f32
    %1279 = vector.broadcast %cst_364 : f32 to vector<4x32xf32>
    %1280 = arith.divf %1279, %1278 : vector<4x32xf32>
    %1281 = arith.mulf %1270, %1212 : vector<4x32xf32>
    %1282 = arith.mulf %1262, %1272 : vector<4x32xf32>
    %1283 = arith.addf %1281, %1282 : vector<4x32xf32>
    %1284 = math.tanh %1283 : vector<4x32xf32>
    %1285 = arith.mulf %1280, %1284 : vector<4x32xf32>
    %1286 = vector.extract_strided_slice %1254 {offsets = [0, 0], sizes = [4, 32], strides = [1, 1]} : vector<4x128xf32> to vector<4x32xf32>
    %cst_365 = arith.constant 0.000000e+00 : f32
    %1287 = vector.broadcast %cst_365 : f32 to vector<4x32xf32>
    %1288 = arith.subf %1287, %1286 : vector<4x32xf32>
    %1289 = math.exp %1288 : vector<4x32xf32>
    %cst_366 = arith.constant 1.000000e+00 : f32
    %1290 = vector.broadcast %cst_366 : f32 to vector<4x32xf32>
    %1291 = arith.addf %1290, %1289 : vector<4x32xf32>
    %cst_367 = arith.constant 1.000000e+00 : f32
    %1292 = vector.broadcast %cst_367 : f32 to vector<4x32xf32>
    %1293 = arith.divf %1292, %1291 : vector<4x32xf32>
    %1294 = vector.extract_strided_slice %1254 {offsets = [0, 32], sizes = [4, 32], strides = [1, 1]} : vector<4x128xf32> to vector<4x32xf32>
    %cst_368 = arith.constant 0.000000e+00 : f32
    %1295 = vector.broadcast %cst_368 : f32 to vector<4x32xf32>
    %1296 = arith.subf %1295, %1294 : vector<4x32xf32>
    %1297 = math.exp %1296 : vector<4x32xf32>
    %cst_369 = arith.constant 1.000000e+00 : f32
    %1298 = vector.broadcast %cst_369 : f32 to vector<4x32xf32>
    %1299 = arith.addf %1298, %1297 : vector<4x32xf32>
    %cst_370 = arith.constant 1.000000e+00 : f32
    %1300 = vector.broadcast %cst_370 : f32 to vector<4x32xf32>
    %1301 = arith.divf %1300, %1299 : vector<4x32xf32>
    %1302 = vector.extract_strided_slice %1254 {offsets = [0, 64], sizes = [4, 32], strides = [1, 1]} : vector<4x128xf32> to vector<4x32xf32>
    %1303 = math.tanh %1302 : vector<4x32xf32>
    %1304 = vector.extract_strided_slice %1254 {offsets = [0, 96], sizes = [4, 32], strides = [1, 1]} : vector<4x128xf32> to vector<4x32xf32>
    %cst_371 = arith.constant 0.000000e+00 : f32
    %1305 = vector.broadcast %cst_371 : f32 to vector<4x32xf32>
    %1306 = arith.subf %1305, %1304 : vector<4x32xf32>
    %1307 = math.exp %1306 : vector<4x32xf32>
    %cst_372 = arith.constant 1.000000e+00 : f32
    %1308 = vector.broadcast %cst_372 : f32 to vector<4x32xf32>
    %1309 = arith.addf %1308, %1307 : vector<4x32xf32>
    %cst_373 = arith.constant 1.000000e+00 : f32
    %1310 = vector.broadcast %cst_373 : f32 to vector<4x32xf32>
    %1311 = arith.divf %1310, %1309 : vector<4x32xf32>
    %1312 = arith.mulf %1301, %1243 : vector<4x32xf32>
    %1313 = arith.mulf %1293, %1303 : vector<4x32xf32>
    %1314 = arith.addf %1312, %1313 : vector<4x32xf32>
    %1315 = math.tanh %1314 : vector<4x32xf32>
    %1316 = arith.mulf %1311, %1315 : vector<4x32xf32>
    %1317 = tpu.concatenate %1285, %1316 in 1 : vector<4x32xf32>, vector<4x32xf32> -> vector<4x64xf32>
    %1318 = arith.truncf %1317 : vector<4x64xf32> to vector<4x64xbf16>
    %cst_374 = arith.constant dense<0.000000e+00> : vector<4x256xf32>
    %1319 = tpu.matmul %1318, %1168, %cst_374 {dimension_numbers = #tpu.dot_dimension_numbers<[1], [0], [0], [1], [0, 0, 1, 1], [], []>} : vector<4x64xbf16>, vector<64x256xbf16>, vector<4x256xf32> -> vector<4x256xf32>
    %1320 = vector.extract_strided_slice %1172 {offsets = [8, 0], sizes = [4, 128], strides = [1, 1]} : vector<32x256xf32> to vector<4x128xf32>
    %1321 = vector.extract_strided_slice %1319 {offsets = [0, 0], sizes = [4, 128], strides = [1, 1]} : vector<4x256xf32> to vector<4x128xf32>
    %1322 = arith.addf %1320, %1321 : vector<4x128xf32>
    %1323 = vector.extract_strided_slice %1172 {offsets = [20, 128], sizes = [4, 128], strides = [1, 1]} : vector<32x256xf32> to vector<4x128xf32>
    %1324 = vector.extract_strided_slice %1319 {offsets = [0, 128], sizes = [4, 128], strides = [1, 1]} : vector<4x256xf32> to vector<4x128xf32>
    %1325 = arith.addf %1323, %1324 : vector<4x128xf32>
    %1326 = vector.extract_strided_slice %1322 {offsets = [0, 0], sizes = [4, 32], strides = [1, 1]} : vector<4x128xf32> to vector<4x32xf32>
    %cst_375 = arith.constant 0.000000e+00 : f32
    %1327 = vector.broadcast %cst_375 : f32 to vector<4x32xf32>
    %1328 = arith.subf %1327, %1326 : vector<4x32xf32>
    %1329 = math.exp %1328 : vector<4x32xf32>
    %cst_376 = arith.constant 1.000000e+00 : f32
    %1330 = vector.broadcast %cst_376 : f32 to vector<4x32xf32>
    %1331 = arith.addf %1330, %1329 : vector<4x32xf32>
    %cst_377 = arith.constant 1.000000e+00 : f32
    %1332 = vector.broadcast %cst_377 : f32 to vector<4x32xf32>
    %1333 = arith.divf %1332, %1331 : vector<4x32xf32>
    %1334 = vector.extract_strided_slice %1322 {offsets = [0, 32], sizes = [4, 32], strides = [1, 1]} : vector<4x128xf32> to vector<4x32xf32>
    %cst_378 = arith.constant 0.000000e+00 : f32
    %1335 = vector.broadcast %cst_378 : f32 to vector<4x32xf32>
    %1336 = arith.subf %1335, %1334 : vector<4x32xf32>
    %1337 = math.exp %1336 : vector<4x32xf32>
    %cst_379 = arith.constant 1.000000e+00 : f32
    %1338 = vector.broadcast %cst_379 : f32 to vector<4x32xf32>
    %1339 = arith.addf %1338, %1337 : vector<4x32xf32>
    %cst_380 = arith.constant 1.000000e+00 : f32
    %1340 = vector.broadcast %cst_380 : f32 to vector<4x32xf32>
    %1341 = arith.divf %1340, %1339 : vector<4x32xf32>
    %1342 = vector.extract_strided_slice %1322 {offsets = [0, 64], sizes = [4, 32], strides = [1, 1]} : vector<4x128xf32> to vector<4x32xf32>
    %1343 = math.tanh %1342 : vector<4x32xf32>
    %1344 = vector.extract_strided_slice %1322 {offsets = [0, 96], sizes = [4, 32], strides = [1, 1]} : vector<4x128xf32> to vector<4x32xf32>
    %cst_381 = arith.constant 0.000000e+00 : f32
    %1345 = vector.broadcast %cst_381 : f32 to vector<4x32xf32>
    %1346 = arith.subf %1345, %1344 : vector<4x32xf32>
    %1347 = math.exp %1346 : vector<4x32xf32>
    %cst_382 = arith.constant 1.000000e+00 : f32
    %1348 = vector.broadcast %cst_382 : f32 to vector<4x32xf32>
    %1349 = arith.addf %1348, %1347 : vector<4x32xf32>
    %cst_383 = arith.constant 1.000000e+00 : f32
    %1350 = vector.broadcast %cst_383 : f32 to vector<4x32xf32>
    %1351 = arith.divf %1350, %1349 : vector<4x32xf32>
    %1352 = arith.mulf %1341, %1283 : vector<4x32xf32>
    %1353 = arith.mulf %1333, %1343 : vector<4x32xf32>
    %1354 = arith.addf %1352, %1353 : vector<4x32xf32>
    %1355 = math.tanh %1354 : vector<4x32xf32>
    %1356 = arith.mulf %1351, %1355 : vector<4x32xf32>
    %1357 = vector.extract_strided_slice %1325 {offsets = [0, 0], sizes = [4, 32], strides = [1, 1]} : vector<4x128xf32> to vector<4x32xf32>
    %cst_384 = arith.constant 0.000000e+00 : f32
    %1358 = vector.broadcast %cst_384 : f32 to vector<4x32xf32>
    %1359 = arith.subf %1358, %1357 : vector<4x32xf32>
    %1360 = math.exp %1359 : vector<4x32xf32>
    %cst_385 = arith.constant 1.000000e+00 : f32
    %1361 = vector.broadcast %cst_385 : f32 to vector<4x32xf32>
    %1362 = arith.addf %1361, %1360 : vector<4x32xf32>
    %cst_386 = arith.constant 1.000000e+00 : f32
    %1363 = vector.broadcast %cst_386 : f32 to vector<4x32xf32>
    %1364 = arith.divf %1363, %1362 : vector<4x32xf32>
    %1365 = vector.extract_strided_slice %1325 {offsets = [0, 32], sizes = [4, 32], strides = [1, 1]} : vector<4x128xf32> to vector<4x32xf32>
    %cst_387 = arith.constant 0.000000e+00 : f32
    %1366 = vector.broadcast %cst_387 : f32 to vector<4x32xf32>
    %1367 = arith.subf %1366, %1365 : vector<4x32xf32>
    %1368 = math.exp %1367 : vector<4x32xf32>
    %cst_388 = arith.constant 1.000000e+00 : f32
    %1369 = vector.broadcast %cst_388 : f32 to vector<4x32xf32>
    %1370 = arith.addf %1369, %1368 : vector<4x32xf32>
    %cst_389 = arith.constant 1.000000e+00 : f32
    %1371 = vector.broadcast %cst_389 : f32 to vector<4x32xf32>
    %1372 = arith.divf %1371, %1370 : vector<4x32xf32>
    %1373 = vector.extract_strided_slice %1325 {offsets = [0, 64], sizes = [4, 32], strides = [1, 1]} : vector<4x128xf32> to vector<4x32xf32>
    %1374 = math.tanh %1373 : vector<4x32xf32>
    %1375 = vector.extract_strided_slice %1325 {offsets = [0, 96], sizes = [4, 32], strides = [1, 1]} : vector<4x128xf32> to vector<4x32xf32>
    %cst_390 = arith.constant 0.000000e+00 : f32
    %1376 = vector.broadcast %cst_390 : f32 to vector<4x32xf32>
    %1377 = arith.subf %1376, %1375 : vector<4x32xf32>
    %1378 = math.exp %1377 : vector<4x32xf32>
    %cst_391 = arith.constant 1.000000e+00 : f32
    %1379 = vector.broadcast %cst_391 : f32 to vector<4x32xf32>
    %1380 = arith.addf %1379, %1378 : vector<4x32xf32>
    %cst_392 = arith.constant 1.000000e+00 : f32
    %1381 = vector.broadcast %cst_392 : f32 to vector<4x32xf32>
    %1382 = arith.divf %1381, %1380 : vector<4x32xf32>
    %1383 = arith.mulf %1372, %1314 : vector<4x32xf32>
    %1384 = arith.mulf %1364, %1374 : vector<4x32xf32>
    %1385 = arith.addf %1383, %1384 : vector<4x32xf32>
    %1386 = math.tanh %1385 : vector<4x32xf32>
    %1387 = arith.mulf %1382, %1386 : vector<4x32xf32>
    %1388 = tpu.concatenate %1356, %1387 in 1 : vector<4x32xf32>, vector<4x32xf32> -> vector<4x64xf32>
    %1389 = arith.truncf %1388 : vector<4x64xf32> to vector<4x64xbf16>
    %cst_393 = arith.constant dense<0.000000e+00> : vector<4x256xf32>
    %1390 = tpu.matmul %1389, %1168, %cst_393 {dimension_numbers = #tpu.dot_dimension_numbers<[1], [0], [0], [1], [0, 0, 1, 1], [], []>} : vector<4x64xbf16>, vector<64x256xbf16>, vector<4x256xf32> -> vector<4x256xf32>
    %1391 = vector.extract_strided_slice %1172 {offsets = [12, 0], sizes = [4, 128], strides = [1, 1]} : vector<32x256xf32> to vector<4x128xf32>
    %1392 = vector.extract_strided_slice %1390 {offsets = [0, 0], sizes = [4, 128], strides = [1, 1]} : vector<4x256xf32> to vector<4x128xf32>
    %1393 = arith.addf %1391, %1392 : vector<4x128xf32>
    %1394 = vector.extract_strided_slice %1172 {offsets = [16, 128], sizes = [4, 128], strides = [1, 1]} : vector<32x256xf32> to vector<4x128xf32>
    %1395 = vector.extract_strided_slice %1390 {offsets = [0, 128], sizes = [4, 128], strides = [1, 1]} : vector<4x256xf32> to vector<4x128xf32>
    %1396 = arith.addf %1394, %1395 : vector<4x128xf32>
    %1397 = vector.extract_strided_slice %1393 {offsets = [0, 0], sizes = [4, 32], strides = [1, 1]} : vector<4x128xf32> to vector<4x32xf32>
    %cst_394 = arith.constant 0.000000e+00 : f32
    %1398 = vector.broadcast %cst_394 : f32 to vector<4x32xf32>
    %1399 = arith.subf %1398, %1397 : vector<4x32xf32>
    %1400 = math.exp %1399 : vector<4x32xf32>
    %cst_395 = arith.constant 1.000000e+00 : f32
    %1401 = vector.broadcast %cst_395 : f32 to vector<4x32xf32>
    %1402 = arith.addf %1401, %1400 : vector<4x32xf32>
    %cst_396 = arith.constant 1.000000e+00 : f32
    %1403 = vector.broadcast %cst_396 : f32 to vector<4x32xf32>
    %1404 = arith.divf %1403, %1402 : vector<4x32xf32>
    %1405 = vector.extract_strided_slice %1393 {offsets = [0, 32], sizes = [4, 32], strides = [1, 1]} : vector<4x128xf32> to vector<4x32xf32>
    %cst_397 = arith.constant 0.000000e+00 : f32
    %1406 = vector.broadcast %cst_397 : f32 to vector<4x32xf32>
    %1407 = arith.subf %1406, %1405 : vector<4x32xf32>
    %1408 = math.exp %1407 : vector<4x32xf32>
    %cst_398 = arith.constant 1.000000e+00 : f32
    %1409 = vector.broadcast %cst_398 : f32 to vector<4x32xf32>
    %1410 = arith.addf %1409, %1408 : vector<4x32xf32>
    %cst_399 = arith.constant 1.000000e+00 : f32
    %1411 = vector.broadcast %cst_399 : f32 to vector<4x32xf32>
    %1412 = arith.divf %1411, %1410 : vector<4x32xf32>
    %1413 = vector.extract_strided_slice %1393 {offsets = [0, 64], sizes = [4, 32], strides = [1, 1]} : vector<4x128xf32> to vector<4x32xf32>
    %1414 = math.tanh %1413 : vector<4x32xf32>
    %1415 = vector.extract_strided_slice %1393 {offsets = [0, 96], sizes = [4, 32], strides = [1, 1]} : vector<4x128xf32> to vector<4x32xf32>
    %cst_400 = arith.constant 0.000000e+00 : f32
    %1416 = vector.broadcast %cst_400 : f32 to vector<4x32xf32>
    %1417 = arith.subf %1416, %1415 : vector<4x32xf32>
    %1418 = math.exp %1417 : vector<4x32xf32>
    %cst_401 = arith.constant 1.000000e+00 : f32
    %1419 = vector.broadcast %cst_401 : f32 to vector<4x32xf32>
    %1420 = arith.addf %1419, %1418 : vector<4x32xf32>
    %cst_402 = arith.constant 1.000000e+00 : f32
    %1421 = vector.broadcast %cst_402 : f32 to vector<4x32xf32>
    %1422 = arith.divf %1421, %1420 : vector<4x32xf32>
    %1423 = arith.mulf %1412, %1354 : vector<4x32xf32>
    %1424 = arith.mulf %1404, %1414 : vector<4x32xf32>
    %1425 = arith.addf %1423, %1424 : vector<4x32xf32>
    %1426 = math.tanh %1425 : vector<4x32xf32>
    %1427 = arith.mulf %1422, %1426 : vector<4x32xf32>
    %1428 = vector.extract_strided_slice %1396 {offsets = [0, 0], sizes = [4, 32], strides = [1, 1]} : vector<4x128xf32> to vector<4x32xf32>
    %cst_403 = arith.constant 0.000000e+00 : f32
    %1429 = vector.broadcast %cst_403 : f32 to vector<4x32xf32>
    %1430 = arith.subf %1429, %1428 : vector<4x32xf32>
    %1431 = math.exp %1430 : vector<4x32xf32>
    %cst_404 = arith.constant 1.000000e+00 : f32
    %1432 = vector.broadcast %cst_404 : f32 to vector<4x32xf32>
    %1433 = arith.addf %1432, %1431 : vector<4x32xf32>
    %cst_405 = arith.constant 1.000000e+00 : f32
    %1434 = vector.broadcast %cst_405 : f32 to vector<4x32xf32>
    %1435 = arith.divf %1434, %1433 : vector<4x32xf32>
    %1436 = vector.extract_strided_slice %1396 {offsets = [0, 32], sizes = [4, 32], strides = [1, 1]} : vector<4x128xf32> to vector<4x32xf32>
    %cst_406 = arith.constant 0.000000e+00 : f32
    %1437 = vector.broadcast %cst_406 : f32 to vector<4x32xf32>
    %1438 = arith.subf %1437, %1436 : vector<4x32xf32>
    %1439 = math.exp %1438 : vector<4x32xf32>
    %cst_407 = arith.constant 1.000000e+00 : f32
    %1440 = vector.broadcast %cst_407 : f32 to vector<4x32xf32>
    %1441 = arith.addf %1440, %1439 : vector<4x32xf32>
    %cst_408 = arith.constant 1.000000e+00 : f32
    %1442 = vector.broadcast %cst_408 : f32 to vector<4x32xf32>
    %1443 = arith.divf %1442, %1441 : vector<4x32xf32>
    %1444 = vector.extract_strided_slice %1396 {offsets = [0, 64], sizes = [4, 32], strides = [1, 1]} : vector<4x128xf32> to vector<4x32xf32>
    %1445 = math.tanh %1444 : vector<4x32xf32>
    %1446 = vector.extract_strided_slice %1396 {offsets = [0, 96], sizes = [4, 32], strides = [1, 1]} : vector<4x128xf32> to vector<4x32xf32>
    %cst_409 = arith.constant 0.000000e+00 : f32
    %1447 = vector.broadcast %cst_409 : f32 to vector<4x32xf32>
    %1448 = arith.subf %1447, %1446 : vector<4x32xf32>
    %1449 = math.exp %1448 : vector<4x32xf32>
    %cst_410 = arith.constant 1.000000e+00 : f32
    %1450 = vector.broadcast %cst_410 : f32 to vector<4x32xf32>
    %1451 = arith.addf %1450, %1449 : vector<4x32xf32>
    %cst_411 = arith.constant 1.000000e+00 : f32
    %1452 = vector.broadcast %cst_411 : f32 to vector<4x32xf32>
    %1453 = arith.divf %1452, %1451 : vector<4x32xf32>
    %1454 = arith.mulf %1443, %1385 : vector<4x32xf32>
    %1455 = arith.mulf %1435, %1445 : vector<4x32xf32>
    %1456 = arith.addf %1454, %1455 : vector<4x32xf32>
    %1457 = math.tanh %1456 : vector<4x32xf32>
    %1458 = arith.mulf %1453, %1457 : vector<4x32xf32>
    %1459 = tpu.concatenate %1427, %1458 in 1 : vector<4x32xf32>, vector<4x32xf32> -> vector<4x64xf32>
    %1460 = arith.truncf %1459 : vector<4x64xf32> to vector<4x64xbf16>
    %cst_412 = arith.constant dense<0.000000e+00> : vector<4x256xf32>
    %1461 = tpu.matmul %1460, %1168, %cst_412 {dimension_numbers = #tpu.dot_dimension_numbers<[1], [0], [0], [1], [0, 0, 1, 1], [], []>} : vector<4x64xbf16>, vector<64x256xbf16>, vector<4x256xf32> -> vector<4x256xf32>
    %1462 = vector.extract_strided_slice %1172 {offsets = [16, 0], sizes = [4, 128], strides = [1, 1]} : vector<32x256xf32> to vector<4x128xf32>
    %1463 = vector.extract_strided_slice %1461 {offsets = [0, 0], sizes = [4, 128], strides = [1, 1]} : vector<4x256xf32> to vector<4x128xf32>
    %1464 = arith.addf %1462, %1463 : vector<4x128xf32>
    %1465 = vector.extract_strided_slice %1172 {offsets = [12, 128], sizes = [4, 128], strides = [1, 1]} : vector<32x256xf32> to vector<4x128xf32>
    %1466 = vector.extract_strided_slice %1461 {offsets = [0, 128], sizes = [4, 128], strides = [1, 1]} : vector<4x256xf32> to vector<4x128xf32>
    %1467 = arith.addf %1465, %1466 : vector<4x128xf32>
    %1468 = vector.extract_strided_slice %1464 {offsets = [0, 0], sizes = [4, 32], strides = [1, 1]} : vector<4x128xf32> to vector<4x32xf32>
    %cst_413 = arith.constant 0.000000e+00 : f32
    %1469 = vector.broadcast %cst_413 : f32 to vector<4x32xf32>
    %1470 = arith.subf %1469, %1468 : vector<4x32xf32>
    %1471 = math.exp %1470 : vector<4x32xf32>
    %cst_414 = arith.constant 1.000000e+00 : f32
    %1472 = vector.broadcast %cst_414 : f32 to vector<4x32xf32>
    %1473 = arith.addf %1472, %1471 : vector<4x32xf32>
    %cst_415 = arith.constant 1.000000e+00 : f32
    %1474 = vector.broadcast %cst_415 : f32 to vector<4x32xf32>
    %1475 = arith.divf %1474, %1473 : vector<4x32xf32>
    %1476 = vector.extract_strided_slice %1464 {offsets = [0, 32], sizes = [4, 32], strides = [1, 1]} : vector<4x128xf32> to vector<4x32xf32>
    %cst_416 = arith.constant 0.000000e+00 : f32
    %1477 = vector.broadcast %cst_416 : f32 to vector<4x32xf32>
    %1478 = arith.subf %1477, %1476 : vector<4x32xf32>
    %1479 = math.exp %1478 : vector<4x32xf32>
    %cst_417 = arith.constant 1.000000e+00 : f32
    %1480 = vector.broadcast %cst_417 : f32 to vector<4x32xf32>
    %1481 = arith.addf %1480, %1479 : vector<4x32xf32>
    %cst_418 = arith.constant 1.000000e+00 : f32
    %1482 = vector.broadcast %cst_418 : f32 to vector<4x32xf32>
    %1483 = arith.divf %1482, %1481 : vector<4x32xf32>
    %1484 = vector.extract_strided_slice %1464 {offsets = [0, 64], sizes = [4, 32], strides = [1, 1]} : vector<4x128xf32> to vector<4x32xf32>
    %1485 = math.tanh %1484 : vector<4x32xf32>
    %1486 = vector.extract_strided_slice %1464 {offsets = [0, 96], sizes = [4, 32], strides = [1, 1]} : vector<4x128xf32> to vector<4x32xf32>
    %cst_419 = arith.constant 0.000000e+00 : f32
    %1487 = vector.broadcast %cst_419 : f32 to vector<4x32xf32>
    %1488 = arith.subf %1487, %1486 : vector<4x32xf32>
    %1489 = math.exp %1488 : vector<4x32xf32>
    %cst_420 = arith.constant 1.000000e+00 : f32
    %1490 = vector.broadcast %cst_420 : f32 to vector<4x32xf32>
    %1491 = arith.addf %1490, %1489 : vector<4x32xf32>
    %cst_421 = arith.constant 1.000000e+00 : f32
    %1492 = vector.broadcast %cst_421 : f32 to vector<4x32xf32>
    %1493 = arith.divf %1492, %1491 : vector<4x32xf32>
    %1494 = arith.mulf %1483, %1425 : vector<4x32xf32>
    %1495 = arith.mulf %1475, %1485 : vector<4x32xf32>
    %1496 = arith.addf %1494, %1495 : vector<4x32xf32>
    %1497 = math.tanh %1496 : vector<4x32xf32>
    %1498 = arith.mulf %1493, %1497 : vector<4x32xf32>
    %1499 = vector.extract_strided_slice %1467 {offsets = [0, 0], sizes = [4, 32], strides = [1, 1]} : vector<4x128xf32> to vector<4x32xf32>
    %cst_422 = arith.constant 0.000000e+00 : f32
    %1500 = vector.broadcast %cst_422 : f32 to vector<4x32xf32>
    %1501 = arith.subf %1500, %1499 : vector<4x32xf32>
    %1502 = math.exp %1501 : vector<4x32xf32>
    %cst_423 = arith.constant 1.000000e+00 : f32
    %1503 = vector.broadcast %cst_423 : f32 to vector<4x32xf32>
    %1504 = arith.addf %1503, %1502 : vector<4x32xf32>
    %cst_424 = arith.constant 1.000000e+00 : f32
    %1505 = vector.broadcast %cst_424 : f32 to vector<4x32xf32>
    %1506 = arith.divf %1505, %1504 : vector<4x32xf32>
    %1507 = vector.extract_strided_slice %1467 {offsets = [0, 32], sizes = [4, 32], strides = [1, 1]} : vector<4x128xf32> to vector<4x32xf32>
    %cst_425 = arith.constant 0.000000e+00 : f32
    %1508 = vector.broadcast %cst_425 : f32 to vector<4x32xf32>
    %1509 = arith.subf %1508, %1507 : vector<4x32xf32>
    %1510 = math.exp %1509 : vector<4x32xf32>
    %cst_426 = arith.constant 1.000000e+00 : f32
    %1511 = vector.broadcast %cst_426 : f32 to vector<4x32xf32>
    %1512 = arith.addf %1511, %1510 : vector<4x32xf32>
    %cst_427 = arith.constant 1.000000e+00 : f32
    %1513 = vector.broadcast %cst_427 : f32 to vector<4x32xf32>
    %1514 = arith.divf %1513, %1512 : vector<4x32xf32>
    %1515 = vector.extract_strided_slice %1467 {offsets = [0, 64], sizes = [4, 32], strides = [1, 1]} : vector<4x128xf32> to vector<4x32xf32>
    %1516 = math.tanh %1515 : vector<4x32xf32>
    %1517 = vector.extract_strided_slice %1467 {offsets = [0, 96], sizes = [4, 32], strides = [1, 1]} : vector<4x128xf32> to vector<4x32xf32>
    %cst_428 = arith.constant 0.000000e+00 : f32
    %1518 = vector.broadcast %cst_428 : f32 to vector<4x32xf32>
    %1519 = arith.subf %1518, %1517 : vector<4x32xf32>
    %1520 = math.exp %1519 : vector<4x32xf32>
    %cst_429 = arith.constant 1.000000e+00 : f32
    %1521 = vector.broadcast %cst_429 : f32 to vector<4x32xf32>
    %1522 = arith.addf %1521, %1520 : vector<4x32xf32>
    %cst_430 = arith.constant 1.000000e+00 : f32
    %1523 = vector.broadcast %cst_430 : f32 to vector<4x32xf32>
    %1524 = arith.divf %1523, %1522 : vector<4x32xf32>
    %1525 = arith.mulf %1514, %1456 : vector<4x32xf32>
    %1526 = arith.mulf %1506, %1516 : vector<4x32xf32>
    %1527 = arith.addf %1525, %1526 : vector<4x32xf32>
    %1528 = math.tanh %1527 : vector<4x32xf32>
    %1529 = arith.mulf %1524, %1528 : vector<4x32xf32>
    %1530 = tpu.concatenate %1498, %1529 in 1 : vector<4x32xf32>, vector<4x32xf32> -> vector<4x64xf32>
    %1531 = arith.truncf %1530 : vector<4x64xf32> to vector<4x64xbf16>
    %cst_431 = arith.constant dense<0.000000e+00> : vector<4x256xf32>
    %1532 = tpu.matmul %1531, %1168, %cst_431 {dimension_numbers = #tpu.dot_dimension_numbers<[1], [0], [0], [1], [0, 0, 1, 1], [], []>} : vector<4x64xbf16>, vector<64x256xbf16>, vector<4x256xf32> -> vector<4x256xf32>
    %1533 = vector.extract_strided_slice %1172 {offsets = [20, 0], sizes = [4, 128], strides = [1, 1]} : vector<32x256xf32> to vector<4x128xf32>
    %1534 = vector.extract_strided_slice %1532 {offsets = [0, 0], sizes = [4, 128], strides = [1, 1]} : vector<4x256xf32> to vector<4x128xf32>
    %1535 = arith.addf %1533, %1534 : vector<4x128xf32>
    %1536 = vector.extract_strided_slice %1172 {offsets = [8, 128], sizes = [4, 128], strides = [1, 1]} : vector<32x256xf32> to vector<4x128xf32>
    %1537 = vector.extract_strided_slice %1532 {offsets = [0, 128], sizes = [4, 128], strides = [1, 1]} : vector<4x256xf32> to vector<4x128xf32>
    %1538 = arith.addf %1536, %1537 : vector<4x128xf32>
    %1539 = vector.extract_strided_slice %1535 {offsets = [0, 0], sizes = [4, 32], strides = [1, 1]} : vector<4x128xf32> to vector<4x32xf32>
    %cst_432 = arith.constant 0.000000e+00 : f32
    %1540 = vector.broadcast %cst_432 : f32 to vector<4x32xf32>
    %1541 = arith.subf %1540, %1539 : vector<4x32xf32>
    %1542 = math.exp %1541 : vector<4x32xf32>
    %cst_433 = arith.constant 1.000000e+00 : f32
    %1543 = vector.broadcast %cst_433 : f32 to vector<4x32xf32>
    %1544 = arith.addf %1543, %1542 : vector<4x32xf32>
    %cst_434 = arith.constant 1.000000e+00 : f32
    %1545 = vector.broadcast %cst_434 : f32 to vector<4x32xf32>
    %1546 = arith.divf %1545, %1544 : vector<4x32xf32>
    %1547 = vector.extract_strided_slice %1535 {offsets = [0, 32], sizes = [4, 32], strides = [1, 1]} : vector<4x128xf32> to vector<4x32xf32>
    %cst_435 = arith.constant 0.000000e+00 : f32
    %1548 = vector.broadcast %cst_435 : f32 to vector<4x32xf32>
    %1549 = arith.subf %1548, %1547 : vector<4x32xf32>
    %1550 = math.exp %1549 : vector<4x32xf32>
    %cst_436 = arith.constant 1.000000e+00 : f32
    %1551 = vector.broadcast %cst_436 : f32 to vector<4x32xf32>
    %1552 = arith.addf %1551, %1550 : vector<4x32xf32>
    %cst_437 = arith.constant 1.000000e+00 : f32
    %1553 = vector.broadcast %cst_437 : f32 to vector<4x32xf32>
    %1554 = arith.divf %1553, %1552 : vector<4x32xf32>
    %1555 = vector.extract_strided_slice %1535 {offsets = [0, 64], sizes = [4, 32], strides = [1, 1]} : vector<4x128xf32> to vector<4x32xf32>
    %1556 = math.tanh %1555 : vector<4x32xf32>
    %1557 = vector.extract_strided_slice %1535 {offsets = [0, 96], sizes = [4, 32], strides = [1, 1]} : vector<4x128xf32> to vector<4x32xf32>
    %cst_438 = arith.constant 0.000000e+00 : f32
    %1558 = vector.broadcast %cst_438 : f32 to vector<4x32xf32>
    %1559 = arith.subf %1558, %1557 : vector<4x32xf32>
    %1560 = math.exp %1559 : vector<4x32xf32>
    %cst_439 = arith.constant 1.000000e+00 : f32
    %1561 = vector.broadcast %cst_439 : f32 to vector<4x32xf32>
    %1562 = arith.addf %1561, %1560 : vector<4x32xf32>
    %cst_440 = arith.constant 1.000000e+00 : f32
    %1563 = vector.broadcast %cst_440 : f32 to vector<4x32xf32>
    %1564 = arith.divf %1563, %1562 : vector<4x32xf32>
    %1565 = arith.mulf %1554, %1496 : vector<4x32xf32>
    %1566 = arith.mulf %1546, %1556 : vector<4x32xf32>
    %1567 = arith.addf %1565, %1566 : vector<4x32xf32>
    %1568 = math.tanh %1567 : vector<4x32xf32>
    %1569 = arith.mulf %1564, %1568 : vector<4x32xf32>
    %1570 = vector.extract_strided_slice %1538 {offsets = [0, 0], sizes = [4, 32], strides = [1, 1]} : vector<4x128xf32> to vector<4x32xf32>
    %cst_441 = arith.constant 0.000000e+00 : f32
    %1571 = vector.broadcast %cst_441 : f32 to vector<4x32xf32>
    %1572 = arith.subf %1571, %1570 : vector<4x32xf32>
    %1573 = math.exp %1572 : vector<4x32xf32>
    %cst_442 = arith.constant 1.000000e+00 : f32
    %1574 = vector.broadcast %cst_442 : f32 to vector<4x32xf32>
    %1575 = arith.addf %1574, %1573 : vector<4x32xf32>
    %cst_443 = arith.constant 1.000000e+00 : f32
    %1576 = vector.broadcast %cst_443 : f32 to vector<4x32xf32>
    %1577 = arith.divf %1576, %1575 : vector<4x32xf32>
    %1578 = vector.extract_strided_slice %1538 {offsets = [0, 32], sizes = [4, 32], strides = [1, 1]} : vector<4x128xf32> to vector<4x32xf32>
    %cst_444 = arith.constant 0.000000e+00 : f32
    %1579 = vector.broadcast %cst_444 : f32 to vector<4x32xf32>
    %1580 = arith.subf %1579, %1578 : vector<4x32xf32>
    %1581 = math.exp %1580 : vector<4x32xf32>
    %cst_445 = arith.constant 1.000000e+00 : f32
    %1582 = vector.broadcast %cst_445 : f32 to vector<4x32xf32>
    %1583 = arith.addf %1582, %1581 : vector<4x32xf32>
    %cst_446 = arith.constant 1.000000e+00 : f32
    %1584 = vector.broadcast %cst_446 : f32 to vector<4x32xf32>
    %1585 = arith.divf %1584, %1583 : vector<4x32xf32>
    %1586 = vector.extract_strided_slice %1538 {offsets = [0, 64], sizes = [4, 32], strides = [1, 1]} : vector<4x128xf32> to vector<4x32xf32>
    %1587 = math.tanh %1586 : vector<4x32xf32>
    %1588 = vector.extract_strided_slice %1538 {offsets = [0, 96], sizes = [4, 32], strides = [1, 1]} : vector<4x128xf32> to vector<4x32xf32>
    %cst_447 = arith.constant 0.000000e+00 : f32
    %1589 = vector.broadcast %cst_447 : f32 to vector<4x32xf32>
    %1590 = arith.subf %1589, %1588 : vector<4x32xf32>
    %1591 = math.exp %1590 : vector<4x32xf32>
    %cst_448 = arith.constant 1.000000e+00 : f32
    %1592 = vector.broadcast %cst_448 : f32 to vector<4x32xf32>
    %1593 = arith.addf %1592, %1591 : vector<4x32xf32>
    %cst_449 = arith.constant 1.000000e+00 : f32
    %1594 = vector.broadcast %cst_449 : f32 to vector<4x32xf32>
    %1595 = arith.divf %1594, %1593 : vector<4x32xf32>
    %1596 = arith.mulf %1585, %1527 : vector<4x32xf32>
    %1597 = arith.mulf %1577, %1587 : vector<4x32xf32>
    %1598 = arith.addf %1596, %1597 : vector<4x32xf32>
    %1599 = math.tanh %1598 : vector<4x32xf32>
    %1600 = arith.mulf %1595, %1599 : vector<4x32xf32>
    %1601 = tpu.concatenate %1569, %1600 in 1 : vector<4x32xf32>, vector<4x32xf32> -> vector<4x64xf32>
    %1602 = arith.truncf %1601 : vector<4x64xf32> to vector<4x64xbf16>
    %cst_450 = arith.constant dense<0.000000e+00> : vector<4x256xf32>
    %1603 = tpu.matmul %1602, %1168, %cst_450 {dimension_numbers = #tpu.dot_dimension_numbers<[1], [0], [0], [1], [0, 0, 1, 1], [], []>} : vector<4x64xbf16>, vector<64x256xbf16>, vector<4x256xf32> -> vector<4x256xf32>
    %1604 = vector.extract_strided_slice %1172 {offsets = [24, 0], sizes = [4, 128], strides = [1, 1]} : vector<32x256xf32> to vector<4x128xf32>
    %1605 = vector.extract_strided_slice %1603 {offsets = [0, 0], sizes = [4, 128], strides = [1, 1]} : vector<4x256xf32> to vector<4x128xf32>
    %1606 = arith.addf %1604, %1605 : vector<4x128xf32>
    %1607 = vector.extract_strided_slice %1172 {offsets = [4, 128], sizes = [4, 128], strides = [1, 1]} : vector<32x256xf32> to vector<4x128xf32>
    %1608 = vector.extract_strided_slice %1603 {offsets = [0, 128], sizes = [4, 128], strides = [1, 1]} : vector<4x256xf32> to vector<4x128xf32>
    %1609 = arith.addf %1607, %1608 : vector<4x128xf32>
    %1610 = vector.extract_strided_slice %1606 {offsets = [0, 0], sizes = [4, 32], strides = [1, 1]} : vector<4x128xf32> to vector<4x32xf32>
    %cst_451 = arith.constant 0.000000e+00 : f32
    %1611 = vector.broadcast %cst_451 : f32 to vector<4x32xf32>
    %1612 = arith.subf %1611, %1610 : vector<4x32xf32>
    %1613 = math.exp %1612 : vector<4x32xf32>
    %cst_452 = arith.constant 1.000000e+00 : f32
    %1614 = vector.broadcast %cst_452 : f32 to vector<4x32xf32>
    %1615 = arith.addf %1614, %1613 : vector<4x32xf32>
    %cst_453 = arith.constant 1.000000e+00 : f32
    %1616 = vector.broadcast %cst_453 : f32 to vector<4x32xf32>
    %1617 = arith.divf %1616, %1615 : vector<4x32xf32>
    %1618 = vector.extract_strided_slice %1606 {offsets = [0, 32], sizes = [4, 32], strides = [1, 1]} : vector<4x128xf32> to vector<4x32xf32>
    %cst_454 = arith.constant 0.000000e+00 : f32
    %1619 = vector.broadcast %cst_454 : f32 to vector<4x32xf32>
    %1620 = arith.subf %1619, %1618 : vector<4x32xf32>
    %1621 = math.exp %1620 : vector<4x32xf32>
    %cst_455 = arith.constant 1.000000e+00 : f32
    %1622 = vector.broadcast %cst_455 : f32 to vector<4x32xf32>
    %1623 = arith.addf %1622, %1621 : vector<4x32xf32>
    %cst_456 = arith.constant 1.000000e+00 : f32
    %1624 = vector.broadcast %cst_456 : f32 to vector<4x32xf32>
    %1625 = arith.divf %1624, %1623 : vector<4x32xf32>
    %1626 = vector.extract_strided_slice %1606 {offsets = [0, 64], sizes = [4, 32], strides = [1, 1]} : vector<4x128xf32> to vector<4x32xf32>
    %1627 = math.tanh %1626 : vector<4x32xf32>
    %1628 = vector.extract_strided_slice %1606 {offsets = [0, 96], sizes = [4, 32], strides = [1, 1]} : vector<4x128xf32> to vector<4x32xf32>
    %cst_457 = arith.constant 0.000000e+00 : f32
    %1629 = vector.broadcast %cst_457 : f32 to vector<4x32xf32>
    %1630 = arith.subf %1629, %1628 : vector<4x32xf32>
    %1631 = math.exp %1630 : vector<4x32xf32>
    %cst_458 = arith.constant 1.000000e+00 : f32
    %1632 = vector.broadcast %cst_458 : f32 to vector<4x32xf32>
    %1633 = arith.addf %1632, %1631 : vector<4x32xf32>
    %cst_459 = arith.constant 1.000000e+00 : f32
    %1634 = vector.broadcast %cst_459 : f32 to vector<4x32xf32>
    %1635 = arith.divf %1634, %1633 : vector<4x32xf32>
    %1636 = arith.mulf %1625, %1567 : vector<4x32xf32>
    %1637 = arith.mulf %1617, %1627 : vector<4x32xf32>
    %1638 = arith.addf %1636, %1637 : vector<4x32xf32>
    %1639 = math.tanh %1638 : vector<4x32xf32>
    %1640 = arith.mulf %1635, %1639 : vector<4x32xf32>
    %1641 = vector.extract_strided_slice %1609 {offsets = [0, 0], sizes = [4, 32], strides = [1, 1]} : vector<4x128xf32> to vector<4x32xf32>
    %cst_460 = arith.constant 0.000000e+00 : f32
    %1642 = vector.broadcast %cst_460 : f32 to vector<4x32xf32>
    %1643 = arith.subf %1642, %1641 : vector<4x32xf32>
    %1644 = math.exp %1643 : vector<4x32xf32>
    %cst_461 = arith.constant 1.000000e+00 : f32
    %1645 = vector.broadcast %cst_461 : f32 to vector<4x32xf32>
    %1646 = arith.addf %1645, %1644 : vector<4x32xf32>
    %cst_462 = arith.constant 1.000000e+00 : f32
    %1647 = vector.broadcast %cst_462 : f32 to vector<4x32xf32>
    %1648 = arith.divf %1647, %1646 : vector<4x32xf32>
    %1649 = vector.extract_strided_slice %1609 {offsets = [0, 32], sizes = [4, 32], strides = [1, 1]} : vector<4x128xf32> to vector<4x32xf32>
    %cst_463 = arith.constant 0.000000e+00 : f32
    %1650 = vector.broadcast %cst_463 : f32 to vector<4x32xf32>
    %1651 = arith.subf %1650, %1649 : vector<4x32xf32>
    %1652 = math.exp %1651 : vector<4x32xf32>
    %cst_464 = arith.constant 1.000000e+00 : f32
    %1653 = vector.broadcast %cst_464 : f32 to vector<4x32xf32>
    %1654 = arith.addf %1653, %1652 : vector<4x32xf32>
    %cst_465 = arith.constant 1.000000e+00 : f32
    %1655 = vector.broadcast %cst_465 : f32 to vector<4x32xf32>
    %1656 = arith.divf %1655, %1654 : vector<4x32xf32>
    %1657 = vector.extract_strided_slice %1609 {offsets = [0, 64], sizes = [4, 32], strides = [1, 1]} : vector<4x128xf32> to vector<4x32xf32>
    %1658 = math.tanh %1657 : vector<4x32xf32>
    %1659 = vector.extract_strided_slice %1609 {offsets = [0, 96], sizes = [4, 32], strides = [1, 1]} : vector<4x128xf32> to vector<4x32xf32>
    %cst_466 = arith.constant 0.000000e+00 : f32
    %1660 = vector.broadcast %cst_466 : f32 to vector<4x32xf32>
    %1661 = arith.subf %1660, %1659 : vector<4x32xf32>
    %1662 = math.exp %1661 : vector<4x32xf32>
    %cst_467 = arith.constant 1.000000e+00 : f32
    %1663 = vector.broadcast %cst_467 : f32 to vector<4x32xf32>
    %1664 = arith.addf %1663, %1662 : vector<4x32xf32>
    %cst_468 = arith.constant 1.000000e+00 : f32
    %1665 = vector.broadcast %cst_468 : f32 to vector<4x32xf32>
    %1666 = arith.divf %1665, %1664 : vector<4x32xf32>
    %1667 = arith.mulf %1656, %1598 : vector<4x32xf32>
    %1668 = arith.mulf %1648, %1658 : vector<4x32xf32>
    %1669 = arith.addf %1667, %1668 : vector<4x32xf32>
    %1670 = math.tanh %1669 : vector<4x32xf32>
    %1671 = arith.mulf %1666, %1670 : vector<4x32xf32>
    %1672 = tpu.concatenate %1640, %1671 in 1 : vector<4x32xf32>, vector<4x32xf32> -> vector<4x64xf32>
    %1673 = arith.truncf %1672 : vector<4x64xf32> to vector<4x64xbf16>
    %cst_469 = arith.constant dense<0.000000e+00> : vector<4x256xf32>
    %1674 = tpu.matmul %1673, %1168, %cst_469 {dimension_numbers = #tpu.dot_dimension_numbers<[1], [0], [0], [1], [0, 0, 1, 1], [], []>} : vector<4x64xbf16>, vector<64x256xbf16>, vector<4x256xf32> -> vector<4x256xf32>
    %1675 = vector.extract_strided_slice %1172 {offsets = [28, 0], sizes = [4, 128], strides = [1, 1]} : vector<32x256xf32> to vector<4x128xf32>
    %1676 = vector.extract_strided_slice %1674 {offsets = [0, 0], sizes = [4, 128], strides = [1, 1]} : vector<4x256xf32> to vector<4x128xf32>
    %1677 = arith.addf %1675, %1676 : vector<4x128xf32>
    %1678 = vector.extract_strided_slice %1172 {offsets = [0, 128], sizes = [4, 128], strides = [1, 1]} : vector<32x256xf32> to vector<4x128xf32>
    %1679 = vector.extract_strided_slice %1674 {offsets = [0, 128], sizes = [4, 128], strides = [1, 1]} : vector<4x256xf32> to vector<4x128xf32>
    %1680 = arith.addf %1678, %1679 : vector<4x128xf32>
    %1681 = vector.extract_strided_slice %1677 {offsets = [0, 0], sizes = [4, 32], strides = [1, 1]} : vector<4x128xf32> to vector<4x32xf32>
    %cst_470 = arith.constant 0.000000e+00 : f32
    %1682 = vector.broadcast %cst_470 : f32 to vector<4x32xf32>
    %1683 = arith.subf %1682, %1681 : vector<4x32xf32>
    %1684 = math.exp %1683 : vector<4x32xf32>
    %cst_471 = arith.constant 1.000000e+00 : f32
    %1685 = vector.broadcast %cst_471 : f32 to vector<4x32xf32>
    %1686 = arith.addf %1685, %1684 : vector<4x32xf32>
    %cst_472 = arith.constant 1.000000e+00 : f32
    %1687 = vector.broadcast %cst_472 : f32 to vector<4x32xf32>
    %1688 = arith.divf %1687, %1686 : vector<4x32xf32>
    %1689 = vector.extract_strided_slice %1677 {offsets = [0, 32], sizes = [4, 32], strides = [1, 1]} : vector<4x128xf32> to vector<4x32xf32>
    %cst_473 = arith.constant 0.000000e+00 : f32
    %1690 = vector.broadcast %cst_473 : f32 to vector<4x32xf32>
    %1691 = arith.subf %1690, %1689 : vector<4x32xf32>
    %1692 = math.exp %1691 : vector<4x32xf32>
    %cst_474 = arith.constant 1.000000e+00 : f32
    %1693 = vector.broadcast %cst_474 : f32 to vector<4x32xf32>
    %1694 = arith.addf %1693, %1692 : vector<4x32xf32>
    %cst_475 = arith.constant 1.000000e+00 : f32
    %1695 = vector.broadcast %cst_475 : f32 to vector<4x32xf32>
    %1696 = arith.divf %1695, %1694 : vector<4x32xf32>
    %1697 = vector.extract_strided_slice %1677 {offsets = [0, 64], sizes = [4, 32], strides = [1, 1]} : vector<4x128xf32> to vector<4x32xf32>
    %1698 = math.tanh %1697 : vector<4x32xf32>
    %1699 = vector.extract_strided_slice %1677 {offsets = [0, 96], sizes = [4, 32], strides = [1, 1]} : vector<4x128xf32> to vector<4x32xf32>
    %cst_476 = arith.constant 0.000000e+00 : f32
    %1700 = vector.broadcast %cst_476 : f32 to vector<4x32xf32>
    %1701 = arith.subf %1700, %1699 : vector<4x32xf32>
    %1702 = math.exp %1701 : vector<4x32xf32>
    %cst_477 = arith.constant 1.000000e+00 : f32
    %1703 = vector.broadcast %cst_477 : f32 to vector<4x32xf32>
    %1704 = arith.addf %1703, %1702 : vector<4x32xf32>
    %cst_478 = arith.constant 1.000000e+00 : f32
    %1705 = vector.broadcast %cst_478 : f32 to vector<4x32xf32>
    %1706 = arith.divf %1705, %1704 : vector<4x32xf32>
    %1707 = arith.mulf %1696, %1638 : vector<4x32xf32>
    %1708 = arith.mulf %1688, %1698 : vector<4x32xf32>
    %1709 = arith.addf %1707, %1708 : vector<4x32xf32>
    %1710 = math.tanh %1709 : vector<4x32xf32>
    %1711 = arith.mulf %1706, %1710 : vector<4x32xf32>
    %1712 = vector.extract_strided_slice %1680 {offsets = [0, 0], sizes = [4, 32], strides = [1, 1]} : vector<4x128xf32> to vector<4x32xf32>
    %cst_479 = arith.constant 0.000000e+00 : f32
    %1713 = vector.broadcast %cst_479 : f32 to vector<4x32xf32>
    %1714 = arith.subf %1713, %1712 : vector<4x32xf32>
    %1715 = math.exp %1714 : vector<4x32xf32>
    %cst_480 = arith.constant 1.000000e+00 : f32
    %1716 = vector.broadcast %cst_480 : f32 to vector<4x32xf32>
    %1717 = arith.addf %1716, %1715 : vector<4x32xf32>
    %cst_481 = arith.constant 1.000000e+00 : f32
    %1718 = vector.broadcast %cst_481 : f32 to vector<4x32xf32>
    %1719 = arith.divf %1718, %1717 : vector<4x32xf32>
    %1720 = vector.extract_strided_slice %1680 {offsets = [0, 32], sizes = [4, 32], strides = [1, 1]} : vector<4x128xf32> to vector<4x32xf32>
    %cst_482 = arith.constant 0.000000e+00 : f32
    %1721 = vector.broadcast %cst_482 : f32 to vector<4x32xf32>
    %1722 = arith.subf %1721, %1720 : vector<4x32xf32>
    %1723 = math.exp %1722 : vector<4x32xf32>
    %cst_483 = arith.constant 1.000000e+00 : f32
    %1724 = vector.broadcast %cst_483 : f32 to vector<4x32xf32>
    %1725 = arith.addf %1724, %1723 : vector<4x32xf32>
    %cst_484 = arith.constant 1.000000e+00 : f32
    %1726 = vector.broadcast %cst_484 : f32 to vector<4x32xf32>
    %1727 = arith.divf %1726, %1725 : vector<4x32xf32>
    %1728 = vector.extract_strided_slice %1680 {offsets = [0, 64], sizes = [4, 32], strides = [1, 1]} : vector<4x128xf32> to vector<4x32xf32>
    %1729 = math.tanh %1728 : vector<4x32xf32>
    %1730 = vector.extract_strided_slice %1680 {offsets = [0, 96], sizes = [4, 32], strides = [1, 1]} : vector<4x128xf32> to vector<4x32xf32>
    %cst_485 = arith.constant 0.000000e+00 : f32
    %1731 = vector.broadcast %cst_485 : f32 to vector<4x32xf32>
    %1732 = arith.subf %1731, %1730 : vector<4x32xf32>
    %1733 = math.exp %1732 : vector<4x32xf32>
    %cst_486 = arith.constant 1.000000e+00 : f32
    %1734 = vector.broadcast %cst_486 : f32 to vector<4x32xf32>
    %1735 = arith.addf %1734, %1733 : vector<4x32xf32>
    %cst_487 = arith.constant 1.000000e+00 : f32
    %1736 = vector.broadcast %cst_487 : f32 to vector<4x32xf32>
    %1737 = arith.divf %1736, %1735 : vector<4x32xf32>
    %1738 = arith.mulf %1727, %1669 : vector<4x32xf32>
    %1739 = arith.mulf %1719, %1729 : vector<4x32xf32>
    %1740 = arith.addf %1738, %1739 : vector<4x32xf32>
    %1741 = math.tanh %1740 : vector<4x32xf32>
    %1742 = arith.mulf %1737, %1741 : vector<4x32xf32>
    %1743 = tpu.concatenate %1711, %1742 in 1 : vector<4x32xf32>, vector<4x32xf32> -> vector<4x64xf32>
    %1744 = tpu.concatenate %1214, %1742 in 1 : vector<4x32xf32>, vector<4x32xf32> -> vector<4x64xf32>
    %1745 = tpu.concatenate %1285, %1671 in 1 : vector<4x32xf32>, vector<4x32xf32> -> vector<4x64xf32>
    %1746 = tpu.concatenate %1356, %1600 in 1 : vector<4x32xf32>, vector<4x32xf32> -> vector<4x64xf32>
    %1747 = tpu.concatenate %1427, %1529 in 1 : vector<4x32xf32>, vector<4x32xf32> -> vector<4x64xf32>
    %1748 = tpu.concatenate %1498, %1458 in 1 : vector<4x32xf32>, vector<4x32xf32> -> vector<4x64xf32>
    %1749 = tpu.concatenate %1569, %1387 in 1 : vector<4x32xf32>, vector<4x32xf32> -> vector<4x64xf32>
    %1750 = tpu.concatenate %1640, %1316 in 1 : vector<4x32xf32>, vector<4x32xf32> -> vector<4x64xf32>
    %1751 = tpu.concatenate %1711, %1245 in 1 : vector<4x32xf32>, vector<4x32xf32> -> vector<4x64xf32>
    %1752 = tpu.concatenate %1744, %1745, %1746, %1747, %1748, %1749, %1750, %1751 in 0 : vector<4x64xf32>, vector<4x64xf32>, vector<4x64xf32>, vector<4x64xf32>, vector<4x64xf32>, vector<4x64xf32>, vector<4x64xf32>, vector<4x64xf32> -> vector<32x64xf32>
    %1753 = arith.truncf %1752 : vector<32x64xf32> to vector<32x64xbf16>
    %c0_488 = arith.constant 0 : index
    %c0_489 = arith.constant 0 : index
    %1754 = vector.load %arg11[%c0_488, %c0_489] : memref<64x256xbf16, #tpu.memory_space<vmem>>, vector<64x256xbf16>
    %c0_490 = arith.constant 0 : index
    %c0_491 = arith.constant 0 : index
    %1755 = vector.load %arg12[%c0_490, %c0_491] : memref<64x256xbf16, #tpu.memory_space<vmem>>, vector<64x256xbf16>
    %c0_492 = arith.constant 0 : index
    %c0_493 = arith.constant 0 : index
    %1756 = vector.load %arg13[%c0_492, %c0_493] : memref<1x256xf32, #tpu.memory_space<vmem>>, vector<1x256xf32>
    %cst_494 = arith.constant dense<0.000000e+00> : vector<32x256xf32>
    %1757 = tpu.matmul %1753, %1754, %cst_494 {dimension_numbers = #tpu.dot_dimension_numbers<[1], [0], [0], [1], [0, 0, 1, 1], [], []>} : vector<32x64xbf16>, vector<64x256xbf16>, vector<32x256xf32> -> vector<32x256xf32>
    %1758 = vector.broadcast %1756 : vector<1x256xf32> to vector<32x256xf32>
    %1759 = arith.addf %1757, %1758 : vector<32x256xf32>
    %cst_495 = arith.constant 0.000000e+00 : f32
    %1760 = vector.broadcast %cst_495 : f32 to vector<4x64xf32>
    %cst_496 = arith.constant 0.000000e+00 : f32
    %1761 = vector.broadcast %cst_496 : f32 to vector<4x32xf32>
    %cst_497 = arith.constant 0.000000e+00 : f32
    %1762 = vector.broadcast %cst_497 : f32 to vector<4x32xf32>
    %1763 = arith.truncf %1760 : vector<4x64xf32> to vector<4x64xbf16>
    %cst_498 = arith.constant dense<0.000000e+00> : vector<4x256xf32>
    %1764 = tpu.matmul %1763, %1755, %cst_498 {dimension_numbers = #tpu.dot_dimension_numbers<[1], [0], [0], [1], [0, 0, 1, 1], [], []>} : vector<4x64xbf16>, vector<64x256xbf16>, vector<4x256xf32> -> vector<4x256xf32>
    %1765 = vector.extract_strided_slice %1759 {offsets = [0, 0], sizes = [4, 128], strides = [1, 1]} : vector<32x256xf32> to vector<4x128xf32>
    %1766 = vector.extract_strided_slice %1764 {offsets = [0, 0], sizes = [4, 128], strides = [1, 1]} : vector<4x256xf32> to vector<4x128xf32>
    %1767 = arith.addf %1765, %1766 : vector<4x128xf32>
    %1768 = vector.extract_strided_slice %1759 {offsets = [28, 128], sizes = [4, 128], strides = [1, 1]} : vector<32x256xf32> to vector<4x128xf32>
    %1769 = vector.extract_strided_slice %1764 {offsets = [0, 128], sizes = [4, 128], strides = [1, 1]} : vector<4x256xf32> to vector<4x128xf32>
    %1770 = arith.addf %1768, %1769 : vector<4x128xf32>
    %1771 = vector.extract_strided_slice %1767 {offsets = [0, 0], sizes = [4, 32], strides = [1, 1]} : vector<4x128xf32> to vector<4x32xf32>
    %cst_499 = arith.constant 0.000000e+00 : f32
    %1772 = vector.broadcast %cst_499 : f32 to vector<4x32xf32>
    %1773 = arith.subf %1772, %1771 : vector<4x32xf32>
    %1774 = math.exp %1773 : vector<4x32xf32>
    %cst_500 = arith.constant 1.000000e+00 : f32
    %1775 = vector.broadcast %cst_500 : f32 to vector<4x32xf32>
    %1776 = arith.addf %1775, %1774 : vector<4x32xf32>
    %cst_501 = arith.constant 1.000000e+00 : f32
    %1777 = vector.broadcast %cst_501 : f32 to vector<4x32xf32>
    %1778 = arith.divf %1777, %1776 : vector<4x32xf32>
    %1779 = vector.extract_strided_slice %1767 {offsets = [0, 32], sizes = [4, 32], strides = [1, 1]} : vector<4x128xf32> to vector<4x32xf32>
    %cst_502 = arith.constant 0.000000e+00 : f32
    %1780 = vector.broadcast %cst_502 : f32 to vector<4x32xf32>
    %1781 = arith.subf %1780, %1779 : vector<4x32xf32>
    %1782 = math.exp %1781 : vector<4x32xf32>
    %cst_503 = arith.constant 1.000000e+00 : f32
    %1783 = vector.broadcast %cst_503 : f32 to vector<4x32xf32>
    %1784 = arith.addf %1783, %1782 : vector<4x32xf32>
    %cst_504 = arith.constant 1.000000e+00 : f32
    %1785 = vector.broadcast %cst_504 : f32 to vector<4x32xf32>
    %1786 = arith.divf %1785, %1784 : vector<4x32xf32>
    %1787 = vector.extract_strided_slice %1767 {offsets = [0, 64], sizes = [4, 32], strides = [1, 1]} : vector<4x128xf32> to vector<4x32xf32>
    %1788 = math.tanh %1787 : vector<4x32xf32>
    %1789 = vector.extract_strided_slice %1767 {offsets = [0, 96], sizes = [4, 32], strides = [1, 1]} : vector<4x128xf32> to vector<4x32xf32>
    %cst_505 = arith.constant 0.000000e+00 : f32
    %1790 = vector.broadcast %cst_505 : f32 to vector<4x32xf32>
    %1791 = arith.subf %1790, %1789 : vector<4x32xf32>
    %1792 = math.exp %1791 : vector<4x32xf32>
    %cst_506 = arith.constant 1.000000e+00 : f32
    %1793 = vector.broadcast %cst_506 : f32 to vector<4x32xf32>
    %1794 = arith.addf %1793, %1792 : vector<4x32xf32>
    %cst_507 = arith.constant 1.000000e+00 : f32
    %1795 = vector.broadcast %cst_507 : f32 to vector<4x32xf32>
    %1796 = arith.divf %1795, %1794 : vector<4x32xf32>
    %1797 = arith.mulf %1786, %1761 : vector<4x32xf32>
    %1798 = arith.mulf %1778, %1788 : vector<4x32xf32>
    %1799 = arith.addf %1797, %1798 : vector<4x32xf32>
    %1800 = math.tanh %1799 : vector<4x32xf32>
    %1801 = arith.mulf %1796, %1800 : vector<4x32xf32>
    %1802 = vector.extract_strided_slice %1770 {offsets = [0, 0], sizes = [4, 32], strides = [1, 1]} : vector<4x128xf32> to vector<4x32xf32>
    %cst_508 = arith.constant 0.000000e+00 : f32
    %1803 = vector.broadcast %cst_508 : f32 to vector<4x32xf32>
    %1804 = arith.subf %1803, %1802 : vector<4x32xf32>
    %1805 = math.exp %1804 : vector<4x32xf32>
    %cst_509 = arith.constant 1.000000e+00 : f32
    %1806 = vector.broadcast %cst_509 : f32 to vector<4x32xf32>
    %1807 = arith.addf %1806, %1805 : vector<4x32xf32>
    %cst_510 = arith.constant 1.000000e+00 : f32
    %1808 = vector.broadcast %cst_510 : f32 to vector<4x32xf32>
    %1809 = arith.divf %1808, %1807 : vector<4x32xf32>
    %1810 = vector.extract_strided_slice %1770 {offsets = [0, 32], sizes = [4, 32], strides = [1, 1]} : vector<4x128xf32> to vector<4x32xf32>
    %cst_511 = arith.constant 0.000000e+00 : f32
    %1811 = vector.broadcast %cst_511 : f32 to vector<4x32xf32>
    %1812 = arith.subf %1811, %1810 : vector<4x32xf32>
    %1813 = math.exp %1812 : vector<4x32xf32>
    %cst_512 = arith.constant 1.000000e+00 : f32
    %1814 = vector.broadcast %cst_512 : f32 to vector<4x32xf32>
    %1815 = arith.addf %1814, %1813 : vector<4x32xf32>
    %cst_513 = arith.constant 1.000000e+00 : f32
    %1816 = vector.broadcast %cst_513 : f32 to vector<4x32xf32>
    %1817 = arith.divf %1816, %1815 : vector<4x32xf32>
    %1818 = vector.extract_strided_slice %1770 {offsets = [0, 64], sizes = [4, 32], strides = [1, 1]} : vector<4x128xf32> to vector<4x32xf32>
    %1819 = math.tanh %1818 : vector<4x32xf32>
    %1820 = vector.extract_strided_slice %1770 {offsets = [0, 96], sizes = [4, 32], strides = [1, 1]} : vector<4x128xf32> to vector<4x32xf32>
    %cst_514 = arith.constant 0.000000e+00 : f32
    %1821 = vector.broadcast %cst_514 : f32 to vector<4x32xf32>
    %1822 = arith.subf %1821, %1820 : vector<4x32xf32>
    %1823 = math.exp %1822 : vector<4x32xf32>
    %cst_515 = arith.constant 1.000000e+00 : f32
    %1824 = vector.broadcast %cst_515 : f32 to vector<4x32xf32>
    %1825 = arith.addf %1824, %1823 : vector<4x32xf32>
    %cst_516 = arith.constant 1.000000e+00 : f32
    %1826 = vector.broadcast %cst_516 : f32 to vector<4x32xf32>
    %1827 = arith.divf %1826, %1825 : vector<4x32xf32>
    %1828 = arith.mulf %1817, %1762 : vector<4x32xf32>
    %1829 = arith.mulf %1809, %1819 : vector<4x32xf32>
    %1830 = arith.addf %1828, %1829 : vector<4x32xf32>
    %1831 = math.tanh %1830 : vector<4x32xf32>
    %1832 = arith.mulf %1827, %1831 : vector<4x32xf32>
    %1833 = tpu.concatenate %1801, %1832 in 1 : vector<4x32xf32>, vector<4x32xf32> -> vector<4x64xf32>
    %1834 = arith.truncf %1833 : vector<4x64xf32> to vector<4x64xbf16>
    %cst_517 = arith.constant dense<0.000000e+00> : vector<4x256xf32>
    %1835 = tpu.matmul %1834, %1755, %cst_517 {dimension_numbers = #tpu.dot_dimension_numbers<[1], [0], [0], [1], [0, 0, 1, 1], [], []>} : vector<4x64xbf16>, vector<64x256xbf16>, vector<4x256xf32> -> vector<4x256xf32>
    %1836 = vector.extract_strided_slice %1759 {offsets = [4, 0], sizes = [4, 128], strides = [1, 1]} : vector<32x256xf32> to vector<4x128xf32>
    %1837 = vector.extract_strided_slice %1835 {offsets = [0, 0], sizes = [4, 128], strides = [1, 1]} : vector<4x256xf32> to vector<4x128xf32>
    %1838 = arith.addf %1836, %1837 : vector<4x128xf32>
    %1839 = vector.extract_strided_slice %1759 {offsets = [24, 128], sizes = [4, 128], strides = [1, 1]} : vector<32x256xf32> to vector<4x128xf32>
    %1840 = vector.extract_strided_slice %1835 {offsets = [0, 128], sizes = [4, 128], strides = [1, 1]} : vector<4x256xf32> to vector<4x128xf32>
    %1841 = arith.addf %1839, %1840 : vector<4x128xf32>
    %1842 = vector.extract_strided_slice %1838 {offsets = [0, 0], sizes = [4, 32], strides = [1, 1]} : vector<4x128xf32> to vector<4x32xf32>
    %cst_518 = arith.constant 0.000000e+00 : f32
    %1843 = vector.broadcast %cst_518 : f32 to vector<4x32xf32>
    %1844 = arith.subf %1843, %1842 : vector<4x32xf32>
    %1845 = math.exp %1844 : vector<4x32xf32>
    %cst_519 = arith.constant 1.000000e+00 : f32
    %1846 = vector.broadcast %cst_519 : f32 to vector<4x32xf32>
    %1847 = arith.addf %1846, %1845 : vector<4x32xf32>
    %cst_520 = arith.constant 1.000000e+00 : f32
    %1848 = vector.broadcast %cst_520 : f32 to vector<4x32xf32>
    %1849 = arith.divf %1848, %1847 : vector<4x32xf32>
    %1850 = vector.extract_strided_slice %1838 {offsets = [0, 32], sizes = [4, 32], strides = [1, 1]} : vector<4x128xf32> to vector<4x32xf32>
    %cst_521 = arith.constant 0.000000e+00 : f32
    %1851 = vector.broadcast %cst_521 : f32 to vector<4x32xf32>
    %1852 = arith.subf %1851, %1850 : vector<4x32xf32>
    %1853 = math.exp %1852 : vector<4x32xf32>
    %cst_522 = arith.constant 1.000000e+00 : f32
    %1854 = vector.broadcast %cst_522 : f32 to vector<4x32xf32>
    %1855 = arith.addf %1854, %1853 : vector<4x32xf32>
    %cst_523 = arith.constant 1.000000e+00 : f32
    %1856 = vector.broadcast %cst_523 : f32 to vector<4x32xf32>
    %1857 = arith.divf %1856, %1855 : vector<4x32xf32>
    %1858 = vector.extract_strided_slice %1838 {offsets = [0, 64], sizes = [4, 32], strides = [1, 1]} : vector<4x128xf32> to vector<4x32xf32>
    %1859 = math.tanh %1858 : vector<4x32xf32>
    %1860 = vector.extract_strided_slice %1838 {offsets = [0, 96], sizes = [4, 32], strides = [1, 1]} : vector<4x128xf32> to vector<4x32xf32>
    %cst_524 = arith.constant 0.000000e+00 : f32
    %1861 = vector.broadcast %cst_524 : f32 to vector<4x32xf32>
    %1862 = arith.subf %1861, %1860 : vector<4x32xf32>
    %1863 = math.exp %1862 : vector<4x32xf32>
    %cst_525 = arith.constant 1.000000e+00 : f32
    %1864 = vector.broadcast %cst_525 : f32 to vector<4x32xf32>
    %1865 = arith.addf %1864, %1863 : vector<4x32xf32>
    %cst_526 = arith.constant 1.000000e+00 : f32
    %1866 = vector.broadcast %cst_526 : f32 to vector<4x32xf32>
    %1867 = arith.divf %1866, %1865 : vector<4x32xf32>
    %1868 = arith.mulf %1857, %1799 : vector<4x32xf32>
    %1869 = arith.mulf %1849, %1859 : vector<4x32xf32>
    %1870 = arith.addf %1868, %1869 : vector<4x32xf32>
    %1871 = math.tanh %1870 : vector<4x32xf32>
    %1872 = arith.mulf %1867, %1871 : vector<4x32xf32>
    %1873 = vector.extract_strided_slice %1841 {offsets = [0, 0], sizes = [4, 32], strides = [1, 1]} : vector<4x128xf32> to vector<4x32xf32>
    %cst_527 = arith.constant 0.000000e+00 : f32
    %1874 = vector.broadcast %cst_527 : f32 to vector<4x32xf32>
    %1875 = arith.subf %1874, %1873 : vector<4x32xf32>
    %1876 = math.exp %1875 : vector<4x32xf32>
    %cst_528 = arith.constant 1.000000e+00 : f32
    %1877 = vector.broadcast %cst_528 : f32 to vector<4x32xf32>
    %1878 = arith.addf %1877, %1876 : vector<4x32xf32>
    %cst_529 = arith.constant 1.000000e+00 : f32
    %1879 = vector.broadcast %cst_529 : f32 to vector<4x32xf32>
    %1880 = arith.divf %1879, %1878 : vector<4x32xf32>
    %1881 = vector.extract_strided_slice %1841 {offsets = [0, 32], sizes = [4, 32], strides = [1, 1]} : vector<4x128xf32> to vector<4x32xf32>
    %cst_530 = arith.constant 0.000000e+00 : f32
    %1882 = vector.broadcast %cst_530 : f32 to vector<4x32xf32>
    %1883 = arith.subf %1882, %1881 : vector<4x32xf32>
    %1884 = math.exp %1883 : vector<4x32xf32>
    %cst_531 = arith.constant 1.000000e+00 : f32
    %1885 = vector.broadcast %cst_531 : f32 to vector<4x32xf32>
    %1886 = arith.addf %1885, %1884 : vector<4x32xf32>
    %cst_532 = arith.constant 1.000000e+00 : f32
    %1887 = vector.broadcast %cst_532 : f32 to vector<4x32xf32>
    %1888 = arith.divf %1887, %1886 : vector<4x32xf32>
    %1889 = vector.extract_strided_slice %1841 {offsets = [0, 64], sizes = [4, 32], strides = [1, 1]} : vector<4x128xf32> to vector<4x32xf32>
    %1890 = math.tanh %1889 : vector<4x32xf32>
    %1891 = vector.extract_strided_slice %1841 {offsets = [0, 96], sizes = [4, 32], strides = [1, 1]} : vector<4x128xf32> to vector<4x32xf32>
    %cst_533 = arith.constant 0.000000e+00 : f32
    %1892 = vector.broadcast %cst_533 : f32 to vector<4x32xf32>
    %1893 = arith.subf %1892, %1891 : vector<4x32xf32>
    %1894 = math.exp %1893 : vector<4x32xf32>
    %cst_534 = arith.constant 1.000000e+00 : f32
    %1895 = vector.broadcast %cst_534 : f32 to vector<4x32xf32>
    %1896 = arith.addf %1895, %1894 : vector<4x32xf32>
    %cst_535 = arith.constant 1.000000e+00 : f32
    %1897 = vector.broadcast %cst_535 : f32 to vector<4x32xf32>
    %1898 = arith.divf %1897, %1896 : vector<4x32xf32>
    %1899 = arith.mulf %1888, %1830 : vector<4x32xf32>
    %1900 = arith.mulf %1880, %1890 : vector<4x32xf32>
    %1901 = arith.addf %1899, %1900 : vector<4x32xf32>
    %1902 = math.tanh %1901 : vector<4x32xf32>
    %1903 = arith.mulf %1898, %1902 : vector<4x32xf32>
    %1904 = tpu.concatenate %1872, %1903 in 1 : vector<4x32xf32>, vector<4x32xf32> -> vector<4x64xf32>
    %1905 = arith.truncf %1904 : vector<4x64xf32> to vector<4x64xbf16>
    %cst_536 = arith.constant dense<0.000000e+00> : vector<4x256xf32>
    %1906 = tpu.matmul %1905, %1755, %cst_536 {dimension_numbers = #tpu.dot_dimension_numbers<[1], [0], [0], [1], [0, 0, 1, 1], [], []>} : vector<4x64xbf16>, vector<64x256xbf16>, vector<4x256xf32> -> vector<4x256xf32>
    %1907 = vector.extract_strided_slice %1759 {offsets = [8, 0], sizes = [4, 128], strides = [1, 1]} : vector<32x256xf32> to vector<4x128xf32>
    %1908 = vector.extract_strided_slice %1906 {offsets = [0, 0], sizes = [4, 128], strides = [1, 1]} : vector<4x256xf32> to vector<4x128xf32>
    %1909 = arith.addf %1907, %1908 : vector<4x128xf32>
    %1910 = vector.extract_strided_slice %1759 {offsets = [20, 128], sizes = [4, 128], strides = [1, 1]} : vector<32x256xf32> to vector<4x128xf32>
    %1911 = vector.extract_strided_slice %1906 {offsets = [0, 128], sizes = [4, 128], strides = [1, 1]} : vector<4x256xf32> to vector<4x128xf32>
    %1912 = arith.addf %1910, %1911 : vector<4x128xf32>
    %1913 = vector.extract_strided_slice %1909 {offsets = [0, 0], sizes = [4, 32], strides = [1, 1]} : vector<4x128xf32> to vector<4x32xf32>
    %cst_537 = arith.constant 0.000000e+00 : f32
    %1914 = vector.broadcast %cst_537 : f32 to vector<4x32xf32>
    %1915 = arith.subf %1914, %1913 : vector<4x32xf32>
    %1916 = math.exp %1915 : vector<4x32xf32>
    %cst_538 = arith.constant 1.000000e+00 : f32
    %1917 = vector.broadcast %cst_538 : f32 to vector<4x32xf32>
    %1918 = arith.addf %1917, %1916 : vector<4x32xf32>
    %cst_539 = arith.constant 1.000000e+00 : f32
    %1919 = vector.broadcast %cst_539 : f32 to vector<4x32xf32>
    %1920 = arith.divf %1919, %1918 : vector<4x32xf32>
    %1921 = vector.extract_strided_slice %1909 {offsets = [0, 32], sizes = [4, 32], strides = [1, 1]} : vector<4x128xf32> to vector<4x32xf32>
    %cst_540 = arith.constant 0.000000e+00 : f32
    %1922 = vector.broadcast %cst_540 : f32 to vector<4x32xf32>
    %1923 = arith.subf %1922, %1921 : vector<4x32xf32>
    %1924 = math.exp %1923 : vector<4x32xf32>
    %cst_541 = arith.constant 1.000000e+00 : f32
    %1925 = vector.broadcast %cst_541 : f32 to vector<4x32xf32>
    %1926 = arith.addf %1925, %1924 : vector<4x32xf32>
    %cst_542 = arith.constant 1.000000e+00 : f32
    %1927 = vector.broadcast %cst_542 : f32 to vector<4x32xf32>
    %1928 = arith.divf %1927, %1926 : vector<4x32xf32>
    %1929 = vector.extract_strided_slice %1909 {offsets = [0, 64], sizes = [4, 32], strides = [1, 1]} : vector<4x128xf32> to vector<4x32xf32>
    %1930 = math.tanh %1929 : vector<4x32xf32>
    %1931 = vector.extract_strided_slice %1909 {offsets = [0, 96], sizes = [4, 32], strides = [1, 1]} : vector<4x128xf32> to vector<4x32xf32>
    %cst_543 = arith.constant 0.000000e+00 : f32
    %1932 = vector.broadcast %cst_543 : f32 to vector<4x32xf32>
    %1933 = arith.subf %1932, %1931 : vector<4x32xf32>
    %1934 = math.exp %1933 : vector<4x32xf32>
    %cst_544 = arith.constant 1.000000e+00 : f32
    %1935 = vector.broadcast %cst_544 : f32 to vector<4x32xf32>
    %1936 = arith.addf %1935, %1934 : vector<4x32xf32>
    %cst_545 = arith.constant 1.000000e+00 : f32
    %1937 = vector.broadcast %cst_545 : f32 to vector<4x32xf32>
    %1938 = arith.divf %1937, %1936 : vector<4x32xf32>
    %1939 = arith.mulf %1928, %1870 : vector<4x32xf32>
    %1940 = arith.mulf %1920, %1930 : vector<4x32xf32>
    %1941 = arith.addf %1939, %1940 : vector<4x32xf32>
    %1942 = math.tanh %1941 : vector<4x32xf32>
    %1943 = arith.mulf %1938, %1942 : vector<4x32xf32>
    %1944 = vector.extract_strided_slice %1912 {offsets = [0, 0], sizes = [4, 32], strides = [1, 1]} : vector<4x128xf32> to vector<4x32xf32>
    %cst_546 = arith.constant 0.000000e+00 : f32
    %1945 = vector.broadcast %cst_546 : f32 to vector<4x32xf32>
    %1946 = arith.subf %1945, %1944 : vector<4x32xf32>
    %1947 = math.exp %1946 : vector<4x32xf32>
    %cst_547 = arith.constant 1.000000e+00 : f32
    %1948 = vector.broadcast %cst_547 : f32 to vector<4x32xf32>
    %1949 = arith.addf %1948, %1947 : vector<4x32xf32>
    %cst_548 = arith.constant 1.000000e+00 : f32
    %1950 = vector.broadcast %cst_548 : f32 to vector<4x32xf32>
    %1951 = arith.divf %1950, %1949 : vector<4x32xf32>
    %1952 = vector.extract_strided_slice %1912 {offsets = [0, 32], sizes = [4, 32], strides = [1, 1]} : vector<4x128xf32> to vector<4x32xf32>
    %cst_549 = arith.constant 0.000000e+00 : f32
    %1953 = vector.broadcast %cst_549 : f32 to vector<4x32xf32>
    %1954 = arith.subf %1953, %1952 : vector<4x32xf32>
    %1955 = math.exp %1954 : vector<4x32xf32>
    %cst_550 = arith.constant 1.000000e+00 : f32
    %1956 = vector.broadcast %cst_550 : f32 to vector<4x32xf32>
    %1957 = arith.addf %1956, %1955 : vector<4x32xf32>
    %cst_551 = arith.constant 1.000000e+00 : f32
    %1958 = vector.broadcast %cst_551 : f32 to vector<4x32xf32>
    %1959 = arith.divf %1958, %1957 : vector<4x32xf32>
    %1960 = vector.extract_strided_slice %1912 {offsets = [0, 64], sizes = [4, 32], strides = [1, 1]} : vector<4x128xf32> to vector<4x32xf32>
    %1961 = math.tanh %1960 : vector<4x32xf32>
    %1962 = vector.extract_strided_slice %1912 {offsets = [0, 96], sizes = [4, 32], strides = [1, 1]} : vector<4x128xf32> to vector<4x32xf32>
    %cst_552 = arith.constant 0.000000e+00 : f32
    %1963 = vector.broadcast %cst_552 : f32 to vector<4x32xf32>
    %1964 = arith.subf %1963, %1962 : vector<4x32xf32>
    %1965 = math.exp %1964 : vector<4x32xf32>
    %cst_553 = arith.constant 1.000000e+00 : f32
    %1966 = vector.broadcast %cst_553 : f32 to vector<4x32xf32>
    %1967 = arith.addf %1966, %1965 : vector<4x32xf32>
    %cst_554 = arith.constant 1.000000e+00 : f32
    %1968 = vector.broadcast %cst_554 : f32 to vector<4x32xf32>
    %1969 = arith.divf %1968, %1967 : vector<4x32xf32>
    %1970 = arith.mulf %1959, %1901 : vector<4x32xf32>
    %1971 = arith.mulf %1951, %1961 : vector<4x32xf32>
    %1972 = arith.addf %1970, %1971 : vector<4x32xf32>
    %1973 = math.tanh %1972 : vector<4x32xf32>
    %1974 = arith.mulf %1969, %1973 : vector<4x32xf32>
    %1975 = tpu.concatenate %1943, %1974 in 1 : vector<4x32xf32>, vector<4x32xf32> -> vector<4x64xf32>
    %1976 = arith.truncf %1975 : vector<4x64xf32> to vector<4x64xbf16>
    %cst_555 = arith.constant dense<0.000000e+00> : vector<4x256xf32>
    %1977 = tpu.matmul %1976, %1755, %cst_555 {dimension_numbers = #tpu.dot_dimension_numbers<[1], [0], [0], [1], [0, 0, 1, 1], [], []>} : vector<4x64xbf16>, vector<64x256xbf16>, vector<4x256xf32> -> vector<4x256xf32>
    %1978 = vector.extract_strided_slice %1759 {offsets = [12, 0], sizes = [4, 128], strides = [1, 1]} : vector<32x256xf32> to vector<4x128xf32>
    %1979 = vector.extract_strided_slice %1977 {offsets = [0, 0], sizes = [4, 128], strides = [1, 1]} : vector<4x256xf32> to vector<4x128xf32>
    %1980 = arith.addf %1978, %1979 : vector<4x128xf32>
    %1981 = vector.extract_strided_slice %1759 {offsets = [16, 128], sizes = [4, 128], strides = [1, 1]} : vector<32x256xf32> to vector<4x128xf32>
    %1982 = vector.extract_strided_slice %1977 {offsets = [0, 128], sizes = [4, 128], strides = [1, 1]} : vector<4x256xf32> to vector<4x128xf32>
    %1983 = arith.addf %1981, %1982 : vector<4x128xf32>
    %1984 = vector.extract_strided_slice %1980 {offsets = [0, 0], sizes = [4, 32], strides = [1, 1]} : vector<4x128xf32> to vector<4x32xf32>
    %cst_556 = arith.constant 0.000000e+00 : f32
    %1985 = vector.broadcast %cst_556 : f32 to vector<4x32xf32>
    %1986 = arith.subf %1985, %1984 : vector<4x32xf32>
    %1987 = math.exp %1986 : vector<4x32xf32>
    %cst_557 = arith.constant 1.000000e+00 : f32
    %1988 = vector.broadcast %cst_557 : f32 to vector<4x32xf32>
    %1989 = arith.addf %1988, %1987 : vector<4x32xf32>
    %cst_558 = arith.constant 1.000000e+00 : f32
    %1990 = vector.broadcast %cst_558 : f32 to vector<4x32xf32>
    %1991 = arith.divf %1990, %1989 : vector<4x32xf32>
    %1992 = vector.extract_strided_slice %1980 {offsets = [0, 32], sizes = [4, 32], strides = [1, 1]} : vector<4x128xf32> to vector<4x32xf32>
    %cst_559 = arith.constant 0.000000e+00 : f32
    %1993 = vector.broadcast %cst_559 : f32 to vector<4x32xf32>
    %1994 = arith.subf %1993, %1992 : vector<4x32xf32>
    %1995 = math.exp %1994 : vector<4x32xf32>
    %cst_560 = arith.constant 1.000000e+00 : f32
    %1996 = vector.broadcast %cst_560 : f32 to vector<4x32xf32>
    %1997 = arith.addf %1996, %1995 : vector<4x32xf32>
    %cst_561 = arith.constant 1.000000e+00 : f32
    %1998 = vector.broadcast %cst_561 : f32 to vector<4x32xf32>
    %1999 = arith.divf %1998, %1997 : vector<4x32xf32>
    %2000 = vector.extract_strided_slice %1980 {offsets = [0, 64], sizes = [4, 32], strides = [1, 1]} : vector<4x128xf32> to vector<4x32xf32>
    %2001 = math.tanh %2000 : vector<4x32xf32>
    %2002 = vector.extract_strided_slice %1980 {offsets = [0, 96], sizes = [4, 32], strides = [1, 1]} : vector<4x128xf32> to vector<4x32xf32>
    %cst_562 = arith.constant 0.000000e+00 : f32
    %2003 = vector.broadcast %cst_562 : f32 to vector<4x32xf32>
    %2004 = arith.subf %2003, %2002 : vector<4x32xf32>
    %2005 = math.exp %2004 : vector<4x32xf32>
    %cst_563 = arith.constant 1.000000e+00 : f32
    %2006 = vector.broadcast %cst_563 : f32 to vector<4x32xf32>
    %2007 = arith.addf %2006, %2005 : vector<4x32xf32>
    %cst_564 = arith.constant 1.000000e+00 : f32
    %2008 = vector.broadcast %cst_564 : f32 to vector<4x32xf32>
    %2009 = arith.divf %2008, %2007 : vector<4x32xf32>
    %2010 = arith.mulf %1999, %1941 : vector<4x32xf32>
    %2011 = arith.mulf %1991, %2001 : vector<4x32xf32>
    %2012 = arith.addf %2010, %2011 : vector<4x32xf32>
    %2013 = math.tanh %2012 : vector<4x32xf32>
    %2014 = arith.mulf %2009, %2013 : vector<4x32xf32>
    %2015 = vector.extract_strided_slice %1983 {offsets = [0, 0], sizes = [4, 32], strides = [1, 1]} : vector<4x128xf32> to vector<4x32xf32>
    %cst_565 = arith.constant 0.000000e+00 : f32
    %2016 = vector.broadcast %cst_565 : f32 to vector<4x32xf32>
    %2017 = arith.subf %2016, %2015 : vector<4x32xf32>
    %2018 = math.exp %2017 : vector<4x32xf32>
    %cst_566 = arith.constant 1.000000e+00 : f32
    %2019 = vector.broadcast %cst_566 : f32 to vector<4x32xf32>
    %2020 = arith.addf %2019, %2018 : vector<4x32xf32>
    %cst_567 = arith.constant 1.000000e+00 : f32
    %2021 = vector.broadcast %cst_567 : f32 to vector<4x32xf32>
    %2022 = arith.divf %2021, %2020 : vector<4x32xf32>
    %2023 = vector.extract_strided_slice %1983 {offsets = [0, 32], sizes = [4, 32], strides = [1, 1]} : vector<4x128xf32> to vector<4x32xf32>
    %cst_568 = arith.constant 0.000000e+00 : f32
    %2024 = vector.broadcast %cst_568 : f32 to vector<4x32xf32>
    %2025 = arith.subf %2024, %2023 : vector<4x32xf32>
    %2026 = math.exp %2025 : vector<4x32xf32>
    %cst_569 = arith.constant 1.000000e+00 : f32
    %2027 = vector.broadcast %cst_569 : f32 to vector<4x32xf32>
    %2028 = arith.addf %2027, %2026 : vector<4x32xf32>
    %cst_570 = arith.constant 1.000000e+00 : f32
    %2029 = vector.broadcast %cst_570 : f32 to vector<4x32xf32>
    %2030 = arith.divf %2029, %2028 : vector<4x32xf32>
    %2031 = vector.extract_strided_slice %1983 {offsets = [0, 64], sizes = [4, 32], strides = [1, 1]} : vector<4x128xf32> to vector<4x32xf32>
    %2032 = math.tanh %2031 : vector<4x32xf32>
    %2033 = vector.extract_strided_slice %1983 {offsets = [0, 96], sizes = [4, 32], strides = [1, 1]} : vector<4x128xf32> to vector<4x32xf32>
    %cst_571 = arith.constant 0.000000e+00 : f32
    %2034 = vector.broadcast %cst_571 : f32 to vector<4x32xf32>
    %2035 = arith.subf %2034, %2033 : vector<4x32xf32>
    %2036 = math.exp %2035 : vector<4x32xf32>
    %cst_572 = arith.constant 1.000000e+00 : f32
    %2037 = vector.broadcast %cst_572 : f32 to vector<4x32xf32>
    %2038 = arith.addf %2037, %2036 : vector<4x32xf32>
    %cst_573 = arith.constant 1.000000e+00 : f32
    %2039 = vector.broadcast %cst_573 : f32 to vector<4x32xf32>
    %2040 = arith.divf %2039, %2038 : vector<4x32xf32>
    %2041 = arith.mulf %2030, %1972 : vector<4x32xf32>
    %2042 = arith.mulf %2022, %2032 : vector<4x32xf32>
    %2043 = arith.addf %2041, %2042 : vector<4x32xf32>
    %2044 = math.tanh %2043 : vector<4x32xf32>
    %2045 = arith.mulf %2040, %2044 : vector<4x32xf32>
    %2046 = tpu.concatenate %2014, %2045 in 1 : vector<4x32xf32>, vector<4x32xf32> -> vector<4x64xf32>
    %2047 = arith.truncf %2046 : vector<4x64xf32> to vector<4x64xbf16>
    %cst_574 = arith.constant dense<0.000000e+00> : vector<4x256xf32>
    %2048 = tpu.matmul %2047, %1755, %cst_574 {dimension_numbers = #tpu.dot_dimension_numbers<[1], [0], [0], [1], [0, 0, 1, 1], [], []>} : vector<4x64xbf16>, vector<64x256xbf16>, vector<4x256xf32> -> vector<4x256xf32>
    %2049 = vector.extract_strided_slice %1759 {offsets = [16, 0], sizes = [4, 128], strides = [1, 1]} : vector<32x256xf32> to vector<4x128xf32>
    %2050 = vector.extract_strided_slice %2048 {offsets = [0, 0], sizes = [4, 128], strides = [1, 1]} : vector<4x256xf32> to vector<4x128xf32>
    %2051 = arith.addf %2049, %2050 : vector<4x128xf32>
    %2052 = vector.extract_strided_slice %1759 {offsets = [12, 128], sizes = [4, 128], strides = [1, 1]} : vector<32x256xf32> to vector<4x128xf32>
    %2053 = vector.extract_strided_slice %2048 {offsets = [0, 128], sizes = [4, 128], strides = [1, 1]} : vector<4x256xf32> to vector<4x128xf32>
    %2054 = arith.addf %2052, %2053 : vector<4x128xf32>
    %2055 = vector.extract_strided_slice %2051 {offsets = [0, 0], sizes = [4, 32], strides = [1, 1]} : vector<4x128xf32> to vector<4x32xf32>
    %cst_575 = arith.constant 0.000000e+00 : f32
    %2056 = vector.broadcast %cst_575 : f32 to vector<4x32xf32>
    %2057 = arith.subf %2056, %2055 : vector<4x32xf32>
    %2058 = math.exp %2057 : vector<4x32xf32>
    %cst_576 = arith.constant 1.000000e+00 : f32
    %2059 = vector.broadcast %cst_576 : f32 to vector<4x32xf32>
    %2060 = arith.addf %2059, %2058 : vector<4x32xf32>
    %cst_577 = arith.constant 1.000000e+00 : f32
    %2061 = vector.broadcast %cst_577 : f32 to vector<4x32xf32>
    %2062 = arith.divf %2061, %2060 : vector<4x32xf32>
    %2063 = vector.extract_strided_slice %2051 {offsets = [0, 32], sizes = [4, 32], strides = [1, 1]} : vector<4x128xf32> to vector<4x32xf32>
    %cst_578 = arith.constant 0.000000e+00 : f32
    %2064 = vector.broadcast %cst_578 : f32 to vector<4x32xf32>
    %2065 = arith.subf %2064, %2063 : vector<4x32xf32>
    %2066 = math.exp %2065 : vector<4x32xf32>
    %cst_579 = arith.constant 1.000000e+00 : f32
    %2067 = vector.broadcast %cst_579 : f32 to vector<4x32xf32>
    %2068 = arith.addf %2067, %2066 : vector<4x32xf32>
    %cst_580 = arith.constant 1.000000e+00 : f32
    %2069 = vector.broadcast %cst_580 : f32 to vector<4x32xf32>
    %2070 = arith.divf %2069, %2068 : vector<4x32xf32>
    %2071 = vector.extract_strided_slice %2051 {offsets = [0, 64], sizes = [4, 32], strides = [1, 1]} : vector<4x128xf32> to vector<4x32xf32>
    %2072 = math.tanh %2071 : vector<4x32xf32>
    %2073 = vector.extract_strided_slice %2051 {offsets = [0, 96], sizes = [4, 32], strides = [1, 1]} : vector<4x128xf32> to vector<4x32xf32>
    %cst_581 = arith.constant 0.000000e+00 : f32
    %2074 = vector.broadcast %cst_581 : f32 to vector<4x32xf32>
    %2075 = arith.subf %2074, %2073 : vector<4x32xf32>
    %2076 = math.exp %2075 : vector<4x32xf32>
    %cst_582 = arith.constant 1.000000e+00 : f32
    %2077 = vector.broadcast %cst_582 : f32 to vector<4x32xf32>
    %2078 = arith.addf %2077, %2076 : vector<4x32xf32>
    %cst_583 = arith.constant 1.000000e+00 : f32
    %2079 = vector.broadcast %cst_583 : f32 to vector<4x32xf32>
    %2080 = arith.divf %2079, %2078 : vector<4x32xf32>
    %2081 = arith.mulf %2070, %2012 : vector<4x32xf32>
    %2082 = arith.mulf %2062, %2072 : vector<4x32xf32>
    %2083 = arith.addf %2081, %2082 : vector<4x32xf32>
    %2084 = math.tanh %2083 : vector<4x32xf32>
    %2085 = arith.mulf %2080, %2084 : vector<4x32xf32>
    %2086 = vector.extract_strided_slice %2054 {offsets = [0, 0], sizes = [4, 32], strides = [1, 1]} : vector<4x128xf32> to vector<4x32xf32>
    %cst_584 = arith.constant 0.000000e+00 : f32
    %2087 = vector.broadcast %cst_584 : f32 to vector<4x32xf32>
    %2088 = arith.subf %2087, %2086 : vector<4x32xf32>
    %2089 = math.exp %2088 : vector<4x32xf32>
    %cst_585 = arith.constant 1.000000e+00 : f32
    %2090 = vector.broadcast %cst_585 : f32 to vector<4x32xf32>
    %2091 = arith.addf %2090, %2089 : vector<4x32xf32>
    %cst_586 = arith.constant 1.000000e+00 : f32
    %2092 = vector.broadcast %cst_586 : f32 to vector<4x32xf32>
    %2093 = arith.divf %2092, %2091 : vector<4x32xf32>
    %2094 = vector.extract_strided_slice %2054 {offsets = [0, 32], sizes = [4, 32], strides = [1, 1]} : vector<4x128xf32> to vector<4x32xf32>
    %cst_587 = arith.constant 0.000000e+00 : f32
    %2095 = vector.broadcast %cst_587 : f32 to vector<4x32xf32>
    %2096 = arith.subf %2095, %2094 : vector<4x32xf32>
    %2097 = math.exp %2096 : vector<4x32xf32>
    %cst_588 = arith.constant 1.000000e+00 : f32
    %2098 = vector.broadcast %cst_588 : f32 to vector<4x32xf32>
    %2099 = arith.addf %2098, %2097 : vector<4x32xf32>
    %cst_589 = arith.constant 1.000000e+00 : f32
    %2100 = vector.broadcast %cst_589 : f32 to vector<4x32xf32>
    %2101 = arith.divf %2100, %2099 : vector<4x32xf32>
    %2102 = vector.extract_strided_slice %2054 {offsets = [0, 64], sizes = [4, 32], strides = [1, 1]} : vector<4x128xf32> to vector<4x32xf32>
    %2103 = math.tanh %2102 : vector<4x32xf32>
    %2104 = vector.extract_strided_slice %2054 {offsets = [0, 96], sizes = [4, 32], strides = [1, 1]} : vector<4x128xf32> to vector<4x32xf32>
    %cst_590 = arith.constant 0.000000e+00 : f32
    %2105 = vector.broadcast %cst_590 : f32 to vector<4x32xf32>
    %2106 = arith.subf %2105, %2104 : vector<4x32xf32>
    %2107 = math.exp %2106 : vector<4x32xf32>
    %cst_591 = arith.constant 1.000000e+00 : f32
    %2108 = vector.broadcast %cst_591 : f32 to vector<4x32xf32>
    %2109 = arith.addf %2108, %2107 : vector<4x32xf32>
    %cst_592 = arith.constant 1.000000e+00 : f32
    %2110 = vector.broadcast %cst_592 : f32 to vector<4x32xf32>
    %2111 = arith.divf %2110, %2109 : vector<4x32xf32>
    %2112 = arith.mulf %2101, %2043 : vector<4x32xf32>
    %2113 = arith.mulf %2093, %2103 : vector<4x32xf32>
    %2114 = arith.addf %2112, %2113 : vector<4x32xf32>
    %2115 = math.tanh %2114 : vector<4x32xf32>
    %2116 = arith.mulf %2111, %2115 : vector<4x32xf32>
    %2117 = tpu.concatenate %2085, %2116 in 1 : vector<4x32xf32>, vector<4x32xf32> -> vector<4x64xf32>
    %2118 = arith.truncf %2117 : vector<4x64xf32> to vector<4x64xbf16>
    %cst_593 = arith.constant dense<0.000000e+00> : vector<4x256xf32>
    %2119 = tpu.matmul %2118, %1755, %cst_593 {dimension_numbers = #tpu.dot_dimension_numbers<[1], [0], [0], [1], [0, 0, 1, 1], [], []>} : vector<4x64xbf16>, vector<64x256xbf16>, vector<4x256xf32> -> vector<4x256xf32>
    %2120 = vector.extract_strided_slice %1759 {offsets = [20, 0], sizes = [4, 128], strides = [1, 1]} : vector<32x256xf32> to vector<4x128xf32>
    %2121 = vector.extract_strided_slice %2119 {offsets = [0, 0], sizes = [4, 128], strides = [1, 1]} : vector<4x256xf32> to vector<4x128xf32>
    %2122 = arith.addf %2120, %2121 : vector<4x128xf32>
    %2123 = vector.extract_strided_slice %1759 {offsets = [8, 128], sizes = [4, 128], strides = [1, 1]} : vector<32x256xf32> to vector<4x128xf32>
    %2124 = vector.extract_strided_slice %2119 {offsets = [0, 128], sizes = [4, 128], strides = [1, 1]} : vector<4x256xf32> to vector<4x128xf32>
    %2125 = arith.addf %2123, %2124 : vector<4x128xf32>
    %2126 = vector.extract_strided_slice %2122 {offsets = [0, 0], sizes = [4, 32], strides = [1, 1]} : vector<4x128xf32> to vector<4x32xf32>
    %cst_594 = arith.constant 0.000000e+00 : f32
    %2127 = vector.broadcast %cst_594 : f32 to vector<4x32xf32>
    %2128 = arith.subf %2127, %2126 : vector<4x32xf32>
    %2129 = math.exp %2128 : vector<4x32xf32>
    %cst_595 = arith.constant 1.000000e+00 : f32
    %2130 = vector.broadcast %cst_595 : f32 to vector<4x32xf32>
    %2131 = arith.addf %2130, %2129 : vector<4x32xf32>
    %cst_596 = arith.constant 1.000000e+00 : f32
    %2132 = vector.broadcast %cst_596 : f32 to vector<4x32xf32>
    %2133 = arith.divf %2132, %2131 : vector<4x32xf32>
    %2134 = vector.extract_strided_slice %2122 {offsets = [0, 32], sizes = [4, 32], strides = [1, 1]} : vector<4x128xf32> to vector<4x32xf32>
    %cst_597 = arith.constant 0.000000e+00 : f32
    %2135 = vector.broadcast %cst_597 : f32 to vector<4x32xf32>
    %2136 = arith.subf %2135, %2134 : vector<4x32xf32>
    %2137 = math.exp %2136 : vector<4x32xf32>
    %cst_598 = arith.constant 1.000000e+00 : f32
    %2138 = vector.broadcast %cst_598 : f32 to vector<4x32xf32>
    %2139 = arith.addf %2138, %2137 : vector<4x32xf32>
    %cst_599 = arith.constant 1.000000e+00 : f32
    %2140 = vector.broadcast %cst_599 : f32 to vector<4x32xf32>
    %2141 = arith.divf %2140, %2139 : vector<4x32xf32>
    %2142 = vector.extract_strided_slice %2122 {offsets = [0, 64], sizes = [4, 32], strides = [1, 1]} : vector<4x128xf32> to vector<4x32xf32>
    %2143 = math.tanh %2142 : vector<4x32xf32>
    %2144 = vector.extract_strided_slice %2122 {offsets = [0, 96], sizes = [4, 32], strides = [1, 1]} : vector<4x128xf32> to vector<4x32xf32>
    %cst_600 = arith.constant 0.000000e+00 : f32
    %2145 = vector.broadcast %cst_600 : f32 to vector<4x32xf32>
    %2146 = arith.subf %2145, %2144 : vector<4x32xf32>
    %2147 = math.exp %2146 : vector<4x32xf32>
    %cst_601 = arith.constant 1.000000e+00 : f32
    %2148 = vector.broadcast %cst_601 : f32 to vector<4x32xf32>
    %2149 = arith.addf %2148, %2147 : vector<4x32xf32>
    %cst_602 = arith.constant 1.000000e+00 : f32
    %2150 = vector.broadcast %cst_602 : f32 to vector<4x32xf32>
    %2151 = arith.divf %2150, %2149 : vector<4x32xf32>
    %2152 = arith.mulf %2141, %2083 : vector<4x32xf32>
    %2153 = arith.mulf %2133, %2143 : vector<4x32xf32>
    %2154 = arith.addf %2152, %2153 : vector<4x32xf32>
    %2155 = math.tanh %2154 : vector<4x32xf32>
    %2156 = arith.mulf %2151, %2155 : vector<4x32xf32>
    %2157 = vector.extract_strided_slice %2125 {offsets = [0, 0], sizes = [4, 32], strides = [1, 1]} : vector<4x128xf32> to vector<4x32xf32>
    %cst_603 = arith.constant 0.000000e+00 : f32
    %2158 = vector.broadcast %cst_603 : f32 to vector<4x32xf32>
    %2159 = arith.subf %2158, %2157 : vector<4x32xf32>
    %2160 = math.exp %2159 : vector<4x32xf32>
    %cst_604 = arith.constant 1.000000e+00 : f32
    %2161 = vector.broadcast %cst_604 : f32 to vector<4x32xf32>
    %2162 = arith.addf %2161, %2160 : vector<4x32xf32>
    %cst_605 = arith.constant 1.000000e+00 : f32
    %2163 = vector.broadcast %cst_605 : f32 to vector<4x32xf32>
    %2164 = arith.divf %2163, %2162 : vector<4x32xf32>
    %2165 = vector.extract_strided_slice %2125 {offsets = [0, 32], sizes = [4, 32], strides = [1, 1]} : vector<4x128xf32> to vector<4x32xf32>
    %cst_606 = arith.constant 0.000000e+00 : f32
    %2166 = vector.broadcast %cst_606 : f32 to vector<4x32xf32>
    %2167 = arith.subf %2166, %2165 : vector<4x32xf32>
    %2168 = math.exp %2167 : vector<4x32xf32>
    %cst_607 = arith.constant 1.000000e+00 : f32
    %2169 = vector.broadcast %cst_607 : f32 to vector<4x32xf32>
    %2170 = arith.addf %2169, %2168 : vector<4x32xf32>
    %cst_608 = arith.constant 1.000000e+00 : f32
    %2171 = vector.broadcast %cst_608 : f32 to vector<4x32xf32>
    %2172 = arith.divf %2171, %2170 : vector<4x32xf32>
    %2173 = vector.extract_strided_slice %2125 {offsets = [0, 64], sizes = [4, 32], strides = [1, 1]} : vector<4x128xf32> to vector<4x32xf32>
    %2174 = math.tanh %2173 : vector<4x32xf32>
    %2175 = vector.extract_strided_slice %2125 {offsets = [0, 96], sizes = [4, 32], strides = [1, 1]} : vector<4x128xf32> to vector<4x32xf32>
    %cst_609 = arith.constant 0.000000e+00 : f32
    %2176 = vector.broadcast %cst_609 : f32 to vector<4x32xf32>
    %2177 = arith.subf %2176, %2175 : vector<4x32xf32>
    %2178 = math.exp %2177 : vector<4x32xf32>
    %cst_610 = arith.constant 1.000000e+00 : f32
    %2179 = vector.broadcast %cst_610 : f32 to vector<4x32xf32>
    %2180 = arith.addf %2179, %2178 : vector<4x32xf32>
    %cst_611 = arith.constant 1.000000e+00 : f32
    %2181 = vector.broadcast %cst_611 : f32 to vector<4x32xf32>
    %2182 = arith.divf %2181, %2180 : vector<4x32xf32>
    %2183 = arith.mulf %2172, %2114 : vector<4x32xf32>
    %2184 = arith.mulf %2164, %2174 : vector<4x32xf32>
    %2185 = arith.addf %2183, %2184 : vector<4x32xf32>
    %2186 = math.tanh %2185 : vector<4x32xf32>
    %2187 = arith.mulf %2182, %2186 : vector<4x32xf32>
    %2188 = tpu.concatenate %2156, %2187 in 1 : vector<4x32xf32>, vector<4x32xf32> -> vector<4x64xf32>
    %2189 = arith.truncf %2188 : vector<4x64xf32> to vector<4x64xbf16>
    %cst_612 = arith.constant dense<0.000000e+00> : vector<4x256xf32>
    %2190 = tpu.matmul %2189, %1755, %cst_612 {dimension_numbers = #tpu.dot_dimension_numbers<[1], [0], [0], [1], [0, 0, 1, 1], [], []>} : vector<4x64xbf16>, vector<64x256xbf16>, vector<4x256xf32> -> vector<4x256xf32>
    %2191 = vector.extract_strided_slice %1759 {offsets = [24, 0], sizes = [4, 128], strides = [1, 1]} : vector<32x256xf32> to vector<4x128xf32>
    %2192 = vector.extract_strided_slice %2190 {offsets = [0, 0], sizes = [4, 128], strides = [1, 1]} : vector<4x256xf32> to vector<4x128xf32>
    %2193 = arith.addf %2191, %2192 : vector<4x128xf32>
    %2194 = vector.extract_strided_slice %1759 {offsets = [4, 128], sizes = [4, 128], strides = [1, 1]} : vector<32x256xf32> to vector<4x128xf32>
    %2195 = vector.extract_strided_slice %2190 {offsets = [0, 128], sizes = [4, 128], strides = [1, 1]} : vector<4x256xf32> to vector<4x128xf32>
    %2196 = arith.addf %2194, %2195 : vector<4x128xf32>
    %2197 = vector.extract_strided_slice %2193 {offsets = [0, 0], sizes = [4, 32], strides = [1, 1]} : vector<4x128xf32> to vector<4x32xf32>
    %cst_613 = arith.constant 0.000000e+00 : f32
    %2198 = vector.broadcast %cst_613 : f32 to vector<4x32xf32>
    %2199 = arith.subf %2198, %2197 : vector<4x32xf32>
    %2200 = math.exp %2199 : vector<4x32xf32>
    %cst_614 = arith.constant 1.000000e+00 : f32
    %2201 = vector.broadcast %cst_614 : f32 to vector<4x32xf32>
    %2202 = arith.addf %2201, %2200 : vector<4x32xf32>
    %cst_615 = arith.constant 1.000000e+00 : f32
    %2203 = vector.broadcast %cst_615 : f32 to vector<4x32xf32>
    %2204 = arith.divf %2203, %2202 : vector<4x32xf32>
    %2205 = vector.extract_strided_slice %2193 {offsets = [0, 32], sizes = [4, 32], strides = [1, 1]} : vector<4x128xf32> to vector<4x32xf32>
    %cst_616 = arith.constant 0.000000e+00 : f32
    %2206 = vector.broadcast %cst_616 : f32 to vector<4x32xf32>
    %2207 = arith.subf %2206, %2205 : vector<4x32xf32>
    %2208 = math.exp %2207 : vector<4x32xf32>
    %cst_617 = arith.constant 1.000000e+00 : f32
    %2209 = vector.broadcast %cst_617 : f32 to vector<4x32xf32>
    %2210 = arith.addf %2209, %2208 : vector<4x32xf32>
    %cst_618 = arith.constant 1.000000e+00 : f32
    %2211 = vector.broadcast %cst_618 : f32 to vector<4x32xf32>
    %2212 = arith.divf %2211, %2210 : vector<4x32xf32>
    %2213 = vector.extract_strided_slice %2193 {offsets = [0, 64], sizes = [4, 32], strides = [1, 1]} : vector<4x128xf32> to vector<4x32xf32>
    %2214 = math.tanh %2213 : vector<4x32xf32>
    %2215 = vector.extract_strided_slice %2193 {offsets = [0, 96], sizes = [4, 32], strides = [1, 1]} : vector<4x128xf32> to vector<4x32xf32>
    %cst_619 = arith.constant 0.000000e+00 : f32
    %2216 = vector.broadcast %cst_619 : f32 to vector<4x32xf32>
    %2217 = arith.subf %2216, %2215 : vector<4x32xf32>
    %2218 = math.exp %2217 : vector<4x32xf32>
    %cst_620 = arith.constant 1.000000e+00 : f32
    %2219 = vector.broadcast %cst_620 : f32 to vector<4x32xf32>
    %2220 = arith.addf %2219, %2218 : vector<4x32xf32>
    %cst_621 = arith.constant 1.000000e+00 : f32
    %2221 = vector.broadcast %cst_621 : f32 to vector<4x32xf32>
    %2222 = arith.divf %2221, %2220 : vector<4x32xf32>
    %2223 = arith.mulf %2212, %2154 : vector<4x32xf32>
    %2224 = arith.mulf %2204, %2214 : vector<4x32xf32>
    %2225 = arith.addf %2223, %2224 : vector<4x32xf32>
    %2226 = math.tanh %2225 : vector<4x32xf32>
    %2227 = arith.mulf %2222, %2226 : vector<4x32xf32>
    %2228 = vector.extract_strided_slice %2196 {offsets = [0, 0], sizes = [4, 32], strides = [1, 1]} : vector<4x128xf32> to vector<4x32xf32>
    %cst_622 = arith.constant 0.000000e+00 : f32
    %2229 = vector.broadcast %cst_622 : f32 to vector<4x32xf32>
    %2230 = arith.subf %2229, %2228 : vector<4x32xf32>
    %2231 = math.exp %2230 : vector<4x32xf32>
    %cst_623 = arith.constant 1.000000e+00 : f32
    %2232 = vector.broadcast %cst_623 : f32 to vector<4x32xf32>
    %2233 = arith.addf %2232, %2231 : vector<4x32xf32>
    %cst_624 = arith.constant 1.000000e+00 : f32
    %2234 = vector.broadcast %cst_624 : f32 to vector<4x32xf32>
    %2235 = arith.divf %2234, %2233 : vector<4x32xf32>
    %2236 = vector.extract_strided_slice %2196 {offsets = [0, 32], sizes = [4, 32], strides = [1, 1]} : vector<4x128xf32> to vector<4x32xf32>
    %cst_625 = arith.constant 0.000000e+00 : f32
    %2237 = vector.broadcast %cst_625 : f32 to vector<4x32xf32>
    %2238 = arith.subf %2237, %2236 : vector<4x32xf32>
    %2239 = math.exp %2238 : vector<4x32xf32>
    %cst_626 = arith.constant 1.000000e+00 : f32
    %2240 = vector.broadcast %cst_626 : f32 to vector<4x32xf32>
    %2241 = arith.addf %2240, %2239 : vector<4x32xf32>
    %cst_627 = arith.constant 1.000000e+00 : f32
    %2242 = vector.broadcast %cst_627 : f32 to vector<4x32xf32>
    %2243 = arith.divf %2242, %2241 : vector<4x32xf32>
    %2244 = vector.extract_strided_slice %2196 {offsets = [0, 64], sizes = [4, 32], strides = [1, 1]} : vector<4x128xf32> to vector<4x32xf32>
    %2245 = math.tanh %2244 : vector<4x32xf32>
    %2246 = vector.extract_strided_slice %2196 {offsets = [0, 96], sizes = [4, 32], strides = [1, 1]} : vector<4x128xf32> to vector<4x32xf32>
    %cst_628 = arith.constant 0.000000e+00 : f32
    %2247 = vector.broadcast %cst_628 : f32 to vector<4x32xf32>
    %2248 = arith.subf %2247, %2246 : vector<4x32xf32>
    %2249 = math.exp %2248 : vector<4x32xf32>
    %cst_629 = arith.constant 1.000000e+00 : f32
    %2250 = vector.broadcast %cst_629 : f32 to vector<4x32xf32>
    %2251 = arith.addf %2250, %2249 : vector<4x32xf32>
    %cst_630 = arith.constant 1.000000e+00 : f32
    %2252 = vector.broadcast %cst_630 : f32 to vector<4x32xf32>
    %2253 = arith.divf %2252, %2251 : vector<4x32xf32>
    %2254 = arith.mulf %2243, %2185 : vector<4x32xf32>
    %2255 = arith.mulf %2235, %2245 : vector<4x32xf32>
    %2256 = arith.addf %2254, %2255 : vector<4x32xf32>
    %2257 = math.tanh %2256 : vector<4x32xf32>
    %2258 = arith.mulf %2253, %2257 : vector<4x32xf32>
    %2259 = tpu.concatenate %2227, %2258 in 1 : vector<4x32xf32>, vector<4x32xf32> -> vector<4x64xf32>
    %2260 = arith.truncf %2259 : vector<4x64xf32> to vector<4x64xbf16>
    %cst_631 = arith.constant dense<0.000000e+00> : vector<4x256xf32>
    %2261 = tpu.matmul %2260, %1755, %cst_631 {dimension_numbers = #tpu.dot_dimension_numbers<[1], [0], [0], [1], [0, 0, 1, 1], [], []>} : vector<4x64xbf16>, vector<64x256xbf16>, vector<4x256xf32> -> vector<4x256xf32>
    %2262 = vector.extract_strided_slice %1759 {offsets = [28, 0], sizes = [4, 128], strides = [1, 1]} : vector<32x256xf32> to vector<4x128xf32>
    %2263 = vector.extract_strided_slice %2261 {offsets = [0, 0], sizes = [4, 128], strides = [1, 1]} : vector<4x256xf32> to vector<4x128xf32>
    %2264 = arith.addf %2262, %2263 : vector<4x128xf32>
    %2265 = vector.extract_strided_slice %1759 {offsets = [0, 128], sizes = [4, 128], strides = [1, 1]} : vector<32x256xf32> to vector<4x128xf32>
    %2266 = vector.extract_strided_slice %2261 {offsets = [0, 128], sizes = [4, 128], strides = [1, 1]} : vector<4x256xf32> to vector<4x128xf32>
    %2267 = arith.addf %2265, %2266 : vector<4x128xf32>
    %2268 = vector.extract_strided_slice %2264 {offsets = [0, 0], sizes = [4, 32], strides = [1, 1]} : vector<4x128xf32> to vector<4x32xf32>
    %cst_632 = arith.constant 0.000000e+00 : f32
    %2269 = vector.broadcast %cst_632 : f32 to vector<4x32xf32>
    %2270 = arith.subf %2269, %2268 : vector<4x32xf32>
    %2271 = math.exp %2270 : vector<4x32xf32>
    %cst_633 = arith.constant 1.000000e+00 : f32
    %2272 = vector.broadcast %cst_633 : f32 to vector<4x32xf32>
    %2273 = arith.addf %2272, %2271 : vector<4x32xf32>
    %cst_634 = arith.constant 1.000000e+00 : f32
    %2274 = vector.broadcast %cst_634 : f32 to vector<4x32xf32>
    %2275 = arith.divf %2274, %2273 : vector<4x32xf32>
    %2276 = vector.extract_strided_slice %2264 {offsets = [0, 32], sizes = [4, 32], strides = [1, 1]} : vector<4x128xf32> to vector<4x32xf32>
    %cst_635 = arith.constant 0.000000e+00 : f32
    %2277 = vector.broadcast %cst_635 : f32 to vector<4x32xf32>
    %2278 = arith.subf %2277, %2276 : vector<4x32xf32>
    %2279 = math.exp %2278 : vector<4x32xf32>
    %cst_636 = arith.constant 1.000000e+00 : f32
    %2280 = vector.broadcast %cst_636 : f32 to vector<4x32xf32>
    %2281 = arith.addf %2280, %2279 : vector<4x32xf32>
    %cst_637 = arith.constant 1.000000e+00 : f32
    %2282 = vector.broadcast %cst_637 : f32 to vector<4x32xf32>
    %2283 = arith.divf %2282, %2281 : vector<4x32xf32>
    %2284 = vector.extract_strided_slice %2264 {offsets = [0, 64], sizes = [4, 32], strides = [1, 1]} : vector<4x128xf32> to vector<4x32xf32>
    %2285 = math.tanh %2284 : vector<4x32xf32>
    %2286 = vector.extract_strided_slice %2264 {offsets = [0, 96], sizes = [4, 32], strides = [1, 1]} : vector<4x128xf32> to vector<4x32xf32>
    %cst_638 = arith.constant 0.000000e+00 : f32
    %2287 = vector.broadcast %cst_638 : f32 to vector<4x32xf32>
    %2288 = arith.subf %2287, %2286 : vector<4x32xf32>
    %2289 = math.exp %2288 : vector<4x32xf32>
    %cst_639 = arith.constant 1.000000e+00 : f32
    %2290 = vector.broadcast %cst_639 : f32 to vector<4x32xf32>
    %2291 = arith.addf %2290, %2289 : vector<4x32xf32>
    %cst_640 = arith.constant 1.000000e+00 : f32
    %2292 = vector.broadcast %cst_640 : f32 to vector<4x32xf32>
    %2293 = arith.divf %2292, %2291 : vector<4x32xf32>
    %2294 = arith.mulf %2283, %2225 : vector<4x32xf32>
    %2295 = arith.mulf %2275, %2285 : vector<4x32xf32>
    %2296 = arith.addf %2294, %2295 : vector<4x32xf32>
    %2297 = math.tanh %2296 : vector<4x32xf32>
    %2298 = arith.mulf %2293, %2297 : vector<4x32xf32>
    %2299 = vector.extract_strided_slice %2267 {offsets = [0, 0], sizes = [4, 32], strides = [1, 1]} : vector<4x128xf32> to vector<4x32xf32>
    %cst_641 = arith.constant 0.000000e+00 : f32
    %2300 = vector.broadcast %cst_641 : f32 to vector<4x32xf32>
    %2301 = arith.subf %2300, %2299 : vector<4x32xf32>
    %2302 = math.exp %2301 : vector<4x32xf32>
    %cst_642 = arith.constant 1.000000e+00 : f32
    %2303 = vector.broadcast %cst_642 : f32 to vector<4x32xf32>
    %2304 = arith.addf %2303, %2302 : vector<4x32xf32>
    %cst_643 = arith.constant 1.000000e+00 : f32
    %2305 = vector.broadcast %cst_643 : f32 to vector<4x32xf32>
    %2306 = arith.divf %2305, %2304 : vector<4x32xf32>
    %2307 = vector.extract_strided_slice %2267 {offsets = [0, 32], sizes = [4, 32], strides = [1, 1]} : vector<4x128xf32> to vector<4x32xf32>
    %cst_644 = arith.constant 0.000000e+00 : f32
    %2308 = vector.broadcast %cst_644 : f32 to vector<4x32xf32>
    %2309 = arith.subf %2308, %2307 : vector<4x32xf32>
    %2310 = math.exp %2309 : vector<4x32xf32>
    %cst_645 = arith.constant 1.000000e+00 : f32
    %2311 = vector.broadcast %cst_645 : f32 to vector<4x32xf32>
    %2312 = arith.addf %2311, %2310 : vector<4x32xf32>
    %cst_646 = arith.constant 1.000000e+00 : f32
    %2313 = vector.broadcast %cst_646 : f32 to vector<4x32xf32>
    %2314 = arith.divf %2313, %2312 : vector<4x32xf32>
    %2315 = vector.extract_strided_slice %2267 {offsets = [0, 64], sizes = [4, 32], strides = [1, 1]} : vector<4x128xf32> to vector<4x32xf32>
    %2316 = math.tanh %2315 : vector<4x32xf32>
    %2317 = vector.extract_strided_slice %2267 {offsets = [0, 96], sizes = [4, 32], strides = [1, 1]} : vector<4x128xf32> to vector<4x32xf32>
    %cst_647 = arith.constant 0.000000e+00 : f32
    %2318 = vector.broadcast %cst_647 : f32 to vector<4x32xf32>
    %2319 = arith.subf %2318, %2317 : vector<4x32xf32>
    %2320 = math.exp %2319 : vector<4x32xf32>
    %cst_648 = arith.constant 1.000000e+00 : f32
    %2321 = vector.broadcast %cst_648 : f32 to vector<4x32xf32>
    %2322 = arith.addf %2321, %2320 : vector<4x32xf32>
    %cst_649 = arith.constant 1.000000e+00 : f32
    %2323 = vector.broadcast %cst_649 : f32 to vector<4x32xf32>
    %2324 = arith.divf %2323, %2322 : vector<4x32xf32>
    %2325 = arith.mulf %2314, %2256 : vector<4x32xf32>
    %2326 = arith.mulf %2306, %2316 : vector<4x32xf32>
    %2327 = arith.addf %2325, %2326 : vector<4x32xf32>
    %2328 = math.tanh %2327 : vector<4x32xf32>
    %2329 = arith.mulf %2324, %2328 : vector<4x32xf32>
    %2330 = tpu.concatenate %2298, %2329 in 1 : vector<4x32xf32>, vector<4x32xf32> -> vector<4x64xf32>
    %2331 = tpu.concatenate %1743, %2330 in 1 : vector<4x64xf32>, vector<4x64xf32> -> vector<4x128xf32>
    %2332 = vector.extract_strided_slice %2331 {offsets = [0, 0], sizes = [2, 128], strides = [1, 1]} : vector<4x128xf32> to vector<2x128xf32>
    %2333 = vector.extract_strided_slice %2331 {offsets = [2, 0], sizes = [2, 128], strides = [1, 1]} : vector<4x128xf32> to vector<2x128xf32>
    %2334 = arith.mulf %1165, %1165 : vector<2x128xf32>
    %cst_650 = arith.constant dense<0.000000e+00> : vector<2xf32>
    %2335 = vector.multi_reduction <add>, %2334, %cst_650 [1] : vector<2x128xf32> to vector<2xf32>
    %2336 = vector.shape_cast %2335 : vector<2xf32> to vector<2x1xf32>
    %cst_651 = arith.constant 1.000000e-16 : f32
    %2337 = vector.broadcast %cst_651 : f32 to vector<2x1xf32>
    %2338 = arith.maximumf %2336, %2337 : vector<2x1xf32>
    %2339 = arith.mulf %2332, %2332 : vector<2x128xf32>
    %cst_652 = arith.constant dense<0.000000e+00> : vector<2xf32>
    %2340 = vector.multi_reduction <add>, %2339, %cst_652 [1] : vector<2x128xf32> to vector<2xf32>
    %2341 = vector.shape_cast %2340 : vector<2xf32> to vector<2x1xf32>
    %cst_653 = arith.constant 1.000000e-16 : f32
    %2342 = vector.broadcast %cst_653 : f32 to vector<2x1xf32>
    %2343 = arith.maximumf %2341, %2342 : vector<2x1xf32>
    %2344 = arith.mulf %2333, %2333 : vector<2x128xf32>
    %cst_654 = arith.constant dense<0.000000e+00> : vector<2xf32>
    %2345 = vector.multi_reduction <add>, %2344, %cst_654 [1] : vector<2x128xf32> to vector<2xf32>
    %2346 = vector.shape_cast %2345 : vector<2xf32> to vector<2x1xf32>
    %cst_655 = arith.constant 1.000000e-16 : f32
    %2347 = vector.broadcast %cst_655 : f32 to vector<2x1xf32>
    %2348 = arith.maximumf %2346, %2347 : vector<2x1xf32>
    %2349 = math.rsqrt %2338 : vector<2x1xf32>
    %2350 = arith.mulf %1165, %2332 : vector<2x128xf32>
    %cst_656 = arith.constant dense<0.000000e+00> : vector<2xf32>
    %2351 = vector.multi_reduction <add>, %2350, %cst_656 [1] : vector<2x128xf32> to vector<2xf32>
    %2352 = vector.shape_cast %2351 : vector<2xf32> to vector<2x1xf32>
    %2353 = arith.mulf %2352, %2349 : vector<2x1xf32>
    %2354 = math.rsqrt %2343 : vector<2x1xf32>
    %2355 = arith.mulf %2353, %2354 : vector<2x1xf32>
    %2356 = arith.mulf %1165, %2333 : vector<2x128xf32>
    %cst_657 = arith.constant dense<0.000000e+00> : vector<2xf32>
    %2357 = vector.multi_reduction <add>, %2356, %cst_657 [1] : vector<2x128xf32> to vector<2xf32>
    %2358 = vector.shape_cast %2357 : vector<2xf32> to vector<2x1xf32>
    %2359 = arith.mulf %2358, %2349 : vector<2x1xf32>
    %2360 = math.rsqrt %2348 : vector<2x1xf32>
    %2361 = arith.mulf %2359, %2360 : vector<2x1xf32>
    %2362 = arith.subf %2355, %2361 : vector<2x1xf32>
    %cst_658 = arith.constant 1.000000e+00 : f32
    %2363 = vector.broadcast %cst_658 : f32 to vector<2x1xf32>
    %2364 = arith.subf %2363, %2362 : vector<2x1xf32>
    %cst_659 = arith.constant 0.000000e+00 : f32
    %2365 = vector.broadcast %cst_659 : f32 to vector<2x1xf32>
    %2366 = arith.maximumf %2364, %2365 : vector<2x1xf32>
    %cst_660 = arith.constant dense<0.000000e+00> : vector<1xf32>
    %2367 = vector.multi_reduction <add>, %2366, %cst_660 [0] : vector<2x1xf32> to vector<1xf32>
    %2368 = vector.shape_cast %2367 : vector<1xf32> to vector<1x1xf32>
    %cst_661 = arith.constant 5.000000e-01 : f32
    %2369 = vector.broadcast %cst_661 : f32 to vector<1x1xf32>
    %2370 = arith.mulf %2368, %2369 : vector<1x1xf32>
    %c0_662 = arith.constant 0 : index
    %c0_663 = arith.constant 0 : index
    %2371 = vector.load %arg14[%c0_662, %c0_663] : memref<2x1xf32, #tpu.memory_space<vmem>>, vector<2x1xf32>
    tpu.vector_store %arg14[%c0_662, %c0_663], %2355 {strides = array<i32>} : memref<2x1xf32, #tpu.memory_space<vmem>>, vector<2x1xf32>,
    %c0_664 = arith.constant 0 : index
    %c0_665 = arith.constant 0 : index
    %2372 = vector.load %arg15[%c0_664, %c0_665] : memref<2x1xf32, #tpu.memory_space<vmem>>, vector<2x1xf32>
    tpu.vector_store %arg15[%c0_664, %c0_665], %2361 {strides = array<i32>} : memref<2x1xf32, #tpu.memory_space<vmem>>, vector<2x1xf32>,
    %c0_666 = arith.constant 0 : index
    %c0_667 = arith.constant 0 : index
    %2373 = vector.load %arg16[%c0_666, %c0_667] : memref<1x1xf32, #tpu.memory_space<vmem>>, vector<1x1xf32>
    tpu.vector_store %arg16[%c0_666, %c0_667], %2370 {strides = array<i32>} : memref<1x1xf32, #tpu.memory_space<vmem>>, vector<1x1xf32>,
    %c0_668 = arith.constant 0 : index
    %c0_669 = arith.constant 0 : index
    %2374 = vector.load %arg17[%c0_668, %c0_669] : memref<2x128xf32, #tpu.memory_space<vmem>>, vector<2x128xf32>
    tpu.vector_store %arg17[%c0_668, %c0_669], %1165 {strides = array<i32>} : memref<2x128xf32, #tpu.memory_space<vmem>>, vector<2x128xf32>,
    %c0_670 = arith.constant 0 : index
    %c0_671 = arith.constant 0 : index
    %2375 = vector.load %arg18[%c0_670, %c0_671] : memref<2x128xf32, #tpu.memory_space<vmem>>, vector<2x128xf32>
    tpu.vector_store %arg18[%c0_670, %c0_671], %2332 {strides = array<i32>} : memref<2x128xf32, #tpu.memory_space<vmem>>, vector<2x128xf32>,
    %c0_672 = arith.constant 0 : index
    %c0_673 = arith.constant 0 : index
    %2376 = vector.load %arg19[%c0_672, %c0_673] : memref<2x128xf32, #tpu.memory_space<vmem>>, vector<2x128xf32>
    tpu.vector_store %arg19[%c0_672, %c0_673], %2333 {strides = array<i32>} : memref<2x128xf32, #tpu.memory_space<vmem>>, vector<2x128xf32>,
    return
  }
}

</mosaic_0001>

<llo_original>
// kernel: bilstm_model_forward.1
$region0: #{bilstm_model_forward.1}
  #allocation0 [shape = 'u32[]', space=smem, size = 0x4, offset = 0x4, fixed_abs, tag = 'smem constant byte address 0x4 - core index']
  #allocation1 [shape = 'u32[144,128]{1,0:T(1,128)}', space=vmem, size = 0x12000, scoped, tag = 'internal scratch']
  %s0 = inlined_call_operand.hbm [shape: bf16[16,32], index: 0, kind: input, shape index: {}]
  %s1 = inlined_call_operand.hbm [shape: bf16[32,32], index: 1, kind: input, shape index: {}]
  %s2 = inlined_call_operand.hbm [shape: bf16[32,256], index: 2, kind: input, shape index: {}]
  %s3 = inlined_call_operand.hbm [shape: bf16[64,256], index: 3, kind: input, shape index: {}]
  %s4 = inlined_call_operand.hbm [shape: f32[1,256], index: 4, kind: input, shape index: {}]
  %s5 = inlined_call_operand.hbm [shape: bf16[64,256], index: 5, kind: input, shape index: {}]
  %s6 = inlined_call_operand.hbm [shape: bf16[64,256], index: 6, kind: input, shape index: {}]
  %s7 = inlined_call_operand.hbm [shape: f32[1,256], index: 7, kind: input, shape index: {}]
  %s8 = inlined_call_operand.hbm [shape: bf16[32,256], index: 8, kind: input, shape index: {}]
  %s9 = inlined_call_operand.hbm [shape: bf16[64,256], index: 9, kind: input, shape index: {}]
  %s10 = inlined_call_operand.hbm [shape: f32[1,256], index: 10, kind: input, shape index: {}]
  %s11 = inlined_call_operand.hbm [shape: bf16[64,256], index: 11, kind: input, shape index: {}]
  %s12 = inlined_call_operand.hbm [shape: bf16[64,256], index: 12, kind: input, shape index: {}]
  %s13 = inlined_call_operand.hbm [shape: f32[1,256], index: 13, kind: input, shape index: {}]
  %s14 = inlined_call_operand.hbm [shape: f32[2,1], index: 14, kind: output, shape index: {0}]
  %s15 = inlined_call_operand.hbm [shape: f32[2,1], index: 15, kind: output, shape index: {1}]
  %s16 = inlined_call_operand.hbm [shape: f32[1,1], index: 16, kind: output, shape index: {2}]
  %s17 = inlined_call_operand.hbm [shape: f32[2,128], index: 17, kind: output, shape index: {3}]
  %s18 = inlined_call_operand.hbm [shape: f32[2,128], index: 18, kind: output, shape index: {4}]
  %s19 = inlined_call_operand.hbm [shape: f32[2,128], index: 19, kind: output, shape index: {5}]
  %20 = xla_tuple %s14, %s15, %s16, %s17, %s18, %s19
  %s21 = sld [smem:[#allocation0]]
  $region162: #{bilstm_model_forward.1} parent=0
    _
  %s23 = ssub.s32 1, %s21
  %s24 = scalar_select 0, %s23, %s21
  $region1: #{bilstm_model_forward.1} parent=0
    #allocation2 [shape = 'u8[4096]{0}', space=vmem, size = 0x1000, scoped, tag = 'input window, operand 0, single buffered']
    #allocation3 [shape = 's32[1]{0}', space=sflag, size = 0x4, scoped, tag = 'scoped memory for bilstm_model_forward.1']
    #allocation4 [shape = 's32[1]{0}', space=sflag, size = 0x4, scoped, tag = 'scoped memory for bilstm_model_forward.1']
    #allocation5 [shape = 'u8[8192]{0}', space=vmem, size = 0x2000, scoped, tag = 'input window, operand 1, single buffered']
    #allocation6 [shape = 's32[1]{0}', space=sflag, size = 0x4, scoped, tag = 'scoped memory for bilstm_model_forward.1']
    #allocation7 [shape = 'u8[16384]{0}', space=vmem, size = 0x4000, scoped, tag = 'input window, operand 2, single buffered']
    #allocation8 [shape = 'u8[32768]{0}', space=vmem, size = 0x8000, scoped, tag = 'input window, operand 3, single buffered']
    #allocation9 [shape = 's32[1]{0}', space=sflag, size = 0x4, scoped, tag = 'scoped memory for bilstm_model_forward.1']
    #allocation10 [shape = 'u8[1024]{0}', space=vmem, size = 0x400, scoped, tag = 'input window, operand 4, single buffered']
    #allocation11 [shape = 'u8[32768]{0}', space=vmem, size = 0x8000, scoped, tag = 'input window, operand 5, single buffered']
    #allocation12 [shape = 's32[1]{0}', space=sflag, size = 0x4, scoped, tag = 'scoped memory for bilstm_model_forward.1']
    #allocation13 [shape = 'u8[32768]{0}', space=vmem, size = 0x8000, scoped, tag = 'input window, operand 6, single buffered']
    #allocation14 [shape = 'u8[1024]{0}', space=vmem, size = 0x400, scoped, tag = 'input window, operand 7, single buffered']
    #allocation15 [shape = 's32[1]{0}', space=sflag, size = 0x4, scoped, tag = 'scoped memory for bilstm_model_forward.1']
    #allocation16 [shape = 'u8[16384]{0}', space=vmem, size = 0x4000, scoped, tag = 'input window, operand 8, single buffered']
    #allocation17 [shape = 'u8[32768]{0}', space=vmem, size = 0x8000, scoped, tag = 'input window, operand 9, single buffered']
    #allocation18 [shape = 's32[1]{0}', space=sflag, size = 0x4, scoped, tag = 'scoped memory for bilstm_model_forward.1']
    #allocation19 [shape = 'u8[1024]{0}', space=vmem, size = 0x400, scoped, tag = 'input window, operand 10, single buffered']
    #allocation20 [shape = 'u8[32768]{0}', space=vmem, size = 0x8000, scoped, tag = 'input window, operand 11, single buffered']
    #allocation21 [shape = 's32[1]{0}', space=sflag, size = 0x4, scoped, tag = 'scoped memory for bilstm_model_forward.1']
    #allocation22 [shape = 'u8[32768]{0}', space=vmem, size = 0x8000, scoped, tag = 'input window, operand 12, single buffered']
    #allocation23 [shape = 'u8[1024]{0}', space=vmem, size = 0x400, scoped, tag = 'input window, operand 13, single buffered']
    #allocation24 [shape = 's32[1]{0}', space=sflag, size = 0x4, scoped, tag = 'scoped memory for bilstm_model_forward.1']
    #allocation25 [shape = 'u8[1024]{0}', space=vmem, size = 0x400, scoped, tag = 'output window, operand 0, single buffered']
    #allocation26 [shape = 'u8[1024]{0}', space=vmem, size = 0x400, scoped, tag = 'output window, operand 1, single buffered']
    #allocation27 [shape = 's32[1]{0}', space=sflag, size = 0x4, scoped, tag = 'scoped memory for bilstm_model_forward.1']
    #allocation28 [shape = 'u8[512]{0}', space=vmem, size = 0x400, scoped, tag = 'output window, operand 2, single buffered']
    #allocation29 [shape = 'u8[1024]{0}', space=vmem, size = 0x400, scoped, tag = 'output window, operand 3, single buffered']
    #allocation30 [shape = 's32[1]{0}', space=sflag, size = 0x4, scoped, tag = 'scoped memory for bilstm_model_forward.1']
    #allocation31 [shape = 'u8[1024]{0}', space=vmem, size = 0x400, scoped, tag = 'output window, operand 4, single buffered']
    #allocation32 [shape = 'u8[1024]{0}', space=vmem, size = 0x400, scoped, tag = 'output window, operand 5, single buffered']
    #allocation33 [shape = 's32[1]{0}', space=sflag, size = 0x4, scoped, tag = 'scoped memory for bilstm_model_forward.1']
    %25 = vsyncpa [#allocation3], 0
    %26 = vsyncpa [#allocation6], 0
    %27 = vsyncpa [#allocation9], 0
    %28 = vsyncpa [#allocation12], 0
    %29 = vsyncpa [#allocation15], 0
    %30 = vsyncpa [#allocation18], 0
    %31 = vsyncpa [#allocation21], 0
    %32 = vsyncpa [#allocation24], 0
    %33 = vsyncpa [#allocation4], 0
    %34 = vsyncpa [#allocation27], 0
    %35 = vsyncpa [#allocation30], 0
    %36 = vsyncpa [#allocation33], 0
    // Predicated region
    $region2: #{bilstm_model_forward.1} parent=1 // pred_check
      _
    $region3: #{bilstm_model_forward.1} parent=1 // pred_check_branch
      %38 = sbr.rel (0) target = $region5
    $region4: #{bilstm_model_forward.1} parent=1 // pred_region
      %s40 = ssub.s32 128, 128
      %41 = vsyncadd [#allocation3], %s40
      %s42 = sshll.u32 [#allocation2], 4
      %s43 = int_to_ptr.vmem [resolvable:$true] %s42
      %48 = dma.hbm_to_vmem [thread:$0]  %s0, 128, %s43, [#allocation3], 64, 64, 4
    $region5: #{bilstm_model_forward.1} parent=1 // pred_fallthru
      _
    // Predicated region
    $region6: #{bilstm_model_forward.1} parent=1 // pred_check
      _
    $region7: #{bilstm_model_forward.1} parent=1 // pred_check_branch
      %50 = sbr.rel (0) target = $region9
    $region8: #{bilstm_model_forward.1} parent=1 // pred_region
      %s52 = ssub.s32 256, 256
      %53 = vsyncadd [#allocation6], %s52
      %s54 = sshll.u32 [#allocation5], 4
      %s55 = int_to_ptr.vmem [resolvable:$true] %s54
      %60 = dma.hbm_to_vmem [thread:$0]  %s1, 256, %s55, [#allocation6], 64, 64, 4
    $region9: #{bilstm_model_forward.1} parent=1 // pred_fallthru
      _
    // Predicated region
    $region10: #{bilstm_model_forward.1} parent=1 // pred_check
      _
    $region11: #{bilstm_model_forward.1} parent=1 // pred_check_branch
      %62 = sbr.rel (0) target = $region13
    $region12: #{bilstm_model_forward.1} parent=1 // pred_region
      %s64 = ssub.s32 512, 512
      %65 = vsyncadd [#allocation6], %s64
      %s66 = sshll.u32 [#allocation7], 4
      %s67 = int_to_ptr.vmem [resolvable:$true] %s66
      %72 = dma.hbm_to_vmem [thread:$0]  %s2, 512, %s67, [#allocation6], 128, 128, 8
    $region13: #{bilstm_model_forward.1} parent=1 // pred_fallthru
      _
    // Predicated region
    $region14: #{bilstm_model_forward.1} parent=1 // pred_check
      _
    $region15: #{bilstm_model_forward.1} parent=1 // pred_check_branch
      %74 = sbr.rel (0) target = $region17
    $region16: #{bilstm_model_forward.1} parent=1 // pred_region
      %s76 = ssub.s32 1024, 1024
      %77 = vsyncadd [#allocation9], %s76
      %s78 = sshll.u32 [#allocation8], 4
      %s79 = int_to_ptr.vmem [resolvable:$true] %s78
      %84 = dma.hbm_to_vmem [thread:$0]  %s3, 1024, %s79, [#allocation9], 128, 128, 8
    $region17: #{bilstm_model_forward.1} parent=1 // pred_fallthru
      _
    // Predicated region
    $region18: #{bilstm_model_forward.1} parent=1 // pred_check
      _
    $region19: #{bilstm_model_forward.1} parent=1 // pred_check_branch
      %86 = sbr.rel (0) target = $region21
    $region20: #{bilstm_model_forward.1} parent=1 // pred_region
      %s88 = ssub.s32 32, 32
      %89 = vsyncadd [#allocation9], %s88
      %s91 = sshll.u32 [#allocation10], 4
      %s92 = int_to_ptr.vmem [resolvable:$true] %s91
      %94 = dma.hbm_to_vmem [thread:$0]  %s4, 32, %s92, [#allocation9]
    $region21: #{bilstm_model_forward.1} parent=1 // pred_fallthru
      _
    // Predicated region
    $region22: #{bilstm_model_forward.1} parent=1 // pred_check
      _
    $region23: #{bilstm_model_forward.1} parent=1 // pred_check_branch
      %96 = sbr.rel (0) target = $region25
    $region24: #{bilstm_model_forward.1} parent=1 // pred_region
      %s98 = ssub.s32 1024, 1024
      %99 = vsyncadd [#allocation12], %s98
      %s100 = sshll.u32 [#allocation11], 4
      %s101 = int_to_ptr.vmem [resolvable:$true] %s100
      %106 = dma.hbm_to_vmem [thread:$0]  %s5, 1024, %s101, [#allocation12], 128, 128, 8
    $region25: #{bilstm_model_forward.1} parent=1 // pred_fallthru
      _
    // Predicated region
    $region26: #{bilstm_model_forward.1} parent=1 // pred_check
      _
    $region27: #{bilstm_model_forward.1} parent=1 // pred_check_branch
      %108 = sbr.rel (0) target = $region29
    $region28: #{bilstm_model_forward.1} parent=1 // pred_region
      %s110 = ssub.s32 1024, 1024
      %111 = vsyncadd [#allocation12], %s110
      %s112 = sshll.u32 [#allocation13], 4
      %s113 = int_to_ptr.vmem [resolvable:$true] %s112
      %118 = dma.hbm_to_vmem [thread:$0]  %s6, 1024, %s113, [#allocation12], 128, 128, 8
    $region29: #{bilstm_model_forward.1} parent=1 // pred_fallthru
      _
    // Predicated region
    $region30: #{bilstm_model_forward.1} parent=1 // pred_check
      _
    $region31: #{bilstm_model_forward.1} parent=1 // pred_check_branch
      %120 = sbr.rel (0) target = $region33
    $region32: #{bilstm_model_forward.1} parent=1 // pred_region
      %s122 = ssub.s32 32, 32
      %123 = vsyncadd [#allocation15], %s122
      %s125 = sshll.u32 [#allocation14], 4
      %s126 = int_to_ptr.vmem [resolvable:$true] %s125
      %128 = dma.hbm_to_vmem [thread:$0]  %s7, 32, %s126, [#allocation15]
    $region33: #{bilstm_model_forward.1} parent=1 // pred_fallthru
      _
    // Predicated region
    $region34: #{bilstm_model_forward.1} parent=1 // pred_check
      _
    $region35: #{bilstm_model_forward.1} parent=1 // pred_check_branch
      %130 = sbr.rel (0) target = $region37
    $region36: #{bilstm_model_forward.1} parent=1 // pred_region
      %s132 = ssub.s32 512, 512
      %133 = vsyncadd [#allocation15], %s132
      %s134 = sshll.u32 [#allocation16], 4
      %s135 = int_to_ptr.vmem [resolvable:$true] %s134
      %140 = dma.hbm_to_vmem [thread:$0]  %s8, 512, %s135, [#allocation15], 128, 128, 8
    $region37: #{bilstm_model_forward.1} parent=1 // pred_fallthru
      _
    // Predicated region
    $region38: #{bilstm_model_forward.1} parent=1 // pred_check
      _
    $region39: #{bilstm_model_forward.1} parent=1 // pred_check_branch
      %142 = sbr.rel (0) target = $region41
    $region40: #{bilstm_model_forward.1} parent=1 // pred_region
      %s144 = ssub.s32 1024, 1024
      %145 = vsyncadd [#allocation18], %s144
      %s146 = sshll.u32 [#allocation17], 4
      %s147 = int_to_ptr.vmem [resolvable:$true] %s146
      %152 = dma.hbm_to_vmem [thread:$0]  %s9, 1024, %s147, [#allocation18], 128, 128, 8
    $region41: #{bilstm_model_forward.1} parent=1 // pred_fallthru
      _
    // Predicated region
    $region42: #{bilstm_model_forward.1} parent=1 // pred_check
      _
    $region43: #{bilstm_model_forward.1} parent=1 // pred_check_branch
      %154 = sbr.rel (0) target = $region45
    $region44: #{bilstm_model_forward.1} parent=1 // pred_region
      %s156 = ssub.s32 32, 32
      %157 = vsyncadd [#allocation18], %s156
      %s159 = sshll.u32 [#allocation19], 4
      %s160 = int_to_ptr.vmem [resolvable:$true] %s159
      %162 = dma.hbm_to_vmem [thread:$0]  %s10, 32, %s160, [#allocation18]
    $region45: #{bilstm_model_forward.1} parent=1 // pred_fallthru
      _
    // Predicated region
    $region46: #{bilstm_model_forward.1} parent=1 // pred_check
      _
    $region47: #{bilstm_model_forward.1} parent=1 // pred_check_branch
      %164 = sbr.rel (0) target = $region49
    $region48: #{bilstm_model_forward.1} parent=1 // pred_region
      %s166 = ssub.s32 1024, 1024
      %167 = vsyncadd [#allocation21], %s166
      %s168 = sshll.u32 [#allocation20], 4
      %s169 = int_to_ptr.vmem [resolvable:$true] %s168
      %174 = dma.hbm_to_vmem [thread:$0]  %s11, 1024, %s169, [#allocation21], 128, 128, 8
    $region49: #{bilstm_model_forward.1} parent=1 // pred_fallthru
      _
    // Predicated region
    $region50: #{bilstm_model_forward.1} parent=1 // pred_check
      _
    $region51: #{bilstm_model_forward.1} parent=1 // pred_check_branch
      %176 = sbr.rel (0) target = $region53
    $region52: #{bilstm_model_forward.1} parent=1 // pred_region
      %s178 = ssub.s32 1024, 1024
      %179 = vsyncadd [#allocation21], %s178
      %s180 = sshll.u32 [#allocation22], 4
      %s181 = int_to_ptr.vmem [resolvable:$true] %s180
      %186 = dma.hbm_to_vmem [thread:$0]  %s12, 1024, %s181, [#allocation21], 128, 128, 8
    $region53: #{bilstm_model_forward.1} parent=1 // pred_fallthru
      _
    // Predicated region
    $region54: #{bilstm_model_forward.1} parent=1 // pred_check
      _
    $region55: #{bilstm_model_forward.1} parent=1 // pred_check_branch
      %188 = sbr.rel (0) target = $region57
    $region56: #{bilstm_model_forward.1} parent=1 // pred_region
      %s190 = ssub.s32 32, 32
      %191 = vsyncadd [#allocation24], %s190
      %s193 = sshll.u32 [#allocation23], 4
      %s194 = int_to_ptr.vmem [resolvable:$true] %s193
      %196 = dma.hbm_to_vmem [thread:$0]  %s13, 32, %s194, [#allocation24]
    $region57: #{bilstm_model_forward.1} parent=1 // pred_fallthru
      _
    // Predicated region
    $region58: #{bilstm_model_forward.1} parent=1 // pred_check
      _
    $region59: #{bilstm_model_forward.1} parent=1 // pred_check_branch
      %198 = sbr.rel (0) target = $region61
    $region60: #{bilstm_model_forward.1} parent=1 // pred_region
      %199 = dma.done [#allocation3], 128
    $region61: #{bilstm_model_forward.1} parent=1 // pred_fallthru
      _
    // Predicated region
    $region62: #{bilstm_model_forward.1} parent=1 // pred_check
      _
    $region63: #{bilstm_model_forward.1} parent=1 // pred_check_branch
      %201 = sbr.rel (0) target = $region65
    $region64: #{bilstm_model_forward.1} parent=1 // pred_region
      %202 = dma.done [#allocation6], 256
    $region65: #{bilstm_model_forward.1} parent=1 // pred_fallthru
      _
    // Predicated region
    $region66: #{bilstm_model_forward.1} parent=1 // pred_check
      _
    $region67: #{bilstm_model_forward.1} parent=1 // pred_check_branch
      %204 = sbr.rel (0) target = $region69
    $region68: #{bilstm_model_forward.1} parent=1 // pred_region
      %205 = dma.done [#allocation6], 512
    $region69: #{bilstm_model_forward.1} parent=1 // pred_fallthru
      _
    // Predicated region
    $region70: #{bilstm_model_forward.1} parent=1 // pred_check
      _
    $region71: #{bilstm_model_forward.1} parent=1 // pred_check_branch
      %207 = sbr.rel (0) target = $region73
    $region72: #{bilstm_model_forward.1} parent=1 // pred_region
      %208 = dma.done [#allocation9], 1024
    $region73: #{bilstm_model_forward.1} parent=1 // pred_fallthru
      _
    // Predicated region
    $region74: #{bilstm_model_forward.1} parent=1 // pred_check
      _
    $region75: #{bilstm_model_forward.1} parent=1 // pred_check_branch
      %210 = sbr.rel (0) target = $region77
    $region76: #{bilstm_model_forward.1} parent=1 // pred_region
      %211 = dma.done [#allocation9], 32
    $region77: #{bilstm_model_forward.1} parent=1 // pred_fallthru
      _
    // Predicated region
    $region78: #{bilstm_model_forward.1} parent=1 // pred_check
      _
    $region79: #{bilstm_model_forward.1} parent=1 // pred_check_branch
      %213 = sbr.rel (0) target = $region81
    $region80: #{bilstm_model_forward.1} parent=1 // pred_region
      %214 = dma.done [#allocation12], 1024
    $region81: #{bilstm_model_forward.1} parent=1 // pred_fallthru
      _
    // Predicated region
    $region82: #{bilstm_model_forward.1} parent=1 // pred_check
      _
    $region83: #{bilstm_model_forward.1} parent=1 // pred_check_branch
      %216 = sbr.rel (0) target = $region85
    $region84: #{bilstm_model_forward.1} parent=1 // pred_region
      %217 = dma.done [#allocation12], 1024
    $region85: #{bilstm_model_forward.1} parent=1 // pred_fallthru
      _
    // Predicated region
    $region86: #{bilstm_model_forward.1} parent=1 // pred_check
      _
    $region87: #{bilstm_model_forward.1} parent=1 // pred_check_branch
      %219 = sbr.rel (0) target = $region89
    $region88: #{bilstm_model_forward.1} parent=1 // pred_region
      %220 = dma.done [#allocation15], 32
    $region89: #{bilstm_model_forward.1} parent=1 // pred_fallthru
      _
    // Predicated region
    $region90: #{bilstm_model_forward.1} parent=1 // pred_check
      _
    $region91: #{bilstm_model_forward.1} parent=1 // pred_check_branch
      %222 = sbr.rel (0) target = $region93
    $region92: #{bilstm_model_forward.1} parent=1 // pred_region
      %223 = dma.done [#allocation15], 512
    $region93: #{bilstm_model_forward.1} parent=1 // pred_fallthru
      _
    // Predicated region
    $region94: #{bilstm_model_forward.1} parent=1 // pred_check
      _
    $region95: #{bilstm_model_forward.1} parent=1 // pred_check_branch
      %225 = sbr.rel (0) target = $region97
    $region96: #{bilstm_model_forward.1} parent=1 // pred_region
      %226 = dma.done [#allocation18], 1024
    $region97: #{bilstm_model_forward.1} parent=1 // pred_fallthru
      _
    // Predicated region
    $region98: #{bilstm_model_forward.1} parent=1 // pred_check
      _
    $region99: #{bilstm_model_forward.1} parent=1 // pred_check_branch
      %228 = sbr.rel (0) target = $region101
    $region100: #{bilstm_model_forward.1} parent=1 // pred_region
      %229 = dma.done [#allocation18], 32
    $region101: #{bilstm_model_forward.1} parent=1 // pred_fallthru
      _
    // Predicated region
    $region102: #{bilstm_model_forward.1} parent=1 // pred_check
      _
    $region103: #{bilstm_model_forward.1} parent=1 // pred_check_branch
      %231 = sbr.rel (0) target = $region105
    $region104: #{bilstm_model_forward.1} parent=1 // pred_region
      %232 = dma.done [#allocation21], 1024
    $region105: #{bilstm_model_forward.1} parent=1 // pred_fallthru
      _
    // Predicated region
    $region106: #{bilstm_model_forward.1} parent=1 // pred_check
      _
    $region107: #{bilstm_model_forward.1} parent=1 // pred_check_branch
      %234 = sbr.rel (0) target = $region109
    $region108: #{bilstm_model_forward.1} parent=1 // pred_region
      %235 = dma.done [#allocation21], 1024
    $region109: #{bilstm_model_forward.1} parent=1 // pred_fallthru
      _
    // Predicated region
    $region110: #{bilstm_model_forward.1} parent=1 // pred_check
      _
    $region111: #{bilstm_model_forward.1} parent=1 // pred_check_branch
      %237 = sbr.rel (0) target = $region113
    $region112: #{bilstm_model_forward.1} parent=1 // pred_region
      %238 = dma.done [#allocation24], 32
    $region113: #{bilstm_model_forward.1} parent=1 // pred_fallthru
      _
    %v240 = vld [vmem:[#allocation2] sm:$0xf]
    %v241 = vld [vmem:[#allocation2 + $0x4] sm:$0xf]
    %v242 = vld [vmem:[#allocation7] sm:$0xff]
    %v243 = vld [vmem:[#allocation7 + $0x8] sm:$0xff]
    %v244 = vld [vmem:[#allocation7 + $0x10] sm:$0xff]
    %v245 = vld [vmem:[#allocation7 + $0x18] sm:$0xff]
    %v246 = vld [vmem:[#allocation8] sm:$0xff]
    %v247 = vld [vmem:[#allocation8 + $0x8] sm:$0xff]
    %v248 = vld [vmem:[#allocation8 + $0x10] sm:$0xff]
    %v249 = vld [vmem:[#allocation8 + $0x18] sm:$0xff]
    %v250 = vld [vmem:[#allocation8 + $0x20] sm:$0xff]
    %v251 = vld [vmem:[#allocation8 + $0x28] sm:$0xff]
    %v252 = vld [vmem:[#allocation8 + $0x30] sm:$0xff]
    %v253 = vld [vmem:[#allocation8 + $0x38] sm:$0xff]
    %v254 = vld [vmem:[#allocation10] sm:$0x3]
    %v256 = vlaneseq
    %v257 = vshrl.u32 %v256, 7
    %v258 = vsub.s32 0, %v257
    %v259 = vrot.slane %v254, %v258
    %v260 = vlaneseq
    %v261 = vshrl.u32 %v260, 7
    %v262 = vsub.s32 1, %v261
    %v263 = vrot.slane %v254, %v262
    %v268 = vunpack.c.l.b16 %v240
    %v269 = vunpack.c.l.b16 %v241
    %v270 = vpack.c.b16 %v269, %v268
    %v275 = vunpack.c.l.b16 %v242
    %v276 = vunpack.c.h.b16 %v242
    %v277 = vunpack.c.l.b16 %v243
    %v278 = vunpack.c.h.b16 %v243
    %v279 = vunpack.c.l.b16 %v244
    %v280 = vunpack.c.h.b16 %v244
    %v281 = vunpack.c.l.b16 %v245
    %v282 = vunpack.c.h.b16 %v245
    %v283 = vpack.c.b16 %v277, %v275
    %v284 = vpack.c.b16 %v278, %v276
    %v285 = vpack.c.b16 %v281, %v279
    %v286 = vpack.c.b16 %v282, %v280
    %vm291 = vcmask 261120
    %v293 = vsel %vm291, %v270, 0
    %295 = vmatprep.subr.bf16.mxu0 %v284
    %296 = vmatpush1.bf16.msra.mxu0 %v283
    %297 = vmatprep.subr.bf16.mxu0 %v286
    %298 = vmatpush1.bf16.msra.mxu0 %v285
    %299 = vmatprep.subr.bf16.mxu0 0
    %300 = vmatpush1.bf16.msra.mxu0 0
    %301 = vmatprep.subr.bf16.mxu0 0
    %302 = vmatpush1.bf16.msra.mxu0 0
    %303 = vmatprep.subr.bf16.mxu0 0
    %304 = vmatpush1.bf16.msra.mxu0 0
    %305 = vmatprep.subr.bf16.mxu0 0
    %306 = vmatpush1.bf16.msra.mxu0 0
    %307 = vmatprep.subr.bf16.mxu0 0
    %308 = vmatpush1.bf16.msra.mxu0 0
    %309 = vmatprep.subr.bf16.mxu0 0
    %310 = vmatpush1.bf16.msra.mxu0 0
    %311 = vmatprep.subr.bf16.mxu0 0
    %312 = vmatpush1.bf16.msra.mxu0 0
    %313 = vmatprep.subr.bf16.mxu0 0
    %314 = vmatpush1.bf16.msra.mxu0 0
    %315 = vmatprep.subr.bf16.mxu0 0
    %316 = vmatpush1.bf16.msra.mxu0 0
    %317 = vmatprep.subr.bf16.mxu0 0
    %318 = vmatpush1.bf16.msra.mxu0 0
    %319 = vmatprep.subr.bf16.mxu0 0
    %320 = vmatpush1.bf16.msra.mxu0 0
    %321 = vmatprep.subr.bf16.mxu0 0
    %322 = vmatpush1.bf16.msra.mxu0 0
    %323 = vmatprep.subr.bf16.mxu0 0
    %324 = vmatpush1.bf16.msra.mxu0 0
    %325 = vmatprep.subr.bf16.mxu0 0
    %326 = vmatpush1.bf16.msra.mxu0 0
    %327 = vmatprep.mubr.bf16.mxu0 0
    %328 = vmatmul.mubr.bf16.gmra.mrb[0].mxu0 %v293
    %v329 = vpop.f32.mrb[0].mxu0
    %v330 = vadd.f32 %v259, %v329
    %v331 = vpop.f32.mrb[0].mxu0
    %v332 = vadd.f32 %v263, %v331
    %v333 = vpop.f32.mrb[0].mxu0
    %v334 = vadd.f32 %v259, %v333
    %v335 = vpop.f32.mrb[0].mxu0
    %v336 = vadd.f32 %v263, %v335
    %337 = vdwg.mxu0
    %v346 = vunpack.c.l.b16 %v246
    %v347 = vunpack.c.h.b16 %v246
    %v348 = vunpack.c.l.b16 %v247
    %v349 = vunpack.c.h.b16 %v247
    %v350 = vunpack.c.l.b16 %v248
    %v351 = vunpack.c.h.b16 %v248
    %v352 = vunpack.c.l.b16 %v249
    %v353 = vunpack.c.h.b16 %v249
    %v354 = vunpack.c.l.b16 %v250
    %v355 = vunpack.c.h.b16 %v250
    %v356 = vunpack.c.l.b16 %v251
    %v357 = vunpack.c.h.b16 %v251
    %v358 = vunpack.c.l.b16 %v252
    %v359 = vunpack.c.h.b16 %v252
    %v360 = vunpack.c.l.b16 %v253
    %v361 = vunpack.c.h.b16 %v253
    %v362 = vpack.c.b16 %v348, %v346
    %v363 = vpack.c.b16 %v349, %v347
    %v364 = vpack.c.b16 %v352, %v350
    %v365 = vpack.c.b16 %v353, %v351
    %v366 = vpack.c.b16 %v356, %v354
    %v367 = vpack.c.b16 %v357, %v355
    %v368 = vpack.c.b16 %v360, %v358
    %v369 = vpack.c.b16 %v361, %v359
    %vm378 = vcmask 523264
    %v380 = vsel %vm378, 0, 0
    %382 = vmatprep.subr.bf16.mxu0 %v363
    %383 = vmatpush1.bf16.msra.mxu0 %v362
    %384 = vmatprep.subr.bf16.mxu0 %v365
    %385 = vmatpush1.bf16.msra.mxu0 %v364
    %386 = vmatprep.subr.bf16.mxu0 %v367
    %387 = vmatpush1.bf16.msra.mxu0 %v366
    %388 = vmatprep.subr.bf16.mxu0 %v369
    %389 = vmatpush1.bf16.msra.mxu0 %v368
    %390 = vmatprep.subr.bf16.mxu0 0
    %391 = vmatpush1.bf16.msra.mxu0 0
    %392 = vmatprep.subr.bf16.mxu0 0
    %393 = vmatpush1.bf16.msra.mxu0 0
    %394 = vmatprep.subr.bf16.mxu0 0
    %395 = vmatpush1.bf16.msra.mxu0 0
    %396 = vmatprep.subr.bf16.mxu0 0
    %397 = vmatpush1.bf16.msra.mxu0 0
    %398 = vmatprep.subr.bf16.mxu0 0
    %399 = vmatpush1.bf16.msra.mxu0 0
    %400 = vmatprep.subr.bf16.mxu0 0
    %401 = vmatpush1.bf16.msra.mxu0 0
    %402 = vmatprep.subr.bf16.mxu0 0
    %403 = vmatpush1.bf16.msra.mxu0 0
    %404 = vmatprep.subr.bf16.mxu0 0
    %405 = vmatpush1.bf16.msra.mxu0 0
    %406 = vmatprep.subr.bf16.mxu0 0
    %407 = vmatpush1.bf16.msra.mxu0 0
    %408 = vmatprep.subr.bf16.mxu0 0
    %409 = vmatpush1.bf16.msra.mxu0 0
    %410 = vmatprep.subr.bf16.mxu0 0
    %411 = vmatpush1.bf16.msra.mxu0 0
    %412 = vmatprep.subr.bf16.mxu0 0
    %413 = vmatpush1.bf16.msra.mxu0 0
    %414 = vmatprep.mubr.bf16.mxu0 0
    %415 = vmatmul.mubr.bf16.gmra.mrb[0].mxu0 %v380
    %v416 = vpop.f32.mrb[0].mxu0
    %v417 = vadd.f32 0.0, %v416
    %v418 = vpop.f32.mrb[0].mxu0
    %v419 = vadd.f32 0.0, %v418
    %v420 = vpop.f32.mrb[0].mxu0
    %v421 = vpop.f32.mrb[0].mxu0
    %422 = vdwg.mxu0
    %v423 = vadd.f32 %v330, %v417
    %v425 = vrot.slane %v419, 2
    %v427 = vadd.f32 %v336, %v425
    %v428 = vsub.f32 0.0, %v423
    %v429 = vmul.f32 %v428, 1.442695
    %v430 = vpow.pop %v429
    %v431 = vadd.f32 %v430, 1.0
    %v432 = vrcp.pop %v431
    %v433 = vmul.f32 1.0, %v432
    %v434 = vtanh.pop %v423
    %v435 = vmul.f32 %v433, 0.0
    %437 = vrot.lane.b32.xlu0 %v434, 64
    %v438 = vpop.permute.xlu0 %437
    %v440 = vmul.f32 %v433, %v438
    %442 = vrot.lane.b32.xlu0 %v440, 32
    %v443 = vpop.permute.xlu0 %442
    %v445 = vadd.f32 %v435, %v443
    %v446 = vtanh.pop %v445
    %448 = vrot.lane.b32.xlu0 %v446, 64
    %v449 = vpop.permute.xlu0 %448
    %v451 = vmul.f32 %v433, %v449
    %v452 = vsub.f32 0.0, %v427
    %v453 = vmul.f32 %v452, 1.442695
    %v454 = vpow.pop %v453
    %v455 = vadd.f32 %v454, 1.0
    %v456 = vrcp.pop %v455
    %v457 = vmul.f32 1.0, %v456
    %v458 = vtanh.pop %v427
    %v459 = vmul.f32 %v457, 0.0
    %461 = vrot.lane.b32.xlu0 %v458, 64
    %v462 = vpop.permute.xlu0 %461
    %v464 = vmul.f32 %v457, %v462
    %466 = vrot.lane.b32.xlu0 %v464, 32
    %v467 = vpop.permute.xlu0 %466
    %v469 = vadd.f32 %v459, %v467
    %v470 = vtanh.pop %v469
    %472 = vrot.lane.b32.xlu0 %v470, 64
    %v473 = vpop.permute.xlu0 %472
    %v475 = vmul.f32 %v457, %v473
    %477 = vrot.lane.b32.xlu0 %v451, 32
    %v478 = vpop.permute.xlu0 %477
    %v481 = vrot.slane %v475, 6
    %482 = vrot.lane.b32.xlu0 %v481, 64
    %v483 = vpop.permute.xlu0 %482
    %v485 = vsel %vm291, %v478, %v483
    %v486 = vpack.c.bf16 %v485, %v485
    %v488 = vsel %vm378, %v486, 0
    %490 = vmatprep.subr.bf16.mxu0 %v363
    %491 = vmatpush1.bf16.msra.mxu0 %v362
    %492 = vmatprep.subr.bf16.mxu0 %v365
    %493 = vmatpush1.bf16.msra.mxu0 %v364
    %494 = vmatprep.subr.bf16.mxu0 %v367
    %495 = vmatpush1.bf16.msra.mxu0 %v366
    %496 = vmatprep.subr.bf16.mxu0 %v369
    %497 = vmatpush1.bf16.msra.mxu0 %v368
    %498 = vmatprep.subr.bf16.mxu0 0
    %499 = vmatpush1.bf16.msra.mxu0 0
    %500 = vmatprep.subr.bf16.mxu0 0
    %501 = vmatpush1.bf16.msra.mxu0 0
    %502 = vmatprep.subr.bf16.mxu0 0
    %503 = vmatpush1.bf16.msra.mxu0 0
    %504 = vmatprep.subr.bf16.mxu0 0
    %505 = vmatpush1.bf16.msra.mxu0 0
    %506 = vmatprep.subr.bf16.mxu0 0
    %507 = vmatpush1.bf16.msra.mxu0 0
    %508 = vmatprep.subr.bf16.mxu0 0
    %509 = vmatpush1.bf16.msra.mxu0 0
    %510 = vmatprep.subr.bf16.mxu0 0
    %511 = vmatpush1.bf16.msra.mxu0 0
    %512 = vmatprep.subr.bf16.mxu0 0
    %513 = vmatpush1.bf16.msra.mxu0 0
    %514 = vmatprep.subr.bf16.mxu0 0
    %515 = vmatpush1.bf16.msra.mxu0 0
    %516 = vmatprep.subr.bf16.mxu0 0
    %517 = vmatpush1.bf16.msra.mxu0 0
    %518 = vmatprep.subr.bf16.mxu0 0
    %519 = vmatpush1.bf16.msra.mxu0 0
    %520 = vmatprep.subr.bf16.mxu0 0
    %521 = vmatpush1.bf16.msra.mxu0 0
    %522 = vmatprep.mubr.bf16.mxu0 0
    %523 = vmatmul.mubr.bf16.gmra.mrb[0].mxu0 %v488
    %v524 = vpop.f32.mrb[0].mxu0
    %v525 = vadd.f32 0.0, %v524
    %v526 = vpop.f32.mrb[0].mxu0
    %v527 = vadd.f32 0.0, %v526
    %v528 = vpop.f32.mrb[0].mxu0
    %v529 = vpop.f32.mrb[0].mxu0
    %530 = vdwg.mxu0
    %v532 = vrot.slane %v525, 6
    %v534 = vadd.f32 %v330, %v532
    %v536 = vrot.slane %v527, 4
    %v538 = vadd.f32 %v336, %v536
    %v539 = vsub.f32 0.0, %v534
    %v540 = vmul.f32 %v539, 1.442695
    %v541 = vpow.pop %v540
    %v542 = vadd.f32 %v541, 1.0
    %v543 = vrcp.pop %v542
    %v544 = vmul.f32 1.0, %v543
    %v545 = vtanh.pop %v534
    %v547 = vrot.slane %v445, 6
    %v549 = vmul.f32 %v544, %v547
    %551 = vrot.lane.b32.xlu0 %v545, 64
    %v552 = vpop.permute.xlu0 %551
    %v554 = vmul.f32 %v544, %v552
    %556 = vrot.lane.b32.xlu0 %v554, 32
    %v557 = vpop.permute.xlu0 %556
    %v559 = vadd.f32 %v549, %v557
    %v560 = vtanh.pop %v559
    %562 = vrot.lane.b32.xlu0 %v560, 64
    %v563 = vpop.permute.xlu0 %562
    %v565 = vmul.f32 %v544, %v563
    %v566 = vsub.f32 0.0, %v538
    %v567 = vmul.f32 %v566, 1.442695
    %v568 = vpow.pop %v567
    %v569 = vadd.f32 %v568, 1.0
    %v570 = vrcp.pop %v569
    %v571 = vmul.f32 1.0, %v570
    %v572 = vtanh.pop %v538
    %v574 = vrot.slane %v469, 2
    %v576 = vmul.f32 %v571, %v574
    %578 = vrot.lane.b32.xlu0 %v572, 64
    %v579 = vpop.permute.xlu0 %578
    %v581 = vmul.f32 %v571, %v579
    %583 = vrot.lane.b32.xlu0 %v581, 32
    %v584 = vpop.permute.xlu0 %583
    %v586 = vadd.f32 %v576, %v584
    %v587 = vtanh.pop %v586
    %589 = vrot.lane.b32.xlu0 %v587, 64
    %v590 = vpop.permute.xlu0 %589
    %v592 = vmul.f32 %v571, %v590
    %594 = vrot.lane.b32.xlu0 %v565, 32
    %v595 = vpop.permute.xlu0 %594
    %v598 = vrot.slane %v592, 2
    %599 = vrot.lane.b32.xlu0 %v598, 64
    %v600 = vpop.permute.xlu0 %599
    %v602 = vsel %vm291, %v595, %v600
    %v603 = vpack.c.bf16 %v602, %v602
    %v605 = vrot.slane %v603, 1
    %v607 = vsel %vm378, %v605, 0
    %609 = vmatprep.subr.bf16.mxu0 %v363
    %610 = vmatpush1.bf16.msra.mxu0 %v362
    %611 = vmatprep.subr.bf16.mxu0 %v365
    %612 = vmatpush1.bf16.msra.mxu0 %v364
    %613 = vmatprep.subr.bf16.mxu0 %v367
    %614 = vmatpush1.bf16.msra.mxu0 %v366
    %615 = vmatprep.subr.bf16.mxu0 %v369
    %616 = vmatpush1.bf16.msra.mxu0 %v368
    %617 = vmatprep.subr.bf16.mxu0 0
    %618 = vmatpush1.bf16.msra.mxu0 0
    %619 = vmatprep.subr.bf16.mxu0 0
    %620 = vmatpush1.bf16.msra.mxu0 0
    %621 = vmatprep.subr.bf16.mxu0 0
    %622 = vmatpush1.bf16.msra.mxu0 0
    %623 = vmatprep.subr.bf16.mxu0 0
    %624 = vmatpush1.bf16.msra.mxu0 0
    %625 = vmatprep.subr.bf16.mxu0 0
    %626 = vmatpush1.bf16.msra.mxu0 0
    %627 = vmatprep.subr.bf16.mxu0 0
    %628 = vmatpush1.bf16.msra.mxu0 0
    %629 = vmatprep.subr.bf16.mxu0 0
    %630 = vmatpush1.bf16.msra.mxu0 0
    %631 = vmatprep.subr.bf16.mxu0 0
    %632 = vmatpush1.bf16.msra.mxu0 0
    %633 = vmatprep.subr.bf16.mxu0 0
    %634 = vmatpush1.bf16.msra.mxu0 0
    %635 = vmatprep.subr.bf16.mxu0 0
    %636 = vmatpush1.bf16.msra.mxu0 0
    %637 = vmatprep.subr.bf16.mxu0 0
    %638 = vmatpush1.bf16.msra.mxu0 0
    %639 = vmatprep.subr.bf16.mxu0 0
    %640 = vmatpush1.bf16.msra.mxu0 0
    %641 = vmatprep.mubr.bf16.mxu0 0
    %642 = vmatmul.mubr.bf16.gmra.mrb[0].mxu0 %v607
    %v643 = vpop.f32.mrb[0].mxu0
    %v644 = vadd.f32 0.0, %v643
    %v645 = vpop.f32.mrb[0].mxu0
    %v646 = vadd.f32 0.0, %v645
    %v647 = vpop.f32.mrb[0].mxu0
    %v648 = vpop.f32.mrb[0].mxu0
    %649 = vdwg.mxu0
    %v651 = vrot.slane %v644, 4
    %v653 = vadd.f32 %v330, %v651
    %v655 = vrot.slane %v646, 6
    %v657 = vadd.f32 %v336, %v655
    %v658 = vsub.f32 0.0, %v653
    %v659 = vmul.f32 %v658, 1.442695
    %v660 = vpow.pop %v659
    %v661 = vadd.f32 %v660, 1.0
    %v662 = vrcp.pop %v661
    %v663 = vmul.f32 1.0, %v662
    %v664 = vtanh.pop %v653
    %v666 = vrot.slane %v559, 6
    %v668 = vmul.f32 %v663, %v666
    %670 = vrot.lane.b32.xlu0 %v664, 64
    %v671 = vpop.permute.xlu0 %670
    %v673 = vmul.f32 %v663, %v671
    %675 = vrot.lane.b32.xlu0 %v673, 32
    %v676 = vpop.permute.xlu0 %675
    %v678 = vadd.f32 %v668, %v676
    %v679 = vtanh.pop %v678
    %681 = vrot.lane.b32.xlu0 %v679, 64
    %v682 = vpop.permute.xlu0 %681
    %v684 = vmul.f32 %v663, %v682
    %v685 = vsub.f32 0.0, %v657
    %v686 = vmul.f32 %v685, 1.442695
    %v687 = vpow.pop %v686
    %v688 = vadd.f32 %v687, 1.0
    %v689 = vrcp.pop %v688
    %v690 = vmul.f32 1.0, %v689
    %v691 = vtanh.pop %v657
    %v693 = vrot.slane %v586, 2
    %v695 = vmul.f32 %v690, %v693
    %697 = vrot.lane.b32.xlu0 %v691, 64
    %v698 = vpop.permute.xlu0 %697
    %v700 = vmul.f32 %v690, %v698
    %702 = vrot.lane.b32.xlu0 %v700, 32
    %v703 = vpop.permute.xlu0 %702
    %v705 = vadd.f32 %v695, %v703
    %v706 = vtanh.pop %v705
    %708 = vrot.lane.b32.xlu0 %v706, 64
    %v709 = vpop.permute.xlu0 %708
    %v711 = vmul.f32 %v690, %v709
    %713 = vrot.lane.b32.xlu0 %v684, 32
    %v714 = vpop.permute.xlu0 %713
    %v717 = vrot.slane %v711, 6
    %718 = vrot.lane.b32.xlu0 %v717, 64
    %v719 = vpop.permute.xlu0 %718
    %v721 = vsel %vm291, %v714, %v719
    %v722 = vpack.c.bf16 %v721, %v721
    %v724 = vrot.slane %v722, 2
    %v726 = vsel %vm378, %v724, 0
    %728 = vmatprep.subr.bf16.mxu0 %v363
    %729 = vmatpush1.bf16.msra.mxu0 %v362
    %730 = vmatprep.subr.bf16.mxu0 %v365
    %731 = vmatpush1.bf16.msra.mxu0 %v364
    %732 = vmatprep.subr.bf16.mxu0 %v367
    %733 = vmatpush1.bf16.msra.mxu0 %v366
    %734 = vmatprep.subr.bf16.mxu0 %v369
    %735 = vmatpush1.bf16.msra.mxu0 %v368
    %736 = vmatprep.subr.bf16.mxu0 0
    %737 = vmatpush1.bf16.msra.mxu0 0
    %738 = vmatprep.subr.bf16.mxu0 0
    %739 = vmatpush1.bf16.msra.mxu0 0
    %740 = vmatprep.subr.bf16.mxu0 0
    %741 = vmatpush1.bf16.msra.mxu0 0
    %742 = vmatprep.subr.bf16.mxu0 0
    %743 = vmatpush1.bf16.msra.mxu0 0
    %744 = vmatprep.subr.bf16.mxu0 0
    %745 = vmatpush1.bf16.msra.mxu0 0
    %746 = vmatprep.subr.bf16.mxu0 0
    %747 = vmatpush1.bf16.msra.mxu0 0
    %748 = vmatprep.subr.bf16.mxu0 0
    %749 = vmatpush1.bf16.msra.mxu0 0
    %750 = vmatprep.subr.bf16.mxu0 0
    %751 = vmatpush1.bf16.msra.mxu0 0
    %752 = vmatprep.subr.bf16.mxu0 0
    %753 = vmatpush1.bf16.msra.mxu0 0
    %754 = vmatprep.subr.bf16.mxu0 0
    %755 = vmatpush1.bf16.msra.mxu0 0
    %756 = vmatprep.subr.bf16.mxu0 0
    %757 = vmatpush1.bf16.msra.mxu0 0
    %758 = vmatprep.subr.bf16.mxu0 0
    %759 = vmatpush1.bf16.msra.mxu0 0
    %760 = vmatprep.mubr.bf16.mxu0 0
    %761 = vmatmul.mubr.bf16.gmra.mrb[0].mxu0 %v726
    %v762 = vpop.f32.mrb[0].mxu0
    %v763 = vadd.f32 0.0, %v762
    %v764 = vpop.f32.mrb[0].mxu0
    %v765 = vadd.f32 0.0, %v764
    %v766 = vpop.f32.mrb[0].mxu0
    %v767 = vpop.f32.mrb[0].mxu0
    %768 = vdwg.mxu0
    %v770 = vrot.slane %v763, 2
    %v772 = vadd.f32 %v330, %v770
    %v773 = vadd.f32 %v336, %v765
    %v774 = vsub.f32 0.0, %v772
    %v775 = vmul.f32 %v774, 1.442695
    %v776 = vpow.pop %v775
    %v777 = vadd.f32 %v776, 1.0
    %v778 = vrcp.pop %v777
    %v779 = vmul.f32 1.0, %v778
    %v780 = vtanh.pop %v772
    %v782 = vrot.slane %v678, 6
    %v784 = vmul.f32 %v779, %v782
    %786 = vrot.lane.b32.xlu0 %v780, 64
    %v787 = vpop.permute.xlu0 %786
    %v789 = vmul.f32 %v779, %v787
    %791 = vrot.lane.b32.xlu0 %v789, 32
    %v792 = vpop.permute.xlu0 %791
    %v794 = vadd.f32 %v784, %v792
    %v795 = vtanh.pop %v794
    %797 = vrot.lane.b32.xlu0 %v795, 64
    %v798 = vpop.permute.xlu0 %797
    %v800 = vmul.f32 %v779, %v798
    %v801 = vsub.f32 0.0, %v773
    %v802 = vmul.f32 %v801, 1.442695
    %v803 = vpow.pop %v802
    %v804 = vadd.f32 %v803, 1.0
    %v805 = vrcp.pop %v804
    %v806 = vmul.f32 1.0, %v805
    %v807 = vtanh.pop %v773
    %v809 = vrot.slane %v705, 2
    %v811 = vmul.f32 %v806, %v809
    %813 = vrot.lane.b32.xlu0 %v807, 64
    %v814 = vpop.permute.xlu0 %813
    %v816 = vmul.f32 %v806, %v814
    %818 = vrot.lane.b32.xlu0 %v816, 32
    %v819 = vpop.permute.xlu0 %818
    %v821 = vadd.f32 %v811, %v819
    %v822 = vtanh.pop %v821
    %824 = vrot.lane.b32.xlu0 %v822, 64
    %v825 = vpop.permute.xlu0 %824
    %v827 = vmul.f32 %v806, %v825
    %829 = vrot.lane.b32.xlu0 %v800, 32
    %v830 = vpop.permute.xlu0 %829
    %v833 = vrot.slane %v827, 2
    %834 = vrot.lane.b32.xlu0 %v833, 64
    %v835 = vpop.permute.xlu0 %834
    %v837 = vsel %vm291, %v830, %v835
    %v838 = vpack.c.bf16 %v837, %v837
    %v840 = vrot.slane %v838, 3
    %v842 = vsel %vm378, %v840, 0
    %844 = vmatprep.subr.bf16.mxu0 %v363
    %845 = vmatpush1.bf16.msra.mxu0 %v362
    %846 = vmatprep.subr.bf16.mxu0 %v365
    %847 = vmatpush1.bf16.msra.mxu0 %v364
    %848 = vmatprep.subr.bf16.mxu0 %v367
    %849 = vmatpush1.bf16.msra.mxu0 %v366
    %850 = vmatprep.subr.bf16.mxu0 %v369
    %851 = vmatpush1.bf16.msra.mxu0 %v368
    %852 = vmatprep.subr.bf16.mxu0 0
    %853 = vmatpush1.bf16.msra.mxu0 0
    %854 = vmatprep.subr.bf16.mxu0 0
    %855 = vmatpush1.bf16.msra.mxu0 0
    %856 = vmatprep.subr.bf16.mxu0 0
    %857 = vmatpush1.bf16.msra.mxu0 0
    %858 = vmatprep.subr.bf16.mxu0 0
    %859 = vmatpush1.bf16.msra.mxu0 0
    %860 = vmatprep.subr.bf16.mxu0 0
    %861 = vmatpush1.bf16.msra.mxu0 0
    %862 = vmatprep.subr.bf16.mxu0 0
    %863 = vmatpush1.bf16.msra.mxu0 0
    %864 = vmatprep.subr.bf16.mxu0 0
    %865 = vmatpush1.bf16.msra.mxu0 0
    %866 = vmatprep.subr.bf16.mxu0 0
    %867 = vmatpush1.bf16.msra.mxu0 0
    %868 = vmatprep.subr.bf16.mxu0 0
    %869 = vmatpush1.bf16.msra.mxu0 0
    %870 = vmatprep.subr.bf16.mxu0 0
    %871 = vmatpush1.bf16.msra.mxu0 0
    %872 = vmatprep.subr.bf16.mxu0 0
    %873 = vmatpush1.bf16.msra.mxu0 0
    %874 = vmatprep.subr.bf16.mxu0 0
    %875 = vmatpush1.bf16.msra.mxu0 0
    %876 = vmatprep.mubr.bf16.mxu0 0
    %877 = vmatmul.mubr.bf16.gmra.mrb[0].mxu0 %v842
    %v878 = vpop.f32.mrb[0].mxu0
    %v879 = vadd.f32 0.0, %v878
    %v880 = vpop.f32.mrb[0].mxu0
    %v881 = vadd.f32 0.0, %v880
    %v882 = vpop.f32.mrb[0].mxu0
    %v883 = vpop.f32.mrb[0].mxu0
    %884 = vdwg.mxu0
    %v885 = vadd.f32 %v334, %v879
    %v887 = vrot.slane %v881, 2
    %v889 = vadd.f32 %v332, %v887
    %v890 = vsub.f32 0.0, %v885
    %v891 = vmul.f32 %v890, 1.442695
    %v892 = vpow.pop %v891
    %v893 = vadd.f32 %v892, 1.0
    %v894 = vrcp.pop %v893
    %v895 = vmul.f32 1.0, %v894
    %v896 = vtanh.pop %v885
    %v898 = vrot.slane %v794, 6
    %v900 = vmul.f32 %v895, %v898
    %902 = vrot.lane.b32.xlu0 %v896, 64
    %v903 = vpop.permute.xlu0 %902
    %v905 = vmul.f32 %v895, %v903
    %907 = vrot.lane.b32.xlu0 %v905, 32
    %v908 = vpop.permute.xlu0 %907
    %v910 = vadd.f32 %v900, %v908
    %v911 = vtanh.pop %v910
    %913 = vrot.lane.b32.xlu0 %v911, 64
    %v914 = vpop.permute.xlu0 %913
    %v916 = vmul.f32 %v895, %v914
    %v917 = vsub.f32 0.0, %v889
    %v918 = vmul.f32 %v917, 1.442695
    %v919 = vpow.pop %v918
    %v920 = vadd.f32 %v919, 1.0
    %v921 = vrcp.pop %v920
    %v922 = vmul.f32 1.0, %v921
    %v923 = vtanh.pop %v889
    %v925 = vrot.slane %v821, 2
    %v927 = vmul.f32 %v922, %v925
    %929 = vrot.lane.b32.xlu0 %v923, 64
    %v930 = vpop.permute.xlu0 %929
    %v932 = vmul.f32 %v922, %v930
    %934 = vrot.lane.b32.xlu0 %v932, 32
    %v935 = vpop.permute.xlu0 %934
    %v937 = vadd.f32 %v927, %v935
    %v938 = vtanh.pop %v937
    %940 = vrot.lane.b32.xlu0 %v938, 64
    %v941 = vpop.permute.xlu0 %940
    %v943 = vmul.f32 %v922, %v941
    %945 = vrot.lane.b32.xlu0 %v916, 32
    %v946 = vpop.permute.xlu0 %945
    %v949 = vrot.slane %v943, 6
    %950 = vrot.lane.b32.xlu0 %v949, 64
    %v951 = vpop.permute.xlu0 %950
    %v953 = vsel %vm291, %v946, %v951
    %v954 = vpack.c.bf16 %v953, %v953
    %v956 = vsel %vm378, %v954, 0
    %958 = vmatprep.subr.bf16.mxu0 %v363
    %959 = vmatpush1.bf16.msra.mxu0 %v362
    %960 = vmatprep.subr.bf16.mxu0 %v365
    %961 = vmatpush1.bf16.msra.mxu0 %v364
    %962 = vmatprep.subr.bf16.mxu0 %v367
    %963 = vmatpush1.bf16.msra.mxu0 %v366
    %964 = vmatprep.subr.bf16.mxu0 %v369
    %965 = vmatpush1.bf16.msra.mxu0 %v368
    %966 = vmatprep.subr.bf16.mxu0 0
    %967 = vmatpush1.bf16.msra.mxu0 0
    %968 = vmatprep.subr.bf16.mxu0 0
    %969 = vmatpush1.bf16.msra.mxu0 0
    %970 = vmatprep.subr.bf16.mxu0 0
    %971 = vmatpush1.bf16.msra.mxu0 0
    %972 = vmatprep.subr.bf16.mxu0 0
    %973 = vmatpush1.bf16.msra.mxu0 0
    %974 = vmatprep.subr.bf16.mxu0 0
    %975 = vmatpush1.bf16.msra.mxu0 0
    %976 = vmatprep.subr.bf16.mxu0 0
    %977 = vmatpush1.bf16.msra.mxu0 0
    %978 = vmatprep.subr.bf16.mxu0 0
    %979 = vmatpush1.bf16.msra.mxu0 0
    %980 = vmatprep.subr.bf16.mxu0 0
    %981 = vmatpush1.bf16.msra.mxu0 0
    %982 = vmatprep.subr.bf16.mxu0 0
    %983 = vmatpush1.bf16.msra.mxu0 0
    %984 = vmatprep.subr.bf16.mxu0 0
    %985 = vmatpush1.bf16.msra.mxu0 0
    %986 = vmatprep.subr.bf16.mxu0 0
    %987 = vmatpush1.bf16.msra.mxu0 0
    %988 = vmatprep.subr.bf16.mxu0 0
    %989 = vmatpush1.bf16.msra.mxu0 0
    %990 = vmatprep.mubr.bf16.mxu0 0
    %991 = vmatmul.mubr.bf16.gmra.mrb[0].mxu0 %v956
    %v992 = vpop.f32.mrb[0].mxu0
    %v993 = vadd.f32 0.0, %v992
    %v994 = vpop.f32.mrb[0].mxu0
    %v995 = vadd.f32 0.0, %v994
    %v996 = vpop.f32.mrb[0].mxu0
    %v997 = vpop.f32.mrb[0].mxu0
    %998 = vdwg.mxu0
    %v1000 = vrot.slane %v993, 6
    %v1002 = vadd.f32 %v334, %v1000
    %v1004 = vrot.slane %v995, 4
    %v1006 = vadd.f32 %v332, %v1004
    %v1007 = vsub.f32 0.0, %v1002
    %v1008 = vmul.f32 %v1007, 1.442695
    %v1009 = vpow.pop %v1008
    %v1010 = vadd.f32 %v1009, 1.0
    %v1011 = vrcp.pop %v1010
    %v1012 = vmul.f32 1.0, %v1011
    %v1013 = vtanh.pop %v1002
    %v1015 = vrot.slane %v910, 6
    %v1017 = vmul.f32 %v1012, %v1015
    %1019 = vrot.lane.b32.xlu0 %v1013, 64
    %v1020 = vpop.permute.xlu0 %1019
    %v1022 = vmul.f32 %v1012, %v1020
    %1024 = vrot.lane.b32.xlu0 %v1022, 32
    %v1025 = vpop.permute.xlu0 %1024
    %v1027 = vadd.f32 %v1017, %v1025
    %v1028 = vtanh.pop %v1027
    %1030 = vrot.lane.b32.xlu0 %v1028, 64
    %v1031 = vpop.permute.xlu0 %1030
    %v1033 = vmul.f32 %v1012, %v1031
    %v1034 = vsub.f32 0.0, %v1006
    %v1035 = vmul.f32 %v1034, 1.442695
    %v1036 = vpow.pop %v1035
    %v1037 = vadd.f32 %v1036, 1.0
    %v1038 = vrcp.pop %v1037
    %v1039 = vmul.f32 1.0, %v1038
    %v1040 = vtanh.pop %v1006
    %v1042 = vrot.slane %v937, 2
    %v1044 = vmul.f32 %v1039, %v1042
    %1046 = vrot.lane.b32.xlu0 %v1040, 64
    %v1047 = vpop.permute.xlu0 %1046
    %v1049 = vmul.f32 %v1039, %v1047
    %1051 = vrot.lane.b32.xlu0 %v1049, 32
    %v1052 = vpop.permute.xlu0 %1051
    %v1054 = vadd.f32 %v1044, %v1052
    %v1055 = vtanh.pop %v1054
    %1057 = vrot.lane.b32.xlu0 %v1055, 64
    %v1058 = vpop.permute.xlu0 %1057
    %v1060 = vmul.f32 %v1039, %v1058
    %1062 = vrot.lane.b32.xlu0 %v1033, 32
    %v1063 = vpop.permute.xlu0 %1062
    %v1066 = vrot.slane %v1060, 2
    %1067 = vrot.lane.b32.xlu0 %v1066, 64
    %v1068 = vpop.permute.xlu0 %1067
    %v1070 = vsel %vm291, %v1063, %v1068
    %v1071 = vpack.c.bf16 %v1070, %v1070
    %v1073 = vrot.slane %v1071, 1
    %v1075 = vsel %vm378, %v1073, 0
    %1077 = vmatprep.subr.bf16.mxu0 %v363
    %1078 = vmatpush1.bf16.msra.mxu0 %v362
    %1079 = vmatprep.subr.bf16.mxu0 %v365
    %1080 = vmatpush1.bf16.msra.mxu0 %v364
    %1081 = vmatprep.subr.bf16.mxu0 %v367
    %1082 = vmatpush1.bf16.msra.mxu0 %v366
    %1083 = vmatprep.subr.bf16.mxu0 %v369
    %1084 = vmatpush1.bf16.msra.mxu0 %v368
    %1085 = vmatprep.subr.bf16.mxu0 0
    %1086 = vmatpush1.bf16.msra.mxu0 0
    %1087 = vmatprep.subr.bf16.mxu0 0
    %1088 = vmatpush1.bf16.msra.mxu0 0
    %1089 = vmatprep.subr.bf16.mxu0 0
    %1090 = vmatpush1.bf16.msra.mxu0 0
    %1091 = vmatprep.subr.bf16.mxu0 0
    %1092 = vmatpush1.bf16.msra.mxu0 0
    %1093 = vmatprep.subr.bf16.mxu0 0
    %1094 = vmatpush1.bf16.msra.mxu0 0
    %1095 = vmatprep.subr.bf16.mxu0 0
    %1096 = vmatpush1.bf16.msra.mxu0 0
    %1097 = vmatprep.subr.bf16.mxu0 0
    %1098 = vmatpush1.bf16.msra.mxu0 0
    %1099 = vmatprep.subr.bf16.mxu0 0
    %1100 = vmatpush1.bf16.msra.mxu0 0
    %1101 = vmatprep.subr.bf16.mxu0 0
    %1102 = vmatpush1.bf16.msra.mxu0 0
    %1103 = vmatprep.subr.bf16.mxu0 0
    %1104 = vmatpush1.bf16.msra.mxu0 0
    %1105 = vmatprep.subr.bf16.mxu0 0
    %1106 = vmatpush1.bf16.msra.mxu0 0
    %1107 = vmatprep.subr.bf16.mxu0 0
    %1108 = vmatpush1.bf16.msra.mxu0 0
    %1109 = vmatprep.mubr.bf16.mxu0 0
    %1110 = vmatmul.mubr.bf16.gmra.mrb[0].mxu0 %v1075
    %v1111 = vpop.f32.mrb[0].mxu0
    %v1112 = vadd.f32 0.0, %v1111
    %v1113 = vpop.f32.mrb[0].mxu0
    %v1114 = vadd.f32 0.0, %v1113
    %v1115 = vpop.f32.mrb[0].mxu0
    %v1116 = vpop.f32.mrb[0].mxu0
    %1117 = vdwg.mxu0
    %v1119 = vrot.slane %v1112, 4
    %v1121 = vadd.f32 %v334, %v1119
    %v1123 = vrot.slane %v1114, 6
    %v1125 = vadd.f32 %v332, %v1123
    %v1126 = vsub.f32 0.0, %v1121
    %v1127 = vmul.f32 %v1126, 1.442695
    %v1128 = vpow.pop %v1127
    %v1129 = vadd.f32 %v1128, 1.0
    %v1130 = vrcp.pop %v1129
    %v1131 = vmul.f32 1.0, %v1130
    %v1132 = vtanh.pop %v1121
    %v1134 = vrot.slane %v1027, 6
    %v1136 = vmul.f32 %v1131, %v1134
    %1138 = vrot.lane.b32.xlu0 %v1132, 64
    %v1139 = vpop.permute.xlu0 %1138
    %v1141 = vmul.f32 %v1131, %v1139
    %1143 = vrot.lane.b32.xlu0 %v1141, 32
    %v1144 = vpop.permute.xlu0 %1143
    %v1146 = vadd.f32 %v1136, %v1144
    %v1147 = vtanh.pop %v1146
    %1149 = vrot.lane.b32.xlu0 %v1147, 64
    %v1150 = vpop.permute.xlu0 %1149
    %v1152 = vmul.f32 %v1131, %v1150
    %v1153 = vsub.f32 0.0, %v1125
    %v1154 = vmul.f32 %v1153, 1.442695
    %v1155 = vpow.pop %v1154
    %v1156 = vadd.f32 %v1155, 1.0
    %v1157 = vrcp.pop %v1156
    %v1158 = vmul.f32 1.0, %v1157
    %v1159 = vtanh.pop %v1125
    %v1161 = vrot.slane %v1054, 2
    %v1163 = vmul.f32 %v1158, %v1161
    %1165 = vrot.lane.b32.xlu0 %v1159, 64
    %v1166 = vpop.permute.xlu0 %1165
    %v1168 = vmul.f32 %v1158, %v1166
    %1170 = vrot.lane.b32.xlu0 %v1168, 32
    %v1171 = vpop.permute.xlu0 %1170
    %v1173 = vadd.f32 %v1163, %v1171
    %v1174 = vtanh.pop %v1173
    %1176 = vrot.lane.b32.xlu0 %v1174, 64
    %v1177 = vpop.permute.xlu0 %1176
    %v1179 = vmul.f32 %v1158, %v1177
    %1181 = vrot.lane.b32.xlu0 %v1152, 32
    %v1182 = vpop.permute.xlu0 %1181
    %v1185 = vrot.slane %v1179, 6
    %1186 = vrot.lane.b32.xlu0 %v1185, 64
    %v1187 = vpop.permute.xlu0 %1186
    %v1189 = vsel %vm291, %v1182, %v1187
    %v1190 = vpack.c.bf16 %v1189, %v1189
    %v1192 = vrot.slane %v1190, 2
    %v1194 = vsel %vm378, %v1192, 0
    %1196 = vmatprep.subr.bf16.mxu0 %v363
    %1197 = vmatpush1.bf16.msra.mxu0 %v362
    %1198 = vmatprep.subr.bf16.mxu0 %v365
    %1199 = vmatpush1.bf16.msra.mxu0 %v364
    %1200 = vmatprep.subr.bf16.mxu0 %v367
    %1201 = vmatpush1.bf16.msra.mxu0 %v366
    %1202 = vmatprep.subr.bf16.mxu0 %v369
    %1203 = vmatpush1.bf16.msra.mxu0 %v368
    %1204 = vmatprep.subr.bf16.mxu0 0
    %1205 = vmatpush1.bf16.msra.mxu0 0
    %1206 = vmatprep.subr.bf16.mxu0 0
    %1207 = vmatpush1.bf16.msra.mxu0 0
    %1208 = vmatprep.subr.bf16.mxu0 0
    %1209 = vmatpush1.bf16.msra.mxu0 0
    %1210 = vmatprep.subr.bf16.mxu0 0
    %1211 = vmatpush1.bf16.msra.mxu0 0
    %1212 = vmatprep.subr.bf16.mxu0 0
    %1213 = vmatpush1.bf16.msra.mxu0 0
    %1214 = vmatprep.subr.bf16.mxu0 0
    %1215 = vmatpush1.bf16.msra.mxu0 0
    %1216 = vmatprep.subr.bf16.mxu0 0
    %1217 = vmatpush1.bf16.msra.mxu0 0
    %1218 = vmatprep.subr.bf16.mxu0 0
    %1219 = vmatpush1.bf16.msra.mxu0 0
    %1220 = vmatprep.subr.bf16.mxu0 0
    %1221 = vmatpush1.bf16.msra.mxu0 0
    %1222 = vmatprep.subr.bf16.mxu0 0
    %1223 = vmatpush1.bf16.msra.mxu0 0
    %1224 = vmatprep.subr.bf16.mxu0 0
    %1225 = vmatpush1.bf16.msra.mxu0 0
    %1226 = vmatprep.subr.bf16.mxu0 0
    %1227 = vmatpush1.bf16.msra.mxu0 0
    %1228 = vmatprep.mubr.bf16.mxu0 0
    %1229 = vmatmul.mubr.bf16.gmra.mrb[0].mxu0 %v1194
    %v1230 = vpop.f32.mrb[0].mxu0
    %v1231 = vadd.f32 0.0, %v1230
    %v1232 = vpop.f32.mrb[0].mxu0
    %v1233 = vadd.f32 0.0, %v1232
    %v1234 = vpop.f32.mrb[0].mxu0
    %v1235 = vpop.f32.mrb[0].mxu0
    %1236 = vdwg.mxu0
    %v1238 = vrot.slane %v1231, 2
    %v1240 = vadd.f32 %v334, %v1238
    %v1241 = vadd.f32 %v332, %v1233
    %v1242 = vsub.f32 0.0, %v1240
    %v1243 = vmul.f32 %v1242, 1.442695
    %v1244 = vpow.pop %v1243
    %v1245 = vadd.f32 %v1244, 1.0
    %v1246 = vrcp.pop %v1245
    %v1247 = vmul.f32 1.0, %v1246
    %v1248 = vtanh.pop %v1240
    %v1250 = vrot.slane %v1146, 6
    %v1252 = vmul.f32 %v1247, %v1250
    %1254 = vrot.lane.b32.xlu0 %v1248, 64
    %v1255 = vpop.permute.xlu0 %1254
    %v1257 = vmul.f32 %v1247, %v1255
    %1259 = vrot.lane.b32.xlu0 %v1257, 32
    %v1260 = vpop.permute.xlu0 %1259
    %v1262 = vadd.f32 %v1252, %v1260
    %v1263 = vtanh.pop %v1262
    %1265 = vrot.lane.b32.xlu0 %v1263, 64
    %v1266 = vpop.permute.xlu0 %1265
    %v1268 = vmul.f32 %v1247, %v1266
    %v1269 = vsub.f32 0.0, %v1241
    %v1270 = vmul.f32 %v1269, 1.442695
    %v1271 = vpow.pop %v1270
    %v1272 = vadd.f32 %v1271, 1.0
    %v1273 = vrcp.pop %v1272
    %v1274 = vmul.f32 1.0, %v1273
    %v1275 = vtanh.pop %v1241
    %v1277 = vrot.slane %v1173, 2
    %v1279 = vmul.f32 %v1274, %v1277
    %1281 = vrot.lane.b32.xlu0 %v1275, 64
    %v1282 = vpop.permute.xlu0 %1281
    %v1284 = vmul.f32 %v1274, %v1282
    %1286 = vrot.lane.b32.xlu0 %v1284, 32
    %v1287 = vpop.permute.xlu0 %1286
    %v1289 = vadd.f32 %v1279, %v1287
    %v1290 = vtanh.pop %v1289
    %1292 = vrot.lane.b32.xlu0 %v1290, 64
    %v1293 = vpop.permute.xlu0 %1292
    %v1295 = vmul.f32 %v1274, %v1293
    %1297 = vrot.lane.b32.xlu0 %v1268, 32
    %v1298 = vpop.permute.xlu0 %1297
    %v1301 = vrot.slane %v1295, 2
    %1302 = vrot.lane.b32.xlu0 %v1301, 64
    %v1303 = vpop.permute.xlu0 %1302
    %v1305 = vsel %vm291, %v1298, %v1303
    %1306 = vrot.lane.b32.xlu0 %v1295, 64
    %v1307 = vpop.permute.xlu0 %1306
    %v1309 = vsel %vm291, %v478, %v1307
    %1310 = vrot.lane.b32.xlu0 %v1179, 64
    %v1311 = vpop.permute.xlu0 %1310
    %v1313 = vsel %vm291, %v595, %v1311
    %1314 = vrot.lane.b32.xlu0 %v1060, 64
    %v1315 = vpop.permute.xlu0 %1314
    %v1317 = vsel %vm291, %v714, %v1315
    %1318 = vrot.lane.b32.xlu0 %v943, 64
    %v1319 = vpop.permute.xlu0 %1318
    %v1321 = vsel %vm291, %v830, %v1319
    %1322 = vrot.lane.b32.xlu0 %v827, 64
    %v1323 = vpop.permute.xlu0 %1322
    %v1325 = vsel %vm291, %v946, %v1323
    %1326 = vrot.lane.b32.xlu0 %v711, 64
    %v1327 = vpop.permute.xlu0 %1326
    %v1329 = vsel %vm291, %v1063, %v1327
    %1330 = vrot.lane.b32.xlu0 %v592, 64
    %v1331 = vpop.permute.xlu0 %1330
    %v1333 = vsel %vm291, %v1182, %v1331
    %1334 = vrot.lane.b32.xlu0 %v475, 64
    %v1335 = vpop.permute.xlu0 %1334
    %v1337 = vsel %vm291, %v1298, %v1335
    %vm1338 = vcmask 1041408
    %v1339 = vsel %vm1338, %v1309, %v1313
    %vm1340 = vcmask 1043456
    %v1341 = vsel %vm1340, %v1339, %v1317
    %vm1342 = vcmask 1045504
    %v1343 = vsel %vm1342, %v1341, %v1321
    %v1344 = vsel %vm1338, %v1325, %v1329
    %v1345 = vsel %vm1340, %v1344, %v1333
    %v1346 = vsel %vm1342, %v1345, %v1337
    %v1347 = vpack.c.bf16 %v1346, %v1343
    %v1348 = vld [vmem:[#allocation11] sm:$0xff]
    %v1349 = vld [vmem:[#allocation11 + $0x8] sm:$0xff]
    %v1350 = vld [vmem:[#allocation11 + $0x10] sm:$0xff]
    %v1351 = vld [vmem:[#allocation11 + $0x18] sm:$0xff]
    %v1352 = vld [vmem:[#allocation11 + $0x20] sm:$0xff]
    %v1353 = vld [vmem:[#allocation11 + $0x28] sm:$0xff]
    %v1354 = vld [vmem:[#allocation11 + $0x30] sm:$0xff]
    %v1355 = vld [vmem:[#allocation11 + $0x38] sm:$0xff]
    %v1356 = vld [vmem:[#allocation13] sm:$0xff]
    %v1357 = vld [vmem:[#allocation13 + $0x8] sm:$0xff]
    %v1358 = vld [vmem:[#allocation13 + $0x10] sm:$0xff]
    %v1359 = vld [vmem:[#allocation13 + $0x18] sm:$0xff]
    %v1360 = vld [vmem:[#allocation13 + $0x20] sm:$0xff]
    %v1361 = vld [vmem:[#allocation13 + $0x28] sm:$0xff]
    %v1362 = vld [vmem:[#allocation13 + $0x30] sm:$0xff]
    %v1363 = vld [vmem:[#allocation13 + $0x38] sm:$0xff]
    %v1364 = vld [vmem:[#allocation14] sm:$0x3]
    %v1366 = vlaneseq
    %v1367 = vshrl.u32 %v1366, 7
    %v1368 = vsub.s32 0, %v1367
    %v1369 = vrot.slane %v1364, %v1368
    %v1370 = vlaneseq
    %v1371 = vshrl.u32 %v1370, 7
    %v1372 = vsub.s32 1, %v1371
    %v1373 = vrot.slane %v1364, %v1372
    %v1384 = vunpack.c.l.b16 %v1348
    %v1385 = vunpack.c.h.b16 %v1348
    %v1386 = vunpack.c.l.b16 %v1349
    %v1387 = vunpack.c.h.b16 %v1349
    %v1388 = vunpack.c.l.b16 %v1350
    %v1389 = vunpack.c.h.b16 %v1350
    %v1390 = vunpack.c.l.b16 %v1351
    %v1391 = vunpack.c.h.b16 %v1351
    %v1392 = vunpack.c.l.b16 %v1352
    %v1393 = vunpack.c.h.b16 %v1352
    %v1394 = vunpack.c.l.b16 %v1353
    %v1395 = vunpack.c.h.b16 %v1353
    %v1396 = vunpack.c.l.b16 %v1354
    %v1397 = vunpack.c.h.b16 %v1354
    %v1398 = vunpack.c.l.b16 %v1355
    %v1399 = vunpack.c.h.b16 %v1355
    %v1400 = vpack.c.b16 %v1386, %v1384
    %v1401 = vpack.c.b16 %v1387, %v1385
    %v1402 = vpack.c.b16 %v1390, %v1388
    %v1403 = vpack.c.b16 %v1391, %v1389
    %v1404 = vpack.c.b16 %v1394, %v1392
    %v1405 = vpack.c.b16 %v1395, %v1393
    %v1406 = vpack.c.b16 %v1398, %v1396
    %v1407 = vpack.c.b16 %v1399, %v1397
    %v1417 = vsel %vm378, %v1347, 0
    %1419 = vmatprep.subr.bf16.mxu0 %v1401
    %1420 = vmatpush1.bf16.msra.mxu0 %v1400
    %1421 = vmatprep.subr.bf16.mxu0 %v1403
    %1422 = vmatpush1.bf16.msra.mxu0 %v1402
    %1423 = vmatprep.subr.bf16.mxu0 %v1405
    %1424 = vmatpush1.bf16.msra.mxu0 %v1404
    %1425 = vmatprep.subr.bf16.mxu0 %v1407
    %1426 = vmatpush1.bf16.msra.mxu0 %v1406
    %1427 = vmatprep.subr.bf16.mxu0 0
    %1428 = vmatpush1.bf16.msra.mxu0 0
    %1429 = vmatprep.subr.bf16.mxu0 0
    %1430 = vmatpush1.bf16.msra.mxu0 0
    %1431 = vmatprep.subr.bf16.mxu0 0
    %1432 = vmatpush1.bf16.msra.mxu0 0
    %1433 = vmatprep.subr.bf16.mxu0 0
    %1434 = vmatpush1.bf16.msra.mxu0 0
    %1435 = vmatprep.subr.bf16.mxu0 0
    %1436 = vmatpush1.bf16.msra.mxu0 0
    %1437 = vmatprep.subr.bf16.mxu0 0
    %1438 = vmatpush1.bf16.msra.mxu0 0
    %1439 = vmatprep.subr.bf16.mxu0 0
    %1440 = vmatpush1.bf16.msra.mxu0 0
    %1441 = vmatprep.subr.bf16.mxu0 0
    %1442 = vmatpush1.bf16.msra.mxu0 0
    %1443 = vmatprep.subr.bf16.mxu0 0
    %1444 = vmatpush1.bf16.msra.mxu0 0
    %1445 = vmatprep.subr.bf16.mxu0 0
    %1446 = vmatpush1.bf16.msra.mxu0 0
    %1447 = vmatprep.subr.bf16.mxu0 0
    %1448 = vmatpush1.bf16.msra.mxu0 0
    %1449 = vmatprep.subr.bf16.mxu0 0
    %1450 = vmatpush1.bf16.msra.mxu0 0
    %1451 = vmatprep.mubr.bf16.mxu0 0
    %1452 = vmatmul.mubr.bf16.gmra.mrb[0].mxu0 %v1417
    %v1453 = vpop.f32.mrb[0].mxu0
    %v1454 = vadd.f32 %v1369, %v1453
    %v1455 = vpop.f32.mrb[0].mxu0
    %v1456 = vadd.f32 %v1373, %v1455
    %v1457 = vpop.f32.mrb[0].mxu0
    %v1458 = vadd.f32 %v1369, %v1457
    %v1459 = vpop.f32.mrb[0].mxu0
    %v1460 = vadd.f32 %v1373, %v1459
    %1461 = vdwg.mxu0
    %v1470 = vunpack.c.l.b16 %v1356
    %v1471 = vunpack.c.h.b16 %v1356
    %v1472 = vunpack.c.l.b16 %v1357
    %v1473 = vunpack.c.h.b16 %v1357
    %v1474 = vunpack.c.l.b16 %v1358
    %v1475 = vunpack.c.h.b16 %v1358
    %v1476 = vunpack.c.l.b16 %v1359
    %v1477 = vunpack.c.h.b16 %v1359
    %v1478 = vunpack.c.l.b16 %v1360
    %v1479 = vunpack.c.h.b16 %v1360
    %v1480 = vunpack.c.l.b16 %v1361
    %v1481 = vunpack.c.h.b16 %v1361
    %v1482 = vunpack.c.l.b16 %v1362
    %v1483 = vunpack.c.h.b16 %v1362
    %v1484 = vunpack.c.l.b16 %v1363
    %v1485 = vunpack.c.h.b16 %v1363
    %v1486 = vpack.c.b16 %v1472, %v1470
    %v1487 = vpack.c.b16 %v1473, %v1471
    %v1488 = vpack.c.b16 %v1476, %v1474
    %v1489 = vpack.c.b16 %v1477, %v1475
    %v1490 = vpack.c.b16 %v1480, %v1478
    %v1491 = vpack.c.b16 %v1481, %v1479
    %v1492 = vpack.c.b16 %v1484, %v1482
    %v1493 = vpack.c.b16 %v1485, %v1483
    %1502 = vmatprep.subr.bf16.mxu0 %v1487
    %1503 = vmatpush1.bf16.msra.mxu0 %v1486
    %1504 = vmatprep.subr.bf16.mxu0 %v1489
    %1505 = vmatpush1.bf16.msra.mxu0 %v1488
    %1506 = vmatprep.subr.bf16.mxu0 %v1491
    %1507 = vmatpush1.bf16.msra.mxu0 %v1490
    %1508 = vmatprep.subr.bf16.mxu0 %v1493
    %1509 = vmatpush1.bf16.msra.mxu0 %v1492
    %1510 = vmatprep.subr.bf16.mxu0 0
    %1511 = vmatpush1.bf16.msra.mxu0 0
    %1512 = vmatprep.subr.bf16.mxu0 0
    %1513 = vmatpush1.bf16.msra.mxu0 0
    %1514 = vmatprep.subr.bf16.mxu0 0
    %1515 = vmatpush1.bf16.msra.mxu0 0
    %1516 = vmatprep.subr.bf16.mxu0 0
    %1517 = vmatpush1.bf16.msra.mxu0 0
    %1518 = vmatprep.subr.bf16.mxu0 0
    %1519 = vmatpush1.bf16.msra.mxu0 0
    %1520 = vmatprep.subr.bf16.mxu0 0
    %1521 = vmatpush1.bf16.msra.mxu0 0
    %1522 = vmatprep.subr.bf16.mxu0 0
    %1523 = vmatpush1.bf16.msra.mxu0 0
    %1524 = vmatprep.subr.bf16.mxu0 0
    %1525 = vmatpush1.bf16.msra.mxu0 0
    %1526 = vmatprep.subr.bf16.mxu0 0
    %1527 = vmatpush1.bf16.msra.mxu0 0
    %1528 = vmatprep.subr.bf16.mxu0 0
    %1529 = vmatpush1.bf16.msra.mxu0 0
    %1530 = vmatprep.subr.bf16.mxu0 0
    %1531 = vmatpush1.bf16.msra.mxu0 0
    %1532 = vmatprep.subr.bf16.mxu0 0
    %1533 = vmatpush1.bf16.msra.mxu0 0
    %1534 = vmatprep.mubr.bf16.mxu0 0
    %1535 = vmatmul.mubr.bf16.gmra.mrb[0].mxu0 %v380
    %v1536 = vpop.f32.mrb[0].mxu0
    %v1537 = vadd.f32 0.0, %v1536
    %v1538 = vpop.f32.mrb[0].mxu0
    %v1539 = vadd.f32 0.0, %v1538
    %v1540 = vpop.f32.mrb[0].mxu0
    %v1541 = vpop.f32.mrb[0].mxu0
    %1542 = vdwg.mxu0
    %v1543 = vadd.f32 %v1454, %v1537
    %v1545 = vrot.slane %v1539, 2
    %v1547 = vadd.f32 %v1460, %v1545
    %v1548 = vsub.f32 0.0, %v1543
    %v1549 = vmul.f32 %v1548, 1.442695
    %v1550 = vpow.pop %v1549
    %v1551 = vadd.f32 %v1550, 1.0
    %v1552 = vrcp.pop %v1551
    %v1553 = vmul.f32 1.0, %v1552
    %v1554 = vtanh.pop %v1543
    %v1555 = vmul.f32 %v1553, 0.0
    %1557 = vrot.lane.b32.xlu0 %v1554, 64
    %v1558 = vpop.permute.xlu0 %1557
    %v1560 = vmul.f32 %v1553, %v1558
    %1562 = vrot.lane.b32.xlu0 %v1560, 32
    %v1563 = vpop.permute.xlu0 %1562
    %v1565 = vadd.f32 %v1555, %v1563
    %v1566 = vtanh.pop %v1565
    %1568 = vrot.lane.b32.xlu0 %v1566, 64
    %v1569 = vpop.permute.xlu0 %1568
    %v1571 = vmul.f32 %v1553, %v1569
    %v1572 = vsub.f32 0.0, %v1547
    %v1573 = vmul.f32 %v1572, 1.442695
    %v1574 = vpow.pop %v1573
    %v1575 = vadd.f32 %v1574, 1.0
    %v1576 = vrcp.pop %v1575
    %v1577 = vmul.f32 1.0, %v1576
    %v1578 = vtanh.pop %v1547
    %v1579 = vmul.f32 %v1577, 0.0
    %1581 = vrot.lane.b32.xlu0 %v1578, 64
    %v1582 = vpop.permute.xlu0 %1581
    %v1584 = vmul.f32 %v1577, %v1582
    %1586 = vrot.lane.b32.xlu0 %v1584, 32
    %v1587 = vpop.permute.xlu0 %1586
    %v1589 = vadd.f32 %v1579, %v1587
    %v1590 = vtanh.pop %v1589
    %1592 = vrot.lane.b32.xlu0 %v1590, 64
    %v1593 = vpop.permute.xlu0 %1592
    %v1595 = vmul.f32 %v1577, %v1593
    %1597 = vrot.lane.b32.xlu0 %v1571, 32
    %v1598 = vpop.permute.xlu0 %1597
    %v1601 = vrot.slane %v1595, 6
    %1602 = vrot.lane.b32.xlu0 %v1601, 64
    %v1603 = vpop.permute.xlu0 %1602
    %v1605 = vsel %vm291, %v1598, %v1603
    %v1606 = vpack.c.bf16 %v1605, %v1605
    %v1608 = vsel %vm378, %v1606, 0
    %1610 = vmatprep.subr.bf16.mxu0 %v1487
    %1611 = vmatpush1.bf16.msra.mxu0 %v1486
    %1612 = vmatprep.subr.bf16.mxu0 %v1489
    %1613 = vmatpush1.bf16.msra.mxu0 %v1488
    %1614 = vmatprep.subr.bf16.mxu0 %v1491
    %1615 = vmatpush1.bf16.msra.mxu0 %v1490
    %1616 = vmatprep.subr.bf16.mxu0 %v1493
    %1617 = vmatpush1.bf16.msra.mxu0 %v1492
    %1618 = vmatprep.subr.bf16.mxu0 0
    %1619 = vmatpush1.bf16.msra.mxu0 0
    %1620 = vmatprep.subr.bf16.mxu0 0
    %1621 = vmatpush1.bf16.msra.mxu0 0
    %1622 = vmatprep.subr.bf16.mxu0 0
    %1623 = vmatpush1.bf16.msra.mxu0 0
    %1624 = vmatprep.subr.bf16.mxu0 0
    %1625 = vmatpush1.bf16.msra.mxu0 0
    %1626 = vmatprep.subr.bf16.mxu0 0
    %1627 = vmatpush1.bf16.msra.mxu0 0
    %1628 = vmatprep.subr.bf16.mxu0 0
    %1629 = vmatpush1.bf16.msra.mxu0 0
    %1630 = vmatprep.subr.bf16.mxu0 0
    %1631 = vmatpush1.bf16.msra.mxu0 0
    %1632 = vmatprep.subr.bf16.mxu0 0
    %1633 = vmatpush1.bf16.msra.mxu0 0
    %1634 = vmatprep.subr.bf16.mxu0 0
    %1635 = vmatpush1.bf16.msra.mxu0 0
    %1636 = vmatprep.subr.bf16.mxu0 0
    %1637 = vmatpush1.bf16.msra.mxu0 0
    %1638 = vmatprep.subr.bf16.mxu0 0
    %1639 = vmatpush1.bf16.msra.mxu0 0
    %1640 = vmatprep.subr.bf16.mxu0 0
    %1641 = vmatpush1.bf16.msra.mxu0 0
    %1642 = vmatprep.mubr.bf16.mxu0 0
    %1643 = vmatmul.mubr.bf16.gmra.mrb[0].mxu0 %v1608
    %v1644 = vpop.f32.mrb[0].mxu0
    %v1645 = vadd.f32 0.0, %v1644
    %v1646 = vpop.f32.mrb[0].mxu0
    %v1647 = vadd.f32 0.0, %v1646
    %v1648 = vpop.f32.mrb[0].mxu0
    %v1649 = vpop.f32.mrb[0].mxu0
    %1650 = vdwg.mxu0
    %v1652 = vrot.slane %v1645, 6
    %v1654 = vadd.f32 %v1454, %v1652
    %v1656 = vrot.slane %v1647, 4
    %v1658 = vadd.f32 %v1460, %v1656
    %v1659 = vsub.f32 0.0, %v1654
    %v1660 = vmul.f32 %v1659, 1.442695
    %v1661 = vpow.pop %v1660
    %v1662 = vadd.f32 %v1661, 1.0
    %v1663 = vrcp.pop %v1662
    %v1664 = vmul.f32 1.0, %v1663
    %v1665 = vtanh.pop %v1654
    %v1667 = vrot.slane %v1565, 6
    %v1669 = vmul.f32 %v1664, %v1667
    %1671 = vrot.lane.b32.xlu0 %v1665, 64
    %v1672 = vpop.permute.xlu0 %1671
    %v1674 = vmul.f32 %v1664, %v1672
    %1676 = vrot.lane.b32.xlu0 %v1674, 32
    %v1677 = vpop.permute.xlu0 %1676
    %v1679 = vadd.f32 %v1669, %v1677
    %v1680 = vtanh.pop %v1679
    %1682 = vrot.lane.b32.xlu0 %v1680, 64
    %v1683 = vpop.permute.xlu0 %1682
    %v1685 = vmul.f32 %v1664, %v1683
    %v1686 = vsub.f32 0.0, %v1658
    %v1687 = vmul.f32 %v1686, 1.442695
    %v1688 = vpow.pop %v1687
    %v1689 = vadd.f32 %v1688, 1.0
    %v1690 = vrcp.pop %v1689
    %v1691 = vmul.f32 1.0, %v1690
    %v1692 = vtanh.pop %v1658
    %v1694 = vrot.slane %v1589, 2
    %v1696 = vmul.f32 %v1691, %v1694
    %1698 = vrot.lane.b32.xlu0 %v1692, 64
    %v1699 = vpop.permute.xlu0 %1698
    %v1701 = vmul.f32 %v1691, %v1699
    %1703 = vrot.lane.b32.xlu0 %v1701, 32
    %v1704 = vpop.permute.xlu0 %1703
    %v1706 = vadd.f32 %v1696, %v1704
    %v1707 = vtanh.pop %v1706
    %1709 = vrot.lane.b32.xlu0 %v1707, 64
    %v1710 = vpop.permute.xlu0 %1709
    %v1712 = vmul.f32 %v1691, %v1710
    %1714 = vrot.lane.b32.xlu0 %v1685, 32
    %v1715 = vpop.permute.xlu0 %1714
    %v1718 = vrot.slane %v1712, 2
    %1719 = vrot.lane.b32.xlu0 %v1718, 64
    %v1720 = vpop.permute.xlu0 %1719
    %v1722 = vsel %vm291, %v1715, %v1720
    %v1723 = vpack.c.bf16 %v1722, %v1722
    %v1725 = vrot.slane %v1723, 1
    %v1727 = vsel %vm378, %v1725, 0
    %1729 = vmatprep.subr.bf16.mxu0 %v1487
    %1730 = vmatpush1.bf16.msra.mxu0 %v1486
    %1731 = vmatprep.subr.bf16.mxu0 %v1489
    %1732 = vmatpush1.bf16.msra.mxu0 %v1488
    %1733 = vmatprep.subr.bf16.mxu0 %v1491
    %1734 = vmatpush1.bf16.msra.mxu0 %v1490
    %1735 = vmatprep.subr.bf16.mxu0 %v1493
    %1736 = vmatpush1.bf16.msra.mxu0 %v1492
    %1737 = vmatprep.subr.bf16.mxu0 0
    %1738 = vmatpush1.bf16.msra.mxu0 0
    %1739 = vmatprep.subr.bf16.mxu0 0
    %1740 = vmatpush1.bf16.msra.mxu0 0
    %1741 = vmatprep.subr.bf16.mxu0 0
    %1742 = vmatpush1.bf16.msra.mxu0 0
    %1743 = vmatprep.subr.bf16.mxu0 0
    %1744 = vmatpush1.bf16.msra.mxu0 0
    %1745 = vmatprep.subr.bf16.mxu0 0
    %1746 = vmatpush1.bf16.msra.mxu0 0
    %1747 = vmatprep.subr.bf16.mxu0 0
    %1748 = vmatpush1.bf16.msra.mxu0 0
    %1749 = vmatprep.subr.bf16.mxu0 0
    %1750 = vmatpush1.bf16.msra.mxu0 0
    %1751 = vmatprep.subr.bf16.mxu0 0
    %1752 = vmatpush1.bf16.msra.mxu0 0
    %1753 = vmatprep.subr.bf16.mxu0 0
    %1754 = vmatpush1.bf16.msra.mxu0 0
    %1755 = vmatprep.subr.bf16.mxu0 0
    %1756 = vmatpush1.bf16.msra.mxu0 0
    %1757 = vmatprep.subr.bf16.mxu0 0
    %1758 = vmatpush1.bf16.msra.mxu0 0
    %1759 = vmatprep.subr.bf16.mxu0 0
    %1760 = vmatpush1.bf16.msra.mxu0 0
    %1761 = vmatprep.mubr.bf16.mxu0 0
    %1762 = vmatmul.mubr.bf16.gmra.mrb[0].mxu0 %v1727
    %v1763 = vpop.f32.mrb[0].mxu0
    %v1764 = vadd.f32 0.0, %v1763
    %v1765 = vpop.f32.mrb[0].mxu0
    %v1766 = vadd.f32 0.0, %v1765
    %v1767 = vpop.f32.mrb[0].mxu0
    %v1768 = vpop.f32.mrb[0].mxu0
    %1769 = vdwg.mxu0
    %v1771 = vrot.slane %v1764, 4
    %v1773 = vadd.f32 %v1454, %v1771
    %v1775 = vrot.slane %v1766, 6
    %v1777 = vadd.f32 %v1460, %v1775
    %v1778 = vsub.f32 0.0, %v1773
    %v1779 = vmul.f32 %v1778, 1.442695
    %v1780 = vpow.pop %v1779
    %v1781 = vadd.f32 %v1780, 1.0
    %v1782 = vrcp.pop %v1781
    %v1783 = vmul.f32 1.0, %v1782
    %v1784 = vtanh.pop %v1773
    %v1786 = vrot.slane %v1679, 6
    %v1788 = vmul.f32 %v1783, %v1786
    %1790 = vrot.lane.b32.xlu0 %v1784, 64
    %v1791 = vpop.permute.xlu0 %1790
    %v1793 = vmul.f32 %v1783, %v1791
    %1795 = vrot.lane.b32.xlu0 %v1793, 32
    %v1796 = vpop.permute.xlu0 %1795
    %v1798 = vadd.f32 %v1788, %v1796
    %v1799 = vtanh.pop %v1798
    %1801 = vrot.lane.b32.xlu0 %v1799, 64
    %v1802 = vpop.permute.xlu0 %1801
    %v1804 = vmul.f32 %v1783, %v1802
    %v1805 = vsub.f32 0.0, %v1777
    %v1806 = vmul.f32 %v1805, 1.442695
    %v1807 = vpow.pop %v1806
    %v1808 = vadd.f32 %v1807, 1.0
    %v1809 = vrcp.pop %v1808
    %v1810 = vmul.f32 1.0, %v1809
    %v1811 = vtanh.pop %v1777
    %v1813 = vrot.slane %v1706, 2
    %v1815 = vmul.f32 %v1810, %v1813
    %1817 = vrot.lane.b32.xlu0 %v1811, 64
    %v1818 = vpop.permute.xlu0 %1817
    %v1820 = vmul.f32 %v1810, %v1818
    %1822 = vrot.lane.b32.xlu0 %v1820, 32
    %v1823 = vpop.permute.xlu0 %1822
    %v1825 = vadd.f32 %v1815, %v1823
    %v1826 = vtanh.pop %v1825
    %1828 = vrot.lane.b32.xlu0 %v1826, 64
    %v1829 = vpop.permute.xlu0 %1828
    %v1831 = vmul.f32 %v1810, %v1829
    %1833 = vrot.lane.b32.xlu0 %v1804, 32
    %v1834 = vpop.permute.xlu0 %1833
    %v1837 = vrot.slane %v1831, 6
    %1838 = vrot.lane.b32.xlu0 %v1837, 64
    %v1839 = vpop.permute.xlu0 %1838
    %v1841 = vsel %vm291, %v1834, %v1839
    %v1842 = vpack.c.bf16 %v1841, %v1841
    %v1844 = vrot.slane %v1842, 2
    %v1846 = vsel %vm378, %v1844, 0
    %1848 = vmatprep.subr.bf16.mxu0 %v1487
    %1849 = vmatpush1.bf16.msra.mxu0 %v1486
    %1850 = vmatprep.subr.bf16.mxu0 %v1489
    %1851 = vmatpush1.bf16.msra.mxu0 %v1488
    %1852 = vmatprep.subr.bf16.mxu0 %v1491
    %1853 = vmatpush1.bf16.msra.mxu0 %v1490
    %1854 = vmatprep.subr.bf16.mxu0 %v1493
    %1855 = vmatpush1.bf16.msra.mxu0 %v1492
    %1856 = vmatprep.subr.bf16.mxu0 0
    %1857 = vmatpush1.bf16.msra.mxu0 0
    %1858 = vmatprep.subr.bf16.mxu0 0
    %1859 = vmatpush1.bf16.msra.mxu0 0
    %1860 = vmatprep.subr.bf16.mxu0 0
    %1861 = vmatpush1.bf16.msra.mxu0 0
    %1862 = vmatprep.subr.bf16.mxu0 0
    %1863 = vmatpush1.bf16.msra.mxu0 0
    %1864 = vmatprep.subr.bf16.mxu0 0
    %1865 = vmatpush1.bf16.msra.mxu0 0
    %1866 = vmatprep.subr.bf16.mxu0 0
    %1867 = vmatpush1.bf16.msra.mxu0 0
    %1868 = vmatprep.subr.bf16.mxu0 0
    %1869 = vmatpush1.bf16.msra.mxu0 0
    %1870 = vmatprep.subr.bf16.mxu0 0
    %1871 = vmatpush1.bf16.msra.mxu0 0
    %1872 = vmatprep.subr.bf16.mxu0 0
    %1873 = vmatpush1.bf16.msra.mxu0 0
    %1874 = vmatprep.subr.bf16.mxu0 0
    %1875 = vmatpush1.bf16.msra.mxu0 0
    %1876 = vmatprep.subr.bf16.mxu0 0
    %1877 = vmatpush1.bf16.msra.mxu0 0
    %1878 = vmatprep.subr.bf16.mxu0 0
    %1879 = vmatpush1.bf16.msra.mxu0 0
    %1880 = vmatprep.mubr.bf16.mxu0 0
    %1881 = vmatmul.mubr.bf16.gmra.mrb[0].mxu0 %v1846
    %v1882 = vpop.f32.mrb[0].mxu0
    %v1883 = vadd.f32 0.0, %v1882
    %v1884 = vpop.f32.mrb[0].mxu0
    %v1885 = vadd.f32 0.0, %v1884
    %v1886 = vpop.f32.mrb[0].mxu0
    %v1887 = vpop.f32.mrb[0].mxu0
    %1888 = vdwg.mxu0
    %v1890 = vrot.slane %v1883, 2
    %v1892 = vadd.f32 %v1454, %v1890
    %v1893 = vadd.f32 %v1460, %v1885
    %v1894 = vsub.f32 0.0, %v1892
    %v1895 = vmul.f32 %v1894, 1.442695
    %v1896 = vpow.pop %v1895
    %v1897 = vadd.f32 %v1896, 1.0
    %v1898 = vrcp.pop %v1897
    %v1899 = vmul.f32 1.0, %v1898
    %v1900 = vtanh.pop %v1892
    %v1902 = vrot.slane %v1798, 6
    %v1904 = vmul.f32 %v1899, %v1902
    %1906 = vrot.lane.b32.xlu0 %v1900, 64
    %v1907 = vpop.permute.xlu0 %1906
    %v1909 = vmul.f32 %v1899, %v1907
    %1911 = vrot.lane.b32.xlu0 %v1909, 32
    %v1912 = vpop.permute.xlu0 %1911
    %v1914 = vadd.f32 %v1904, %v1912
    %v1915 = vtanh.pop %v1914
    %1917 = vrot.lane.b32.xlu0 %v1915, 64
    %v1918 = vpop.permute.xlu0 %1917
    %v1920 = vmul.f32 %v1899, %v1918
    %v1921 = vsub.f32 0.0, %v1893
    %v1922 = vmul.f32 %v1921, 1.442695
    %v1923 = vpow.pop %v1922
    %v1924 = vadd.f32 %v1923, 1.0
    %v1925 = vrcp.pop %v1924
    %v1926 = vmul.f32 1.0, %v1925
    %v1927 = vtanh.pop %v1893
    %v1929 = vrot.slane %v1825, 2
    %v1931 = vmul.f32 %v1926, %v1929
    %1933 = vrot.lane.b32.xlu0 %v1927, 64
    %v1934 = vpop.permute.xlu0 %1933
    %v1936 = vmul.f32 %v1926, %v1934
    %1938 = vrot.lane.b32.xlu0 %v1936, 32
    %v1939 = vpop.permute.xlu0 %1938
    %v1941 = vadd.f32 %v1931, %v1939
    %v1942 = vtanh.pop %v1941
    %1944 = vrot.lane.b32.xlu0 %v1942, 64
    %v1945 = vpop.permute.xlu0 %1944
    %v1947 = vmul.f32 %v1926, %v1945
    %1949 = vrot.lane.b32.xlu0 %v1920, 32
    %v1950 = vpop.permute.xlu0 %1949
    %v1953 = vrot.slane %v1947, 2
    %1954 = vrot.lane.b32.xlu0 %v1953, 64
    %v1955 = vpop.permute.xlu0 %1954
    %v1957 = vsel %vm291, %v1950, %v1955
    %v1958 = vpack.c.bf16 %v1957, %v1957
    %v1960 = vrot.slane %v1958, 3
    %v1962 = vsel %vm378, %v1960, 0
    %1964 = vmatprep.subr.bf16.mxu0 %v1487
    %1965 = vmatpush1.bf16.msra.mxu0 %v1486
    %1966 = vmatprep.subr.bf16.mxu0 %v1489
    %1967 = vmatpush1.bf16.msra.mxu0 %v1488
    %1968 = vmatprep.subr.bf16.mxu0 %v1491
    %1969 = vmatpush1.bf16.msra.mxu0 %v1490
    %1970 = vmatprep.subr.bf16.mxu0 %v1493
    %1971 = vmatpush1.bf16.msra.mxu0 %v1492
    %1972 = vmatprep.subr.bf16.mxu0 0
    %1973 = vmatpush1.bf16.msra.mxu0 0
    %1974 = vmatprep.subr.bf16.mxu0 0
    %1975 = vmatpush1.bf16.msra.mxu0 0
    %1976 = vmatprep.subr.bf16.mxu0 0
    %1977 = vmatpush1.bf16.msra.mxu0 0
    %1978 = vmatprep.subr.bf16.mxu0 0
    %1979 = vmatpush1.bf16.msra.mxu0 0
    %1980 = vmatprep.subr.bf16.mxu0 0
    %1981 = vmatpush1.bf16.msra.mxu0 0
    %1982 = vmatprep.subr.bf16.mxu0 0
    %1983 = vmatpush1.bf16.msra.mxu0 0
    %1984 = vmatprep.subr.bf16.mxu0 0
    %1985 = vmatpush1.bf16.msra.mxu0 0
    %1986 = vmatprep.subr.bf16.mxu0 0
    %1987 = vmatpush1.bf16.msra.mxu0 0
    %1988 = vmatprep.subr.bf16.mxu0 0
    %1989 = vmatpush1.bf16.msra.mxu0 0
    %1990 = vmatprep.subr.bf16.mxu0 0
    %1991 = vmatpush1.bf16.msra.mxu0 0
    %1992 = vmatprep.subr.bf16.mxu0 0
    %1993 = vmatpush1.bf16.msra.mxu0 0
    %1994 = vmatprep.subr.bf16.mxu0 0
    %1995 = vmatpush1.bf16.msra.mxu0 0
    %1996 = vmatprep.mubr.bf16.mxu0 0
    %1997 = vmatmul.mubr.bf16.gmra.mrb[0].mxu0 %v1962
    %v1998 = vpop.f32.mrb[0].mxu0
    %v1999 = vadd.f32 0.0, %v1998
    %v2000 = vpop.f32.mrb[0].mxu0
    %v2001 = vadd.f32 0.0, %v2000
    %v2002 = vpop.f32.mrb[0].mxu0
    %v2003 = vpop.f32.mrb[0].mxu0
    %2004 = vdwg.mxu0
    %v2005 = vadd.f32 %v1458, %v1999
    %v2007 = vrot.slane %v2001, 2
    %v2009 = vadd.f32 %v1456, %v2007
    %v2010 = vsub.f32 0.0, %v2005
    %v2011 = vmul.f32 %v2010, 1.442695
    %v2012 = vpow.pop %v2011
    %v2013 = vadd.f32 %v2012, 1.0
    %v2014 = vrcp.pop %v2013
    %v2015 = vmul.f32 1.0, %v2014
    %v2016 = vtanh.pop %v2005
    %v2018 = vrot.slane %v1914, 6
    %v2020 = vmul.f32 %v2015, %v2018
    %2022 = vrot.lane.b32.xlu0 %v2016, 64
    %v2023 = vpop.permute.xlu0 %2022
    %v2025 = vmul.f32 %v2015, %v2023
    %2027 = vrot.lane.b32.xlu0 %v2025, 32
    %v2028 = vpop.permute.xlu0 %2027
    %v2030 = vadd.f32 %v2020, %v2028
    %v2031 = vtanh.pop %v2030
    %2033 = vrot.lane.b32.xlu0 %v2031, 64
    %v2034 = vpop.permute.xlu0 %2033
    %v2036 = vmul.f32 %v2015, %v2034
    %v2037 = vsub.f32 0.0, %v2009
    %v2038 = vmul.f32 %v2037, 1.442695
    %v2039 = vpow.pop %v2038
    %v2040 = vadd.f32 %v2039, 1.0
    %v2041 = vrcp.pop %v2040
    %v2042 = vmul.f32 1.0, %v2041
    %v2043 = vtanh.pop %v2009
    %v2045 = vrot.slane %v1941, 2
    %v2047 = vmul.f32 %v2042, %v2045
    %2049 = vrot.lane.b32.xlu0 %v2043, 64
    %v2050 = vpop.permute.xlu0 %2049
    %v2052 = vmul.f32 %v2042, %v2050
    %2054 = vrot.lane.b32.xlu0 %v2052, 32
    %v2055 = vpop.permute.xlu0 %2054
    %v2057 = vadd.f32 %v2047, %v2055
    %v2058 = vtanh.pop %v2057
    %2060 = vrot.lane.b32.xlu0 %v2058, 64
    %v2061 = vpop.permute.xlu0 %2060
    %v2063 = vmul.f32 %v2042, %v2061
    %2065 = vrot.lane.b32.xlu0 %v2036, 32
    %v2066 = vpop.permute.xlu0 %2065
    %v2069 = vrot.slane %v2063, 6
    %2070 = vrot.lane.b32.xlu0 %v2069, 64
    %v2071 = vpop.permute.xlu0 %2070
    %v2073 = vsel %vm291, %v2066, %v2071
    %v2074 = vpack.c.bf16 %v2073, %v2073
    %v2076 = vsel %vm378, %v2074, 0
    %2078 = vmatprep.subr.bf16.mxu0 %v1487
    %2079 = vmatpush1.bf16.msra.mxu0 %v1486
    %2080 = vmatprep.subr.bf16.mxu0 %v1489
    %2081 = vmatpush1.bf16.msra.mxu0 %v1488
    %2082 = vmatprep.subr.bf16.mxu0 %v1491
    %2083 = vmatpush1.bf16.msra.mxu0 %v1490
    %2084 = vmatprep.subr.bf16.mxu0 %v1493
    %2085 = vmatpush1.bf16.msra.mxu0 %v1492
    %2086 = vmatprep.subr.bf16.mxu0 0
    %2087 = vmatpush1.bf16.msra.mxu0 0
    %2088 = vmatprep.subr.bf16.mxu0 0
    %2089 = vmatpush1.bf16.msra.mxu0 0
    %2090 = vmatprep.subr.bf16.mxu0 0
    %2091 = vmatpush1.bf16.msra.mxu0 0
    %2092 = vmatprep.subr.bf16.mxu0 0
    %2093 = vmatpush1.bf16.msra.mxu0 0
    %2094 = vmatprep.subr.bf16.mxu0 0
    %2095 = vmatpush1.bf16.msra.mxu0 0
    %2096 = vmatprep.subr.bf16.mxu0 0
    %2097 = vmatpush1.bf16.msra.mxu0 0
    %2098 = vmatprep.subr.bf16.mxu0 0
    %2099 = vmatpush1.bf16.msra.mxu0 0
    %2100 = vmatprep.subr.bf16.mxu0 0
    %2101 = vmatpush1.bf16.msra.mxu0 0
    %2102 = vmatprep.subr.bf16.mxu0 0
    %2103 = vmatpush1.bf16.msra.mxu0 0
    %2104 = vmatprep.subr.bf16.mxu0 0
    %2105 = vmatpush1.bf16.msra.mxu0 0
    %2106 = vmatprep.subr.bf16.mxu0 0
    %2107 = vmatpush1.bf16.msra.mxu0 0
    %2108 = vmatprep.subr.bf16.mxu0 0
    %2109 = vmatpush1.bf16.msra.mxu0 0
    %2110 = vmatprep.mubr.bf16.mxu0 0
    %2111 = vmatmul.mubr.bf16.gmra.mrb[0].mxu0 %v2076
    %v2112 = vpop.f32.mrb[0].mxu0
    %v2113 = vadd.f32 0.0, %v2112
    %v2114 = vpop.f32.mrb[0].mxu0
    %v2115 = vadd.f32 0.0, %v2114
    %v2116 = vpop.f32.mrb[0].mxu0
    %v2117 = vpop.f32.mrb[0].mxu0
    %2118 = vdwg.mxu0
    %v2120 = vrot.slane %v2113, 6
    %v2122 = vadd.f32 %v1458, %v2120
    %v2124 = vrot.slane %v2115, 4
    %v2126 = vadd.f32 %v1456, %v2124
    %v2127 = vsub.f32 0.0, %v2122
    %v2128 = vmul.f32 %v2127, 1.442695
    %v2129 = vpow.pop %v2128
    %v2130 = vadd.f32 %v2129, 1.0
    %v2131 = vrcp.pop %v2130
    %v2132 = vmul.f32 1.0, %v2131
    %v2133 = vtanh.pop %v2122
    %v2135 = vrot.slane %v2030, 6
    %v2137 = vmul.f32 %v2132, %v2135
    %2139 = vrot.lane.b32.xlu0 %v2133, 64
    %v2140 = vpop.permute.xlu0 %2139
    %v2142 = vmul.f32 %v2132, %v2140
    %2144 = vrot.lane.b32.xlu0 %v2142, 32
    %v2145 = vpop.permute.xlu0 %2144
    %v2147 = vadd.f32 %v2137, %v2145
    %v2148 = vtanh.pop %v2147
    %2150 = vrot.lane.b32.xlu0 %v2148, 64
    %v2151 = vpop.permute.xlu0 %2150
    %v2153 = vmul.f32 %v2132, %v2151
    %v2154 = vsub.f32 0.0, %v2126
    %v2155 = vmul.f32 %v2154, 1.442695
    %v2156 = vpow.pop %v2155
    %v2157 = vadd.f32 %v2156, 1.0
    %v2158 = vrcp.pop %v2157
    %v2159 = vmul.f32 1.0, %v2158
    %v2160 = vtanh.pop %v2126
    %v2162 = vrot.slane %v2057, 2
    %v2164 = vmul.f32 %v2159, %v2162
    %2166 = vrot.lane.b32.xlu0 %v2160, 64
    %v2167 = vpop.permute.xlu0 %2166
    %v2169 = vmul.f32 %v2159, %v2167
    %2171 = vrot.lane.b32.xlu0 %v2169, 32
    %v2172 = vpop.permute.xlu0 %2171
    %v2174 = vadd.f32 %v2164, %v2172
    %v2175 = vtanh.pop %v2174
    %2177 = vrot.lane.b32.xlu0 %v2175, 64
    %v2178 = vpop.permute.xlu0 %2177
    %v2180 = vmul.f32 %v2159, %v2178
    %2182 = vrot.lane.b32.xlu0 %v2153, 32
    %v2183 = vpop.permute.xlu0 %2182
    %v2186 = vrot.slane %v2180, 2
    %2187 = vrot.lane.b32.xlu0 %v2186, 64
    %v2188 = vpop.permute.xlu0 %2187
    %v2190 = vsel %vm291, %v2183, %v2188
    %v2191 = vpack.c.bf16 %v2190, %v2190
    %v2193 = vrot.slane %v2191, 1
    %v2195 = vsel %vm378, %v2193, 0
    %2197 = vmatprep.subr.bf16.mxu0 %v1487
    %2198 = vmatpush1.bf16.msra.mxu0 %v1486
    %2199 = vmatprep.subr.bf16.mxu0 %v1489
    %2200 = vmatpush1.bf16.msra.mxu0 %v1488
    %2201 = vmatprep.subr.bf16.mxu0 %v1491
    %2202 = vmatpush1.bf16.msra.mxu0 %v1490
    %2203 = vmatprep.subr.bf16.mxu0 %v1493
    %2204 = vmatpush1.bf16.msra.mxu0 %v1492
    %2205 = vmatprep.subr.bf16.mxu0 0
    %2206 = vmatpush1.bf16.msra.mxu0 0
    %2207 = vmatprep.subr.bf16.mxu0 0
    %2208 = vmatpush1.bf16.msra.mxu0 0
    %2209 = vmatprep.subr.bf16.mxu0 0
    %2210 = vmatpush1.bf16.msra.mxu0 0
    %2211 = vmatprep.subr.bf16.mxu0 0
    %2212 = vmatpush1.bf16.msra.mxu0 0
    %2213 = vmatprep.subr.bf16.mxu0 0
    %2214 = vmatpush1.bf16.msra.mxu0 0
    %2215 = vmatprep.subr.bf16.mxu0 0
    %2216 = vmatpush1.bf16.msra.mxu0 0
    %2217 = vmatprep.subr.bf16.mxu0 0
    %2218 = vmatpush1.bf16.msra.mxu0 0
    %2219 = vmatprep.subr.bf16.mxu0 0
    %2220 = vmatpush1.bf16.msra.mxu0 0
    %2221 = vmatprep.subr.bf16.mxu0 0
    %2222 = vmatpush1.bf16.msra.mxu0 0
    %2223 = vmatprep.subr.bf16.mxu0 0
    %2224 = vmatpush1.bf16.msra.mxu0 0
    %2225 = vmatprep.subr.bf16.mxu0 0
    %2226 = vmatpush1.bf16.msra.mxu0 0
    %2227 = vmatprep.subr.bf16.mxu0 0
    %2228 = vmatpush1.bf16.msra.mxu0 0
    %2229 = vmatprep.mubr.bf16.mxu0 0
    %2230 = vmatmul.mubr.bf16.gmra.mrb[0].mxu0 %v2195
    %v2231 = vpop.f32.mrb[0].mxu0
    %v2232 = vadd.f32 0.0, %v2231
    %v2233 = vpop.f32.mrb[0].mxu0
    %v2234 = vadd.f32 0.0, %v2233
    %v2235 = vpop.f32.mrb[0].mxu0
    %v2236 = vpop.f32.mrb[0].mxu0
    %2237 = vdwg.mxu0
    %v2239 = vrot.slane %v2232, 4
    %v2241 = vadd.f32 %v1458, %v2239
    %v2243 = vrot.slane %v2234, 6
    %v2245 = vadd.f32 %v1456, %v2243
    %v2246 = vsub.f32 0.0, %v2241
    %v2247 = vmul.f32 %v2246, 1.442695
    %v2248 = vpow.pop %v2247
    %v2249 = vadd.f32 %v2248, 1.0
    %v2250 = vrcp.pop %v2249
    %v2251 = vmul.f32 1.0, %v2250
    %v2252 = vtanh.pop %v2241
    %v2254 = vrot.slane %v2147, 6
    %v2256 = vmul.f32 %v2251, %v2254
    %2258 = vrot.lane.b32.xlu0 %v2252, 64
    %v2259 = vpop.permute.xlu0 %2258
    %v2261 = vmul.f32 %v2251, %v2259
    %2263 = vrot.lane.b32.xlu0 %v2261, 32
    %v2264 = vpop.permute.xlu0 %2263
    %v2266 = vadd.f32 %v2256, %v2264
    %v2267 = vtanh.pop %v2266
    %2269 = vrot.lane.b32.xlu0 %v2267, 64
    %v2270 = vpop.permute.xlu0 %2269
    %v2272 = vmul.f32 %v2251, %v2270
    %v2273 = vsub.f32 0.0, %v2245
    %v2274 = vmul.f32 %v2273, 1.442695
    %v2275 = vpow.pop %v2274
    %v2276 = vadd.f32 %v2275, 1.0
    %v2277 = vrcp.pop %v2276
    %v2278 = vmul.f32 1.0, %v2277
    %v2279 = vtanh.pop %v2245
    %v2281 = vrot.slane %v2174, 2
    %v2283 = vmul.f32 %v2278, %v2281
    %2285 = vrot.lane.b32.xlu0 %v2279, 64
    %v2286 = vpop.permute.xlu0 %2285
    %v2288 = vmul.f32 %v2278, %v2286
    %2290 = vrot.lane.b32.xlu0 %v2288, 32
    %v2291 = vpop.permute.xlu0 %2290
    %v2293 = vadd.f32 %v2283, %v2291
    %v2294 = vtanh.pop %v2293
    %2296 = vrot.lane.b32.xlu0 %v2294, 64
    %v2297 = vpop.permute.xlu0 %2296
    %v2299 = vmul.f32 %v2278, %v2297
    %2301 = vrot.lane.b32.xlu0 %v2272, 32
    %v2302 = vpop.permute.xlu0 %2301
    %v2305 = vrot.slane %v2299, 6
    %2306 = vrot.lane.b32.xlu0 %v2305, 64
    %v2307 = vpop.permute.xlu0 %2306
    %v2309 = vsel %vm291, %v2302, %v2307
    %v2310 = vpack.c.bf16 %v2309, %v2309
    %v2312 = vrot.slane %v2310, 2
    %v2314 = vsel %vm378, %v2312, 0
    %2316 = vmatprep.subr.bf16.mxu0 %v1487
    %2317 = vmatpush1.bf16.msra.mxu0 %v1486
    %2318 = vmatprep.subr.bf16.mxu0 %v1489
    %2319 = vmatpush1.bf16.msra.mxu0 %v1488
    %2320 = vmatprep.subr.bf16.mxu0 %v1491
    %2321 = vmatpush1.bf16.msra.mxu0 %v1490
    %2322 = vmatprep.subr.bf16.mxu0 %v1493
    %2323 = vmatpush1.bf16.msra.mxu0 %v1492
    %2324 = vmatprep.subr.bf16.mxu0 0
    %2325 = vmatpush1.bf16.msra.mxu0 0
    %2326 = vmatprep.subr.bf16.mxu0 0
    %2327 = vmatpush1.bf16.msra.mxu0 0
    %2328 = vmatprep.subr.bf16.mxu0 0
    %2329 = vmatpush1.bf16.msra.mxu0 0
    %2330 = vmatprep.subr.bf16.mxu0 0
    %2331 = vmatpush1.bf16.msra.mxu0 0
    %2332 = vmatprep.subr.bf16.mxu0 0
    %2333 = vmatpush1.bf16.msra.mxu0 0
    %2334 = vmatprep.subr.bf16.mxu0 0
    %2335 = vmatpush1.bf16.msra.mxu0 0
    %2336 = vmatprep.subr.bf16.mxu0 0
    %2337 = vmatpush1.bf16.msra.mxu0 0
    %2338 = vmatprep.subr.bf16.mxu0 0
    %2339 = vmatpush1.bf16.msra.mxu0 0
    %2340 = vmatprep.subr.bf16.mxu0 0
    %2341 = vmatpush1.bf16.msra.mxu0 0
    %2342 = vmatprep.subr.bf16.mxu0 0
    %2343 = vmatpush1.bf16.msra.mxu0 0
    %2344 = vmatprep.subr.bf16.mxu0 0
    %2345 = vmatpush1.bf16.msra.mxu0 0
    %2346 = vmatprep.subr.bf16.mxu0 0
    %2347 = vmatpush1.bf16.msra.mxu0 0
    %2348 = vmatprep.mubr.bf16.mxu0 0
    %2349 = vmatmul.mubr.bf16.gmra.mrb[0].mxu0 %v2314
    %v2350 = vpop.f32.mrb[0].mxu0
    %v2351 = vadd.f32 0.0, %v2350
    %v2352 = vpop.f32.mrb[0].mxu0
    %v2353 = vadd.f32 0.0, %v2352
    %v2354 = vpop.f32.mrb[0].mxu0
    %v2355 = vpop.f32.mrb[0].mxu0
    %2356 = vdwg.mxu0
    %v2358 = vrot.slane %v2351, 2
    %v2360 = vadd.f32 %v1458, %v2358
    %v2361 = vadd.f32 %v1456, %v2353
    %v2362 = vsub.f32 0.0, %v2360
    %v2363 = vmul.f32 %v2362, 1.442695
    %v2364 = vpow.pop %v2363
    %v2365 = vadd.f32 %v2364, 1.0
    %v2366 = vrcp.pop %v2365
    %v2367 = vmul.f32 1.0, %v2366
    %v2368 = vtanh.pop %v2360
    %v2370 = vrot.slane %v2266, 6
    %v2372 = vmul.f32 %v2367, %v2370
    %2374 = vrot.lane.b32.xlu0 %v2368, 64
    %v2375 = vpop.permute.xlu0 %2374
    %v2377 = vmul.f32 %v2367, %v2375
    %2379 = vrot.lane.b32.xlu0 %v2377, 32
    %v2380 = vpop.permute.xlu0 %2379
    %v2382 = vadd.f32 %v2372, %v2380
    %v2383 = vtanh.pop %v2382
    %2385 = vrot.lane.b32.xlu0 %v2383, 64
    %v2386 = vpop.permute.xlu0 %2385
    %v2388 = vmul.f32 %v2367, %v2386
    %v2389 = vsub.f32 0.0, %v2361
    %v2390 = vmul.f32 %v2389, 1.442695
    %v2391 = vpow.pop %v2390
    %v2392 = vadd.f32 %v2391, 1.0
    %v2393 = vrcp.pop %v2392
    %v2394 = vmul.f32 1.0, %v2393
    %v2395 = vtanh.pop %v2361
    %v2397 = vrot.slane %v2293, 2
    %v2399 = vmul.f32 %v2394, %v2397
    %2401 = vrot.lane.b32.xlu0 %v2395, 64
    %v2402 = vpop.permute.xlu0 %2401
    %v2404 = vmul.f32 %v2394, %v2402
    %2406 = vrot.lane.b32.xlu0 %v2404, 32
    %v2407 = vpop.permute.xlu0 %2406
    %v2409 = vadd.f32 %v2399, %v2407
    %v2410 = vtanh.pop %v2409
    %2412 = vrot.lane.b32.xlu0 %v2410, 64
    %v2413 = vpop.permute.xlu0 %2412
    %v2415 = vmul.f32 %v2394, %v2413
    %2417 = vrot.lane.b32.xlu0 %v2388, 32
    %v2418 = vpop.permute.xlu0 %2417
    %v2421 = vrot.slane %v2415, 2
    %2422 = vrot.lane.b32.xlu0 %v2421, 64
    %v2423 = vpop.permute.xlu0 %2422
    %v2425 = vsel %vm291, %v2418, %v2423
    %2427 = vrot.lane.b32.xlu0 %v2425, 64
    %v2428 = vpop.permute.xlu0 %2427
    %v2430 = vsel %vm378, %v1305, %v2428
    %v2431 = vld [vmem:[#allocation5] sm:$0xf]
    %v2432 = vld [vmem:[#allocation5 + $0x4] sm:$0xf]
    %v2433 = vld [vmem:[#allocation5 + $0x8] sm:$0xf]
    %v2434 = vld [vmem:[#allocation5 + $0xc] sm:$0xf]
    %v2435 = vld [vmem:[#allocation16] sm:$0xff]
    %v2436 = vld [vmem:[#allocation16 + $0x8] sm:$0xff]
    %v2437 = vld [vmem:[#allocation16 + $0x10] sm:$0xff]
    %v2438 = vld [vmem:[#allocation16 + $0x18] sm:$0xff]
    %v2439 = vld [vmem:[#allocation17] sm:$0xff]
    %v2440 = vld [vmem:[#allocation17 + $0x8] sm:$0xff]
    %v2441 = vld [vmem:[#allocation17 + $0x10] sm:$0xff]
    %v2442 = vld [vmem:[#allocation17 + $0x18] sm:$0xff]
    %v2443 = vld [vmem:[#allocation17 + $0x20] sm:$0xff]
    %v2444 = vld [vmem:[#allocation17 + $0x28] sm:$0xff]
    %v2445 = vld [vmem:[#allocation17 + $0x30] sm:$0xff]
    %v2446 = vld [vmem:[#allocation17 + $0x38] sm:$0xff]
    %v2447 = vld [vmem:[#allocation19] sm:$0x3]
    %v2449 = vlaneseq
    %v2450 = vshrl.u32 %v2449, 7
    %v2451 = vsub.s32 0, %v2450
    %v2452 = vrot.slane %v2447, %v2451
    %v2453 = vlaneseq
    %v2454 = vshrl.u32 %v2453, 7
    %v2455 = vsub.s32 1, %v2454
    %v2456 = vrot.slane %v2447, %v2455
    %v2463 = vunpack.c.l.b16 %v2431
    %v2464 = vunpack.c.l.b16 %v2432
    %v2465 = vunpack.c.l.b16 %v2433
    %v2466 = vunpack.c.l.b16 %v2434
    %v2467 = vpack.c.b16 %v2464, %v2463
    %v2468 = vpack.c.b16 %v2466, %v2465
    %v2473 = vunpack.c.l.b16 %v2435
    %v2474 = vunpack.c.h.b16 %v2435
    %v2475 = vunpack.c.l.b16 %v2436
    %v2476 = vunpack.c.h.b16 %v2436
    %v2477 = vunpack.c.l.b16 %v2437
    %v2478 = vunpack.c.h.b16 %v2437
    %v2479 = vunpack.c.l.b16 %v2438
    %v2480 = vunpack.c.h.b16 %v2438
    %v2481 = vpack.c.b16 %v2475, %v2473
    %v2482 = vpack.c.b16 %v2476, %v2474
    %v2483 = vpack.c.b16 %v2479, %v2477
    %v2484 = vpack.c.b16 %v2480, %v2478
    %v2490 = vsel %vm291, %v2467, 0
    %v2493 = vsel %vm291, %v2468, 0
    %2495 = vmatprep.subr.bf16.mxu0 %v2482
    %2496 = vmatpush1.bf16.msra.mxu0 %v2481
    %2497 = vmatprep.subr.bf16.mxu0 %v2484
    %2498 = vmatpush1.bf16.msra.mxu0 %v2483
    %2499 = vmatprep.subr.bf16.mxu0 0
    %2500 = vmatpush1.bf16.msra.mxu0 0
    %2501 = vmatprep.subr.bf16.mxu0 0
    %2502 = vmatpush1.bf16.msra.mxu0 0
    %2503 = vmatprep.subr.bf16.mxu0 0
    %2504 = vmatpush1.bf16.msra.mxu0 0
    %2505 = vmatprep.subr.bf16.mxu0 0
    %2506 = vmatpush1.bf16.msra.mxu0 0
    %2507 = vmatprep.subr.bf16.mxu0 0
    %2508 = vmatpush1.bf16.msra.mxu0 0
    %2509 = vmatprep.subr.bf16.mxu0 0
    %2510 = vmatpush1.bf16.msra.mxu0 0
    %2511 = vmatprep.subr.bf16.mxu0 0
    %2512 = vmatpush1.bf16.msra.mxu0 0
    %2513 = vmatprep.subr.bf16.mxu0 0
    %2514 = vmatpush1.bf16.msra.mxu0 0
    %2515 = vmatprep.subr.bf16.mxu0 0
    %2516 = vmatpush1.bf16.msra.mxu0 0
    %2517 = vmatprep.subr.bf16.mxu0 0
    %2518 = vmatpush1.bf16.msra.mxu0 0
    %2519 = vmatprep.subr.bf16.mxu0 0
    %2520 = vmatpush1.bf16.msra.mxu0 0
    %2521 = vmatprep.subr.bf16.mxu0 0
    %2522 = vmatpush1.bf16.msra.mxu0 0
    %2523 = vmatprep.subr.bf16.mxu0 0
    %2524 = vmatpush1.bf16.msra.mxu0 0
    %2525 = vmatprep.subr.bf16.mxu0 0
    %2526 = vmatpush1.bf16.msra.mxu0 0
    %2527 = vmatprep.mubr.bf16.mxu0 0
    %2528 = vmatmul.mubr.bf16.gmra.mrb[0].mxu0 %v2490
    %v2529 = vpop.f32.mrb[0].mxu0
    %v2530 = vadd.f32 %v2452, %v2529
    %v2531 = vpop.f32.mrb[0].mxu0
    %v2532 = vadd.f32 %v2456, %v2531
    %v2533 = vpop.f32.mrb[0].mxu0
    %v2534 = vadd.f32 %v2452, %v2533
    %v2535 = vpop.f32.mrb[0].mxu0
    %v2536 = vadd.f32 %v2456, %v2535
    %2537 = vmatprep.mubr.bf16.mxu0 0
    %2538 = vmatmul.mubr.bf16.gmra.mrb[0].mxu0 %v2493
    %v2539 = vpop.f32.mrb[0].mxu0
    %v2540 = vadd.f32 %v2452, %v2539
    %v2541 = vpop.f32.mrb[0].mxu0
    %v2542 = vadd.f32 %v2456, %v2541
    %v2543 = vpop.f32.mrb[0].mxu0
    %v2544 = vadd.f32 %v2452, %v2543
    %v2545 = vpop.f32.mrb[0].mxu0
    %v2546 = vadd.f32 %v2456, %v2545
    %2547 = vdwg.mxu0
    %v2556 = vunpack.c.l.b16 %v2439
    %v2557 = vunpack.c.h.b16 %v2439
    %v2558 = vunpack.c.l.b16 %v2440
    %v2559 = vunpack.c.h.b16 %v2440
    %v2560 = vunpack.c.l.b16 %v2441
    %v2561 = vunpack.c.h.b16 %v2441
    %v2562 = vunpack.c.l.b16 %v2442
    %v2563 = vunpack.c.h.b16 %v2442
    %v2564 = vunpack.c.l.b16 %v2443
    %v2565 = vunpack.c.h.b16 %v2443
    %v2566 = vunpack.c.l.b16 %v2444
    %v2567 = vunpack.c.h.b16 %v2444
    %v2568 = vunpack.c.l.b16 %v2445
    %v2569 = vunpack.c.h.b16 %v2445
    %v2570 = vunpack.c.l.b16 %v2446
    %v2571 = vunpack.c.h.b16 %v2446
    %v2572 = vpack.c.b16 %v2558, %v2556
    %v2573 = vpack.c.b16 %v2559, %v2557
    %v2574 = vpack.c.b16 %v2562, %v2560
    %v2575 = vpack.c.b16 %v2563, %v2561
    %v2576 = vpack.c.b16 %v2566, %v2564
    %v2577 = vpack.c.b16 %v2567, %v2565
    %v2578 = vpack.c.b16 %v2570, %v2568
    %v2579 = vpack.c.b16 %v2571, %v2569
    %2588 = vmatprep.subr.bf16.mxu0 %v2573
    %2589 = vmatpush1.bf16.msra.mxu0 %v2572
    %2590 = vmatprep.subr.bf16.mxu0 %v2575
    %2591 = vmatpush1.bf16.msra.mxu0 %v2574
    %2592 = vmatprep.subr.bf16.mxu0 %v2577
    %2593 = vmatpush1.bf16.msra.mxu0 %v2576
    %2594 = vmatprep.subr.bf16.mxu0 %v2579
    %2595 = vmatpush1.bf16.msra.mxu0 %v2578
    %2596 = vmatprep.subr.bf16.mxu0 0
    %2597 = vmatpush1.bf16.msra.mxu0 0
    %2598 = vmatprep.subr.bf16.mxu0 0
    %2599 = vmatpush1.bf16.msra.mxu0 0
    %2600 = vmatprep.subr.bf16.mxu0 0
    %2601 = vmatpush1.bf16.msra.mxu0 0
    %2602 = vmatprep.subr.bf16.mxu0 0
    %2603 = vmatpush1.bf16.msra.mxu0 0
    %2604 = vmatprep.subr.bf16.mxu0 0
    %2605 = vmatpush1.bf16.msra.mxu0 0
    %2606 = vmatprep.subr.bf16.mxu0 0
    %2607 = vmatpush1.bf16.msra.mxu0 0
    %2608 = vmatprep.subr.bf16.mxu0 0
    %2609 = vmatpush1.bf16.msra.mxu0 0
    %2610 = vmatprep.subr.bf16.mxu0 0
    %2611 = vmatpush1.bf16.msra.mxu0 0
    %2612 = vmatprep.subr.bf16.mxu0 0
    %2613 = vmatpush1.bf16.msra.mxu0 0
    %2614 = vmatprep.subr.bf16.mxu0 0
    %2615 = vmatpush1.bf16.msra.mxu0 0
    %2616 = vmatprep.subr.bf16.mxu0 0
    %2617 = vmatpush1.bf16.msra.mxu0 0
    %2618 = vmatprep.subr.bf16.mxu0 0
    %2619 = vmatpush1.bf16.msra.mxu0 0
    %2620 = vmatprep.mubr.bf16.mxu0 0
    %2621 = vmatmul.mubr.bf16.gmra.mrb[0].mxu0 %v380
    %v2622 = vpop.f32.mrb[0].mxu0
    %v2623 = vadd.f32 0.0, %v2622
    %v2624 = vpop.f32.mrb[0].mxu0
    %v2625 = vadd.f32 0.0, %v2624
    %v2626 = vpop.f32.mrb[0].mxu0
    %v2627 = vpop.f32.mrb[0].mxu0
    %2628 = vdwg.mxu0
    %v2629 = vadd.f32 %v2530, %v2623
    %v2631 = vrot.slane %v2625, 4
    %v2633 = vadd.f32 %v2546, %v2631
    %v2634 = vsub.f32 0.0, %v2629
    %v2635 = vmul.f32 %v2634, 1.442695
    %v2636 = vpow.pop %v2635
    %v2637 = vadd.f32 %v2636, 1.0
    %v2638 = vrcp.pop %v2637
    %v2639 = vmul.f32 1.0, %v2638
    %v2640 = vtanh.pop %v2629
    %v2641 = vmul.f32 %v2639, 0.0
    %2643 = vrot.lane.b32.xlu0 %v2640, 64
    %v2644 = vpop.permute.xlu0 %2643
    %v2646 = vmul.f32 %v2639, %v2644
    %2648 = vrot.lane.b32.xlu0 %v2646, 32
    %v2649 = vpop.permute.xlu0 %2648
    %v2651 = vadd.f32 %v2641, %v2649
    %v2652 = vtanh.pop %v2651
    %2654 = vrot.lane.b32.xlu0 %v2652, 64
    %v2655 = vpop.permute.xlu0 %2654
    %v2657 = vmul.f32 %v2639, %v2655
    %v2658 = vsub.f32 0.0, %v2633
    %v2659 = vmul.f32 %v2658, 1.442695
    %v2660 = vpow.pop %v2659
    %v2661 = vadd.f32 %v2660, 1.0
    %v2662 = vrcp.pop %v2661
    %v2663 = vmul.f32 1.0, %v2662
    %v2664 = vtanh.pop %v2633
    %v2665 = vmul.f32 %v2663, 0.0
    %2667 = vrot.lane.b32.xlu0 %v2664, 64
    %v2668 = vpop.permute.xlu0 %2667
    %v2670 = vmul.f32 %v2663, %v2668
    %2672 = vrot.lane.b32.xlu0 %v2670, 32
    %v2673 = vpop.permute.xlu0 %2672
    %v2675 = vadd.f32 %v2665, %v2673
    %v2676 = vtanh.pop %v2675
    %2678 = vrot.lane.b32.xlu0 %v2676, 64
    %v2679 = vpop.permute.xlu0 %2678
    %v2681 = vmul.f32 %v2663, %v2679
    %2683 = vrot.lane.b32.xlu0 %v2657, 32
    %v2684 = vpop.permute.xlu0 %2683
    %v2687 = vrot.slane %v2681, 4
    %2688 = vrot.lane.b32.xlu0 %v2687, 64
    %v2689 = vpop.permute.xlu0 %2688
    %v2691 = vsel %vm291, %v2684, %v2689
    %v2692 = vpack.c.bf16 %v2691, %v2691
    %v2694 = vsel %vm378, %v2692, 0
    %2696 = vmatprep.subr.bf16.mxu0 %v2573
    %2697 = vmatpush1.bf16.msra.mxu0 %v2572
    %2698 = vmatprep.subr.bf16.mxu0 %v2575
    %2699 = vmatpush1.bf16.msra.mxu0 %v2574
    %2700 = vmatprep.subr.bf16.mxu0 %v2577
    %2701 = vmatpush1.bf16.msra.mxu0 %v2576
    %2702 = vmatprep.subr.bf16.mxu0 %v2579
    %2703 = vmatpush1.bf16.msra.mxu0 %v2578
    %2704 = vmatprep.subr.bf16.mxu0 0
    %2705 = vmatpush1.bf16.msra.mxu0 0
    %2706 = vmatprep.subr.bf16.mxu0 0
    %2707 = vmatpush1.bf16.msra.mxu0 0
    %2708 = vmatprep.subr.bf16.mxu0 0
    %2709 = vmatpush1.bf16.msra.mxu0 0
    %2710 = vmatprep.subr.bf16.mxu0 0
    %2711 = vmatpush1.bf16.msra.mxu0 0
    %2712 = vmatprep.subr.bf16.mxu0 0
    %2713 = vmatpush1.bf16.msra.mxu0 0
    %2714 = vmatprep.subr.bf16.mxu0 0
    %2715 = vmatpush1.bf16.msra.mxu0 0
    %2716 = vmatprep.subr.bf16.mxu0 0
    %2717 = vmatpush1.bf16.msra.mxu0 0
    %2718 = vmatprep.subr.bf16.mxu0 0
    %2719 = vmatpush1.bf16.msra.mxu0 0
    %2720 = vmatprep.subr.bf16.mxu0 0
    %2721 = vmatpush1.bf16.msra.mxu0 0
    %2722 = vmatprep.subr.bf16.mxu0 0
    %2723 = vmatpush1.bf16.msra.mxu0 0
    %2724 = vmatprep.subr.bf16.mxu0 0
    %2725 = vmatpush1.bf16.msra.mxu0 0
    %2726 = vmatprep.subr.bf16.mxu0 0
    %2727 = vmatpush1.bf16.msra.mxu0 0
    %2728 = vmatprep.mubr.bf16.mxu0 0
    %2729 = vmatmul.mubr.bf16.gmra.mrb[0].mxu0 %v2694
    %v2730 = vpop.f32.mrb[0].mxu0
    %v2731 = vadd.f32 0.0, %v2730
    %v2732 = vpop.f32.mrb[0].mxu0
    %v2733 = vadd.f32 0.0, %v2732
    %v2734 = vpop.f32.mrb[0].mxu0
    %v2735 = vpop.f32.mrb[0].mxu0
    %2736 = vdwg.mxu0
    %v2738 = vrot.slane %v2731, 4
    %v2740 = vadd.f32 %v2530, %v2738
    %v2741 = vadd.f32 %v2546, %v2733
    %v2742 = vsub.f32 0.0, %v2740
    %v2743 = vmul.f32 %v2742, 1.442695
    %v2744 = vpow.pop %v2743
    %v2745 = vadd.f32 %v2744, 1.0
    %v2746 = vrcp.pop %v2745
    %v2747 = vmul.f32 1.0, %v2746
    %v2748 = vtanh.pop %v2740
    %v2750 = vrot.slane %v2651, 4
    %v2752 = vmul.f32 %v2747, %v2750
    %2754 = vrot.lane.b32.xlu0 %v2748, 64
    %v2755 = vpop.permute.xlu0 %2754
    %v2757 = vmul.f32 %v2747, %v2755
    %2759 = vrot.lane.b32.xlu0 %v2757, 32
    %v2760 = vpop.permute.xlu0 %2759
    %v2762 = vadd.f32 %v2752, %v2760
    %v2763 = vtanh.pop %v2762
    %2765 = vrot.lane.b32.xlu0 %v2763, 64
    %v2766 = vpop.permute.xlu0 %2765
    %v2768 = vmul.f32 %v2747, %v2766
    %v2769 = vsub.f32 0.0, %v2741
    %v2770 = vmul.f32 %v2769, 1.442695
    %v2771 = vpow.pop %v2770
    %v2772 = vadd.f32 %v2771, 1.0
    %v2773 = vrcp.pop %v2772
    %v2774 = vmul.f32 1.0, %v2773
    %v2775 = vtanh.pop %v2741
    %v2777 = vrot.slane %v2675, 4
    %v2779 = vmul.f32 %v2774, %v2777
    %2781 = vrot.lane.b32.xlu0 %v2775, 64
    %v2782 = vpop.permute.xlu0 %2781
    %v2784 = vmul.f32 %v2774, %v2782
    %2786 = vrot.lane.b32.xlu0 %v2784, 32
    %v2787 = vpop.permute.xlu0 %2786
    %v2789 = vadd.f32 %v2779, %v2787
    %v2790 = vtanh.pop %v2789
    %2792 = vrot.lane.b32.xlu0 %v2790, 64
    %v2793 = vpop.permute.xlu0 %2792
    %v2795 = vmul.f32 %v2774, %v2793
    %2797 = vrot.lane.b32.xlu0 %v2768, 32
    %v2798 = vpop.permute.xlu0 %2797
    %v2801 = vrot.slane %v2795, 4
    %2802 = vrot.lane.b32.xlu0 %v2801, 64
    %v2803 = vpop.permute.xlu0 %2802
    %v2805 = vsel %vm291, %v2798, %v2803
    %v2806 = vpack.c.bf16 %v2805, %v2805
    %v2808 = vrot.slane %v2806, 2
    %v2810 = vsel %vm378, %v2808, 0
    %2812 = vmatprep.subr.bf16.mxu0 %v2573
    %2813 = vmatpush1.bf16.msra.mxu0 %v2572
    %2814 = vmatprep.subr.bf16.mxu0 %v2575
    %2815 = vmatpush1.bf16.msra.mxu0 %v2574
    %2816 = vmatprep.subr.bf16.mxu0 %v2577
    %2817 = vmatpush1.bf16.msra.mxu0 %v2576
    %2818 = vmatprep.subr.bf16.mxu0 %v2579
    %2819 = vmatpush1.bf16.msra.mxu0 %v2578
    %2820 = vmatprep.subr.bf16.mxu0 0
    %2821 = vmatpush1.bf16.msra.mxu0 0
    %2822 = vmatprep.subr.bf16.mxu0 0
    %2823 = vmatpush1.bf16.msra.mxu0 0
    %2824 = vmatprep.subr.bf16.mxu0 0
    %2825 = vmatpush1.bf16.msra.mxu0 0
    %2826 = vmatprep.subr.bf16.mxu0 0
    %2827 = vmatpush1.bf16.msra.mxu0 0
    %2828 = vmatprep.subr.bf16.mxu0 0
    %2829 = vmatpush1.bf16.msra.mxu0 0
    %2830 = vmatprep.subr.bf16.mxu0 0
    %2831 = vmatpush1.bf16.msra.mxu0 0
    %2832 = vmatprep.subr.bf16.mxu0 0
    %2833 = vmatpush1.bf16.msra.mxu0 0
    %2834 = vmatprep.subr.bf16.mxu0 0
    %2835 = vmatpush1.bf16.msra.mxu0 0
    %2836 = vmatprep.subr.bf16.mxu0 0
    %2837 = vmatpush1.bf16.msra.mxu0 0
    %2838 = vmatprep.subr.bf16.mxu0 0
    %2839 = vmatpush1.bf16.msra.mxu0 0
    %2840 = vmatprep.subr.bf16.mxu0 0
    %2841 = vmatpush1.bf16.msra.mxu0 0
    %2842 = vmatprep.subr.bf16.mxu0 0
    %2843 = vmatpush1.bf16.msra.mxu0 0
    %2844 = vmatprep.mubr.bf16.mxu0 0
    %2845 = vmatmul.mubr.bf16.gmra.mrb[0].mxu0 %v2810
    %v2846 = vpop.f32.mrb[0].mxu0
    %v2847 = vadd.f32 0.0, %v2846
    %v2848 = vpop.f32.mrb[0].mxu0
    %v2849 = vadd.f32 0.0, %v2848
    %v2850 = vpop.f32.mrb[0].mxu0
    %v2851 = vpop.f32.mrb[0].mxu0
    %2852 = vdwg.mxu0
    %v2853 = vadd.f32 %v2534, %v2847
    %v2855 = vrot.slane %v2849, 4
    %v2857 = vadd.f32 %v2542, %v2855
    %v2858 = vsub.f32 0.0, %v2853
    %v2859 = vmul.f32 %v2858, 1.442695
    %v2860 = vpow.pop %v2859
    %v2861 = vadd.f32 %v2860, 1.0
    %v2862 = vrcp.pop %v2861
    %v2863 = vmul.f32 1.0, %v2862
    %v2864 = vtanh.pop %v2853
    %v2866 = vrot.slane %v2762, 4
    %v2868 = vmul.f32 %v2863, %v2866
    %2870 = vrot.lane.b32.xlu0 %v2864, 64
    %v2871 = vpop.permute.xlu0 %2870
    %v2873 = vmul.f32 %v2863, %v2871
    %2875 = vrot.lane.b32.xlu0 %v2873, 32
    %v2876 = vpop.permute.xlu0 %2875
    %v2878 = vadd.f32 %v2868, %v2876
    %v2879 = vtanh.pop %v2878
    %2881 = vrot.lane.b32.xlu0 %v2879, 64
    %v2882 = vpop.permute.xlu0 %2881
    %v2884 = vmul.f32 %v2863, %v2882
    %v2885 = vsub.f32 0.0, %v2857
    %v2886 = vmul.f32 %v2885, 1.442695
    %v2887 = vpow.pop %v2886
    %v2888 = vadd.f32 %v2887, 1.0
    %v2889 = vrcp.pop %v2888
    %v2890 = vmul.f32 1.0, %v2889
    %v2891 = vtanh.pop %v2857
    %v2893 = vrot.slane %v2789, 4
    %v2895 = vmul.f32 %v2890, %v2893
    %2897 = vrot.lane.b32.xlu0 %v2891, 64
    %v2898 = vpop.permute.xlu0 %2897
    %v2900 = vmul.f32 %v2890, %v2898
    %2902 = vrot.lane.b32.xlu0 %v2900, 32
    %v2903 = vpop.permute.xlu0 %2902
    %v2905 = vadd.f32 %v2895, %v2903
    %v2906 = vtanh.pop %v2905
    %2908 = vrot.lane.b32.xlu0 %v2906, 64
    %v2909 = vpop.permute.xlu0 %2908
    %v2911 = vmul.f32 %v2890, %v2909
    %2913 = vrot.lane.b32.xlu0 %v2884, 32
    %v2914 = vpop.permute.xlu0 %2913
    %v2917 = vrot.slane %v2911, 4
    %2918 = vrot.lane.b32.xlu0 %v2917, 64
    %v2919 = vpop.permute.xlu0 %2918
    %v2921 = vsel %vm291, %v2914, %v2919
    %v2922 = vpack.c.bf16 %v2921, %v2921
    %v2924 = vsel %vm378, %v2922, 0
    %2926 = vmatprep.subr.bf16.mxu0 %v2573
    %2927 = vmatpush1.bf16.msra.mxu0 %v2572
    %2928 = vmatprep.subr.bf16.mxu0 %v2575
    %2929 = vmatpush1.bf16.msra.mxu0 %v2574
    %2930 = vmatprep.subr.bf16.mxu0 %v2577
    %2931 = vmatpush1.bf16.msra.mxu0 %v2576
    %2932 = vmatprep.subr.bf16.mxu0 %v2579
    %2933 = vmatpush1.bf16.msra.mxu0 %v2578
    %2934 = vmatprep.subr.bf16.mxu0 0
    %2935 = vmatpush1.bf16.msra.mxu0 0
    %2936 = vmatprep.subr.bf16.mxu0 0
    %2937 = vmatpush1.bf16.msra.mxu0 0
    %2938 = vmatprep.subr.bf16.mxu0 0
    %2939 = vmatpush1.bf16.msra.mxu0 0
    %2940 = vmatprep.subr.bf16.mxu0 0
    %2941 = vmatpush1.bf16.msra.mxu0 0
    %2942 = vmatprep.subr.bf16.mxu0 0
    %2943 = vmatpush1.bf16.msra.mxu0 0
    %2944 = vmatprep.subr.bf16.mxu0 0
    %2945 = vmatpush1.bf16.msra.mxu0 0
    %2946 = vmatprep.subr.bf16.mxu0 0
    %2947 = vmatpush1.bf16.msra.mxu0 0
    %2948 = vmatprep.subr.bf16.mxu0 0
    %2949 = vmatpush1.bf16.msra.mxu0 0
    %2950 = vmatprep.subr.bf16.mxu0 0
    %2951 = vmatpush1.bf16.msra.mxu0 0
    %2952 = vmatprep.subr.bf16.mxu0 0
    %2953 = vmatpush1.bf16.msra.mxu0 0
    %2954 = vmatprep.subr.bf16.mxu0 0
    %2955 = vmatpush1.bf16.msra.mxu0 0
    %2956 = vmatprep.subr.bf16.mxu0 0
    %2957 = vmatpush1.bf16.msra.mxu0 0
    %2958 = vmatprep.mubr.bf16.mxu0 0
    %2959 = vmatmul.mubr.bf16.gmra.mrb[0].mxu0 %v2924
    %v2960 = vpop.f32.mrb[0].mxu0
    %v2961 = vadd.f32 0.0, %v2960
    %v2962 = vpop.f32.mrb[0].mxu0
    %v2963 = vadd.f32 0.0, %v2962
    %v2964 = vpop.f32.mrb[0].mxu0
    %v2965 = vpop.f32.mrb[0].mxu0
    %2966 = vdwg.mxu0
    %v2968 = vrot.slane %v2961, 4
    %v2970 = vadd.f32 %v2534, %v2968
    %v2971 = vadd.f32 %v2542, %v2963
    %v2972 = vsub.f32 0.0, %v2970
    %v2973 = vmul.f32 %v2972, 1.442695
    %v2974 = vpow.pop %v2973
    %v2975 = vadd.f32 %v2974, 1.0
    %v2976 = vrcp.pop %v2975
    %v2977 = vmul.f32 1.0, %v2976
    %v2978 = vtanh.pop %v2970
    %v2980 = vrot.slane %v2878, 4
    %v2982 = vmul.f32 %v2977, %v2980
    %2984 = vrot.lane.b32.xlu0 %v2978, 64
    %v2985 = vpop.permute.xlu0 %2984
    %v2987 = vmul.f32 %v2977, %v2985
    %2989 = vrot.lane.b32.xlu0 %v2987, 32
    %v2990 = vpop.permute.xlu0 %2989
    %v2992 = vadd.f32 %v2982, %v2990
    %v2993 = vtanh.pop %v2992
    %2995 = vrot.lane.b32.xlu0 %v2993, 64
    %v2996 = vpop.permute.xlu0 %2995
    %v2998 = vmul.f32 %v2977, %v2996
    %v2999 = vsub.f32 0.0, %v2971
    %v3000 = vmul.f32 %v2999, 1.442695
    %v3001 = vpow.pop %v3000
    %v3002 = vadd.f32 %v3001, 1.0
    %v3003 = vrcp.pop %v3002
    %v3004 = vmul.f32 1.0, %v3003
    %v3005 = vtanh.pop %v2971
    %v3007 = vrot.slane %v2905, 4
    %v3009 = vmul.f32 %v3004, %v3007
    %3011 = vrot.lane.b32.xlu0 %v3005, 64
    %v3012 = vpop.permute.xlu0 %3011
    %v3014 = vmul.f32 %v3004, %v3012
    %3016 = vrot.lane.b32.xlu0 %v3014, 32
    %v3017 = vpop.permute.xlu0 %3016
    %v3019 = vadd.f32 %v3009, %v3017
    %v3020 = vtanh.pop %v3019
    %3022 = vrot.lane.b32.xlu0 %v3020, 64
    %v3023 = vpop.permute.xlu0 %3022
    %v3025 = vmul.f32 %v3004, %v3023
    %3027 = vrot.lane.b32.xlu0 %v2998, 32
    %v3028 = vpop.permute.xlu0 %3027
    %v3031 = vrot.slane %v3025, 4
    %3032 = vrot.lane.b32.xlu0 %v3031, 64
    %v3033 = vpop.permute.xlu0 %3032
    %v3035 = vsel %vm291, %v3028, %v3033
    %v3036 = vpack.c.bf16 %v3035, %v3035
    %v3038 = vrot.slane %v3036, 2
    %v3040 = vsel %vm378, %v3038, 0
    %3042 = vmatprep.subr.bf16.mxu0 %v2573
    %3043 = vmatpush1.bf16.msra.mxu0 %v2572
    %3044 = vmatprep.subr.bf16.mxu0 %v2575
    %3045 = vmatpush1.bf16.msra.mxu0 %v2574
    %3046 = vmatprep.subr.bf16.mxu0 %v2577
    %3047 = vmatpush1.bf16.msra.mxu0 %v2576
    %3048 = vmatprep.subr.bf16.mxu0 %v2579
    %3049 = vmatpush1.bf16.msra.mxu0 %v2578
    %3050 = vmatprep.subr.bf16.mxu0 0
    %3051 = vmatpush1.bf16.msra.mxu0 0
    %3052 = vmatprep.subr.bf16.mxu0 0
    %3053 = vmatpush1.bf16.msra.mxu0 0
    %3054 = vmatprep.subr.bf16.mxu0 0
    %3055 = vmatpush1.bf16.msra.mxu0 0
    %3056 = vmatprep.subr.bf16.mxu0 0
    %3057 = vmatpush1.bf16.msra.mxu0 0
    %3058 = vmatprep.subr.bf16.mxu0 0
    %3059 = vmatpush1.bf16.msra.mxu0 0
    %3060 = vmatprep.subr.bf16.mxu0 0
    %3061 = vmatpush1.bf16.msra.mxu0 0
    %3062 = vmatprep.subr.bf16.mxu0 0
    %3063 = vmatpush1.bf16.msra.mxu0 0
    %3064 = vmatprep.subr.bf16.mxu0 0
    %3065 = vmatpush1.bf16.msra.mxu0 0
    %3066 = vmatprep.subr.bf16.mxu0 0
    %3067 = vmatpush1.bf16.msra.mxu0 0
    %3068 = vmatprep.subr.bf16.mxu0 0
    %3069 = vmatpush1.bf16.msra.mxu0 0
    %3070 = vmatprep.subr.bf16.mxu0 0
    %3071 = vmatpush1.bf16.msra.mxu0 0
    %3072 = vmatprep.subr.bf16.mxu0 0
    %3073 = vmatpush1.bf16.msra.mxu0 0
    %3074 = vmatprep.mubr.bf16.mxu0 0
    %3075 = vmatmul.mubr.bf16.gmra.mrb[0].mxu0 %v3040
    %v3076 = vpop.f32.mrb[0].mxu0
    %v3077 = vadd.f32 0.0, %v3076
    %v3078 = vpop.f32.mrb[0].mxu0
    %v3079 = vadd.f32 0.0, %v3078
    %v3080 = vpop.f32.mrb[0].mxu0
    %v3081 = vpop.f32.mrb[0].mxu0
    %3082 = vdwg.mxu0
    %v3083 = vadd.f32 %v2540, %v3077
    %v3085 = vrot.slane %v3079, 4
    %v3087 = vadd.f32 %v2536, %v3085
    %v3088 = vsub.f32 0.0, %v3083
    %v3089 = vmul.f32 %v3088, 1.442695
    %v3090 = vpow.pop %v3089
    %v3091 = vadd.f32 %v3090, 1.0
    %v3092 = vrcp.pop %v3091
    %v3093 = vmul.f32 1.0, %v3092
    %v3094 = vtanh.pop %v3083
    %v3096 = vrot.slane %v2992, 4
    %v3098 = vmul.f32 %v3093, %v3096
    %3100 = vrot.lane.b32.xlu0 %v3094, 64
    %v3101 = vpop.permute.xlu0 %3100
    %v3103 = vmul.f32 %v3093, %v3101
    %3105 = vrot.lane.b32.xlu0 %v3103, 32
    %v3106 = vpop.permute.xlu0 %3105
    %v3108 = vadd.f32 %v3098, %v3106
    %v3109 = vtanh.pop %v3108
    %3111 = vrot.lane.b32.xlu0 %v3109, 64
    %v3112 = vpop.permute.xlu0 %3111
    %v3114 = vmul.f32 %v3093, %v3112
    %v3115 = vsub.f32 0.0, %v3087
    %v3116 = vmul.f32 %v3115, 1.442695
    %v3117 = vpow.pop %v3116
    %v3118 = vadd.f32 %v3117, 1.0
    %v3119 = vrcp.pop %v3118
    %v3120 = vmul.f32 1.0, %v3119
    %v3121 = vtanh.pop %v3087
    %v3123 = vrot.slane %v3019, 4
    %v3125 = vmul.f32 %v3120, %v3123
    %3127 = vrot.lane.b32.xlu0 %v3121, 64
    %v3128 = vpop.permute.xlu0 %3127
    %v3130 = vmul.f32 %v3120, %v3128
    %3132 = vrot.lane.b32.xlu0 %v3130, 32
    %v3133 = vpop.permute.xlu0 %3132
    %v3135 = vadd.f32 %v3125, %v3133
    %v3136 = vtanh.pop %v3135
    %3138 = vrot.lane.b32.xlu0 %v3136, 64
    %v3139 = vpop.permute.xlu0 %3138
    %v3141 = vmul.f32 %v3120, %v3139
    %3143 = vrot.lane.b32.xlu0 %v3114, 32
    %v3144 = vpop.permute.xlu0 %3143
    %v3147 = vrot.slane %v3141, 4
    %3148 = vrot.lane.b32.xlu0 %v3147, 64
    %v3149 = vpop.permute.xlu0 %3148
    %v3151 = vsel %vm291, %v3144, %v3149
    %v3152 = vpack.c.bf16 %v3151, %v3151
    %v3154 = vsel %vm378, %v3152, 0
    %3156 = vmatprep.subr.bf16.mxu0 %v2573
    %3157 = vmatpush1.bf16.msra.mxu0 %v2572
    %3158 = vmatprep.subr.bf16.mxu0 %v2575
    %3159 = vmatpush1.bf16.msra.mxu0 %v2574
    %3160 = vmatprep.subr.bf16.mxu0 %v2577
    %3161 = vmatpush1.bf16.msra.mxu0 %v2576
    %3162 = vmatprep.subr.bf16.mxu0 %v2579
    %3163 = vmatpush1.bf16.msra.mxu0 %v2578
    %3164 = vmatprep.subr.bf16.mxu0 0
    %3165 = vmatpush1.bf16.msra.mxu0 0
    %3166 = vmatprep.subr.bf16.mxu0 0
    %3167 = vmatpush1.bf16.msra.mxu0 0
    %3168 = vmatprep.subr.bf16.mxu0 0
    %3169 = vmatpush1.bf16.msra.mxu0 0
    %3170 = vmatprep.subr.bf16.mxu0 0
    %3171 = vmatpush1.bf16.msra.mxu0 0
    %3172 = vmatprep.subr.bf16.mxu0 0
    %3173 = vmatpush1.bf16.msra.mxu0 0
    %3174 = vmatprep.subr.bf16.mxu0 0
    %3175 = vmatpush1.bf16.msra.mxu0 0
    %3176 = vmatprep.subr.bf16.mxu0 0
    %3177 = vmatpush1.bf16.msra.mxu0 0
    %3178 = vmatprep.subr.bf16.mxu0 0
    %3179 = vmatpush1.bf16.msra.mxu0 0
    %3180 = vmatprep.subr.bf16.mxu0 0
    %3181 = vmatpush1.bf16.msra.mxu0 0
    %3182 = vmatprep.subr.bf16.mxu0 0
    %3183 = vmatpush1.bf16.msra.mxu0 0
    %3184 = vmatprep.subr.bf16.mxu0 0
    %3185 = vmatpush1.bf16.msra.mxu0 0
    %3186 = vmatprep.subr.bf16.mxu0 0
    %3187 = vmatpush1.bf16.msra.mxu0 0
    %3188 = vmatprep.mubr.bf16.mxu0 0
    %3189 = vmatmul.mubr.bf16.gmra.mrb[0].mxu0 %v3154
    %v3190 = vpop.f32.mrb[0].mxu0
    %v3191 = vadd.f32 0.0, %v3190
    %v3192 = vpop.f32.mrb[0].mxu0
    %v3193 = vadd.f32 0.0, %v3192
    %v3194 = vpop.f32.mrb[0].mxu0
    %v3195 = vpop.f32.mrb[0].mxu0
    %3196 = vdwg.mxu0
    %v3198 = vrot.slane %v3191, 4
    %v3200 = vadd.f32 %v2540, %v3198
    %v3201 = vadd.f32 %v2536, %v3193
    %v3202 = vsub.f32 0.0, %v3200
    %v3203 = vmul.f32 %v3202, 1.442695
    %v3204 = vpow.pop %v3203
    %v3205 = vadd.f32 %v3204, 1.0
    %v3206 = vrcp.pop %v3205
    %v3207 = vmul.f32 1.0, %v3206
    %v3208 = vtanh.pop %v3200
    %v3210 = vrot.slane %v3108, 4
    %v3212 = vmul.f32 %v3207, %v3210
    %3214 = vrot.lane.b32.xlu0 %v3208, 64
    %v3215 = vpop.permute.xlu0 %3214
    %v3217 = vmul.f32 %v3207, %v3215
    %3219 = vrot.lane.b32.xlu0 %v3217, 32
    %v3220 = vpop.permute.xlu0 %3219
    %v3222 = vadd.f32 %v3212, %v3220
    %v3223 = vtanh.pop %v3222
    %3225 = vrot.lane.b32.xlu0 %v3223, 64
    %v3226 = vpop.permute.xlu0 %3225
    %v3228 = vmul.f32 %v3207, %v3226
    %v3229 = vsub.f32 0.0, %v3201
    %v3230 = vmul.f32 %v3229, 1.442695
    %v3231 = vpow.pop %v3230
    %v3232 = vadd.f32 %v3231, 1.0
    %v3233 = vrcp.pop %v3232
    %v3234 = vmul.f32 1.0, %v3233
    %v3235 = vtanh.pop %v3201
    %v3237 = vrot.slane %v3135, 4
    %v3239 = vmul.f32 %v3234, %v3237
    %3241 = vrot.lane.b32.xlu0 %v3235, 64
    %v3242 = vpop.permute.xlu0 %3241
    %v3244 = vmul.f32 %v3234, %v3242
    %3246 = vrot.lane.b32.xlu0 %v3244, 32
    %v3247 = vpop.permute.xlu0 %3246
    %v3249 = vadd.f32 %v3239, %v3247
    %v3250 = vtanh.pop %v3249
    %3252 = vrot.lane.b32.xlu0 %v3250, 64
    %v3253 = vpop.permute.xlu0 %3252
    %v3255 = vmul.f32 %v3234, %v3253
    %3257 = vrot.lane.b32.xlu0 %v3228, 32
    %v3258 = vpop.permute.xlu0 %3257
    %v3261 = vrot.slane %v3255, 4
    %3262 = vrot.lane.b32.xlu0 %v3261, 64
    %v3263 = vpop.permute.xlu0 %3262
    %v3265 = vsel %vm291, %v3258, %v3263
    %v3266 = vpack.c.bf16 %v3265, %v3265
    %v3268 = vrot.slane %v3266, 2
    %v3270 = vsel %vm378, %v3268, 0
    %3272 = vmatprep.subr.bf16.mxu0 %v2573
    %3273 = vmatpush1.bf16.msra.mxu0 %v2572
    %3274 = vmatprep.subr.bf16.mxu0 %v2575
    %3275 = vmatpush1.bf16.msra.mxu0 %v2574
    %3276 = vmatprep.subr.bf16.mxu0 %v2577
    %3277 = vmatpush1.bf16.msra.mxu0 %v2576
    %3278 = vmatprep.subr.bf16.mxu0 %v2579
    %3279 = vmatpush1.bf16.msra.mxu0 %v2578
    %3280 = vmatprep.subr.bf16.mxu0 0
    %3281 = vmatpush1.bf16.msra.mxu0 0
    %3282 = vmatprep.subr.bf16.mxu0 0
    %3283 = vmatpush1.bf16.msra.mxu0 0
    %3284 = vmatprep.subr.bf16.mxu0 0
    %3285 = vmatpush1.bf16.msra.mxu0 0
    %3286 = vmatprep.subr.bf16.mxu0 0
    %3287 = vmatpush1.bf16.msra.mxu0 0
    %3288 = vmatprep.subr.bf16.mxu0 0
    %3289 = vmatpush1.bf16.msra.mxu0 0
    %3290 = vmatprep.subr.bf16.mxu0 0
    %3291 = vmatpush1.bf16.msra.mxu0 0
    %3292 = vmatprep.subr.bf16.mxu0 0
    %3293 = vmatpush1.bf16.msra.mxu0 0
    %3294 = vmatprep.subr.bf16.mxu0 0
    %3295 = vmatpush1.bf16.msra.mxu0 0
    %3296 = vmatprep.subr.bf16.mxu0 0
    %3297 = vmatpush1.bf16.msra.mxu0 0
    %3298 = vmatprep.subr.bf16.mxu0 0
    %3299 = vmatpush1.bf16.msra.mxu0 0
    %3300 = vmatprep.subr.bf16.mxu0 0
    %3301 = vmatpush1.bf16.msra.mxu0 0
    %3302 = vmatprep.subr.bf16.mxu0 0
    %3303 = vmatpush1.bf16.msra.mxu0 0
    %3304 = vmatprep.mubr.bf16.mxu0 0
    %3305 = vmatmul.mubr.bf16.gmra.mrb[0].mxu0 %v3270
    %v3306 = vpop.f32.mrb[0].mxu0
    %v3307 = vadd.f32 0.0, %v3306
    %v3308 = vpop.f32.mrb[0].mxu0
    %v3309 = vadd.f32 0.0, %v3308
    %v3310 = vpop.f32.mrb[0].mxu0
    %v3311 = vpop.f32.mrb[0].mxu0
    %3312 = vdwg.mxu0
    %v3313 = vadd.f32 %v2544, %v3307
    %v3315 = vrot.slane %v3309, 4
    %v3317 = vadd.f32 %v2532, %v3315
    %v3318 = vsub.f32 0.0, %v3313
    %v3319 = vmul.f32 %v3318, 1.442695
    %v3320 = vpow.pop %v3319
    %v3321 = vadd.f32 %v3320, 1.0
    %v3322 = vrcp.pop %v3321
    %v3323 = vmul.f32 1.0, %v3322
    %v3324 = vtanh.pop %v3313
    %v3326 = vrot.slane %v3222, 4
    %v3328 = vmul.f32 %v3323, %v3326
    %3330 = vrot.lane.b32.xlu0 %v3324, 64
    %v3331 = vpop.permute.xlu0 %3330
    %v3333 = vmul.f32 %v3323, %v3331
    %3335 = vrot.lane.b32.xlu0 %v3333, 32
    %v3336 = vpop.permute.xlu0 %3335
    %v3338 = vadd.f32 %v3328, %v3336
    %v3339 = vtanh.pop %v3338
    %3341 = vrot.lane.b32.xlu0 %v3339, 64
    %v3342 = vpop.permute.xlu0 %3341
    %v3344 = vmul.f32 %v3323, %v3342
    %v3345 = vsub.f32 0.0, %v3317
    %v3346 = vmul.f32 %v3345, 1.442695
    %v3347 = vpow.pop %v3346
    %v3348 = vadd.f32 %v3347, 1.0
    %v3349 = vrcp.pop %v3348
    %v3350 = vmul.f32 1.0, %v3349
    %v3351 = vtanh.pop %v3317
    %v3353 = vrot.slane %v3249, 4
    %v3355 = vmul.f32 %v3350, %v3353
    %3357 = vrot.lane.b32.xlu0 %v3351, 64
    %v3358 = vpop.permute.xlu0 %3357
    %v3360 = vmul.f32 %v3350, %v3358
    %3362 = vrot.lane.b32.xlu0 %v3360, 32
    %v3363 = vpop.permute.xlu0 %3362
    %v3365 = vadd.f32 %v3355, %v3363
    %v3366 = vtanh.pop %v3365
    %3368 = vrot.lane.b32.xlu0 %v3366, 64
    %v3369 = vpop.permute.xlu0 %3368
    %v3371 = vmul.f32 %v3350, %v3369
    %3373 = vrot.lane.b32.xlu0 %v3344, 32
    %v3374 = vpop.permute.xlu0 %3373
    %v3377 = vrot.slane %v3371, 4
    %3378 = vrot.lane.b32.xlu0 %v3377, 64
    %v3379 = vpop.permute.xlu0 %3378
    %v3381 = vsel %vm291, %v3374, %v3379
    %v3382 = vpack.c.bf16 %v3381, %v3381
    %v3384 = vsel %vm378, %v3382, 0
    %3386 = vmatprep.subr.bf16.mxu0 %v2573
    %3387 = vmatpush1.bf16.msra.mxu0 %v2572
    %3388 = vmatprep.subr.bf16.mxu0 %v2575
    %3389 = vmatpush1.bf16.msra.mxu0 %v2574
    %3390 = vmatprep.subr.bf16.mxu0 %v2577
    %3391 = vmatpush1.bf16.msra.mxu0 %v2576
    %3392 = vmatprep.subr.bf16.mxu0 %v2579
    %3393 = vmatpush1.bf16.msra.mxu0 %v2578
    %3394 = vmatprep.subr.bf16.mxu0 0
    %3395 = vmatpush1.bf16.msra.mxu0 0
    %3396 = vmatprep.subr.bf16.mxu0 0
    %3397 = vmatpush1.bf16.msra.mxu0 0
    %3398 = vmatprep.subr.bf16.mxu0 0
    %3399 = vmatpush1.bf16.msra.mxu0 0
    %3400 = vmatprep.subr.bf16.mxu0 0
    %3401 = vmatpush1.bf16.msra.mxu0 0
    %3402 = vmatprep.subr.bf16.mxu0 0
    %3403 = vmatpush1.bf16.msra.mxu0 0
    %3404 = vmatprep.subr.bf16.mxu0 0
    %3405 = vmatpush1.bf16.msra.mxu0 0
    %3406 = vmatprep.subr.bf16.mxu0 0
    %3407 = vmatpush1.bf16.msra.mxu0 0
    %3408 = vmatprep.subr.bf16.mxu0 0
    %3409 = vmatpush1.bf16.msra.mxu0 0
    %3410 = vmatprep.subr.bf16.mxu0 0
    %3411 = vmatpush1.bf16.msra.mxu0 0
    %3412 = vmatprep.subr.bf16.mxu0 0
    %3413 = vmatpush1.bf16.msra.mxu0 0
    %3414 = vmatprep.subr.bf16.mxu0 0
    %3415 = vmatpush1.bf16.msra.mxu0 0
    %3416 = vmatprep.subr.bf16.mxu0 0
    %3417 = vmatpush1.bf16.msra.mxu0 0
    %3418 = vmatprep.mubr.bf16.mxu0 0
    %3419 = vmatmul.mubr.bf16.gmra.mrb[0].mxu0 %v3384
    %v3420 = vpop.f32.mrb[0].mxu0
    %v3421 = vadd.f32 0.0, %v3420
    %v3422 = vpop.f32.mrb[0].mxu0
    %v3423 = vadd.f32 0.0, %v3422
    %v3424 = vpop.f32.mrb[0].mxu0
    %v3425 = vpop.f32.mrb[0].mxu0
    %3426 = vdwg.mxu0
    %v3428 = vrot.slane %v3421, 4
    %v3430 = vadd.f32 %v2544, %v3428
    %v3431 = vadd.f32 %v2532, %v3423
    %v3432 = vsub.f32 0.0, %v3430
    %v3433 = vmul.f32 %v3432, 1.442695
    %v3434 = vpow.pop %v3433
    %v3435 = vadd.f32 %v3434, 1.0
    %v3436 = vrcp.pop %v3435
    %v3437 = vmul.f32 1.0, %v3436
    %v3438 = vtanh.pop %v3430
    %v3440 = vrot.slane %v3338, 4
    %v3442 = vmul.f32 %v3437, %v3440
    %3444 = vrot.lane.b32.xlu0 %v3438, 64
    %v3445 = vpop.permute.xlu0 %3444
    %v3447 = vmul.f32 %v3437, %v3445
    %3449 = vrot.lane.b32.xlu0 %v3447, 32
    %v3450 = vpop.permute.xlu0 %3449
    %v3452 = vadd.f32 %v3442, %v3450
    %v3453 = vtanh.pop %v3452
    %3455 = vrot.lane.b32.xlu0 %v3453, 64
    %v3456 = vpop.permute.xlu0 %3455
    %v3458 = vmul.f32 %v3437, %v3456
    %v3459 = vsub.f32 0.0, %v3431
    %v3460 = vmul.f32 %v3459, 1.442695
    %v3461 = vpow.pop %v3460
    %v3462 = vadd.f32 %v3461, 1.0
    %v3463 = vrcp.pop %v3462
    %v3464 = vmul.f32 1.0, %v3463
    %v3465 = vtanh.pop %v3431
    %v3467 = vrot.slane %v3365, 4
    %v3469 = vmul.f32 %v3464, %v3467
    %3471 = vrot.lane.b32.xlu0 %v3465, 64
    %v3472 = vpop.permute.xlu0 %3471
    %v3474 = vmul.f32 %v3464, %v3472
    %3476 = vrot.lane.b32.xlu0 %v3474, 32
    %v3477 = vpop.permute.xlu0 %3476
    %v3479 = vadd.f32 %v3469, %v3477
    %v3480 = vtanh.pop %v3479
    %3482 = vrot.lane.b32.xlu0 %v3480, 64
    %v3483 = vpop.permute.xlu0 %3482
    %v3485 = vmul.f32 %v3464, %v3483
    %3487 = vrot.lane.b32.xlu0 %v3458, 32
    %v3488 = vpop.permute.xlu0 %3487
    %v3491 = vrot.slane %v3485, 4
    %3492 = vrot.lane.b32.xlu0 %v3491, 64
    %v3493 = vpop.permute.xlu0 %3492
    %v3495 = vsel %vm291, %v3488, %v3493
    %3496 = vrot.lane.b32.xlu0 %v3485, 64
    %v3497 = vpop.permute.xlu0 %3496
    %v3499 = vsel %vm291, %v2684, %v3497
    %3500 = vrot.lane.b32.xlu0 %v3371, 64
    %v3501 = vpop.permute.xlu0 %3500
    %v3503 = vsel %vm291, %v2798, %v3501
    %3504 = vrot.lane.b32.xlu0 %v3255, 64
    %v3505 = vpop.permute.xlu0 %3504
    %v3507 = vsel %vm291, %v2914, %v3505
    %3508 = vrot.lane.b32.xlu0 %v3141, 64
    %v3509 = vpop.permute.xlu0 %3508
    %v3511 = vsel %vm291, %v3028, %v3509
    %3512 = vrot.lane.b32.xlu0 %v3025, 64
    %v3513 = vpop.permute.xlu0 %3512
    %v3515 = vsel %vm291, %v3144, %v3513
    %3516 = vrot.lane.b32.xlu0 %v2911, 64
    %v3517 = vpop.permute.xlu0 %3516
    %v3519 = vsel %vm291, %v3258, %v3517
    %3520 = vrot.lane.b32.xlu0 %v2795, 64
    %v3521 = vpop.permute.xlu0 %3520
    %v3523 = vsel %vm291, %v3374, %v3521
    %3524 = vrot.lane.b32.xlu0 %v2681, 64
    %v3525 = vpop.permute.xlu0 %3524
    %v3527 = vsel %vm291, %v3488, %v3525
    %v3528 = vsel %vm1340, %v3499, %v3503
    %v3529 = vsel %vm1340, %v3507, %v3511
    %v3530 = vsel %vm1340, %v3515, %v3519
    %v3531 = vsel %vm1340, %v3523, %v3527
    %v3532 = vpack.c.bf16 %v3529, %v3528
    %v3533 = vpack.c.bf16 %v3531, %v3530
    %v3534 = vld [vmem:[#allocation20] sm:$0xff]
    %v3535 = vld [vmem:[#allocation20 + $0x8] sm:$0xff]
    %v3536 = vld [vmem:[#allocation20 + $0x10] sm:$0xff]
    %v3537 = vld [vmem:[#allocation20 + $0x18] sm:$0xff]
    %v3538 = vld [vmem:[#allocation20 + $0x20] sm:$0xff]
    %v3539 = vld [vmem:[#allocation20 + $0x28] sm:$0xff]
    %v3540 = vld [vmem:[#allocation20 + $0x30] sm:$0xff]
    %v3541 = vld [vmem:[#allocation20 + $0x38] sm:$0xff]
    %v3542 = vld [vmem:[#allocation22] sm:$0xff]
    %v3543 = vld [vmem:[#allocation22 + $0x8] sm:$0xff]
    %v3544 = vld [vmem:[#allocation22 + $0x10] sm:$0xff]
    %v3545 = vld [vmem:[#allocation22 + $0x18] sm:$0xff]
    %v3546 = vld [vmem:[#allocation22 + $0x20] sm:$0xff]
    %v3547 = vld [vmem:[#allocation22 + $0x28] sm:$0xff]
    %v3548 = vld [vmem:[#allocation22 + $0x30] sm:$0xff]
    %v3549 = vld [vmem:[#allocation22 + $0x38] sm:$0xff]
    %v3550 = vld [vmem:[#allocation23] sm:$0x3]
    %v3552 = vlaneseq
    %v3553 = vshrl.u32 %v3552, 7
    %v3554 = vsub.s32 0, %v3553
    %v3555 = vrot.slane %v3550, %v3554
    %v3556 = vlaneseq
    %v3557 = vshrl.u32 %v3556, 7
    %v3558 = vsub.s32 1, %v3557
    %v3559 = vrot.slane %v3550, %v3558
    %v3570 = vunpack.c.l.b16 %v3534
    %v3571 = vunpack.c.h.b16 %v3534
    %v3572 = vunpack.c.l.b16 %v3535
    %v3573 = vunpack.c.h.b16 %v3535
    %v3574 = vunpack.c.l.b16 %v3536
    %v3575 = vunpack.c.h.b16 %v3536
    %v3576 = vunpack.c.l.b16 %v3537
    %v3577 = vunpack.c.h.b16 %v3537
    %v3578 = vunpack.c.l.b16 %v3538
    %v3579 = vunpack.c.h.b16 %v3538
    %v3580 = vunpack.c.l.b16 %v3539
    %v3581 = vunpack.c.h.b16 %v3539
    %v3582 = vunpack.c.l.b16 %v3540
    %v3583 = vunpack.c.h.b16 %v3540
    %v3584 = vunpack.c.l.b16 %v3541
    %v3585 = vunpack.c.h.b16 %v3541
    %v3586 = vpack.c.b16 %v3572, %v3570
    %v3587 = vpack.c.b16 %v3573, %v3571
    %v3588 = vpack.c.b16 %v3576, %v3574
    %v3589 = vpack.c.b16 %v3577, %v3575
    %v3590 = vpack.c.b16 %v3580, %v3578
    %v3591 = vpack.c.b16 %v3581, %v3579
    %v3592 = vpack.c.b16 %v3584, %v3582
    %v3593 = vpack.c.b16 %v3585, %v3583
    %v3603 = vsel %vm378, %v3532, 0
    %v3606 = vsel %vm378, %v3533, 0
    %3608 = vmatprep.subr.bf16.mxu0 %v3587
    %3609 = vmatpush1.bf16.msra.mxu0 %v3586
    %3610 = vmatprep.subr.bf16.mxu0 %v3589
    %3611 = vmatpush1.bf16.msra.mxu0 %v3588
    %3612 = vmatprep.subr.bf16.mxu0 %v3591
    %3613 = vmatpush1.bf16.msra.mxu0 %v3590
    %3614 = vmatprep.subr.bf16.mxu0 %v3593
    %3615 = vmatpush1.bf16.msra.mxu0 %v3592
    %3616 = vmatprep.subr.bf16.mxu0 0
    %3617 = vmatpush1.bf16.msra.mxu0 0
    %3618 = vmatprep.subr.bf16.mxu0 0
    %3619 = vmatpush1.bf16.msra.mxu0 0
    %3620 = vmatprep.subr.bf16.mxu0 0
    %3621 = vmatpush1.bf16.msra.mxu0 0
    %3622 = vmatprep.subr.bf16.mxu0 0
    %3623 = vmatpush1.bf16.msra.mxu0 0
    %3624 = vmatprep.subr.bf16.mxu0 0
    %3625 = vmatpush1.bf16.msra.mxu0 0
    %3626 = vmatprep.subr.bf16.mxu0 0
    %3627 = vmatpush1.bf16.msra.mxu0 0
    %3628 = vmatprep.subr.bf16.mxu0 0
    %3629 = vmatpush1.bf16.msra.mxu0 0
    %3630 = vmatprep.subr.bf16.mxu0 0
    %3631 = vmatpush1.bf16.msra.mxu0 0
    %3632 = vmatprep.subr.bf16.mxu0 0
    %3633 = vmatpush1.bf16.msra.mxu0 0
    %3634 = vmatprep.subr.bf16.mxu0 0
    %3635 = vmatpush1.bf16.msra.mxu0 0
    %3636 = vmatprep.subr.bf16.mxu0 0
    %3637 = vmatpush1.bf16.msra.mxu0 0
    %3638 = vmatprep.subr.bf16.mxu0 0
    %3639 = vmatpush1.bf16.msra.mxu0 0
    %3640 = vmatprep.mubr.bf16.mxu0 0
    %3641 = vmatmul.mubr.bf16.gmra.mrb[0].mxu0 %v3603
    %v3642 = vpop.f32.mrb[0].mxu0
    %v3643 = vadd.f32 %v3555, %v3642
    %v3644 = vpop.f32.mrb[0].mxu0
    %v3645 = vadd.f32 %v3559, %v3644
    %v3646 = vpop.f32.mrb[0].mxu0
    %v3647 = vadd.f32 %v3555, %v3646
    %v3648 = vpop.f32.mrb[0].mxu0
    %v3649 = vadd.f32 %v3559, %v3648
    %3650 = vmatprep.mubr.bf16.mxu0 0
    %3651 = vmatmul.mubr.bf16.gmra.mrb[0].mxu0 %v3606
    %v3652 = vpop.f32.mrb[0].mxu0
    %v3653 = vadd.f32 %v3555, %v3652
    %v3654 = vpop.f32.mrb[0].mxu0
    %v3655 = vadd.f32 %v3559, %v3654
    %v3656 = vpop.f32.mrb[0].mxu0
    %v3657 = vadd.f32 %v3555, %v3656
    %v3658 = vpop.f32.mrb[0].mxu0
    %v3659 = vadd.f32 %v3559, %v3658
    %3660 = vdwg.mxu0
    %v3669 = vunpack.c.l.b16 %v3542
    %v3670 = vunpack.c.h.b16 %v3542
    %v3671 = vunpack.c.l.b16 %v3543
    %v3672 = vunpack.c.h.b16 %v3543
    %v3673 = vunpack.c.l.b16 %v3544
    %v3674 = vunpack.c.h.b16 %v3544
    %v3675 = vunpack.c.l.b16 %v3545
    %v3676 = vunpack.c.h.b16 %v3545
    %v3677 = vunpack.c.l.b16 %v3546
    %v3678 = vunpack.c.h.b16 %v3546
    %v3679 = vunpack.c.l.b16 %v3547
    %v3680 = vunpack.c.h.b16 %v3547
    %v3681 = vunpack.c.l.b16 %v3548
    %v3682 = vunpack.c.h.b16 %v3548
    %v3683 = vunpack.c.l.b16 %v3549
    %v3684 = vunpack.c.h.b16 %v3549
    %v3685 = vpack.c.b16 %v3671, %v3669
    %v3686 = vpack.c.b16 %v3672, %v3670
    %v3687 = vpack.c.b16 %v3675, %v3673
    %v3688 = vpack.c.b16 %v3676, %v3674
    %v3689 = vpack.c.b16 %v3679, %v3677
    %v3690 = vpack.c.b16 %v3680, %v3678
    %v3691 = vpack.c.b16 %v3683, %v3681
    %v3692 = vpack.c.b16 %v3684, %v3682
    %3701 = vmatprep.subr.bf16.mxu0 %v3686
    %3702 = vmatpush1.bf16.msra.mxu0 %v3685
    %3703 = vmatprep.subr.bf16.mxu0 %v3688
    %3704 = vmatpush1.bf16.msra.mxu0 %v3687
    %3705 = vmatprep.subr.bf16.mxu0 %v3690
    %3706 = vmatpush1.bf16.msra.mxu0 %v3689
    %3707 = vmatprep.subr.bf16.mxu0 %v3692
    %3708 = vmatpush1.bf16.msra.mxu0 %v3691
    %3709 = vmatprep.subr.bf16.mxu0 0
    %3710 = vmatpush1.bf16.msra.mxu0 0
    %3711 = vmatprep.subr.bf16.mxu0 0
    %3712 = vmatpush1.bf16.msra.mxu0 0
    %3713 = vmatprep.subr.bf16.mxu0 0
    %3714 = vmatpush1.bf16.msra.mxu0 0
    %3715 = vmatprep.subr.bf16.mxu0 0
    %3716 = vmatpush1.bf16.msra.mxu0 0
    %3717 = vmatprep.subr.bf16.mxu0 0
    %3718 = vmatpush1.bf16.msra.mxu0 0
    %3719 = vmatprep.subr.bf16.mxu0 0
    %3720 = vmatpush1.bf16.msra.mxu0 0
    %3721 = vmatprep.subr.bf16.mxu0 0
    %3722 = vmatpush1.bf16.msra.mxu0 0
    %3723 = vmatprep.subr.bf16.mxu0 0
    %3724 = vmatpush1.bf16.msra.mxu0 0
    %3725 = vmatprep.subr.bf16.mxu0 0
    %3726 = vmatpush1.bf16.msra.mxu0 0
    %3727 = vmatprep.subr.bf16.mxu0 0
    %3728 = vmatpush1.bf16.msra.mxu0 0
    %3729 = vmatprep.subr.bf16.mxu0 0
    %3730 = vmatpush1.bf16.msra.mxu0 0
    %3731 = vmatprep.subr.bf16.mxu0 0
    %3732 = vmatpush1.bf16.msra.mxu0 0
    %3733 = vmatprep.mubr.bf16.mxu0 0
    %3734 = vmatmul.mubr.bf16.gmra.mrb[0].mxu0 %v380
    %v3735 = vpop.f32.mrb[0].mxu0
    %v3736 = vadd.f32 0.0, %v3735
    %v3737 = vpop.f32.mrb[0].mxu0
    %v3738 = vadd.f32 0.0, %v3737
    %v3739 = vpop.f32.mrb[0].mxu0
    %v3740 = vpop.f32.mrb[0].mxu0
    %3741 = vdwg.mxu0
    %v3742 = vadd.f32 %v3643, %v3736
    %v3744 = vrot.slane %v3738, 4
    %v3746 = vadd.f32 %v3659, %v3744
    %v3747 = vsub.f32 0.0, %v3742
    %v3748 = vmul.f32 %v3747, 1.442695
    %v3749 = vpow.pop %v3748
    %v3750 = vadd.f32 %v3749, 1.0
    %v3751 = vrcp.pop %v3750
    %v3752 = vmul.f32 1.0, %v3751
    %v3753 = vtanh.pop %v3742
    %v3754 = vmul.f32 %v3752, 0.0
    %3756 = vrot.lane.b32.xlu0 %v3753, 64
    %v3757 = vpop.permute.xlu0 %3756
    %v3759 = vmul.f32 %v3752, %v3757
    %3761 = vrot.lane.b32.xlu0 %v3759, 32
    %v3762 = vpop.permute.xlu0 %3761
    %v3764 = vadd.f32 %v3754, %v3762
    %v3765 = vtanh.pop %v3764
    %3767 = vrot.lane.b32.xlu0 %v3765, 64
    %v3768 = vpop.permute.xlu0 %3767
    %v3770 = vmul.f32 %v3752, %v3768
    %v3771 = vsub.f32 0.0, %v3746
    %v3772 = vmul.f32 %v3771, 1.442695
    %v3773 = vpow.pop %v3772
    %v3774 = vadd.f32 %v3773, 1.0
    %v3775 = vrcp.pop %v3774
    %v3776 = vmul.f32 1.0, %v3775
    %v3777 = vtanh.pop %v3746
    %v3778 = vmul.f32 %v3776, 0.0
    %3780 = vrot.lane.b32.xlu0 %v3777, 64
    %v3781 = vpop.permute.xlu0 %3780
    %v3783 = vmul.f32 %v3776, %v3781
    %3785 = vrot.lane.b32.xlu0 %v3783, 32
    %v3786 = vpop.permute.xlu0 %3785
    %v3788 = vadd.f32 %v3778, %v3786
    %v3789 = vtanh.pop %v3788
    %3791 = vrot.lane.b32.xlu0 %v3789, 64
    %v3792 = vpop.permute.xlu0 %3791
    %v3794 = vmul.f32 %v3776, %v3792
    %3796 = vrot.lane.b32.xlu0 %v3770, 32
    %v3797 = vpop.permute.xlu0 %3796
    %v3800 = vrot.slane %v3794, 4
    %3801 = vrot.lane.b32.xlu0 %v3800, 64
    %v3802 = vpop.permute.xlu0 %3801
    %v3804 = vsel %vm291, %v3797, %v3802
    %v3805 = vpack.c.bf16 %v3804, %v3804
    %v3807 = vsel %vm378, %v3805, 0
    %3809 = vmatprep.subr.bf16.mxu0 %v3686
    %3810 = vmatpush1.bf16.msra.mxu0 %v3685
    %3811 = vmatprep.subr.bf16.mxu0 %v3688
    %3812 = vmatpush1.bf16.msra.mxu0 %v3687
    %3813 = vmatprep.subr.bf16.mxu0 %v3690
    %3814 = vmatpush1.bf16.msra.mxu0 %v3689
    %3815 = vmatprep.subr.bf16.mxu0 %v3692
    %3816 = vmatpush1.bf16.msra.mxu0 %v3691
    %3817 = vmatprep.subr.bf16.mxu0 0
    %3818 = vmatpush1.bf16.msra.mxu0 0
    %3819 = vmatprep.subr.bf16.mxu0 0
    %3820 = vmatpush1.bf16.msra.mxu0 0
    %3821 = vmatprep.subr.bf16.mxu0 0
    %3822 = vmatpush1.bf16.msra.mxu0 0
    %3823 = vmatprep.subr.bf16.mxu0 0
    %3824 = vmatpush1.bf16.msra.mxu0 0
    %3825 = vmatprep.subr.bf16.mxu0 0
    %3826 = vmatpush1.bf16.msra.mxu0 0
    %3827 = vmatprep.subr.bf16.mxu0 0
    %3828 = vmatpush1.bf16.msra.mxu0 0
    %3829 = vmatprep.subr.bf16.mxu0 0
    %3830 = vmatpush1.bf16.msra.mxu0 0
    %3831 = vmatprep.subr.bf16.mxu0 0
    %3832 = vmatpush1.bf16.msra.mxu0 0
    %3833 = vmatprep.subr.bf16.mxu0 0
    %3834 = vmatpush1.bf16.msra.mxu0 0
    %3835 = vmatprep.subr.bf16.mxu0 0
    %3836 = vmatpush1.bf16.msra.mxu0 0
    %3837 = vmatprep.subr.bf16.mxu0 0
    %3838 = vmatpush1.bf16.msra.mxu0 0
    %3839 = vmatprep.subr.bf16.mxu0 0
    %3840 = vmatpush1.bf16.msra.mxu0 0
    %3841 = vmatprep.mubr.bf16.mxu0 0
    %3842 = vmatmul.mubr.bf16.gmra.mrb[0].mxu0 %v3807
    %v3843 = vpop.f32.mrb[0].mxu0
    %v3844 = vadd.f32 0.0, %v3843
    %v3845 = vpop.f32.mrb[0].mxu0
    %v3846 = vadd.f32 0.0, %v3845
    %v3847 = vpop.f32.mrb[0].mxu0
    %v3848 = vpop.f32.mrb[0].mxu0
    %3849 = vdwg.mxu0
    %v3851 = vrot.slane %v3844, 4
    %v3853 = vadd.f32 %v3643, %v3851
    %v3854 = vadd.f32 %v3659, %v3846
    %v3855 = vsub.f32 0.0, %v3853
    %v3856 = vmul.f32 %v3855, 1.442695
    %v3857 = vpow.pop %v3856
    %v3858 = vadd.f32 %v3857, 1.0
    %v3859 = vrcp.pop %v3858
    %v3860 = vmul.f32 1.0, %v3859
    %v3861 = vtanh.pop %v3853
    %v3863 = vrot.slane %v3764, 4
    %v3865 = vmul.f32 %v3860, %v3863
    %3867 = vrot.lane.b32.xlu0 %v3861, 64
    %v3868 = vpop.permute.xlu0 %3867
    %v3870 = vmul.f32 %v3860, %v3868
    %3872 = vrot.lane.b32.xlu0 %v3870, 32
    %v3873 = vpop.permute.xlu0 %3872
    %v3875 = vadd.f32 %v3865, %v3873
    %v3876 = vtanh.pop %v3875
    %3878 = vrot.lane.b32.xlu0 %v3876, 64
    %v3879 = vpop.permute.xlu0 %3878
    %v3881 = vmul.f32 %v3860, %v3879
    %v3882 = vsub.f32 0.0, %v3854
    %v3883 = vmul.f32 %v3882, 1.442695
    %v3884 = vpow.pop %v3883
    %v3885 = vadd.f32 %v3884, 1.0
    %v3886 = vrcp.pop %v3885
    %v3887 = vmul.f32 1.0, %v3886
    %v3888 = vtanh.pop %v3854
    %v3890 = vrot.slane %v3788, 4
    %v3892 = vmul.f32 %v3887, %v3890
    %3894 = vrot.lane.b32.xlu0 %v3888, 64
    %v3895 = vpop.permute.xlu0 %3894
    %v3897 = vmul.f32 %v3887, %v3895
    %3899 = vrot.lane.b32.xlu0 %v3897, 32
    %v3900 = vpop.permute.xlu0 %3899
    %v3902 = vadd.f32 %v3892, %v3900
    %v3903 = vtanh.pop %v3902
    %3905 = vrot.lane.b32.xlu0 %v3903, 64
    %v3906 = vpop.permute.xlu0 %3905
    %v3908 = vmul.f32 %v3887, %v3906
    %3910 = vrot.lane.b32.xlu0 %v3881, 32
    %v3911 = vpop.permute.xlu0 %3910
    %v3914 = vrot.slane %v3908, 4
    %3915 = vrot.lane.b32.xlu0 %v3914, 64
    %v3916 = vpop.permute.xlu0 %3915
    %v3918 = vsel %vm291, %v3911, %v3916
    %v3919 = vpack.c.bf16 %v3918, %v3918
    %v3921 = vrot.slane %v3919, 2
    %v3923 = vsel %vm378, %v3921, 0
    %3925 = vmatprep.subr.bf16.mxu0 %v3686
    %3926 = vmatpush1.bf16.msra.mxu0 %v3685
    %3927 = vmatprep.subr.bf16.mxu0 %v3688
    %3928 = vmatpush1.bf16.msra.mxu0 %v3687
    %3929 = vmatprep.subr.bf16.mxu0 %v3690
    %3930 = vmatpush1.bf16.msra.mxu0 %v3689
    %3931 = vmatprep.subr.bf16.mxu0 %v3692
    %3932 = vmatpush1.bf16.msra.mxu0 %v3691
    %3933 = vmatprep.subr.bf16.mxu0 0
    %3934 = vmatpush1.bf16.msra.mxu0 0
    %3935 = vmatprep.subr.bf16.mxu0 0
    %3936 = vmatpush1.bf16.msra.mxu0 0
    %3937 = vmatprep.subr.bf16.mxu0 0
    %3938 = vmatpush1.bf16.msra.mxu0 0
    %3939 = vmatprep.subr.bf16.mxu0 0
    %3940 = vmatpush1.bf16.msra.mxu0 0
    %3941 = vmatprep.subr.bf16.mxu0 0
    %3942 = vmatpush1.bf16.msra.mxu0 0
    %3943 = vmatprep.subr.bf16.mxu0 0
    %3944 = vmatpush1.bf16.msra.mxu0 0
    %3945 = vmatprep.subr.bf16.mxu0 0
    %3946 = vmatpush1.bf16.msra.mxu0 0
    %3947 = vmatprep.subr.bf16.mxu0 0
    %3948 = vmatpush1.bf16.msra.mxu0 0
    %3949 = vmatprep.subr.bf16.mxu0 0
    %3950 = vmatpush1.bf16.msra.mxu0 0
    %3951 = vmatprep.subr.bf16.mxu0 0
    %3952 = vmatpush1.bf16.msra.mxu0 0
    %3953 = vmatprep.subr.bf16.mxu0 0
    %3954 = vmatpush1.bf16.msra.mxu0 0
    %3955 = vmatprep.subr.bf16.mxu0 0
    %3956 = vmatpush1.bf16.msra.mxu0 0
    %3957 = vmatprep.mubr.bf16.mxu0 0
    %3958 = vmatmul.mubr.bf16.gmra.mrb[0].mxu0 %v3923
    %v3959 = vpop.f32.mrb[0].mxu0
    %v3960 = vadd.f32 0.0, %v3959
    %v3961 = vpop.f32.mrb[0].mxu0
    %v3962 = vadd.f32 0.0, %v3961
    %v3963 = vpop.f32.mrb[0].mxu0
    %v3964 = vpop.f32.mrb[0].mxu0
    %3965 = vdwg.mxu0
    %v3966 = vadd.f32 %v3647, %v3960
    %v3968 = vrot.slane %v3962, 4
    %v3970 = vadd.f32 %v3655, %v3968
    %v3971 = vsub.f32 0.0, %v3966
    %v3972 = vmul.f32 %v3971, 1.442695
    %v3973 = vpow.pop %v3972
    %v3974 = vadd.f32 %v3973, 1.0
    %v3975 = vrcp.pop %v3974
    %v3976 = vmul.f32 1.0, %v3975
    %v3977 = vtanh.pop %v3966
    %v3979 = vrot.slane %v3875, 4
    %v3981 = vmul.f32 %v3976, %v3979
    %3983 = vrot.lane.b32.xlu0 %v3977, 64
    %v3984 = vpop.permute.xlu0 %3983
    %v3986 = vmul.f32 %v3976, %v3984
    %3988 = vrot.lane.b32.xlu0 %v3986, 32
    %v3989 = vpop.permute.xlu0 %3988
    %v3991 = vadd.f32 %v3981, %v3989
    %v3992 = vtanh.pop %v3991
    %3994 = vrot.lane.b32.xlu0 %v3992, 64
    %v3995 = vpop.permute.xlu0 %3994
    %v3997 = vmul.f32 %v3976, %v3995
    %v3998 = vsub.f32 0.0, %v3970
    %v3999 = vmul.f32 %v3998, 1.442695
    %v4000 = vpow.pop %v3999
    %v4001 = vadd.f32 %v4000, 1.0
    %v4002 = vrcp.pop %v4001
    %v4003 = vmul.f32 1.0, %v4002
    %v4004 = vtanh.pop %v3970
    %v4006 = vrot.slane %v3902, 4
    %v4008 = vmul.f32 %v4003, %v4006
    %4010 = vrot.lane.b32.xlu0 %v4004, 64
    %v4011 = vpop.permute.xlu0 %4010
    %v4013 = vmul.f32 %v4003, %v4011
    %4015 = vrot.lane.b32.xlu0 %v4013, 32
    %v4016 = vpop.permute.xlu0 %4015
    %v4018 = vadd.f32 %v4008, %v4016
    %v4019 = vtanh.pop %v4018
    %4021 = vrot.lane.b32.xlu0 %v4019, 64
    %v4022 = vpop.permute.xlu0 %4021
    %v4024 = vmul.f32 %v4003, %v4022
    %4026 = vrot.lane.b32.xlu0 %v3997, 32
    %v4027 = vpop.permute.xlu0 %4026
    %v4030 = vrot.slane %v4024, 4
    %4031 = vrot.lane.b32.xlu0 %v4030, 64
    %v4032 = vpop.permute.xlu0 %4031
    %v4034 = vsel %vm291, %v4027, %v4032
    %v4035 = vpack.c.bf16 %v4034, %v4034
    %v4037 = vsel %vm378, %v4035, 0
    %4039 = vmatprep.subr.bf16.mxu0 %v3686
    %4040 = vmatpush1.bf16.msra.mxu0 %v3685
    %4041 = vmatprep.subr.bf16.mxu0 %v3688
    %4042 = vmatpush1.bf16.msra.mxu0 %v3687
    %4043 = vmatprep.subr.bf16.mxu0 %v3690
    %4044 = vmatpush1.bf16.msra.mxu0 %v3689
    %4045 = vmatprep.subr.bf16.mxu0 %v3692
    %4046 = vmatpush1.bf16.msra.mxu0 %v3691
    %4047 = vmatprep.subr.bf16.mxu0 0
    %4048 = vmatpush1.bf16.msra.mxu0 0
    %4049 = vmatprep.subr.bf16.mxu0 0
    %4050 = vmatpush1.bf16.msra.mxu0 0
    %4051 = vmatprep.subr.bf16.mxu0 0
    %4052 = vmatpush1.bf16.msra.mxu0 0
    %4053 = vmatprep.subr.bf16.mxu0 0
    %4054 = vmatpush1.bf16.msra.mxu0 0
    %4055 = vmatprep.subr.bf16.mxu0 0
    %4056 = vmatpush1.bf16.msra.mxu0 0
    %4057 = vmatprep.subr.bf16.mxu0 0
    %4058 = vmatpush1.bf16.msra.mxu0 0
    %4059 = vmatprep.subr.bf16.mxu0 0
    %4060 = vmatpush1.bf16.msra.mxu0 0
    %4061 = vmatprep.subr.bf16.mxu0 0
    %4062 = vmatpush1.bf16.msra.mxu0 0
    %4063 = vmatprep.subr.bf16.mxu0 0
    %4064 = vmatpush1.bf16.msra.mxu0 0
    %4065 = vmatprep.subr.bf16.mxu0 0
    %4066 = vmatpush1.bf16.msra.mxu0 0
    %4067 = vmatprep.subr.bf16.mxu0 0
    %4068 = vmatpush1.bf16.msra.mxu0 0
    %4069 = vmatprep.subr.bf16.mxu0 0
    %4070 = vmatpush1.bf16.msra.mxu0 0
    %4071 = vmatprep.mubr.bf16.mxu0 0
    %4072 = vmatmul.mubr.bf16.gmra.mrb[0].mxu0 %v4037
    %v4073 = vpop.f32.mrb[0].mxu0
    %v4074 = vadd.f32 0.0, %v4073
    %v4075 = vpop.f32.mrb[0].mxu0
    %v4076 = vadd.f32 0.0, %v4075
    %v4077 = vpop.f32.mrb[0].mxu0
    %v4078 = vpop.f32.mrb[0].mxu0
    %4079 = vdwg.mxu0
    %v4081 = vrot.slane %v4074, 4
    %v4083 = vadd.f32 %v3647, %v4081
    %v4084 = vadd.f32 %v3655, %v4076
    %v4085 = vsub.f32 0.0, %v4083
    %v4086 = vmul.f32 %v4085, 1.442695
    %v4087 = vpow.pop %v4086
    %v4088 = vadd.f32 %v4087, 1.0
    %v4089 = vrcp.pop %v4088
    %v4090 = vmul.f32 1.0, %v4089
    %v4091 = vtanh.pop %v4083
    %v4093 = vrot.slane %v3991, 4
    %v4095 = vmul.f32 %v4090, %v4093
    %4097 = vrot.lane.b32.xlu0 %v4091, 64
    %v4098 = vpop.permute.xlu0 %4097
    %v4100 = vmul.f32 %v4090, %v4098
    %4102 = vrot.lane.b32.xlu0 %v4100, 32
    %v4103 = vpop.permute.xlu0 %4102
    %v4105 = vadd.f32 %v4095, %v4103
    %v4106 = vtanh.pop %v4105
    %4108 = vrot.lane.b32.xlu0 %v4106, 64
    %v4109 = vpop.permute.xlu0 %4108
    %v4111 = vmul.f32 %v4090, %v4109
    %v4112 = vsub.f32 0.0, %v4084
    %v4113 = vmul.f32 %v4112, 1.442695
    %v4114 = vpow.pop %v4113
    %v4115 = vadd.f32 %v4114, 1.0
    %v4116 = vrcp.pop %v4115
    %v4117 = vmul.f32 1.0, %v4116
    %v4118 = vtanh.pop %v4084
    %v4120 = vrot.slane %v4018, 4
    %v4122 = vmul.f32 %v4117, %v4120
    %4124 = vrot.lane.b32.xlu0 %v4118, 64
    %v4125 = vpop.permute.xlu0 %4124
    %v4127 = vmul.f32 %v4117, %v4125
    %4129 = vrot.lane.b32.xlu0 %v4127, 32
    %v4130 = vpop.permute.xlu0 %4129
    %v4132 = vadd.f32 %v4122, %v4130
    %v4133 = vtanh.pop %v4132
    %4135 = vrot.lane.b32.xlu0 %v4133, 64
    %v4136 = vpop.permute.xlu0 %4135
    %v4138 = vmul.f32 %v4117, %v4136
    %4140 = vrot.lane.b32.xlu0 %v4111, 32
    %v4141 = vpop.permute.xlu0 %4140
    %v4144 = vrot.slane %v4138, 4
    %4145 = vrot.lane.b32.xlu0 %v4144, 64
    %v4146 = vpop.permute.xlu0 %4145
    %v4148 = vsel %vm291, %v4141, %v4146
    %v4149 = vpack.c.bf16 %v4148, %v4148
    %v4151 = vrot.slane %v4149, 2
    %v4153 = vsel %vm378, %v4151, 0
    %4155 = vmatprep.subr.bf16.mxu0 %v3686
    %4156 = vmatpush1.bf16.msra.mxu0 %v3685
    %4157 = vmatprep.subr.bf16.mxu0 %v3688
    %4158 = vmatpush1.bf16.msra.mxu0 %v3687
    %4159 = vmatprep.subr.bf16.mxu0 %v3690
    %4160 = vmatpush1.bf16.msra.mxu0 %v3689
    %4161 = vmatprep.subr.bf16.mxu0 %v3692
    %4162 = vmatpush1.bf16.msra.mxu0 %v3691
    %4163 = vmatprep.subr.bf16.mxu0 0
    %4164 = vmatpush1.bf16.msra.mxu0 0
    %4165 = vmatprep.subr.bf16.mxu0 0
    %4166 = vmatpush1.bf16.msra.mxu0 0
    %4167 = vmatprep.subr.bf16.mxu0 0
    %4168 = vmatpush1.bf16.msra.mxu0 0
    %4169 = vmatprep.subr.bf16.mxu0 0
    %4170 = vmatpush1.bf16.msra.mxu0 0
    %4171 = vmatprep.subr.bf16.mxu0 0
    %4172 = vmatpush1.bf16.msra.mxu0 0
    %4173 = vmatprep.subr.bf16.mxu0 0
    %4174 = vmatpush1.bf16.msra.mxu0 0
    %4175 = vmatprep.subr.bf16.mxu0 0
    %4176 = vmatpush1.bf16.msra.mxu0 0
    %4177 = vmatprep.subr.bf16.mxu0 0
    %4178 = vmatpush1.bf16.msra.mxu0 0
    %4179 = vmatprep.subr.bf16.mxu0 0
    %4180 = vmatpush1.bf16.msra.mxu0 0
    %4181 = vmatprep.subr.bf16.mxu0 0
    %4182 = vmatpush1.bf16.msra.mxu0 0
    %4183 = vmatprep.subr.bf16.mxu0 0
    %4184 = vmatpush1.bf16.msra.mxu0 0
    %4185 = vmatprep.subr.bf16.mxu0 0
    %4186 = vmatpush1.bf16.msra.mxu0 0
    %4187 = vmatprep.mubr.bf16.mxu0 0
    %4188 = vmatmul.mubr.bf16.gmra.mrb[0].mxu0 %v4153
    %v4189 = vpop.f32.mrb[0].mxu0
    %v4190 = vadd.f32 0.0, %v4189
    %v4191 = vpop.f32.mrb[0].mxu0
    %v4192 = vadd.f32 0.0, %v4191
    %v4193 = vpop.f32.mrb[0].mxu0
    %v4194 = vpop.f32.mrb[0].mxu0
    %4195 = vdwg.mxu0
    %v4196 = vadd.f32 %v3653, %v4190
    %v4198 = vrot.slane %v4192, 4
    %v4200 = vadd.f32 %v3649, %v4198
    %v4201 = vsub.f32 0.0, %v4196
    %v4202 = vmul.f32 %v4201, 1.442695
    %v4203 = vpow.pop %v4202
    %v4204 = vadd.f32 %v4203, 1.0
    %v4205 = vrcp.pop %v4204
    %v4206 = vmul.f32 1.0, %v4205
    %v4207 = vtanh.pop %v4196
    %v4209 = vrot.slane %v4105, 4
    %v4211 = vmul.f32 %v4206, %v4209
    %4213 = vrot.lane.b32.xlu0 %v4207, 64
    %v4214 = vpop.permute.xlu0 %4213
    %v4216 = vmul.f32 %v4206, %v4214
    %4218 = vrot.lane.b32.xlu0 %v4216, 32
    %v4219 = vpop.permute.xlu0 %4218
    %v4221 = vadd.f32 %v4211, %v4219
    %v4222 = vtanh.pop %v4221
    %4224 = vrot.lane.b32.xlu0 %v4222, 64
    %v4225 = vpop.permute.xlu0 %4224
    %v4227 = vmul.f32 %v4206, %v4225
    %v4228 = vsub.f32 0.0, %v4200
    %v4229 = vmul.f32 %v4228, 1.442695
    %v4230 = vpow.pop %v4229
    %v4231 = vadd.f32 %v4230, 1.0
    %v4232 = vrcp.pop %v4231
    %v4233 = vmul.f32 1.0, %v4232
    %v4234 = vtanh.pop %v4200
    %v4236 = vrot.slane %v4132, 4
    %v4238 = vmul.f32 %v4233, %v4236
    %4240 = vrot.lane.b32.xlu0 %v4234, 64
    %v4241 = vpop.permute.xlu0 %4240
    %v4243 = vmul.f32 %v4233, %v4241
    %4245 = vrot.lane.b32.xlu0 %v4243, 32
    %v4246 = vpop.permute.xlu0 %4245
    %v4248 = vadd.f32 %v4238, %v4246
    %v4249 = vtanh.pop %v4248
    %4251 = vrot.lane.b32.xlu0 %v4249, 64
    %v4252 = vpop.permute.xlu0 %4251
    %v4254 = vmul.f32 %v4233, %v4252
    %4256 = vrot.lane.b32.xlu0 %v4227, 32
    %v4257 = vpop.permute.xlu0 %4256
    %v4260 = vrot.slane %v4254, 4
    %4261 = vrot.lane.b32.xlu0 %v4260, 64
    %v4262 = vpop.permute.xlu0 %4261
    %v4264 = vsel %vm291, %v4257, %v4262
    %v4265 = vpack.c.bf16 %v4264, %v4264
    %v4267 = vsel %vm378, %v4265, 0
    %4269 = vmatprep.subr.bf16.mxu0 %v3686
    %4270 = vmatpush1.bf16.msra.mxu0 %v3685
    %4271 = vmatprep.subr.bf16.mxu0 %v3688
    %4272 = vmatpush1.bf16.msra.mxu0 %v3687
    %4273 = vmatprep.subr.bf16.mxu0 %v3690
    %4274 = vmatpush1.bf16.msra.mxu0 %v3689
    %4275 = vmatprep.subr.bf16.mxu0 %v3692
    %4276 = vmatpush1.bf16.msra.mxu0 %v3691
    %4277 = vmatprep.subr.bf16.mxu0 0
    %4278 = vmatpush1.bf16.msra.mxu0 0
    %4279 = vmatprep.subr.bf16.mxu0 0
    %4280 = vmatpush1.bf16.msra.mxu0 0
    %4281 = vmatprep.subr.bf16.mxu0 0
    %4282 = vmatpush1.bf16.msra.mxu0 0
    %4283 = vmatprep.subr.bf16.mxu0 0
    %4284 = vmatpush1.bf16.msra.mxu0 0
    %4285 = vmatprep.subr.bf16.mxu0 0
    %4286 = vmatpush1.bf16.msra.mxu0 0
    %4287 = vmatprep.subr.bf16.mxu0 0
    %4288 = vmatpush1.bf16.msra.mxu0 0
    %4289 = vmatprep.subr.bf16.mxu0 0
    %4290 = vmatpush1.bf16.msra.mxu0 0
    %4291 = vmatprep.subr.bf16.mxu0 0
    %4292 = vmatpush1.bf16.msra.mxu0 0
    %4293 = vmatprep.subr.bf16.mxu0 0
    %4294 = vmatpush1.bf16.msra.mxu0 0
    %4295 = vmatprep.subr.bf16.mxu0 0
    %4296 = vmatpush1.bf16.msra.mxu0 0
    %4297 = vmatprep.subr.bf16.mxu0 0
    %4298 = vmatpush1.bf16.msra.mxu0 0
    %4299 = vmatprep.subr.bf16.mxu0 0
    %4300 = vmatpush1.bf16.msra.mxu0 0
    %4301 = vmatprep.mubr.bf16.mxu0 0
    %4302 = vmatmul.mubr.bf16.gmra.mrb[0].mxu0 %v4267
    %v4303 = vpop.f32.mrb[0].mxu0
    %v4304 = vadd.f32 0.0, %v4303
    %v4305 = vpop.f32.mrb[0].mxu0
    %v4306 = vadd.f32 0.0, %v4305
    %v4307 = vpop.f32.mrb[0].mxu0
    %v4308 = vpop.f32.mrb[0].mxu0
    %4309 = vdwg.mxu0
    %v4311 = vrot.slane %v4304, 4
    %v4313 = vadd.f32 %v3653, %v4311
    %v4314 = vadd.f32 %v3649, %v4306
    %v4315 = vsub.f32 0.0, %v4313
    %v4316 = vmul.f32 %v4315, 1.442695
    %v4317 = vpow.pop %v4316
    %v4318 = vadd.f32 %v4317, 1.0
    %v4319 = vrcp.pop %v4318
    %v4320 = vmul.f32 1.0, %v4319
    %v4321 = vtanh.pop %v4313
    %v4323 = vrot.slane %v4221, 4
    %v4325 = vmul.f32 %v4320, %v4323
    %4327 = vrot.lane.b32.xlu0 %v4321, 64
    %v4328 = vpop.permute.xlu0 %4327
    %v4330 = vmul.f32 %v4320, %v4328
    %4332 = vrot.lane.b32.xlu0 %v4330, 32
    %v4333 = vpop.permute.xlu0 %4332
    %v4335 = vadd.f32 %v4325, %v4333
    %v4336 = vtanh.pop %v4335
    %4338 = vrot.lane.b32.xlu0 %v4336, 64
    %v4339 = vpop.permute.xlu0 %4338
    %v4341 = vmul.f32 %v4320, %v4339
    %v4342 = vsub.f32 0.0, %v4314
    %v4343 = vmul.f32 %v4342, 1.442695
    %v4344 = vpow.pop %v4343
    %v4345 = vadd.f32 %v4344, 1.0
    %v4346 = vrcp.pop %v4345
    %v4347 = vmul.f32 1.0, %v4346
    %v4348 = vtanh.pop %v4314
    %v4350 = vrot.slane %v4248, 4
    %v4352 = vmul.f32 %v4347, %v4350
    %4354 = vrot.lane.b32.xlu0 %v4348, 64
    %v4355 = vpop.permute.xlu0 %4354
    %v4357 = vmul.f32 %v4347, %v4355
    %4359 = vrot.lane.b32.xlu0 %v4357, 32
    %v4360 = vpop.permute.xlu0 %4359
    %v4362 = vadd.f32 %v4352, %v4360
    %v4363 = vtanh.pop %v4362
    %4365 = vrot.lane.b32.xlu0 %v4363, 64
    %v4366 = vpop.permute.xlu0 %4365
    %v4368 = vmul.f32 %v4347, %v4366
    %4370 = vrot.lane.b32.xlu0 %v4341, 32
    %v4371 = vpop.permute.xlu0 %4370
    %v4374 = vrot.slane %v4368, 4
    %4375 = vrot.lane.b32.xlu0 %v4374, 64
    %v4376 = vpop.permute.xlu0 %4375
    %v4378 = vsel %vm291, %v4371, %v4376
    %v4379 = vpack.c.bf16 %v4378, %v4378
    %v4381 = vrot.slane %v4379, 2
    %v4383 = vsel %vm378, %v4381, 0
    %4385 = vmatprep.subr.bf16.mxu0 %v3686
    %4386 = vmatpush1.bf16.msra.mxu0 %v3685
    %4387 = vmatprep.subr.bf16.mxu0 %v3688
    %4388 = vmatpush1.bf16.msra.mxu0 %v3687
    %4389 = vmatprep.subr.bf16.mxu0 %v3690
    %4390 = vmatpush1.bf16.msra.mxu0 %v3689
    %4391 = vmatprep.subr.bf16.mxu0 %v3692
    %4392 = vmatpush1.bf16.msra.mxu0 %v3691
    %4393 = vmatprep.subr.bf16.mxu0 0
    %4394 = vmatpush1.bf16.msra.mxu0 0
    %4395 = vmatprep.subr.bf16.mxu0 0
    %4396 = vmatpush1.bf16.msra.mxu0 0
    %4397 = vmatprep.subr.bf16.mxu0 0
    %4398 = vmatpush1.bf16.msra.mxu0 0
    %4399 = vmatprep.subr.bf16.mxu0 0
    %4400 = vmatpush1.bf16.msra.mxu0 0
    %4401 = vmatprep.subr.bf16.mxu0 0
    %4402 = vmatpush1.bf16.msra.mxu0 0
    %4403 = vmatprep.subr.bf16.mxu0 0
    %4404 = vmatpush1.bf16.msra.mxu0 0
    %4405 = vmatprep.subr.bf16.mxu0 0
    %4406 = vmatpush1.bf16.msra.mxu0 0
    %4407 = vmatprep.subr.bf16.mxu0 0
    %4408 = vmatpush1.bf16.msra.mxu0 0
    %4409 = vmatprep.subr.bf16.mxu0 0
    %4410 = vmatpush1.bf16.msra.mxu0 0
    %4411 = vmatprep.subr.bf16.mxu0 0
    %4412 = vmatpush1.bf16.msra.mxu0 0
    %4413 = vmatprep.subr.bf16.mxu0 0
    %4414 = vmatpush1.bf16.msra.mxu0 0
    %4415 = vmatprep.subr.bf16.mxu0 0
    %4416 = vmatpush1.bf16.msra.mxu0 0
    %4417 = vmatprep.mubr.bf16.mxu0 0
    %4418 = vmatmul.mubr.bf16.gmra.mrb[0].mxu0 %v4383
    %v4419 = vpop.f32.mrb[0].mxu0
    %v4420 = vadd.f32 0.0, %v4419
    %v4421 = vpop.f32.mrb[0].mxu0
    %v4422 = vadd.f32 0.0, %v4421
    %v4423 = vpop.f32.mrb[0].mxu0
    %v4424 = vpop.f32.mrb[0].mxu0
    %4425 = vdwg.mxu0
    %v4426 = vadd.f32 %v3657, %v4420
    %v4428 = vrot.slane %v4422, 4
    %v4430 = vadd.f32 %v3645, %v4428
    %v4431 = vsub.f32 0.0, %v4426
    %v4432 = vmul.f32 %v4431, 1.442695
    %v4433 = vpow.pop %v4432
    %v4434 = vadd.f32 %v4433, 1.0
    %v4435 = vrcp.pop %v4434
    %v4436 = vmul.f32 1.0, %v4435
    %v4437 = vtanh.pop %v4426
    %v4439 = vrot.slane %v4335, 4
    %v4441 = vmul.f32 %v4436, %v4439
    %4443 = vrot.lane.b32.xlu0 %v4437, 64
    %v4444 = vpop.permute.xlu0 %4443
    %v4446 = vmul.f32 %v4436, %v4444
    %4448 = vrot.lane.b32.xlu0 %v4446, 32
    %v4449 = vpop.permute.xlu0 %4448
    %v4451 = vadd.f32 %v4441, %v4449
    %v4452 = vtanh.pop %v4451
    %4454 = vrot.lane.b32.xlu0 %v4452, 64
    %v4455 = vpop.permute.xlu0 %4454
    %v4457 = vmul.f32 %v4436, %v4455
    %v4458 = vsub.f32 0.0, %v4430
    %v4459 = vmul.f32 %v4458, 1.442695
    %v4460 = vpow.pop %v4459
    %v4461 = vadd.f32 %v4460, 1.0
    %v4462 = vrcp.pop %v4461
    %v4463 = vmul.f32 1.0, %v4462
    %v4464 = vtanh.pop %v4430
    %v4466 = vrot.slane %v4362, 4
    %v4468 = vmul.f32 %v4463, %v4466
    %4470 = vrot.lane.b32.xlu0 %v4464, 64
    %v4471 = vpop.permute.xlu0 %4470
    %v4473 = vmul.f32 %v4463, %v4471
    %4475 = vrot.lane.b32.xlu0 %v4473, 32
    %v4476 = vpop.permute.xlu0 %4475
    %v4478 = vadd.f32 %v4468, %v4476
    %v4479 = vtanh.pop %v4478
    %4481 = vrot.lane.b32.xlu0 %v4479, 64
    %v4482 = vpop.permute.xlu0 %4481
    %v4484 = vmul.f32 %v4463, %v4482
    %4486 = vrot.lane.b32.xlu0 %v4457, 32
    %v4487 = vpop.permute.xlu0 %4486
    %v4490 = vrot.slane %v4484, 4
    %4491 = vrot.lane.b32.xlu0 %v4490, 64
    %v4492 = vpop.permute.xlu0 %4491
    %v4494 = vsel %vm291, %v4487, %v4492
    %v4495 = vpack.c.bf16 %v4494, %v4494
    %v4497 = vsel %vm378, %v4495, 0
    %4499 = vmatprep.subr.bf16.mxu0 %v3686
    %4500 = vmatpush1.bf16.msra.mxu0 %v3685
    %4501 = vmatprep.subr.bf16.mxu0 %v3688
    %4502 = vmatpush1.bf16.msra.mxu0 %v3687
    %4503 = vmatprep.subr.bf16.mxu0 %v3690
    %4504 = vmatpush1.bf16.msra.mxu0 %v3689
    %4505 = vmatprep.subr.bf16.mxu0 %v3692
    %4506 = vmatpush1.bf16.msra.mxu0 %v3691
    %4507 = vmatprep.subr.bf16.mxu0 0
    %4508 = vmatpush1.bf16.msra.mxu0 0
    %4509 = vmatprep.subr.bf16.mxu0 0
    %4510 = vmatpush1.bf16.msra.mxu0 0
    %4511 = vmatprep.subr.bf16.mxu0 0
    %4512 = vmatpush1.bf16.msra.mxu0 0
    %4513 = vmatprep.subr.bf16.mxu0 0
    %4514 = vmatpush1.bf16.msra.mxu0 0
    %4515 = vmatprep.subr.bf16.mxu0 0
    %4516 = vmatpush1.bf16.msra.mxu0 0
    %4517 = vmatprep.subr.bf16.mxu0 0
    %4518 = vmatpush1.bf16.msra.mxu0 0
    %4519 = vmatprep.subr.bf16.mxu0 0
    %4520 = vmatpush1.bf16.msra.mxu0 0
    %4521 = vmatprep.subr.bf16.mxu0 0
    %4522 = vmatpush1.bf16.msra.mxu0 0
    %4523 = vmatprep.subr.bf16.mxu0 0
    %4524 = vmatpush1.bf16.msra.mxu0 0
    %4525 = vmatprep.subr.bf16.mxu0 0
    %4526 = vmatpush1.bf16.msra.mxu0 0
    %4527 = vmatprep.subr.bf16.mxu0 0
    %4528 = vmatpush1.bf16.msra.mxu0 0
    %4529 = vmatprep.subr.bf16.mxu0 0
    %4530 = vmatpush1.bf16.msra.mxu0 0
    %4531 = vmatprep.mubr.bf16.mxu0 0
    %4532 = vmatmul.mubr.bf16.gmra.mrb[0].mxu0 %v4497
    %v4533 = vpop.f32.mrb[0].mxu0
    %v4534 = vadd.f32 0.0, %v4533
    %v4535 = vpop.f32.mrb[0].mxu0
    %v4536 = vadd.f32 0.0, %v4535
    %v4537 = vpop.f32.mrb[0].mxu0
    %v4538 = vpop.f32.mrb[0].mxu0
    %4539 = vdwg.mxu0
    %v4541 = vrot.slane %v4534, 4
    %v4543 = vadd.f32 %v3657, %v4541
    %v4544 = vadd.f32 %v3645, %v4536
    %v4545 = vsub.f32 0.0, %v4543
    %v4546 = vmul.f32 %v4545, 1.442695
    %v4547 = vpow.pop %v4546
    %v4548 = vadd.f32 %v4547, 1.0
    %v4549 = vrcp.pop %v4548
    %v4550 = vmul.f32 1.0, %v4549
    %v4551 = vtanh.pop %v4543
    %v4553 = vrot.slane %v4451, 4
    %v4555 = vmul.f32 %v4550, %v4553
    %4557 = vrot.lane.b32.xlu0 %v4551, 64
    %v4558 = vpop.permute.xlu0 %4557
    %v4560 = vmul.f32 %v4550, %v4558
    %4562 = vrot.lane.b32.xlu0 %v4560, 32
    %v4563 = vpop.permute.xlu0 %4562
    %v4565 = vadd.f32 %v4555, %v4563
    %v4566 = vtanh.pop %v4565
    %4568 = vrot.lane.b32.xlu0 %v4566, 64
    %v4569 = vpop.permute.xlu0 %4568
    %v4571 = vmul.f32 %v4550, %v4569
    %v4572 = vsub.f32 0.0, %v4544
    %v4573 = vmul.f32 %v4572, 1.442695
    %v4574 = vpow.pop %v4573
    %v4575 = vadd.f32 %v4574, 1.0
    %v4576 = vrcp.pop %v4575
    %v4577 = vmul.f32 1.0, %v4576
    %v4578 = vtanh.pop %v4544
    %v4580 = vrot.slane %v4478, 4
    %v4582 = vmul.f32 %v4577, %v4580
    %4584 = vrot.lane.b32.xlu0 %v4578, 64
    %v4585 = vpop.permute.xlu0 %4584
    %v4587 = vmul.f32 %v4577, %v4585
    %4589 = vrot.lane.b32.xlu0 %v4587, 32
    %v4590 = vpop.permute.xlu0 %4589
    %v4592 = vadd.f32 %v4582, %v4590
    %v4593 = vtanh.pop %v4592
    %4595 = vrot.lane.b32.xlu0 %v4593, 64
    %v4596 = vpop.permute.xlu0 %4595
    %v4598 = vmul.f32 %v4577, %v4596
    %4600 = vrot.lane.b32.xlu0 %v4571, 32
    %v4601 = vpop.permute.xlu0 %4600
    %v4604 = vrot.slane %v4598, 4
    %4605 = vrot.lane.b32.xlu0 %v4604, 64
    %v4606 = vpop.permute.xlu0 %4605
    %v4608 = vsel %vm291, %v4601, %v4606
    %4610 = vrot.lane.b32.xlu0 %v4608, 64
    %v4611 = vpop.permute.xlu0 %4610
    %v4613 = vsel %vm378, %v3495, %v4611
    %v4614 = vmul.f32 %v2430, %v2430
    %vm4615 = vcmask 1047558
    %v4616 = vsel %vm4615, %v4614, 0.0
    %4617 = vadd.xlane.f32.xlu0 %v4616
    %v4618 = vpop.xlane.xlu0 %4617
    %v4619 = vmax.f32 %v4618, 1e-16
    %v4620 = vmul.f32 %v4613, %v4613
    %vm4621 = vcmask 1045508
    %v4622 = vsel %vm4621, %v4620, 0.0
    %4623 = vadd.xlane.f32.xlu0 %v4622
    %v4624 = vpop.xlane.xlu0 %4623
    %v4625 = vmax.f32 %v4624, 1e-16
    %v4626 = vsel %vm4615, %v4620, 0.0
    %4627 = vadd.xlane.f32.xlu0 %v4626
    %v4628 = vpop.xlane.xlu0 %4627
    %v4629 = vmax.f32 %v4628, 1e-16
    %v4630 = vrsqrt.pop %v4619
    %v4632 = vrot.slane %v4613, 6
    %v4634 = vmul.f32 %v2430, %v4632
    %v4635 = vsel %vm4615, %v4634, 0.0
    %4636 = vadd.xlane.f32.xlu0 %v4635
    %v4637 = vpop.xlane.xlu0 %4636
    %v4638 = vmul.f32 %v4637, %v4630
    %v4639 = vrsqrt.pop %v4625
    %v4641 = vrot.slane %v4639, 6
    %v4643 = vmul.f32 %v4638, %v4641
    %v4644 = vmul.f32 %v2430, %v4613
    %v4645 = vsel %vm4615, %v4644, 0.0
    %4646 = vadd.xlane.f32.xlu0 %v4645
    %v4647 = vpop.xlane.xlu0 %4646
    %v4648 = vmul.f32 %v4647, %v4630
    %v4649 = vrsqrt.pop %v4629
    %v4650 = vmul.f32 %v4648, %v4649
    %v4651 = vsub.f32 %v4643, %v4650
    %v4652 = vsub.f32 1.0, %v4651
    %v4653 = vmax.f32 %v4652, 0.0
    %v4655 = vrot.slane %v4653, 6
    %vm4657 = vcmask 1024
    %v4658 = vsel %vm4657, %v4655, 0.0
    %v4659 = vrot.slane %v4658, 4
    %v4660 = vadd.f32 %v4658, %v4659
    %v4661 = vrot.slane %v4660, 2
    %v4662 = vadd.f32 %v4660, %v4661
    %v4663 = vrot.slane %v4662, 1
    %v4664 = vadd.f32 %v4662, %v4663
    %v4665 = vmul.f32 %v4664, 0.5
    %vm4666 = vcmask 7174
    %4667 = vst.msk [vmem:[#allocation25 - $0x6] sm:$0xc0] %vm4666, %v4643
    %4668 = vst.msk [vmem:[#allocation26 - $0x6] sm:$0xc0] %vm4666, %v4650
    %vm4669 = vcmask 0
    %4670 = vst.msk [vmem:[#allocation28] sm:$0x1] %vm4669, %v4665
    %4671 = vst [vmem:[#allocation29 - $0x6] sm:$0xc0] %v2430
    %4672 = vst [vmem:[#allocation31 - $0x4] sm:$0x30] %v4613
    %4673 = vst [vmem:[#allocation32 - $0x6] sm:$0xc0] %v4613
    // Predicated region
    $region114: #{bilstm_model_forward.1} parent=1 // pred_check
      _
    $region115: #{bilstm_model_forward.1} parent=1 // pred_check_branch
      %4675 = sbr.rel (0) target = $region117
    $region116: #{bilstm_model_forward.1} parent=1 // pred_region
      %s4677 = ssub.s32 32, 32
      %4678 = vsyncadd [#allocation4], %s4677
      %s4680 = sshll.u32 [#allocation25], 4
      %s4681 = int_to_ptr.vmem [resolvable:$true] %s4680
      %4683 = dma.vmem_to_hbm [thread:$0]  %s4681, 32, %s14, [#allocation4]
    $region117: #{bilstm_model_forward.1} parent=1 // pred_fallthru
      _
    // Predicated region
    $region118: #{bilstm_model_forward.1} parent=1 // pred_check
      _
    $region119: #{bilstm_model_forward.1} parent=1 // pred_check_branch
      %4685 = sbr.rel (0) target = $region121
    $region120: #{bilstm_model_forward.1} parent=1 // pred_region
      %s4687 = ssub.s32 32, 32
      %4688 = vsyncadd [#allocation27], %s4687
      %s4690 = sshll.u32 [#allocation26], 4
      %s4691 = int_to_ptr.vmem [resolvable:$true] %s4690
      %4693 = dma.vmem_to_hbm [thread:$0]  %s4691, 32, %s15, [#allocation27]
    $region121: #{bilstm_model_forward.1} parent=1 // pred_fallthru
      _
    // Predicated region
    $region122: #{bilstm_model_forward.1} parent=1 // pred_check
      _
    $region123: #{bilstm_model_forward.1} parent=1 // pred_check_branch
      %4695 = sbr.rel (0) target = $region125
    $region124: #{bilstm_model_forward.1} parent=1 // pred_region
      %s4697 = ssub.s32 16, 16
      %4698 = vsyncadd [#allocation27], %s4697
      %s4700 = sshll.u32 [#allocation28], 4
      %s4701 = int_to_ptr.vmem [resolvable:$true] %s4700
      %4703 = dma.vmem_to_hbm [thread:$0]  %s4701, 16, %s16, [#allocation27]
    $region125: #{bilstm_model_forward.1} parent=1 // pred_fallthru
      _
    // Predicated region
    $region126: #{bilstm_model_forward.1} parent=1 // pred_check
      _
    $region127: #{bilstm_model_forward.1} parent=1 // pred_check_branch
      %4705 = sbr.rel (0) target = $region129
    $region128: #{bilstm_model_forward.1} parent=1 // pred_region
      %s4707 = ssub.s32 32, 32
      %4708 = vsyncadd [#allocation30], %s4707
      %s4710 = sshll.u32 [#allocation29], 4
      %s4711 = int_to_ptr.vmem [resolvable:$true] %s4710
      %4713 = dma.vmem_to_hbm [thread:$0]  %s4711, 32, %s17, [#allocation30]
    $region129: #{bilstm_model_forward.1} parent=1 // pred_fallthru
      _
    // Predicated region
    $region130: #{bilstm_model_forward.1} parent=1 // pred_check
      _
    $region131: #{bilstm_model_forward.1} parent=1 // pred_check_branch
      %4715 = sbr.rel (0) target = $region133
    $region132: #{bilstm_model_forward.1} parent=1 // pred_region
      %s4717 = ssub.s32 32, 32
      %4718 = vsyncadd [#allocation30], %s4717
      %s4720 = sshll.u32 [#allocation31], 4
      %s4721 = int_to_ptr.vmem [resolvable:$true] %s4720
      %4723 = dma.vmem_to_hbm [thread:$0]  %s4721, 32, %s18, [#allocation30]
    $region133: #{bilstm_model_forward.1} parent=1 // pred_fallthru
      _
    // Predicated region
    $region134: #{bilstm_model_forward.1} parent=1 // pred_check
      _
    $region135: #{bilstm_model_forward.1} parent=1 // pred_check_branch
      %4725 = sbr.rel (0) target = $region137
    $region136: #{bilstm_model_forward.1} parent=1 // pred_region
      %s4727 = ssub.s32 32, 32
      %4728 = vsyncadd [#allocation33], %s4727
      %s4730 = sshll.u32 [#allocation32], 4
      %s4731 = int_to_ptr.vmem [resolvable:$true] %s4730
      %4733 = dma.vmem_to_hbm [thread:$0]  %s4731, 32, %s19, [#allocation33]
    $region137: #{bilstm_model_forward.1} parent=1 // pred_fallthru
      _
    // Predicated region
    $region138: #{bilstm_model_forward.1} parent=1 // pred_check
      _
    $region139: #{bilstm_model_forward.1} parent=1 // pred_check_branch
      %4735 = sbr.rel (0) target = $region141
    $region140: #{bilstm_model_forward.1} parent=1 // pred_region
      %4736 = dma.done [#allocation4], 32
    $region141: #{bilstm_model_forward.1} parent=1 // pred_fallthru
      _
    // Predicated region
    $region142: #{bilstm_model_forward.1} parent=1 // pred_check
      _
    $region143: #{bilstm_model_forward.1} parent=1 // pred_check_branch
      %4738 = sbr.rel (0) target = $region145
    $region144: #{bilstm_model_forward.1} parent=1 // pred_region
      %4739 = dma.done [#allocation27], 32
    $region145: #{bilstm_model_forward.1} parent=1 // pred_fallthru
      _
    // Predicated region
    $region146: #{bilstm_model_forward.1} parent=1 // pred_check
      _
    $region147: #{bilstm_model_forward.1} parent=1 // pred_check_branch
      %4741 = sbr.rel (0) target = $region149
    $region148: #{bilstm_model_forward.1} parent=1 // pred_region
      %4742 = dma.done [#allocation27], 16
    $region149: #{bilstm_model_forward.1} parent=1 // pred_fallthru
      _
    // Predicated region
    $region150: #{bilstm_model_forward.1} parent=1 // pred_check
      _
    $region151: #{bilstm_model_forward.1} parent=1 // pred_check_branch
      %4744 = sbr.rel (0) target = $region153
    $region152: #{bilstm_model_forward.1} parent=1 // pred_region
      %4745 = dma.done [#allocation30], 32
    $region153: #{bilstm_model_forward.1} parent=1 // pred_fallthru
      _
    // Predicated region
    $region154: #{bilstm_model_forward.1} parent=1 // pred_check
      _
    $region155: #{bilstm_model_forward.1} parent=1 // pred_check_branch
      %4747 = sbr.rel (0) target = $region157
    $region156: #{bilstm_model_forward.1} parent=1 // pred_region
      %4748 = dma.done [#allocation30], 32
    $region157: #{bilstm_model_forward.1} parent=1 // pred_fallthru
      _
    // Predicated region
    $region158: #{bilstm_model_forward.1} parent=1 // pred_check
      _
    $region159: #{bilstm_model_forward.1} parent=1 // pred_check_branch
      %4750 = sbr.rel (0) target = $region161
    $region160: #{bilstm_model_forward.1} parent=1 // pred_region
      %4751 = dma.done [#allocation33], 32
    $region161: #{bilstm_model_forward.1} parent=1 // pred_fallthru
      _
    %4752 = vsyncpa [#allocation3], 1
    %4753 = vsyncpa [#allocation6], 1
    %4754 = vsyncpa [#allocation9], 1
    %4755 = vsyncpa [#allocation12], 1
    %4756 = vsyncpa [#allocation15], 1
    %4757 = vsyncpa [#allocation18], 1
    %4758 = vsyncpa [#allocation21], 1
    %4759 = vsyncpa [#allocation24], 1
    %4760 = vsyncpa [#allocation4], 1
    %4761 = vsyncpa [#allocation27], 1
    %4762 = vsyncpa [#allocation30], 1
    %4763 = vsyncpa [#allocation33], 1

</llo_original>
